<compile_context>
chip_gen: v7x
topology: tpu7x:2x2x1
jax: 0.10.0
libtpu: 0.0.40
codegen_flags: <defaults>
</compile_context>

<pallas_src>
import functools

import jax
import jax.numpy as jnp
import numpy as np
from jax.experimental import pallas as pl
from jax.experimental.pallas import tpu as pltpu


def get_padding(kernel_size, dilation=1):
    return (kernel_size * dilation - dilation) // 2


def _round_up(x, m):
    return ((x + m - 1) // m) * m


# ----------------------------------------------------------------------------
# Fused Pallas kernel: whole ParralelBlock on NLC tensors.
# ----------------------------------------------------------------------------
def fused_parallel_block_nlc(x_nlc, packed_ws, packed_bs, kernel_sizes,
                             dilation_sizes, mm_dtype=jnp.bfloat16,
                             use_im2col=True):
    """x_nlc: (B, L, C) f32.
    packed_ws[i]: (2*n_layers, k_i*C, C) im2col weight in mm_dtype, row = t*C + c_in.
    packed_bs[i]: (2*n_layers, 1, C) f32."""
    B, L, C = x_nlc.shape
    n_branch = len(kernel_sizes)
    scratch_dtype = mm_dtype

    pad_raw = max(get_padding(k, d)
                  for k, dils in zip(kernel_sizes, dilation_sizes)
                  for d in tuple(dils) + (1,))
    # Sublane-align the halo (16 rows covers f32 (8/vreg) and bf16 (16/vreg))
    # so every activation store into the scratch interior is unmasked.
    pad_max = _round_up(max(pad_raw, 1), 16)
    Lp = L + 2 * pad_max
    inv_nb = 1.0 / float(n_branch)

    def kernel(*refs):
        x_ref = refs[0]
        wb_refs = refs[1:1 + 2 * n_branch]
        o_ref = refs[1 + 2 * n_branch]
        xs_refs = refs[2 + 2 * n_branch:]            # n_branch x (Lp, C) VMEM

        # Zero only the halo rows; the interior [pad_max, pad_max+L) is always
        # overwritten before being read.  Per-iteration, never program_id-gated
        # (megacore-safe).
        halo0 = jnp.zeros((pad_max, C), scratch_dtype)
        for xs_ref in xs_refs:
            xs_ref[:pad_max, :] = halo0
            xs_ref[pad_max + L:, :] = halo0

        def conv_silu(xs_ref, x, w_flat, b_row, k, d):
            """y = Conv1d_{k, dil=d, 'same'}(silu(x)) + bias   -> (L, C) f32."""
            xa = x * jax.nn.sigmoid(x)                    # SiLU in f32 (VPU+EUP)
            xs_ref[pad_max:pad_max + L, :] = xa.astype(scratch_dtype)
            xp = xs_ref[...]                              # (Lp, C) mm_dtype
            off = pad_max - get_padding(k, d)
            taps = [xp[off + t * d: off + t * d + L, :] for t in range(k)]
            if use_im2col:
                cols = jnp.concatenate(taps, axis=1)      # (L, k*C) mm_dtype
                y = jnp.dot(cols, w_flat, preferred_element_type=jnp.float32)
            else:
                # Fallback: per-tap matmuls accumulated in f32.
                y = jnp.zeros((L, C), jnp.float32)
                for t in range(k):
                    y = y + jnp.dot(taps[t], w_flat[t * C:(t + 1) * C, :],
                                    preferred_element_type=jnp.float32)
            return y + b_row

        x0 = x_ref[...].astype(jnp.float32)               # (L, C)
        acc = jnp.zeros((L, C), jnp.float32)
        for bi, (k, dils) in enumerate(zip(kernel_sizes, dilation_sizes)):
            w_ref, b_ref = wb_refs[2 * bi], wb_refs[2 * bi + 1]
            xs_ref = xs_refs[bi]
            x = x0
            for li, d in enumerate(dils):                 # ResBlock1 layers
                h = conv_silu(xs_ref, x, w_ref[2 * li], b_ref[2 * li], k, int(d))
                x = conv_silu(xs_ref, h, w_ref[2 * li + 1], b_ref[2 * li + 1],
                              k, 1) + x
            acc = acc + x                                 # branch output
        o_ref[...] = (acc * inv_nb).astype(o_ref.dtype)   # mean over branches

    in_specs = [pl.BlockSpec((None, L, C), lambda b: (b, 0, 0))]
    inputs = [x_nlc]
    for w_s, b_s in zip(packed_ws, packed_bs):
        in_specs.append(pl.BlockSpec(w_s.shape, lambda b: (0, 0, 0)))
        in_specs.append(pl.BlockSpec(b_s.shape, lambda b: (0, 0, 0)))
        inputs += [w_s, b_s]

    # VMEM budget: weights + biases + double-buffered in/out blocks +
    # per-branch halo scratch + im2col transients, 2x headroom, clamped to
    # [16 MiB, 48 MiB] (48 MiB keeps headroom under v7x's 64 MiB physical).
    bpe = np.dtype(mm_dtype).itemsize
    k_max = max(kernel_sizes)
    est = (sum(int(np.prod(w.shape)) * w.dtype.itemsize for w in packed_ws)
           + sum(int(np.prod(b.shape)) * 4 for b in packed_bs)
           + 2 * 2 * L * C * 4
           + n_branch * Lp * C * bpe
           + 4 * L * k_max * C * bpe)
    vmem_limit = int(min(48 * 1024 * 1024, max(2 * est, 16 * 1024 * 1024)))

    grid_spec = pltpu.PrefetchScalarGridSpec(
        num_scalar_prefetch=0,
        grid=(B,),
        in_specs=in_specs,
        out_specs=pl.BlockSpec((None, L, C), lambda b: (b, 0, 0)),
        scratch_shapes=[pltpu.VMEM((Lp, C), scratch_dtype)
                        for _ in range(n_branch)],
    )
    return pl.pallas_call(
        kernel,
        out_shape=jax.ShapeDtypeStruct((B, L, C), x_nlc.dtype),
        grid_spec=grid_spec,
        compiler_params=pltpu.CompilerParams(
            dimension_semantics=("parallel",),
            vmem_limit_bytes=vmem_limit),
    )(*inputs)


# ----------------------------------------------------------------------------
# Wrapper: PyTorch NCL layout in/out, weight packing into im2col layout.
# ----------------------------------------------------------------------------
def pack_params(all_params, kernel_sizes, channels, mm_dtype=jnp.bfloat16):
    packed_ws, packed_bs = [], []
    for block_params, k in zip(all_params, kernel_sizes):
        ws, bs = [], []
        for (w1, b1, w2, b2) in block_params:
            for w, b in ((w1, b1), (w2, b2)):
                # (C_out, C_in, k) -> (k, C_in, C_out) -> (k*C_in, C_out)
                ws.append(jnp.transpose(w, (2, 1, 0))
                          .reshape(k * channels, channels).astype(mm_dtype))
                bs.append(b.reshape(1, channels).astype(jnp.float32))
        packed_ws.append(jnp.stack(ws, 0))      # (2*n_layers, k*C, C) mm_dtype
        packed_bs.append(jnp.stack(bs, 0))      # (2*n_layers, 1, C)   f32
    return packed_ws, packed_bs


def parallel_block_forward(x_ncl, all_params, kernel_sizes, dilation_sizes,
                           mm_dtype=jnp.bfloat16, use_im2col=True):
    B, C, L = x_ncl.shape
    packed_ws, packed_bs = pack_params(all_params, kernel_sizes, C, mm_dtype)
    x_nlc = jnp.transpose(x_ncl, (0, 2, 1))
    y_nlc = fused_parallel_block_nlc(x_nlc, packed_ws, packed_bs,
                                     kernel_sizes, dilation_sizes,
                                     mm_dtype=mm_dtype, use_im2col=use_im2col)
    return jnp.transpose(y_nlc, (0, 2, 1))       # back to (B, C, L)


# ----------------------------------------------------------------------------
# Deterministic parameter construction (mirrors module __init__ shapes).
# weight_norm at init is identity (g = ||v||) -> plain Conv1d weights with
# normal(0, 0.01); biases use the PyTorch default uniform(+-1/sqrt(C*k)).
# ----------------------------------------------------------------------------
def init_params(key, channels, kernel_sizes, dilation_sizes):
    all_params = []
    for k, dils in zip(kernel_sizes, dilation_sizes):
        block_params = []
        for _ in dils:
            key, k1, k2, k3, k4 = jax.random.split(key, 5)
            bound = 1.0 / np.sqrt(channels * k)
            w1 = 0.01 * jax.random.normal(k1, (channels, channels, k), jnp.float32)
            b1 = jax.random.uniform(k2, (channels,), jnp.float32, -bound, bound)
            w2 = 0.01 * jax.random.normal(k3, (channels, channels, k), jnp.float32)
            b2 = jax.random.uniform(k4, (channels,), jnp.float32, -bound, bound)
            block_params.append((w1, b1, w2, b2))
        all_params.append(block_params)
    return all_params


# ----------------------------------------------------------------------------
# Pure-JAX reference (correctness check only).
# ----------------------------------------------------------------------------
def ref_conv1d_silu(x_nlc, w_oik, bias, d, residual=None):
    k = w_oik.shape[2]
    pad = get_padding(k, d)
    xa = jax.nn.silu(x_nlc)
    w_hio = jnp.transpose(w_oik, (2, 1, 0))
    y = jax.lax.conv_general_dilated(
        xa, w_hio, window_strides=(1,), padding=[(pad, pad)],
        rhs_dilation=(d,), dimension_numbers=("NHC", "HIO", "NHC")) + bias
    if residual is not None:
        y = y + residual
    return y


def ref_parallel_block(x_ncl, all_params, kernel_sizes, dilation_sizes):
    x_nlc = jnp.transpose(x_ncl, (0, 2, 1))
    outs = []
    for params, dils in zip(all_params, dilation_sizes):
        x = x_nlc
        for (w1, b1, w2, b2), d in zip(params, dils):
            h = ref_conv1d_silu(x, w1, b1, d)
            x = ref_conv1d_silu(h, w2, b2, 1, residual=x)
        outs.append(x)
    y = jnp.mean(jnp.stack(outs, 0), 0)
    return jnp.transpose(y, (0, 2, 1))


if __name__ == "__main__":
    B, C, L = 2, 32, 64
    kernel_sizes = (3, 7, 11)
    dilation_sizes = ((1, 3, 5), (1, 3, 5), (1, 3, 5))

    key = jax.random.PRNGKey(0)
    key, xkey = jax.random.split(key)
    x = jax.random.normal(xkey, (B, C, L), jnp.float32)   # PyTorch NCL layout
    params = init_params(key, C, kernel_sizes, dilation_sizes)

    ref = jax.block_until_ready(
        ref_parallel_block(x, params, kernel_sizes, dilation_sizes))

    def run(mm_dtype, use_im2col):
        fwd = jax.jit(functools.partial(
            parallel_block_forward, kernel_sizes=kernel_sizes,
            dilation_sizes=dilation_sizes, mm_dtype=mm_dtype,
            use_im2col=use_im2col))
        return jax.block_until_ready(fwd(x, params))

    def check(use_im2col):
        # Exact-math config (f32 MXU operands + f32 scratch): tight check.
        out32 = run(jnp.float32, use_im2col)
        np.testing.assert_allclose(np.asarray(out32), np.asarray(ref),
                                   rtol=1e-4, atol=1e-4)
        # Perf config (bf16 MXU operands/scratch, f32 accumulate & element-wise
        # math); looser tolerance accounts for the bf16 operand rounding.
        outbf = run(jnp.bfloat16, use_im2col)
        np.testing.assert_allclose(np.asarray(outbf), np.asarray(ref),
                                   rtol=2e-2, atol=2e-2)
        return outbf

    try:
        out = check(use_im2col=True)
    except pltpu.LoweringException:
        # Portability fallback: per-tap matmuls if this Mosaic build rejects
        # the unaligned minor-dim concatenation used by the im2col path.
        out = check(use_im2col=False)

    assert out.shape == (B, C, L), out.shape
    print("KERNEL_OK")
</pallas_src>

<mosaic_0001>
module attributes {stable_mosaic.version = 11 : i64} {
  func.func @kernel(%arg0: i32, %arg1: memref<1x64x32xf32, #tpu.memory_space<vmem>>, %arg2: memref<6x96x32xf32, #tpu.memory_space<vmem>>, %arg3: memref<6x1x32xf32, #tpu.memory_space<vmem>>, %arg4: memref<6x224x32xf32, #tpu.memory_space<vmem>>, %arg5: memref<6x1x32xf32, #tpu.memory_space<vmem>>, %arg6: memref<6x352x32xf32, #tpu.memory_space<vmem>>, %arg7: memref<6x1x32xf32, #tpu.memory_space<vmem>>, %arg8: memref<1x64x32xf32, #tpu.memory_space<vmem>>, %arg9: memref<128x32xf32, #tpu.memory_space<vmem>>, %arg10: memref<128x32xf32, #tpu.memory_space<vmem>>, %arg11: memref<128x32xf32, #tpu.memory_space<vmem>>) attributes {dimension_semantics = [#tpu.dimension_semantics<parallel>], iteration_bounds = array<i64: 2>, scalar_prefetch = 0 : i64, scratch_operands = 3 : i64, tpu.core_type = #tpu.core_type<tc>, window_params = [{transform_indices = @transform_0, window_bounds = array<i64: 1, 64, 32>}, {pipeline_mode = #tpu.pipeline_mode<synchronous>, transform_indices = @transform_1, window_bounds = array<i64: 6, 96, 32>}, {pipeline_mode = #tpu.pipeline_mode<synchronous>, transform_indices = @transform_2, window_bounds = array<i64: 6, 1, 32>}, {pipeline_mode = #tpu.pipeline_mode<synchronous>, transform_indices = @transform_3, window_bounds = array<i64: 6, 224, 32>}, {pipeline_mode = #tpu.pipeline_mode<synchronous>, transform_indices = @transform_4, window_bounds = array<i64: 6, 1, 32>}, {pipeline_mode = #tpu.pipeline_mode<synchronous>, transform_indices = @transform_5, window_bounds = array<i64: 6, 352, 32>}, {pipeline_mode = #tpu.pipeline_mode<synchronous>, transform_indices = @transform_6, window_bounds = array<i64: 6, 1, 32>}, {transform_indices = @transform_7, window_bounds = array<i64: 1, 64, 32>}]} {
    %cst = arith.constant 0.000000e+00 : f32
    %0 = vector.broadcast %cst : f32 to vector<32x32xf32>
    %c0 = arith.constant 0 : index
    %c0_0 = arith.constant 0 : index
    %1 = vector.load %arg9[%c0, %c0_0] : memref<128x32xf32, #tpu.memory_space<vmem>>, vector<32x32xf32>
    tpu.vector_store %arg9[%c0, %c0_0], %0 {strides = array<i32>} : memref<128x32xf32, #tpu.memory_space<vmem>>, vector<32x32xf32>,
    %c96 = arith.constant 96 : index
    %c0_1 = arith.constant 0 : index
    %2 = vector.load %arg9[%c96, %c0_1] : memref<128x32xf32, #tpu.memory_space<vmem>>, vector<32x32xf32>
    tpu.vector_store %arg9[%c96, %c0_1], %0 {strides = array<i32>} : memref<128x32xf32, #tpu.memory_space<vmem>>, vector<32x32xf32>,
    %c0_2 = arith.constant 0 : index
    %c0_3 = arith.constant 0 : index
    %3 = vector.load %arg10[%c0_2, %c0_3] : memref<128x32xf32, #tpu.memory_space<vmem>>, vector<32x32xf32>
    tpu.vector_store %arg10[%c0_2, %c0_3], %0 {strides = array<i32>} : memref<128x32xf32, #tpu.memory_space<vmem>>, vector<32x32xf32>,
    %c96_4 = arith.constant 96 : index
    %c0_5 = arith.constant 0 : index
    %4 = vector.load %arg10[%c96_4, %c0_5] : memref<128x32xf32, #tpu.memory_space<vmem>>, vector<32x32xf32>
    tpu.vector_store %arg10[%c96_4, %c0_5], %0 {strides = array<i32>} : memref<128x32xf32, #tpu.memory_space<vmem>>, vector<32x32xf32>,
    %c0_6 = arith.constant 0 : index
    %c0_7 = arith.constant 0 : index
    %5 = vector.load %arg11[%c0_6, %c0_7] : memref<128x32xf32, #tpu.memory_space<vmem>>, vector<32x32xf32>
    tpu.vector_store %arg11[%c0_6, %c0_7], %0 {strides = array<i32>} : memref<128x32xf32, #tpu.memory_space<vmem>>, vector<32x32xf32>,
    %c96_8 = arith.constant 96 : index
    %c0_9 = arith.constant 0 : index
    %6 = vector.load %arg11[%c96_8, %c0_9] : memref<128x32xf32, #tpu.memory_space<vmem>>, vector<32x32xf32>
    tpu.vector_store %arg11[%c96_8, %c0_9], %0 {strides = array<i32>} : memref<128x32xf32, #tpu.memory_space<vmem>>, vector<32x32xf32>,
    %c0_10 = arith.constant 0 : index
    %c0_11 = arith.constant 0 : index
    %c0_12 = arith.constant 0 : index
    %7 = vector.load %arg1[%c0_10, %c0_11, %c0_12] : memref<1x64x32xf32, #tpu.memory_space<vmem>>, vector<1x64x32xf32>
    %8 = vector.shape_cast %7 : vector<1x64x32xf32> to vector<64x32xf32>
    %cst_13 = arith.constant 0.000000e+00 : f32
    %9 = vector.broadcast %cst_13 : f32 to vector<64x32xf32>
    %c0_14 = arith.constant 0 : index
    %c0_15 = arith.constant 0 : index
    %c0_16 = arith.constant 0 : index
    %10 = vector.load %arg2[%c0_14, %c0_15, %c0_16] : memref<6x96x32xf32, #tpu.memory_space<vmem>>, vector<1x96x32xf32>
    %11 = vector.shape_cast %10 : vector<1x96x32xf32> to vector<96x32xf32>
    %c0_17 = arith.constant 0 : index
    %c0_18 = arith.constant 0 : index
    %c0_19 = arith.constant 0 : index
    %12 = vector.load %arg3[%c0_17, %c0_18, %c0_19] : memref<6x1x32xf32, #tpu.memory_space<vmem>>, vector<1x1x32xf32>
    %13 = vector.shape_cast %12 : vector<1x1x32xf32> to vector<1x32xf32>
    %14 = arith.negf %8 : vector<64x32xf32>
    %15 = math.exp %14 : vector<64x32xf32>
    %cst_20 = arith.constant 1.000000e+00 : f32
    %16 = vector.broadcast %cst_20 : f32 to vector<64x32xf32>
    %17 = arith.addf %16, %15 : vector<64x32xf32>
    %18 = arith.divf %16, %17 : vector<64x32xf32>
    %19 = arith.mulf %8, %18 : vector<64x32xf32>
    %c32 = arith.constant 32 : index
    %c0_21 = arith.constant 0 : index
    %20 = vector.load %arg9[%c32, %c0_21] : memref<128x32xf32, #tpu.memory_space<vmem>>, vector<64x32xf32>
    tpu.vector_store %arg9[%c32, %c0_21], %19 {strides = array<i32>} : memref<128x32xf32, #tpu.memory_space<vmem>>, vector<64x32xf32>,
    %c0_22 = arith.constant 0 : index
    %c0_23 = arith.constant 0 : index
    %21 = vector.load %arg9[%c0_22, %c0_23] : memref<128x32xf32, #tpu.memory_space<vmem>>, vector<128x32xf32>
    %22 = vector.extract_strided_slice %21 {offsets = [31, 0], sizes = [64, 32], strides = [1, 1]} : vector<128x32xf32> to vector<64x32xf32>
    %23 = vector.extract_strided_slice %21 {offsets = [32, 0], sizes = [64, 32], strides = [1, 1]} : vector<128x32xf32> to vector<64x32xf32>
    %24 = vector.extract_strided_slice %21 {offsets = [33, 0], sizes = [64, 32], strides = [1, 1]} : vector<128x32xf32> to vector<64x32xf32>
    %25 = tpu.concatenate %22, %23, %24 in 1 : vector<64x32xf32>, vector<64x32xf32>, vector<64x32xf32> -> vector<64x96xf32>
    %cst_24 = arith.constant dense<0.000000e+00> : vector<64x32xf32>
    %26 = tpu.matmul %25, %11, %cst_24 {dimension_numbers = #tpu.dot_dimension_numbers<[1], [0], [0], [1], [0, 0, 1, 1], [], []>} : vector<64x96xf32>, vector<96x32xf32>, vector<64x32xf32> -> vector<64x32xf32>
    %27 = vector.broadcast %13 : vector<1x32xf32> to vector<64x32xf32>
    %28 = arith.addf %26, %27 : vector<64x32xf32>
    %c1 = arith.constant 1 : index
    %c0_25 = arith.constant 0 : index
    %c0_26 = arith.constant 0 : index
    %29 = vector.load %arg2[%c1, %c0_25, %c0_26] : memref<6x96x32xf32, #tpu.memory_space<vmem>>, vector<1x96x32xf32>
    %30 = vector.shape_cast %29 : vector<1x96x32xf32> to vector<96x32xf32>
    %c1_27 = arith.constant 1 : index
    %c0_28 = arith.constant 0 : index
    %c0_29 = arith.constant 0 : index
    %31 = vector.load %arg3[%c1_27, %c0_28, %c0_29] : memref<6x1x32xf32, #tpu.memory_space<vmem>>, vector<1x1x32xf32>
    %32 = vector.shape_cast %31 : vector<1x1x32xf32> to vector<1x32xf32>
    %33 = arith.negf %28 : vector<64x32xf32>
    %34 = math.exp %33 : vector<64x32xf32>
    %cst_30 = arith.constant 1.000000e+00 : f32
    %35 = vector.broadcast %cst_30 : f32 to vector<64x32xf32>
    %36 = arith.addf %35, %34 : vector<64x32xf32>
    %37 = arith.divf %35, %36 : vector<64x32xf32>
    %38 = arith.mulf %28, %37 : vector<64x32xf32>
    %c32_31 = arith.constant 32 : index
    %c0_32 = arith.constant 0 : index
    %39 = vector.load %arg9[%c32_31, %c0_32] : memref<128x32xf32, #tpu.memory_space<vmem>>, vector<64x32xf32>
    tpu.vector_store %arg9[%c32_31, %c0_32], %38 {strides = array<i32>} : memref<128x32xf32, #tpu.memory_space<vmem>>, vector<64x32xf32>,
    %c0_33 = arith.constant 0 : index
    %c0_34 = arith.constant 0 : index
    %40 = vector.load %arg9[%c0_33, %c0_34] : memref<128x32xf32, #tpu.memory_space<vmem>>, vector<128x32xf32>
    %41 = vector.extract_strided_slice %40 {offsets = [31, 0], sizes = [64, 32], strides = [1, 1]} : vector<128x32xf32> to vector<64x32xf32>
    %42 = vector.extract_strided_slice %40 {offsets = [32, 0], sizes = [64, 32], strides = [1, 1]} : vector<128x32xf32> to vector<64x32xf32>
    %43 = vector.extract_strided_slice %40 {offsets = [33, 0], sizes = [64, 32], strides = [1, 1]} : vector<128x32xf32> to vector<64x32xf32>
    %44 = tpu.concatenate %41, %42, %43 in 1 : vector<64x32xf32>, vector<64x32xf32>, vector<64x32xf32> -> vector<64x96xf32>
    %cst_35 = arith.constant dense<0.000000e+00> : vector<64x32xf32>
    %45 = tpu.matmul %44, %30, %cst_35 {dimension_numbers = #tpu.dot_dimension_numbers<[1], [0], [0], [1], [0, 0, 1, 1], [], []>} : vector<64x96xf32>, vector<96x32xf32>, vector<64x32xf32> -> vector<64x32xf32>
    %46 = vector.broadcast %32 : vector<1x32xf32> to vector<64x32xf32>
    %47 = arith.addf %45, %46 : vector<64x32xf32>
    %48 = arith.addf %47, %8 : vector<64x32xf32>
    %c2 = arith.constant 2 : index
    %c0_36 = arith.constant 0 : index
    %c0_37 = arith.constant 0 : index
    %49 = vector.load %arg2[%c2, %c0_36, %c0_37] : memref<6x96x32xf32, #tpu.memory_space<vmem>>, vector<1x96x32xf32>
    %50 = vector.shape_cast %49 : vector<1x96x32xf32> to vector<96x32xf32>
    %c2_38 = arith.constant 2 : index
    %c0_39 = arith.constant 0 : index
    %c0_40 = arith.constant 0 : index
    %51 = vector.load %arg3[%c2_38, %c0_39, %c0_40] : memref<6x1x32xf32, #tpu.memory_space<vmem>>, vector<1x1x32xf32>
    %52 = vector.shape_cast %51 : vector<1x1x32xf32> to vector<1x32xf32>
    %53 = arith.negf %48 : vector<64x32xf32>
    %54 = math.exp %53 : vector<64x32xf32>
    %cst_41 = arith.constant 1.000000e+00 : f32
    %55 = vector.broadcast %cst_41 : f32 to vector<64x32xf32>
    %56 = arith.addf %55, %54 : vector<64x32xf32>
    %57 = arith.divf %55, %56 : vector<64x32xf32>
    %58 = arith.mulf %48, %57 : vector<64x32xf32>
    %c32_42 = arith.constant 32 : index
    %c0_43 = arith.constant 0 : index
    %59 = vector.load %arg9[%c32_42, %c0_43] : memref<128x32xf32, #tpu.memory_space<vmem>>, vector<64x32xf32>
    tpu.vector_store %arg9[%c32_42, %c0_43], %58 {strides = array<i32>} : memref<128x32xf32, #tpu.memory_space<vmem>>, vector<64x32xf32>,
    %c0_44 = arith.constant 0 : index
    %c0_45 = arith.constant 0 : index
    %60 = vector.load %arg9[%c0_44, %c0_45] : memref<128x32xf32, #tpu.memory_space<vmem>>, vector<128x32xf32>
    %61 = vector.extract_strided_slice %60 {offsets = [29, 0], sizes = [64, 32], strides = [1, 1]} : vector<128x32xf32> to vector<64x32xf32>
    %62 = vector.extract_strided_slice %60 {offsets = [32, 0], sizes = [64, 32], strides = [1, 1]} : vector<128x32xf32> to vector<64x32xf32>
    %63 = vector.extract_strided_slice %60 {offsets = [35, 0], sizes = [64, 32], strides = [1, 1]} : vector<128x32xf32> to vector<64x32xf32>
    %64 = tpu.concatenate %61, %62, %63 in 1 : vector<64x32xf32>, vector<64x32xf32>, vector<64x32xf32> -> vector<64x96xf32>
    %cst_46 = arith.constant dense<0.000000e+00> : vector<64x32xf32>
    %65 = tpu.matmul %64, %50, %cst_46 {dimension_numbers = #tpu.dot_dimension_numbers<[1], [0], [0], [1], [0, 0, 1, 1], [], []>} : vector<64x96xf32>, vector<96x32xf32>, vector<64x32xf32> -> vector<64x32xf32>
    %66 = vector.broadcast %52 : vector<1x32xf32> to vector<64x32xf32>
    %67 = arith.addf %65, %66 : vector<64x32xf32>
    %c3 = arith.constant 3 : index
    %c0_47 = arith.constant 0 : index
    %c0_48 = arith.constant 0 : index
    %68 = vector.load %arg2[%c3, %c0_47, %c0_48] : memref<6x96x32xf32, #tpu.memory_space<vmem>>, vector<1x96x32xf32>
    %69 = vector.shape_cast %68 : vector<1x96x32xf32> to vector<96x32xf32>
    %c3_49 = arith.constant 3 : index
    %c0_50 = arith.constant 0 : index
    %c0_51 = arith.constant 0 : index
    %70 = vector.load %arg3[%c3_49, %c0_50, %c0_51] : memref<6x1x32xf32, #tpu.memory_space<vmem>>, vector<1x1x32xf32>
    %71 = vector.shape_cast %70 : vector<1x1x32xf32> to vector<1x32xf32>
    %72 = arith.negf %67 : vector<64x32xf32>
    %73 = math.exp %72 : vector<64x32xf32>
    %cst_52 = arith.constant 1.000000e+00 : f32
    %74 = vector.broadcast %cst_52 : f32 to vector<64x32xf32>
    %75 = arith.addf %74, %73 : vector<64x32xf32>
    %76 = arith.divf %74, %75 : vector<64x32xf32>
    %77 = arith.mulf %67, %76 : vector<64x32xf32>
    %c32_53 = arith.constant 32 : index
    %c0_54 = arith.constant 0 : index
    %78 = vector.load %arg9[%c32_53, %c0_54] : memref<128x32xf32, #tpu.memory_space<vmem>>, vector<64x32xf32>
    tpu.vector_store %arg9[%c32_53, %c0_54], %77 {strides = array<i32>} : memref<128x32xf32, #tpu.memory_space<vmem>>, vector<64x32xf32>,
    %c0_55 = arith.constant 0 : index
    %c0_56 = arith.constant 0 : index
    %79 = vector.load %arg9[%c0_55, %c0_56] : memref<128x32xf32, #tpu.memory_space<vmem>>, vector<128x32xf32>
    %80 = vector.extract_strided_slice %79 {offsets = [31, 0], sizes = [64, 32], strides = [1, 1]} : vector<128x32xf32> to vector<64x32xf32>
    %81 = vector.extract_strided_slice %79 {offsets = [32, 0], sizes = [64, 32], strides = [1, 1]} : vector<128x32xf32> to vector<64x32xf32>
    %82 = vector.extract_strided_slice %79 {offsets = [33, 0], sizes = [64, 32], strides = [1, 1]} : vector<128x32xf32> to vector<64x32xf32>
    %83 = tpu.concatenate %80, %81, %82 in 1 : vector<64x32xf32>, vector<64x32xf32>, vector<64x32xf32> -> vector<64x96xf32>
    %cst_57 = arith.constant dense<0.000000e+00> : vector<64x32xf32>
    %84 = tpu.matmul %83, %69, %cst_57 {dimension_numbers = #tpu.dot_dimension_numbers<[1], [0], [0], [1], [0, 0, 1, 1], [], []>} : vector<64x96xf32>, vector<96x32xf32>, vector<64x32xf32> -> vector<64x32xf32>
    %85 = vector.broadcast %71 : vector<1x32xf32> to vector<64x32xf32>
    %86 = arith.addf %84, %85 : vector<64x32xf32>
    %87 = arith.addf %86, %48 : vector<64x32xf32>
    %c4 = arith.constant 4 : index
    %c0_58 = arith.constant 0 : index
    %c0_59 = arith.constant 0 : index
    %88 = vector.load %arg2[%c4, %c0_58, %c0_59] : memref<6x96x32xf32, #tpu.memory_space<vmem>>, vector<1x96x32xf32>
    %89 = vector.shape_cast %88 : vector<1x96x32xf32> to vector<96x32xf32>
    %c4_60 = arith.constant 4 : index
    %c0_61 = arith.constant 0 : index
    %c0_62 = arith.constant 0 : index
    %90 = vector.load %arg3[%c4_60, %c0_61, %c0_62] : memref<6x1x32xf32, #tpu.memory_space<vmem>>, vector<1x1x32xf32>
    %91 = vector.shape_cast %90 : vector<1x1x32xf32> to vector<1x32xf32>
    %92 = arith.negf %87 : vector<64x32xf32>
    %93 = math.exp %92 : vector<64x32xf32>
    %cst_63 = arith.constant 1.000000e+00 : f32
    %94 = vector.broadcast %cst_63 : f32 to vector<64x32xf32>
    %95 = arith.addf %94, %93 : vector<64x32xf32>
    %96 = arith.divf %94, %95 : vector<64x32xf32>
    %97 = arith.mulf %87, %96 : vector<64x32xf32>
    %c32_64 = arith.constant 32 : index
    %c0_65 = arith.constant 0 : index
    %98 = vector.load %arg9[%c32_64, %c0_65] : memref<128x32xf32, #tpu.memory_space<vmem>>, vector<64x32xf32>
    tpu.vector_store %arg9[%c32_64, %c0_65], %97 {strides = array<i32>} : memref<128x32xf32, #tpu.memory_space<vmem>>, vector<64x32xf32>,
    %c0_66 = arith.constant 0 : index
    %c0_67 = arith.constant 0 : index
    %99 = vector.load %arg9[%c0_66, %c0_67] : memref<128x32xf32, #tpu.memory_space<vmem>>, vector<128x32xf32>
    %100 = vector.extract_strided_slice %99 {offsets = [27, 0], sizes = [64, 32], strides = [1, 1]} : vector<128x32xf32> to vector<64x32xf32>
    %101 = vector.extract_strided_slice %99 {offsets = [32, 0], sizes = [64, 32], strides = [1, 1]} : vector<128x32xf32> to vector<64x32xf32>
    %102 = vector.extract_strided_slice %99 {offsets = [37, 0], sizes = [64, 32], strides = [1, 1]} : vector<128x32xf32> to vector<64x32xf32>
    %103 = tpu.concatenate %100, %101, %102 in 1 : vector<64x32xf32>, vector<64x32xf32>, vector<64x32xf32> -> vector<64x96xf32>
    %cst_68 = arith.constant dense<0.000000e+00> : vector<64x32xf32>
    %104 = tpu.matmul %103, %89, %cst_68 {dimension_numbers = #tpu.dot_dimension_numbers<[1], [0], [0], [1], [0, 0, 1, 1], [], []>} : vector<64x96xf32>, vector<96x32xf32>, vector<64x32xf32> -> vector<64x32xf32>
    %105 = vector.broadcast %91 : vector<1x32xf32> to vector<64x32xf32>
    %106 = arith.addf %104, %105 : vector<64x32xf32>
    %c5 = arith.constant 5 : index
    %c0_69 = arith.constant 0 : index
    %c0_70 = arith.constant 0 : index
    %107 = vector.load %arg2[%c5, %c0_69, %c0_70] : memref<6x96x32xf32, #tpu.memory_space<vmem>>, vector<1x96x32xf32>
    %108 = vector.shape_cast %107 : vector<1x96x32xf32> to vector<96x32xf32>
    %c5_71 = arith.constant 5 : index
    %c0_72 = arith.constant 0 : index
    %c0_73 = arith.constant 0 : index
    %109 = vector.load %arg3[%c5_71, %c0_72, %c0_73] : memref<6x1x32xf32, #tpu.memory_space<vmem>>, vector<1x1x32xf32>
    %110 = vector.shape_cast %109 : vector<1x1x32xf32> to vector<1x32xf32>
    %111 = arith.negf %106 : vector<64x32xf32>
    %112 = math.exp %111 : vector<64x32xf32>
    %cst_74 = arith.constant 1.000000e+00 : f32
    %113 = vector.broadcast %cst_74 : f32 to vector<64x32xf32>
    %114 = arith.addf %113, %112 : vector<64x32xf32>
    %115 = arith.divf %113, %114 : vector<64x32xf32>
    %116 = arith.mulf %106, %115 : vector<64x32xf32>
    %c32_75 = arith.constant 32 : index
    %c0_76 = arith.constant 0 : index
    %117 = vector.load %arg9[%c32_75, %c0_76] : memref<128x32xf32, #tpu.memory_space<vmem>>, vector<64x32xf32>
    tpu.vector_store %arg9[%c32_75, %c0_76], %116 {strides = array<i32>} : memref<128x32xf32, #tpu.memory_space<vmem>>, vector<64x32xf32>,
    %c0_77 = arith.constant 0 : index
    %c0_78 = arith.constant 0 : index
    %118 = vector.load %arg9[%c0_77, %c0_78] : memref<128x32xf32, #tpu.memory_space<vmem>>, vector<128x32xf32>
    %119 = vector.extract_strided_slice %118 {offsets = [31, 0], sizes = [64, 32], strides = [1, 1]} : vector<128x32xf32> to vector<64x32xf32>
    %120 = vector.extract_strided_slice %118 {offsets = [32, 0], sizes = [64, 32], strides = [1, 1]} : vector<128x32xf32> to vector<64x32xf32>
    %121 = vector.extract_strided_slice %118 {offsets = [33, 0], sizes = [64, 32], strides = [1, 1]} : vector<128x32xf32> to vector<64x32xf32>
    %122 = tpu.concatenate %119, %120, %121 in 1 : vector<64x32xf32>, vector<64x32xf32>, vector<64x32xf32> -> vector<64x96xf32>
    %cst_79 = arith.constant dense<0.000000e+00> : vector<64x32xf32>
    %123 = tpu.matmul %122, %108, %cst_79 {dimension_numbers = #tpu.dot_dimension_numbers<[1], [0], [0], [1], [0, 0, 1, 1], [], []>} : vector<64x96xf32>, vector<96x32xf32>, vector<64x32xf32> -> vector<64x32xf32>
    %124 = vector.broadcast %110 : vector<1x32xf32> to vector<64x32xf32>
    %125 = arith.addf %123, %124 : vector<64x32xf32>
    %126 = arith.addf %125, %87 : vector<64x32xf32>
    %127 = arith.addf %9, %126 : vector<64x32xf32>
    %c0_80 = arith.constant 0 : index
    %c0_81 = arith.constant 0 : index
    %c0_82 = arith.constant 0 : index
    %128 = vector.load %arg4[%c0_80, %c0_81, %c0_82] : memref<6x224x32xf32, #tpu.memory_space<vmem>>, vector<1x224x32xf32>
    %129 = vector.shape_cast %128 : vector<1x224x32xf32> to vector<224x32xf32>
    %c0_83 = arith.constant 0 : index
    %c0_84 = arith.constant 0 : index
    %c0_85 = arith.constant 0 : index
    %130 = vector.load %arg5[%c0_83, %c0_84, %c0_85] : memref<6x1x32xf32, #tpu.memory_space<vmem>>, vector<1x1x32xf32>
    %131 = vector.shape_cast %130 : vector<1x1x32xf32> to vector<1x32xf32>
    %132 = arith.negf %8 : vector<64x32xf32>
    %133 = math.exp %132 : vector<64x32xf32>
    %cst_86 = arith.constant 1.000000e+00 : f32
    %134 = vector.broadcast %cst_86 : f32 to vector<64x32xf32>
    %135 = arith.addf %134, %133 : vector<64x32xf32>
    %136 = arith.divf %134, %135 : vector<64x32xf32>
    %137 = arith.mulf %8, %136 : vector<64x32xf32>
    %c32_87 = arith.constant 32 : index
    %c0_88 = arith.constant 0 : index
    %138 = vector.load %arg10[%c32_87, %c0_88] : memref<128x32xf32, #tpu.memory_space<vmem>>, vector<64x32xf32>
    tpu.vector_store %arg10[%c32_87, %c0_88], %137 {strides = array<i32>} : memref<128x32xf32, #tpu.memory_space<vmem>>, vector<64x32xf32>,
    %c0_89 = arith.constant 0 : index
    %c0_90 = arith.constant 0 : index
    %139 = vector.load %arg10[%c0_89, %c0_90] : memref<128x32xf32, #tpu.memory_space<vmem>>, vector<128x32xf32>
    %140 = vector.extract_strided_slice %139 {offsets = [29, 0], sizes = [64, 32], strides = [1, 1]} : vector<128x32xf32> to vector<64x32xf32>
    %141 = vector.extract_strided_slice %139 {offsets = [30, 0], sizes = [64, 32], strides = [1, 1]} : vector<128x32xf32> to vector<64x32xf32>
    %142 = vector.extract_strided_slice %139 {offsets = [31, 0], sizes = [64, 32], strides = [1, 1]} : vector<128x32xf32> to vector<64x32xf32>
    %143 = vector.extract_strided_slice %139 {offsets = [32, 0], sizes = [64, 32], strides = [1, 1]} : vector<128x32xf32> to vector<64x32xf32>
    %144 = vector.extract_strided_slice %139 {offsets = [33, 0], sizes = [64, 32], strides = [1, 1]} : vector<128x32xf32> to vector<64x32xf32>
    %145 = vector.extract_strided_slice %139 {offsets = [34, 0], sizes = [64, 32], strides = [1, 1]} : vector<128x32xf32> to vector<64x32xf32>
    %146 = vector.extract_strided_slice %139 {offsets = [35, 0], sizes = [64, 32], strides = [1, 1]} : vector<128x32xf32> to vector<64x32xf32>
    %147 = tpu.concatenate %140, %141, %142, %143, %144, %145, %146 in 1 : vector<64x32xf32>, vector<64x32xf32>, vector<64x32xf32>, vector<64x32xf32>, vector<64x32xf32>, vector<64x32xf32>, vector<64x32xf32> -> vector<64x224xf32>
    %cst_91 = arith.constant dense<0.000000e+00> : vector<64x32xf32>
    %148 = tpu.matmul %147, %129, %cst_91 {dimension_numbers = #tpu.dot_dimension_numbers<[1], [0], [0], [1], [0, 0, 1, 1], [], []>} : vector<64x224xf32>, vector<224x32xf32>, vector<64x32xf32> -> vector<64x32xf32>
    %149 = vector.broadcast %131 : vector<1x32xf32> to vector<64x32xf32>
    %150 = arith.addf %148, %149 : vector<64x32xf32>
    %c1_92 = arith.constant 1 : index
    %c0_93 = arith.constant 0 : index
    %c0_94 = arith.constant 0 : index
    %151 = vector.load %arg4[%c1_92, %c0_93, %c0_94] : memref<6x224x32xf32, #tpu.memory_space<vmem>>, vector<1x224x32xf32>
    %152 = vector.shape_cast %151 : vector<1x224x32xf32> to vector<224x32xf32>
    %c1_95 = arith.constant 1 : index
    %c0_96 = arith.constant 0 : index
    %c0_97 = arith.constant 0 : index
    %153 = vector.load %arg5[%c1_95, %c0_96, %c0_97] : memref<6x1x32xf32, #tpu.memory_space<vmem>>, vector<1x1x32xf32>
    %154 = vector.shape_cast %153 : vector<1x1x32xf32> to vector<1x32xf32>
    %155 = arith.negf %150 : vector<64x32xf32>
    %156 = math.exp %155 : vector<64x32xf32>
    %cst_98 = arith.constant 1.000000e+00 : f32
    %157 = vector.broadcast %cst_98 : f32 to vector<64x32xf32>
    %158 = arith.addf %157, %156 : vector<64x32xf32>
    %159 = arith.divf %157, %158 : vector<64x32xf32>
    %160 = arith.mulf %150, %159 : vector<64x32xf32>
    %c32_99 = arith.constant 32 : index
    %c0_100 = arith.constant 0 : index
    %161 = vector.load %arg10[%c32_99, %c0_100] : memref<128x32xf32, #tpu.memory_space<vmem>>, vector<64x32xf32>
    tpu.vector_store %arg10[%c32_99, %c0_100], %160 {strides = array<i32>} : memref<128x32xf32, #tpu.memory_space<vmem>>, vector<64x32xf32>,
    %c0_101 = arith.constant 0 : index
    %c0_102 = arith.constant 0 : index
    %162 = vector.load %arg10[%c0_101, %c0_102] : memref<128x32xf32, #tpu.memory_space<vmem>>, vector<128x32xf32>
    %163 = vector.extract_strided_slice %162 {offsets = [29, 0], sizes = [64, 32], strides = [1, 1]} : vector<128x32xf32> to vector<64x32xf32>
    %164 = vector.extract_strided_slice %162 {offsets = [30, 0], sizes = [64, 32], strides = [1, 1]} : vector<128x32xf32> to vector<64x32xf32>
    %165 = vector.extract_strided_slice %162 {offsets = [31, 0], sizes = [64, 32], strides = [1, 1]} : vector<128x32xf32> to vector<64x32xf32>
    %166 = vector.extract_strided_slice %162 {offsets = [32, 0], sizes = [64, 32], strides = [1, 1]} : vector<128x32xf32> to vector<64x32xf32>
    %167 = vector.extract_strided_slice %162 {offsets = [33, 0], sizes = [64, 32], strides = [1, 1]} : vector<128x32xf32> to vector<64x32xf32>
    %168 = vector.extract_strided_slice %162 {offsets = [34, 0], sizes = [64, 32], strides = [1, 1]} : vector<128x32xf32> to vector<64x32xf32>
    %169 = vector.extract_strided_slice %162 {offsets = [35, 0], sizes = [64, 32], strides = [1, 1]} : vector<128x32xf32> to vector<64x32xf32>
    %170 = tpu.concatenate %163, %164, %165, %166, %167, %168, %169 in 1 : vector<64x32xf32>, vector<64x32xf32>, vector<64x32xf32>, vector<64x32xf32>, vector<64x32xf32>, vector<64x32xf32>, vector<64x32xf32> -> vector<64x224xf32>
    %cst_103 = arith.constant dense<0.000000e+00> : vector<64x32xf32>
    %171 = tpu.matmul %170, %152, %cst_103 {dimension_numbers = #tpu.dot_dimension_numbers<[1], [0], [0], [1], [0, 0, 1, 1], [], []>} : vector<64x224xf32>, vector<224x32xf32>, vector<64x32xf32> -> vector<64x32xf32>
    %172 = vector.broadcast %154 : vector<1x32xf32> to vector<64x32xf32>
    %173 = arith.addf %171, %172 : vector<64x32xf32>
    %174 = arith.addf %173, %8 : vector<64x32xf32>
    %c2_104 = arith.constant 2 : index
    %c0_105 = arith.constant 0 : index
    %c0_106 = arith.constant 0 : index
    %175 = vector.load %arg4[%c2_104, %c0_105, %c0_106] : memref<6x224x32xf32, #tpu.memory_space<vmem>>, vector<1x224x32xf32>
    %176 = vector.shape_cast %175 : vector<1x224x32xf32> to vector<224x32xf32>
    %c2_107 = arith.constant 2 : index
    %c0_108 = arith.constant 0 : index
    %c0_109 = arith.constant 0 : index
    %177 = vector.load %arg5[%c2_107, %c0_108, %c0_109] : memref<6x1x32xf32, #tpu.memory_space<vmem>>, vector<1x1x32xf32>
    %178 = vector.shape_cast %177 : vector<1x1x32xf32> to vector<1x32xf32>
    %179 = arith.negf %174 : vector<64x32xf32>
    %180 = math.exp %179 : vector<64x32xf32>
    %cst_110 = arith.constant 1.000000e+00 : f32
    %181 = vector.broadcast %cst_110 : f32 to vector<64x32xf32>
    %182 = arith.addf %181, %180 : vector<64x32xf32>
    %183 = arith.divf %181, %182 : vector<64x32xf32>
    %184 = arith.mulf %174, %183 : vector<64x32xf32>
    %c32_111 = arith.constant 32 : index
    %c0_112 = arith.constant 0 : index
    %185 = vector.load %arg10[%c32_111, %c0_112] : memref<128x32xf32, #tpu.memory_space<vmem>>, vector<64x32xf32>
    tpu.vector_store %arg10[%c32_111, %c0_112], %184 {strides = array<i32>} : memref<128x32xf32, #tpu.memory_space<vmem>>, vector<64x32xf32>,
    %c0_113 = arith.constant 0 : index
    %c0_114 = arith.constant 0 : index
    %186 = vector.load %arg10[%c0_113, %c0_114] : memref<128x32xf32, #tpu.memory_space<vmem>>, vector<128x32xf32>
    %187 = vector.extract_strided_slice %186 {offsets = [23, 0], sizes = [64, 32], strides = [1, 1]} : vector<128x32xf32> to vector<64x32xf32>
    %188 = vector.extract_strided_slice %186 {offsets = [26, 0], sizes = [64, 32], strides = [1, 1]} : vector<128x32xf32> to vector<64x32xf32>
    %189 = vector.extract_strided_slice %186 {offsets = [29, 0], sizes = [64, 32], strides = [1, 1]} : vector<128x32xf32> to vector<64x32xf32>
    %190 = vector.extract_strided_slice %186 {offsets = [32, 0], sizes = [64, 32], strides = [1, 1]} : vector<128x32xf32> to vector<64x32xf32>
    %191 = vector.extract_strided_slice %186 {offsets = [35, 0], sizes = [64, 32], strides = [1, 1]} : vector<128x32xf32> to vector<64x32xf32>
    %192 = vector.extract_strided_slice %186 {offsets = [38, 0], sizes = [64, 32], strides = [1, 1]} : vector<128x32xf32> to vector<64x32xf32>
    %193 = vector.extract_strided_slice %186 {offsets = [41, 0], sizes = [64, 32], strides = [1, 1]} : vector<128x32xf32> to vector<64x32xf32>
    %194 = tpu.concatenate %187, %188, %189, %190, %191, %192, %193 in 1 : vector<64x32xf32>, vector<64x32xf32>, vector<64x32xf32>, vector<64x32xf32>, vector<64x32xf32>, vector<64x32xf32>, vector<64x32xf32> -> vector<64x224xf32>
    %cst_115 = arith.constant dense<0.000000e+00> : vector<64x32xf32>
    %195 = tpu.matmul %194, %176, %cst_115 {dimension_numbers = #tpu.dot_dimension_numbers<[1], [0], [0], [1], [0, 0, 1, 1], [], []>} : vector<64x224xf32>, vector<224x32xf32>, vector<64x32xf32> -> vector<64x32xf32>
    %196 = vector.broadcast %178 : vector<1x32xf32> to vector<64x32xf32>
    %197 = arith.addf %195, %196 : vector<64x32xf32>
    %c3_116 = arith.constant 3 : index
    %c0_117 = arith.constant 0 : index
    %c0_118 = arith.constant 0 : index
    %198 = vector.load %arg4[%c3_116, %c0_117, %c0_118] : memref<6x224x32xf32, #tpu.memory_space<vmem>>, vector<1x224x32xf32>
    %199 = vector.shape_cast %198 : vector<1x224x32xf32> to vector<224x32xf32>
    %c3_119 = arith.constant 3 : index
    %c0_120 = arith.constant 0 : index
    %c0_121 = arith.constant 0 : index
    %200 = vector.load %arg5[%c3_119, %c0_120, %c0_121] : memref<6x1x32xf32, #tpu.memory_space<vmem>>, vector<1x1x32xf32>
    %201 = vector.shape_cast %200 : vector<1x1x32xf32> to vector<1x32xf32>
    %202 = arith.negf %197 : vector<64x32xf32>
    %203 = math.exp %202 : vector<64x32xf32>
    %cst_122 = arith.constant 1.000000e+00 : f32
    %204 = vector.broadcast %cst_122 : f32 to vector<64x32xf32>
    %205 = arith.addf %204, %203 : vector<64x32xf32>
    %206 = arith.divf %204, %205 : vector<64x32xf32>
    %207 = arith.mulf %197, %206 : vector<64x32xf32>
    %c32_123 = arith.constant 32 : index
    %c0_124 = arith.constant 0 : index
    %208 = vector.load %arg10[%c32_123, %c0_124] : memref<128x32xf32, #tpu.memory_space<vmem>>, vector<64x32xf32>
    tpu.vector_store %arg10[%c32_123, %c0_124], %207 {strides = array<i32>} : memref<128x32xf32, #tpu.memory_space<vmem>>, vector<64x32xf32>,
    %c0_125 = arith.constant 0 : index
    %c0_126 = arith.constant 0 : index
    %209 = vector.load %arg10[%c0_125, %c0_126] : memref<128x32xf32, #tpu.memory_space<vmem>>, vector<128x32xf32>
    %210 = vector.extract_strided_slice %209 {offsets = [29, 0], sizes = [64, 32], strides = [1, 1]} : vector<128x32xf32> to vector<64x32xf32>
    %211 = vector.extract_strided_slice %209 {offsets = [30, 0], sizes = [64, 32], strides = [1, 1]} : vector<128x32xf32> to vector<64x32xf32>
    %212 = vector.extract_strided_slice %209 {offsets = [31, 0], sizes = [64, 32], strides = [1, 1]} : vector<128x32xf32> to vector<64x32xf32>
    %213 = vector.extract_strided_slice %209 {offsets = [32, 0], sizes = [64, 32], strides = [1, 1]} : vector<128x32xf32> to vector<64x32xf32>
    %214 = vector.extract_strided_slice %209 {offsets = [33, 0], sizes = [64, 32], strides = [1, 1]} : vector<128x32xf32> to vector<64x32xf32>
    %215 = vector.extract_strided_slice %209 {offsets = [34, 0], sizes = [64, 32], strides = [1, 1]} : vector<128x32xf32> to vector<64x32xf32>
    %216 = vector.extract_strided_slice %209 {offsets = [35, 0], sizes = [64, 32], strides = [1, 1]} : vector<128x32xf32> to vector<64x32xf32>
    %217 = tpu.concatenate %210, %211, %212, %213, %214, %215, %216 in 1 : vector<64x32xf32>, vector<64x32xf32>, vector<64x32xf32>, vector<64x32xf32>, vector<64x32xf32>, vector<64x32xf32>, vector<64x32xf32> -> vector<64x224xf32>
    %cst_127 = arith.constant dense<0.000000e+00> : vector<64x32xf32>
    %218 = tpu.matmul %217, %199, %cst_127 {dimension_numbers = #tpu.dot_dimension_numbers<[1], [0], [0], [1], [0, 0, 1, 1], [], []>} : vector<64x224xf32>, vector<224x32xf32>, vector<64x32xf32> -> vector<64x32xf32>
    %219 = vector.broadcast %201 : vector<1x32xf32> to vector<64x32xf32>
    %220 = arith.addf %218, %219 : vector<64x32xf32>
    %221 = arith.addf %220, %174 : vector<64x32xf32>
    %c4_128 = arith.constant 4 : index
    %c0_129 = arith.constant 0 : index
    %c0_130 = arith.constant 0 : index
    %222 = vector.load %arg4[%c4_128, %c0_129, %c0_130] : memref<6x224x32xf32, #tpu.memory_space<vmem>>, vector<1x224x32xf32>
    %223 = vector.shape_cast %222 : vector<1x224x32xf32> to vector<224x32xf32>
    %c4_131 = arith.constant 4 : index
    %c0_132 = arith.constant 0 : index
    %c0_133 = arith.constant 0 : index
    %224 = vector.load %arg5[%c4_131, %c0_132, %c0_133] : memref<6x1x32xf32, #tpu.memory_space<vmem>>, vector<1x1x32xf32>
    %225 = vector.shape_cast %224 : vector<1x1x32xf32> to vector<1x32xf32>
    %226 = arith.negf %221 : vector<64x32xf32>
    %227 = math.exp %226 : vector<64x32xf32>
    %cst_134 = arith.constant 1.000000e+00 : f32
    %228 = vector.broadcast %cst_134 : f32 to vector<64x32xf32>
    %229 = arith.addf %228, %227 : vector<64x32xf32>
    %230 = arith.divf %228, %229 : vector<64x32xf32>
    %231 = arith.mulf %221, %230 : vector<64x32xf32>
    %c32_135 = arith.constant 32 : index
    %c0_136 = arith.constant 0 : index
    %232 = vector.load %arg10[%c32_135, %c0_136] : memref<128x32xf32, #tpu.memory_space<vmem>>, vector<64x32xf32>
    tpu.vector_store %arg10[%c32_135, %c0_136], %231 {strides = array<i32>} : memref<128x32xf32, #tpu.memory_space<vmem>>, vector<64x32xf32>,
    %c0_137 = arith.constant 0 : index
    %c0_138 = arith.constant 0 : index
    %233 = vector.load %arg10[%c0_137, %c0_138] : memref<128x32xf32, #tpu.memory_space<vmem>>, vector<128x32xf32>
    %234 = vector.extract_strided_slice %233 {offsets = [17, 0], sizes = [64, 32], strides = [1, 1]} : vector<128x32xf32> to vector<64x32xf32>
    %235 = vector.extract_strided_slice %233 {offsets = [22, 0], sizes = [64, 32], strides = [1, 1]} : vector<128x32xf32> to vector<64x32xf32>
    %236 = vector.extract_strided_slice %233 {offsets = [27, 0], sizes = [64, 32], strides = [1, 1]} : vector<128x32xf32> to vector<64x32xf32>
    %237 = vector.extract_strided_slice %233 {offsets = [32, 0], sizes = [64, 32], strides = [1, 1]} : vector<128x32xf32> to vector<64x32xf32>
    %238 = vector.extract_strided_slice %233 {offsets = [37, 0], sizes = [64, 32], strides = [1, 1]} : vector<128x32xf32> to vector<64x32xf32>
    %239 = vector.extract_strided_slice %233 {offsets = [42, 0], sizes = [64, 32], strides = [1, 1]} : vector<128x32xf32> to vector<64x32xf32>
    %240 = vector.extract_strided_slice %233 {offsets = [47, 0], sizes = [64, 32], strides = [1, 1]} : vector<128x32xf32> to vector<64x32xf32>
    %241 = tpu.concatenate %234, %235, %236, %237, %238, %239, %240 in 1 : vector<64x32xf32>, vector<64x32xf32>, vector<64x32xf32>, vector<64x32xf32>, vector<64x32xf32>, vector<64x32xf32>, vector<64x32xf32> -> vector<64x224xf32>
    %cst_139 = arith.constant dense<0.000000e+00> : vector<64x32xf32>
    %242 = tpu.matmul %241, %223, %cst_139 {dimension_numbers = #tpu.dot_dimension_numbers<[1], [0], [0], [1], [0, 0, 1, 1], [], []>} : vector<64x224xf32>, vector<224x32xf32>, vector<64x32xf32> -> vector<64x32xf32>
    %243 = vector.broadcast %225 : vector<1x32xf32> to vector<64x32xf32>
    %244 = arith.addf %242, %243 : vector<64x32xf32>
    %c5_140 = arith.constant 5 : index
    %c0_141 = arith.constant 0 : index
    %c0_142 = arith.constant 0 : index
    %245 = vector.load %arg4[%c5_140, %c0_141, %c0_142] : memref<6x224x32xf32, #tpu.memory_space<vmem>>, vector<1x224x32xf32>
    %246 = vector.shape_cast %245 : vector<1x224x32xf32> to vector<224x32xf32>
    %c5_143 = arith.constant 5 : index
    %c0_144 = arith.constant 0 : index
    %c0_145 = arith.constant 0 : index
    %247 = vector.load %arg5[%c5_143, %c0_144, %c0_145] : memref<6x1x32xf32, #tpu.memory_space<vmem>>, vector<1x1x32xf32>
    %248 = vector.shape_cast %247 : vector<1x1x32xf32> to vector<1x32xf32>
    %249 = arith.negf %244 : vector<64x32xf32>
    %250 = math.exp %249 : vector<64x32xf32>
    %cst_146 = arith.constant 1.000000e+00 : f32
    %251 = vector.broadcast %cst_146 : f32 to vector<64x32xf32>
    %252 = arith.addf %251, %250 : vector<64x32xf32>
    %253 = arith.divf %251, %252 : vector<64x32xf32>
    %254 = arith.mulf %244, %253 : vector<64x32xf32>
    %c32_147 = arith.constant 32 : index
    %c0_148 = arith.constant 0 : index
    %255 = vector.load %arg10[%c32_147, %c0_148] : memref<128x32xf32, #tpu.memory_space<vmem>>, vector<64x32xf32>
    tpu.vector_store %arg10[%c32_147, %c0_148], %254 {strides = array<i32>} : memref<128x32xf32, #tpu.memory_space<vmem>>, vector<64x32xf32>,
    %c0_149 = arith.constant 0 : index
    %c0_150 = arith.constant 0 : index
    %256 = vector.load %arg10[%c0_149, %c0_150] : memref<128x32xf32, #tpu.memory_space<vmem>>, vector<128x32xf32>
    %257 = vector.extract_strided_slice %256 {offsets = [29, 0], sizes = [64, 32], strides = [1, 1]} : vector<128x32xf32> to vector<64x32xf32>
    %258 = vector.extract_strided_slice %256 {offsets = [30, 0], sizes = [64, 32], strides = [1, 1]} : vector<128x32xf32> to vector<64x32xf32>
    %259 = vector.extract_strided_slice %256 {offsets = [31, 0], sizes = [64, 32], strides = [1, 1]} : vector<128x32xf32> to vector<64x32xf32>
    %260 = vector.extract_strided_slice %256 {offsets = [32, 0], sizes = [64, 32], strides = [1, 1]} : vector<128x32xf32> to vector<64x32xf32>
    %261 = vector.extract_strided_slice %256 {offsets = [33, 0], sizes = [64, 32], strides = [1, 1]} : vector<128x32xf32> to vector<64x32xf32>
    %262 = vector.extract_strided_slice %256 {offsets = [34, 0], sizes = [64, 32], strides = [1, 1]} : vector<128x32xf32> to vector<64x32xf32>
    %263 = vector.extract_strided_slice %256 {offsets = [35, 0], sizes = [64, 32], strides = [1, 1]} : vector<128x32xf32> to vector<64x32xf32>
    %264 = tpu.concatenate %257, %258, %259, %260, %261, %262, %263 in 1 : vector<64x32xf32>, vector<64x32xf32>, vector<64x32xf32>, vector<64x32xf32>, vector<64x32xf32>, vector<64x32xf32>, vector<64x32xf32> -> vector<64x224xf32>
    %cst_151 = arith.constant dense<0.000000e+00> : vector<64x32xf32>
    %265 = tpu.matmul %264, %246, %cst_151 {dimension_numbers = #tpu.dot_dimension_numbers<[1], [0], [0], [1], [0, 0, 1, 1], [], []>} : vector<64x224xf32>, vector<224x32xf32>, vector<64x32xf32> -> vector<64x32xf32>
    %266 = vector.broadcast %248 : vector<1x32xf32> to vector<64x32xf32>
    %267 = arith.addf %265, %266 : vector<64x32xf32>
    %268 = arith.addf %267, %221 : vector<64x32xf32>
    %269 = arith.addf %127, %268 : vector<64x32xf32>
    %c0_152 = arith.constant 0 : index
    %c0_153 = arith.constant 0 : index
    %c0_154 = arith.constant 0 : index
    %270 = vector.load %arg6[%c0_152, %c0_153, %c0_154] : memref<6x352x32xf32, #tpu.memory_space<vmem>>, vector<1x352x32xf32>
    %271 = vector.shape_cast %270 : vector<1x352x32xf32> to vector<352x32xf32>
    %c0_155 = arith.constant 0 : index
    %c0_156 = arith.constant 0 : index
    %c0_157 = arith.constant 0 : index
    %272 = vector.load %arg7[%c0_155, %c0_156, %c0_157] : memref<6x1x32xf32, #tpu.memory_space<vmem>>, vector<1x1x32xf32>
    %273 = vector.shape_cast %272 : vector<1x1x32xf32> to vector<1x32xf32>
    %274 = arith.negf %8 : vector<64x32xf32>
    %275 = math.exp %274 : vector<64x32xf32>
    %cst_158 = arith.constant 1.000000e+00 : f32
    %276 = vector.broadcast %cst_158 : f32 to vector<64x32xf32>
    %277 = arith.addf %276, %275 : vector<64x32xf32>
    %278 = arith.divf %276, %277 : vector<64x32xf32>
    %279 = arith.mulf %8, %278 : vector<64x32xf32>
    %c32_159 = arith.constant 32 : index
    %c0_160 = arith.constant 0 : index
    %280 = vector.load %arg11[%c32_159, %c0_160] : memref<128x32xf32, #tpu.memory_space<vmem>>, vector<64x32xf32>
    tpu.vector_store %arg11[%c32_159, %c0_160], %279 {strides = array<i32>} : memref<128x32xf32, #tpu.memory_space<vmem>>, vector<64x32xf32>,
    %c0_161 = arith.constant 0 : index
    %c0_162 = arith.constant 0 : index
    %281 = vector.load %arg11[%c0_161, %c0_162] : memref<128x32xf32, #tpu.memory_space<vmem>>, vector<128x32xf32>
    %282 = vector.extract_strided_slice %281 {offsets = [27, 0], sizes = [64, 32], strides = [1, 1]} : vector<128x32xf32> to vector<64x32xf32>
    %283 = vector.extract_strided_slice %281 {offsets = [28, 0], sizes = [64, 32], strides = [1, 1]} : vector<128x32xf32> to vector<64x32xf32>
    %284 = vector.extract_strided_slice %281 {offsets = [29, 0], sizes = [64, 32], strides = [1, 1]} : vector<128x32xf32> to vector<64x32xf32>
    %285 = vector.extract_strided_slice %281 {offsets = [30, 0], sizes = [64, 32], strides = [1, 1]} : vector<128x32xf32> to vector<64x32xf32>
    %286 = vector.extract_strided_slice %281 {offsets = [31, 0], sizes = [64, 32], strides = [1, 1]} : vector<128x32xf32> to vector<64x32xf32>
    %287 = vector.extract_strided_slice %281 {offsets = [32, 0], sizes = [64, 32], strides = [1, 1]} : vector<128x32xf32> to vector<64x32xf32>
    %288 = vector.extract_strided_slice %281 {offsets = [33, 0], sizes = [64, 32], strides = [1, 1]} : vector<128x32xf32> to vector<64x32xf32>
    %289 = vector.extract_strided_slice %281 {offsets = [34, 0], sizes = [64, 32], strides = [1, 1]} : vector<128x32xf32> to vector<64x32xf32>
    %290 = vector.extract_strided_slice %281 {offsets = [35, 0], sizes = [64, 32], strides = [1, 1]} : vector<128x32xf32> to vector<64x32xf32>
    %291 = vector.extract_strided_slice %281 {offsets = [36, 0], sizes = [64, 32], strides = [1, 1]} : vector<128x32xf32> to vector<64x32xf32>
    %292 = vector.extract_strided_slice %281 {offsets = [37, 0], sizes = [64, 32], strides = [1, 1]} : vector<128x32xf32> to vector<64x32xf32>
    %293 = tpu.concatenate %282, %283, %284, %285, %286, %287, %288, %289, %290, %291, %292 in 1 : vector<64x32xf32>, vector<64x32xf32>, vector<64x32xf32>, vector<64x32xf32>, vector<64x32xf32>, vector<64x32xf32>, vector<64x32xf32>, vector<64x32xf32>, vector<64x32xf32>, vector<64x32xf32>, vector<64x32xf32> -> vector<64x352xf32>
    %cst_163 = arith.constant dense<0.000000e+00> : vector<64x32xf32>
    %294 = tpu.matmul %293, %271, %cst_163 {dimension_numbers = #tpu.dot_dimension_numbers<[1], [0], [0], [1], [0, 0, 1, 1], [], []>} : vector<64x352xf32>, vector<352x32xf32>, vector<64x32xf32> -> vector<64x32xf32>
    %295 = vector.broadcast %273 : vector<1x32xf32> to vector<64x32xf32>
    %296 = arith.addf %294, %295 : vector<64x32xf32>
    %c1_164 = arith.constant 1 : index
    %c0_165 = arith.constant 0 : index
    %c0_166 = arith.constant 0 : index
    %297 = vector.load %arg6[%c1_164, %c0_165, %c0_166] : memref<6x352x32xf32, #tpu.memory_space<vmem>>, vector<1x352x32xf32>
    %298 = vector.shape_cast %297 : vector<1x352x32xf32> to vector<352x32xf32>
    %c1_167 = arith.constant 1 : index
    %c0_168 = arith.constant 0 : index
    %c0_169 = arith.constant 0 : index
    %299 = vector.load %arg7[%c1_167, %c0_168, %c0_169] : memref<6x1x32xf32, #tpu.memory_space<vmem>>, vector<1x1x32xf32>
    %300 = vector.shape_cast %299 : vector<1x1x32xf32> to vector<1x32xf32>
    %301 = arith.negf %296 : vector<64x32xf32>
    %302 = math.exp %301 : vector<64x32xf32>
    %cst_170 = arith.constant 1.000000e+00 : f32
    %303 = vector.broadcast %cst_170 : f32 to vector<64x32xf32>
    %304 = arith.addf %303, %302 : vector<64x32xf32>
    %305 = arith.divf %303, %304 : vector<64x32xf32>
    %306 = arith.mulf %296, %305 : vector<64x32xf32>
    %c32_171 = arith.constant 32 : index
    %c0_172 = arith.constant 0 : index
    %307 = vector.load %arg11[%c32_171, %c0_172] : memref<128x32xf32, #tpu.memory_space<vmem>>, vector<64x32xf32>
    tpu.vector_store %arg11[%c32_171, %c0_172], %306 {strides = array<i32>} : memref<128x32xf32, #tpu.memory_space<vmem>>, vector<64x32xf32>,
    %c0_173 = arith.constant 0 : index
    %c0_174 = arith.constant 0 : index
    %308 = vector.load %arg11[%c0_173, %c0_174] : memref<128x32xf32, #tpu.memory_space<vmem>>, vector<128x32xf32>
    %309 = vector.extract_strided_slice %308 {offsets = [27, 0], sizes = [64, 32], strides = [1, 1]} : vector<128x32xf32> to vector<64x32xf32>
    %310 = vector.extract_strided_slice %308 {offsets = [28, 0], sizes = [64, 32], strides = [1, 1]} : vector<128x32xf32> to vector<64x32xf32>
    %311 = vector.extract_strided_slice %308 {offsets = [29, 0], sizes = [64, 32], strides = [1, 1]} : vector<128x32xf32> to vector<64x32xf32>
    %312 = vector.extract_strided_slice %308 {offsets = [30, 0], sizes = [64, 32], strides = [1, 1]} : vector<128x32xf32> to vector<64x32xf32>
    %313 = vector.extract_strided_slice %308 {offsets = [31, 0], sizes = [64, 32], strides = [1, 1]} : vector<128x32xf32> to vector<64x32xf32>
    %314 = vector.extract_strided_slice %308 {offsets = [32, 0], sizes = [64, 32], strides = [1, 1]} : vector<128x32xf32> to vector<64x32xf32>
    %315 = vector.extract_strided_slice %308 {offsets = [33, 0], sizes = [64, 32], strides = [1, 1]} : vector<128x32xf32> to vector<64x32xf32>
    %316 = vector.extract_strided_slice %308 {offsets = [34, 0], sizes = [64, 32], strides = [1, 1]} : vector<128x32xf32> to vector<64x32xf32>
    %317 = vector.extract_strided_slice %308 {offsets = [35, 0], sizes = [64, 32], strides = [1, 1]} : vector<128x32xf32> to vector<64x32xf32>
    %318 = vector.extract_strided_slice %308 {offsets = [36, 0], sizes = [64, 32], strides = [1, 1]} : vector<128x32xf32> to vector<64x32xf32>
    %319 = vector.extract_strided_slice %308 {offsets = [37, 0], sizes = [64, 32], strides = [1, 1]} : vector<128x32xf32> to vector<64x32xf32>
    %320 = tpu.concatenate %309, %310, %311, %312, %313, %314, %315, %316, %317, %318, %319 in 1 : vector<64x32xf32>, vector<64x32xf32>, vector<64x32xf32>, vector<64x32xf32>, vector<64x32xf32>, vector<64x32xf32>, vector<64x32xf32>, vector<64x32xf32>, vector<64x32xf32>, vector<64x32xf32>, vector<64x32xf32> -> vector<64x352xf32>
    %cst_175 = arith.constant dense<0.000000e+00> : vector<64x32xf32>
    %321 = tpu.matmul %320, %298, %cst_175 {dimension_numbers = #tpu.dot_dimension_numbers<[1], [0], [0], [1], [0, 0, 1, 1], [], []>} : vector<64x352xf32>, vector<352x32xf32>, vector<64x32xf32> -> vector<64x32xf32>
    %322 = vector.broadcast %300 : vector<1x32xf32> to vector<64x32xf32>
    %323 = arith.addf %321, %322 : vector<64x32xf32>
    %324 = arith.addf %323, %8 : vector<64x32xf32>
    %c2_176 = arith.constant 2 : index
    %c0_177 = arith.constant 0 : index
    %c0_178 = arith.constant 0 : index
    %325 = vector.load %arg6[%c2_176, %c0_177, %c0_178] : memref<6x352x32xf32, #tpu.memory_space<vmem>>, vector<1x352x32xf32>
    %326 = vector.shape_cast %325 : vector<1x352x32xf32> to vector<352x32xf32>
    %c2_179 = arith.constant 2 : index
    %c0_180 = arith.constant 0 : index
    %c0_181 = arith.constant 0 : index
    %327 = vector.load %arg7[%c2_179, %c0_180, %c0_181] : memref<6x1x32xf32, #tpu.memory_space<vmem>>, vector<1x1x32xf32>
    %328 = vector.shape_cast %327 : vector<1x1x32xf32> to vector<1x32xf32>
    %329 = arith.negf %324 : vector<64x32xf32>
    %330 = math.exp %329 : vector<64x32xf32>
    %cst_182 = arith.constant 1.000000e+00 : f32
    %331 = vector.broadcast %cst_182 : f32 to vector<64x32xf32>
    %332 = arith.addf %331, %330 : vector<64x32xf32>
    %333 = arith.divf %331, %332 : vector<64x32xf32>
    %334 = arith.mulf %324, %333 : vector<64x32xf32>
    %c32_183 = arith.constant 32 : index
    %c0_184 = arith.constant 0 : index
    %335 = vector.load %arg11[%c32_183, %c0_184] : memref<128x32xf32, #tpu.memory_space<vmem>>, vector<64x32xf32>
    tpu.vector_store %arg11[%c32_183, %c0_184], %334 {strides = array<i32>} : memref<128x32xf32, #tpu.memory_space<vmem>>, vector<64x32xf32>,
    %c0_185 = arith.constant 0 : index
    %c0_186 = arith.constant 0 : index
    %336 = vector.load %arg11[%c0_185, %c0_186] : memref<128x32xf32, #tpu.memory_space<vmem>>, vector<128x32xf32>
    %337 = vector.extract_strided_slice %336 {offsets = [17, 0], sizes = [64, 32], strides = [1, 1]} : vector<128x32xf32> to vector<64x32xf32>
    %338 = vector.extract_strided_slice %336 {offsets = [20, 0], sizes = [64, 32], strides = [1, 1]} : vector<128x32xf32> to vector<64x32xf32>
    %339 = vector.extract_strided_slice %336 {offsets = [23, 0], sizes = [64, 32], strides = [1, 1]} : vector<128x32xf32> to vector<64x32xf32>
    %340 = vector.extract_strided_slice %336 {offsets = [26, 0], sizes = [64, 32], strides = [1, 1]} : vector<128x32xf32> to vector<64x32xf32>
    %341 = vector.extract_strided_slice %336 {offsets = [29, 0], sizes = [64, 32], strides = [1, 1]} : vector<128x32xf32> to vector<64x32xf32>
    %342 = vector.extract_strided_slice %336 {offsets = [32, 0], sizes = [64, 32], strides = [1, 1]} : vector<128x32xf32> to vector<64x32xf32>
    %343 = vector.extract_strided_slice %336 {offsets = [35, 0], sizes = [64, 32], strides = [1, 1]} : vector<128x32xf32> to vector<64x32xf32>
    %344 = vector.extract_strided_slice %336 {offsets = [38, 0], sizes = [64, 32], strides = [1, 1]} : vector<128x32xf32> to vector<64x32xf32>
    %345 = vector.extract_strided_slice %336 {offsets = [41, 0], sizes = [64, 32], strides = [1, 1]} : vector<128x32xf32> to vector<64x32xf32>
    %346 = vector.extract_strided_slice %336 {offsets = [44, 0], sizes = [64, 32], strides = [1, 1]} : vector<128x32xf32> to vector<64x32xf32>
    %347 = vector.extract_strided_slice %336 {offsets = [47, 0], sizes = [64, 32], strides = [1, 1]} : vector<128x32xf32> to vector<64x32xf32>
    %348 = tpu.concatenate %337, %338, %339, %340, %341, %342, %343, %344, %345, %346, %347 in 1 : vector<64x32xf32>, vector<64x32xf32>, vector<64x32xf32>, vector<64x32xf32>, vector<64x32xf32>, vector<64x32xf32>, vector<64x32xf32>, vector<64x32xf32>, vector<64x32xf32>, vector<64x32xf32>, vector<64x32xf32> -> vector<64x352xf32>
    %cst_187 = arith.constant dense<0.000000e+00> : vector<64x32xf32>
    %349 = tpu.matmul %348, %326, %cst_187 {dimension_numbers = #tpu.dot_dimension_numbers<[1], [0], [0], [1], [0, 0, 1, 1], [], []>} : vector<64x352xf32>, vector<352x32xf32>, vector<64x32xf32> -> vector<64x32xf32>
    %350 = vector.broadcast %328 : vector<1x32xf32> to vector<64x32xf32>
    %351 = arith.addf %349, %350 : vector<64x32xf32>
    %c3_188 = arith.constant 3 : index
    %c0_189 = arith.constant 0 : index
    %c0_190 = arith.constant 0 : index
    %352 = vector.load %arg6[%c3_188, %c0_189, %c0_190] : memref<6x352x32xf32, #tpu.memory_space<vmem>>, vector<1x352x32xf32>
    %353 = vector.shape_cast %352 : vector<1x352x32xf32> to vector<352x32xf32>
    %c3_191 = arith.constant 3 : index
    %c0_192 = arith.constant 0 : index
    %c0_193 = arith.constant 0 : index
    %354 = vector.load %arg7[%c3_191, %c0_192, %c0_193] : memref<6x1x32xf32, #tpu.memory_space<vmem>>, vector<1x1x32xf32>
    %355 = vector.shape_cast %354 : vector<1x1x32xf32> to vector<1x32xf32>
    %356 = arith.negf %351 : vector<64x32xf32>
    %357 = math.exp %356 : vector<64x32xf32>
    %cst_194 = arith.constant 1.000000e+00 : f32
    %358 = vector.broadcast %cst_194 : f32 to vector<64x32xf32>
    %359 = arith.addf %358, %357 : vector<64x32xf32>
    %360 = arith.divf %358, %359 : vector<64x32xf32>
    %361 = arith.mulf %351, %360 : vector<64x32xf32>
    %c32_195 = arith.constant 32 : index
    %c0_196 = arith.constant 0 : index
    %362 = vector.load %arg11[%c32_195, %c0_196] : memref<128x32xf32, #tpu.memory_space<vmem>>, vector<64x32xf32>
    tpu.vector_store %arg11[%c32_195, %c0_196], %361 {strides = array<i32>} : memref<128x32xf32, #tpu.memory_space<vmem>>, vector<64x32xf32>,
    %c0_197 = arith.constant 0 : index
    %c0_198 = arith.constant 0 : index
    %363 = vector.load %arg11[%c0_197, %c0_198] : memref<128x32xf32, #tpu.memory_space<vmem>>, vector<128x32xf32>
    %364 = vector.extract_strided_slice %363 {offsets = [27, 0], sizes = [64, 32], strides = [1, 1]} : vector<128x32xf32> to vector<64x32xf32>
    %365 = vector.extract_strided_slice %363 {offsets = [28, 0], sizes = [64, 32], strides = [1, 1]} : vector<128x32xf32> to vector<64x32xf32>
    %366 = vector.extract_strided_slice %363 {offsets = [29, 0], sizes = [64, 32], strides = [1, 1]} : vector<128x32xf32> to vector<64x32xf32>
    %367 = vector.extract_strided_slice %363 {offsets = [30, 0], sizes = [64, 32], strides = [1, 1]} : vector<128x32xf32> to vector<64x32xf32>
    %368 = vector.extract_strided_slice %363 {offsets = [31, 0], sizes = [64, 32], strides = [1, 1]} : vector<128x32xf32> to vector<64x32xf32>
    %369 = vector.extract_strided_slice %363 {offsets = [32, 0], sizes = [64, 32], strides = [1, 1]} : vector<128x32xf32> to vector<64x32xf32>
    %370 = vector.extract_strided_slice %363 {offsets = [33, 0], sizes = [64, 32], strides = [1, 1]} : vector<128x32xf32> to vector<64x32xf32>
    %371 = vector.extract_strided_slice %363 {offsets = [34, 0], sizes = [64, 32], strides = [1, 1]} : vector<128x32xf32> to vector<64x32xf32>
    %372 = vector.extract_strided_slice %363 {offsets = [35, 0], sizes = [64, 32], strides = [1, 1]} : vector<128x32xf32> to vector<64x32xf32>
    %373 = vector.extract_strided_slice %363 {offsets = [36, 0], sizes = [64, 32], strides = [1, 1]} : vector<128x32xf32> to vector<64x32xf32>
    %374 = vector.extract_strided_slice %363 {offsets = [37, 0], sizes = [64, 32], strides = [1, 1]} : vector<128x32xf32> to vector<64x32xf32>
    %375 = tpu.concatenate %364, %365, %366, %367, %368, %369, %370, %371, %372, %373, %374 in 1 : vector<64x32xf32>, vector<64x32xf32>, vector<64x32xf32>, vector<64x32xf32>, vector<64x32xf32>, vector<64x32xf32>, vector<64x32xf32>, vector<64x32xf32>, vector<64x32xf32>, vector<64x32xf32>, vector<64x32xf32> -> vector<64x352xf32>
    %cst_199 = arith.constant dense<0.000000e+00> : vector<64x32xf32>
    %376 = tpu.matmul %375, %353, %cst_199 {dimension_numbers = #tpu.dot_dimension_numbers<[1], [0], [0], [1], [0, 0, 1, 1], [], []>} : vector<64x352xf32>, vector<352x32xf32>, vector<64x32xf32> -> vector<64x32xf32>
    %377 = vector.broadcast %355 : vector<1x32xf32> to vector<64x32xf32>
    %378 = arith.addf %376, %377 : vector<64x32xf32>
    %379 = arith.addf %378, %324 : vector<64x32xf32>
    %c4_200 = arith.constant 4 : index
    %c0_201 = arith.constant 0 : index
    %c0_202 = arith.constant 0 : index
    %380 = vector.load %arg6[%c4_200, %c0_201, %c0_202] : memref<6x352x32xf32, #tpu.memory_space<vmem>>, vector<1x352x32xf32>
    %381 = vector.shape_cast %380 : vector<1x352x32xf32> to vector<352x32xf32>
    %c4_203 = arith.constant 4 : index
    %c0_204 = arith.constant 0 : index
    %c0_205 = arith.constant 0 : index
    %382 = vector.load %arg7[%c4_203, %c0_204, %c0_205] : memref<6x1x32xf32, #tpu.memory_space<vmem>>, vector<1x1x32xf32>
    %383 = vector.shape_cast %382 : vector<1x1x32xf32> to vector<1x32xf32>
    %384 = arith.negf %379 : vector<64x32xf32>
    %385 = math.exp %384 : vector<64x32xf32>
    %cst_206 = arith.constant 1.000000e+00 : f32
    %386 = vector.broadcast %cst_206 : f32 to vector<64x32xf32>
    %387 = arith.addf %386, %385 : vector<64x32xf32>
    %388 = arith.divf %386, %387 : vector<64x32xf32>
    %389 = arith.mulf %379, %388 : vector<64x32xf32>
    %c32_207 = arith.constant 32 : index
    %c0_208 = arith.constant 0 : index
    %390 = vector.load %arg11[%c32_207, %c0_208] : memref<128x32xf32, #tpu.memory_space<vmem>>, vector<64x32xf32>
    tpu.vector_store %arg11[%c32_207, %c0_208], %389 {strides = array<i32>} : memref<128x32xf32, #tpu.memory_space<vmem>>, vector<64x32xf32>,
    %c0_209 = arith.constant 0 : index
    %c0_210 = arith.constant 0 : index
    %391 = vector.load %arg11[%c0_209, %c0_210] : memref<128x32xf32, #tpu.memory_space<vmem>>, vector<128x32xf32>
    %392 = vector.extract_strided_slice %391 {offsets = [7, 0], sizes = [64, 32], strides = [1, 1]} : vector<128x32xf32> to vector<64x32xf32>
    %393 = vector.extract_strided_slice %391 {offsets = [12, 0], sizes = [64, 32], strides = [1, 1]} : vector<128x32xf32> to vector<64x32xf32>
    %394 = vector.extract_strided_slice %391 {offsets = [17, 0], sizes = [64, 32], strides = [1, 1]} : vector<128x32xf32> to vector<64x32xf32>
    %395 = vector.extract_strided_slice %391 {offsets = [22, 0], sizes = [64, 32], strides = [1, 1]} : vector<128x32xf32> to vector<64x32xf32>
    %396 = vector.extract_strided_slice %391 {offsets = [27, 0], sizes = [64, 32], strides = [1, 1]} : vector<128x32xf32> to vector<64x32xf32>
    %397 = vector.extract_strided_slice %391 {offsets = [32, 0], sizes = [64, 32], strides = [1, 1]} : vector<128x32xf32> to vector<64x32xf32>
    %398 = vector.extract_strided_slice %391 {offsets = [37, 0], sizes = [64, 32], strides = [1, 1]} : vector<128x32xf32> to vector<64x32xf32>
    %399 = vector.extract_strided_slice %391 {offsets = [42, 0], sizes = [64, 32], strides = [1, 1]} : vector<128x32xf32> to vector<64x32xf32>
    %400 = vector.extract_strided_slice %391 {offsets = [47, 0], sizes = [64, 32], strides = [1, 1]} : vector<128x32xf32> to vector<64x32xf32>
    %401 = vector.extract_strided_slice %391 {offsets = [52, 0], sizes = [64, 32], strides = [1, 1]} : vector<128x32xf32> to vector<64x32xf32>
    %402 = vector.extract_strided_slice %391 {offsets = [57, 0], sizes = [64, 32], strides = [1, 1]} : vector<128x32xf32> to vector<64x32xf32>
    %403 = tpu.concatenate %392, %393, %394, %395, %396, %397, %398, %399, %400, %401, %402 in 1 : vector<64x32xf32>, vector<64x32xf32>, vector<64x32xf32>, vector<64x32xf32>, vector<64x32xf32>, vector<64x32xf32>, vector<64x32xf32>, vector<64x32xf32>, vector<64x32xf32>, vector<64x32xf32>, vector<64x32xf32> -> vector<64x352xf32>
    %cst_211 = arith.constant dense<0.000000e+00> : vector<64x32xf32>
    %404 = tpu.matmul %403, %381, %cst_211 {dimension_numbers = #tpu.dot_dimension_numbers<[1], [0], [0], [1], [0, 0, 1, 1], [], []>} : vector<64x352xf32>, vector<352x32xf32>, vector<64x32xf32> -> vector<64x32xf32>
    %405 = vector.broadcast %383 : vector<1x32xf32> to vector<64x32xf32>
    %406 = arith.addf %404, %405 : vector<64x32xf32>
    %c5_212 = arith.constant 5 : index
    %c0_213 = arith.constant 0 : index
    %c0_214 = arith.constant 0 : index
    %407 = vector.load %arg6[%c5_212, %c0_213, %c0_214] : memref<6x352x32xf32, #tpu.memory_space<vmem>>, vector<1x352x32xf32>
    %408 = vector.shape_cast %407 : vector<1x352x32xf32> to vector<352x32xf32>
    %c5_215 = arith.constant 5 : index
    %c0_216 = arith.constant 0 : index
    %c0_217 = arith.constant 0 : index
    %409 = vector.load %arg7[%c5_215, %c0_216, %c0_217] : memref<6x1x32xf32, #tpu.memory_space<vmem>>, vector<1x1x32xf32>
    %410 = vector.shape_cast %409 : vector<1x1x32xf32> to vector<1x32xf32>
    %411 = arith.negf %406 : vector<64x32xf32>
    %412 = math.exp %411 : vector<64x32xf32>
    %cst_218 = arith.constant 1.000000e+00 : f32
    %413 = vector.broadcast %cst_218 : f32 to vector<64x32xf32>
    %414 = arith.addf %413, %412 : vector<64x32xf32>
    %415 = arith.divf %413, %414 : vector<64x32xf32>
    %416 = arith.mulf %406, %415 : vector<64x32xf32>
    %c32_219 = arith.constant 32 : index
    %c0_220 = arith.constant 0 : index
    %417 = vector.load %arg11[%c32_219, %c0_220] : memref<128x32xf32, #tpu.memory_space<vmem>>, vector<64x32xf32>
    tpu.vector_store %arg11[%c32_219, %c0_220], %416 {strides = array<i32>} : memref<128x32xf32, #tpu.memory_space<vmem>>, vector<64x32xf32>,
    %c0_221 = arith.constant 0 : index
    %c0_222 = arith.constant 0 : index
    %418 = vector.load %arg11[%c0_221, %c0_222] : memref<128x32xf32, #tpu.memory_space<vmem>>, vector<128x32xf32>
    %419 = vector.extract_strided_slice %418 {offsets = [27, 0], sizes = [64, 32], strides = [1, 1]} : vector<128x32xf32> to vector<64x32xf32>
    %420 = vector.extract_strided_slice %418 {offsets = [28, 0], sizes = [64, 32], strides = [1, 1]} : vector<128x32xf32> to vector<64x32xf32>
    %421 = vector.extract_strided_slice %418 {offsets = [29, 0], sizes = [64, 32], strides = [1, 1]} : vector<128x32xf32> to vector<64x32xf32>
    %422 = vector.extract_strided_slice %418 {offsets = [30, 0], sizes = [64, 32], strides = [1, 1]} : vector<128x32xf32> to vector<64x32xf32>
    %423 = vector.extract_strided_slice %418 {offsets = [31, 0], sizes = [64, 32], strides = [1, 1]} : vector<128x32xf32> to vector<64x32xf32>
    %424 = vector.extract_strided_slice %418 {offsets = [32, 0], sizes = [64, 32], strides = [1, 1]} : vector<128x32xf32> to vector<64x32xf32>
    %425 = vector.extract_strided_slice %418 {offsets = [33, 0], sizes = [64, 32], strides = [1, 1]} : vector<128x32xf32> to vector<64x32xf32>
    %426 = vector.extract_strided_slice %418 {offsets = [34, 0], sizes = [64, 32], strides = [1, 1]} : vector<128x32xf32> to vector<64x32xf32>
    %427 = vector.extract_strided_slice %418 {offsets = [35, 0], sizes = [64, 32], strides = [1, 1]} : vector<128x32xf32> to vector<64x32xf32>
    %428 = vector.extract_strided_slice %418 {offsets = [36, 0], sizes = [64, 32], strides = [1, 1]} : vector<128x32xf32> to vector<64x32xf32>
    %429 = vector.extract_strided_slice %418 {offsets = [37, 0], sizes = [64, 32], strides = [1, 1]} : vector<128x32xf32> to vector<64x32xf32>
    %430 = tpu.concatenate %419, %420, %421, %422, %423, %424, %425, %426, %427, %428, %429 in 1 : vector<64x32xf32>, vector<64x32xf32>, vector<64x32xf32>, vector<64x32xf32>, vector<64x32xf32>, vector<64x32xf32>, vector<64x32xf32>, vector<64x32xf32>, vector<64x32xf32>, vector<64x32xf32>, vector<64x32xf32> -> vector<64x352xf32>
    %cst_223 = arith.constant dense<0.000000e+00> : vector<64x32xf32>
    %431 = tpu.matmul %430, %408, %cst_223 {dimension_numbers = #tpu.dot_dimension_numbers<[1], [0], [0], [1], [0, 0, 1, 1], [], []>} : vector<64x352xf32>, vector<352x32xf32>, vector<64x32xf32> -> vector<64x32xf32>
    %432 = vector.broadcast %410 : vector<1x32xf32> to vector<64x32xf32>
    %433 = arith.addf %431, %432 : vector<64x32xf32>
    %434 = arith.addf %433, %379 : vector<64x32xf32>
    %435 = arith.addf %269, %434 : vector<64x32xf32>
    %cst_224 = arith.constant 0.333333343 : f32
    %436 = vector.broadcast %cst_224 : f32 to vector<64x32xf32>
    %437 = arith.mulf %435, %436 : vector<64x32xf32>
    %c0_225 = arith.constant 0 : index
    %c0_226 = arith.constant 0 : index
    %c0_227 = arith.constant 0 : index
    %438 = vector.load %arg8[%c0_225, %c0_226, %c0_227] : memref<1x64x32xf32, #tpu.memory_space<vmem>>, vector<1x64x32xf32>
    %439 = vector.shape_cast %438 : vector<1x64x32xf32> to vector<64x32xf32>
    %440 = vector.shape_cast %437 : vector<64x32xf32> to vector<1x64x32xf32>
    tpu.vector_store %arg8[%c0_225, %c0_226, %c0_227], %440 {strides = array<i32>} : memref<1x64x32xf32, #tpu.memory_space<vmem>>, vector<1x64x32xf32>,
    return
  }
  func.func @transform_0(%arg0: i32) -> (i32, i32, i32) {
    %c0_i32 = arith.constant 0 : i32
    %c0_i32_0 = arith.constant 0 : i32
    %c0_i32_1 = arith.constant 0 : i32
    return %arg0, %c0_i32, %c0_i32_0 : i32, i32, i32
  }
  func.func @transform_1(%arg0: i32) -> (i32, i32, i32) {
    %c0_i32 = arith.constant 0 : i32
    %c0_i32_0 = arith.constant 0 : i32
    %c0_i32_1 = arith.constant 0 : i32
    %c0_i32_2 = arith.constant 0 : i32
    return %c0_i32, %c0_i32_0, %c0_i32_1 : i32, i32, i32
  }
  func.func @transform_2(%arg0: i32) -> (i32, i32, i32) {
    %c0_i32 = arith.constant 0 : i32
    %c0_i32_0 = arith.constant 0 : i32
    %c0_i32_1 = arith.constant 0 : i32
    %c0_i32_2 = arith.constant 0 : i32
    return %c0_i32, %c0_i32_0, %c0_i32_1 : i32, i32, i32
  }
  func.func @transform_3(%arg0: i32) -> (i32, i32, i32) {
    %c0_i32 = arith.constant 0 : i32
    %c0_i32_0 = arith.constant 0 : i32
    %c0_i32_1 = arith.constant 0 : i32
    %c0_i32_2 = arith.constant 0 : i32
    return %c0_i32, %c0_i32_0, %c0_i32_1 : i32, i32, i32
  }
  func.func @transform_4(%arg0: i32) -> (i32, i32, i32) {
    %c0_i32 = arith.constant 0 : i32
    %c0_i32_0 = arith.constant 0 : i32
    %c0_i32_1 = arith.constant 0 : i32
    %c0_i32_2 = arith.constant 0 : i32
    return %c0_i32, %c0_i32_0, %c0_i32_1 : i32, i32, i32
  }
  func.func @transform_5(%arg0: i32) -> (i32, i32, i32) {
    %c0_i32 = arith.constant 0 : i32
    %c0_i32_0 = arith.constant 0 : i32
    %c0_i32_1 = arith.constant 0 : i32
    %c0_i32_2 = arith.constant 0 : i32
    return %c0_i32, %c0_i32_0, %c0_i32_1 : i32, i32, i32
  }
  func.func @transform_6(%arg0: i32) -> (i32, i32, i32) {
    %c0_i32 = arith.constant 0 : i32
    %c0_i32_0 = arith.constant 0 : i32
    %c0_i32_1 = arith.constant 0 : i32
    %c0_i32_2 = arith.constant 0 : i32
    return %c0_i32, %c0_i32_0, %c0_i32_1 : i32, i32, i32
  }
  func.func @transform_7(%arg0: i32) -> (i32, i32, i32) {
    %c0_i32 = arith.constant 0 : i32
    %c0_i32_0 = arith.constant 0 : i32
    %c0_i32_1 = arith.constant 0 : i32
    return %arg0, %c0_i32, %c0_i32_0 : i32, i32, i32
  }
}

</mosaic_0001>

<llo_original>
// kernel: parallel_block_forward.1
$region0: #{parallel_block_forward.1}
  #allocation0 [shape = 'u32[]', space=smem, size = 0x4, offset = 0x4, fixed_abs, tag = 'smem constant byte address 0x4 - core index']
  #allocation1 [shape = 'u32[144,128]{1,0:T(1,128)}', space=vmem, size = 0x12000, scoped, tag = 'internal scratch']
  #allocation2 [shape = 'f32[128,32]{1,0:T(8,128)}', space=vmem, size = 0x10000, scoped, tag = 'scratch operand']
  #allocation3 [shape = 'f32[128,32]{1,0:T(8,128)}', space=vmem, size = 0x10000, scoped, tag = 'scratch operand']
  #allocation4 [shape = 'f32[128,32]{1,0:T(8,128)}', space=vmem, size = 0x10000, scoped, tag = 'scratch operand']
  %s0 = inlined_call_operand.vmem [shape: f32[2,64,32], index: 0, kind: input, shape index: {}]
  %s1 = inlined_call_operand.vmem [shape: f32[6,96,32], index: 1, kind: input, shape index: {}]
  %s2 = inlined_call_operand.vmem [shape: f32[6,1,32], index: 2, kind: input, shape index: {}]
  %s3 = inlined_call_operand.vmem [shape: f32[6,224,32], index: 3, kind: input, shape index: {}]
  %s4 = inlined_call_operand.vmem [shape: f32[6,1,32], index: 4, kind: input, shape index: {}]
  %s5 = inlined_call_operand.vmem [shape: f32[6,352,32], index: 5, kind: input, shape index: {}]
  %s6 = inlined_call_operand.vmem [shape: f32[6,1,32], index: 6, kind: input, shape index: {}]
  %s7 = inlined_call_operand.vmem [shape: f32[2,64,32], index: 7, kind: output, shape index: {}]
  %s8 = sld [smem:[#allocation0]]
  $region61: #{parallel_block_forward.1} parent=0
    _
  %s10 = ssub.s32 1, %s8
  %s11 = scalar_select 0, %s10, %s8
  loop: start=0, step=1, limit=4
  $region2: #{parallel_block_forward.1} parent=0 // loop_pre_header
    _
  $region3: #{parallel_block_forward.1} parent=0 // loop_header
    %s13 = sphi 0, %s17
    %p14 = scmp.ge.s32.totalorder %s13, 4
    %s23 = sphi 0, %s25
    %s26 = sphi 0, %s23
    %s27 = sphi 0, %s26
    %s43 = sphi 0, %s27
    %s47 = sphi 0, %s47
    %s49 = sphi 0, %s47
    %s50 = sphi 0, %s49
    %s64 = sphi 0, %s50
    %s68 = sphi 0, %s68
    %s70 = sphi 0, %s68
    %s71 = sphi 0, %s70
    %s85 = sphi 0, %s71
    %s89 = sphi 0, %s89
    %s91 = sphi 0, %s89
    %s92 = sphi 0, %s91
    %s106 = sphi 0, %s92
    %s110 = sphi 0, %s110
    %s112 = sphi 0, %s110
    %s113 = sphi 0, %s112
    %s127 = sphi 0, %s113
    %s131 = sphi 0, %s131
    %s133 = sphi 0, %s131
    %s134 = sphi 0, %s133
    %s148 = sphi 0, %s134
    %s152 = sphi 0, %s152
    %s154 = sphi 0, %s152
    %s155 = sphi 0, %s154
    %s169 = sphi 0, %s155
    %s175 = sphi 0, %s177
    %s178 = sphi 0, %s175
    %s179 = sphi 0, %s178
    %s195 = sphi 0, %s179
  $region4: #{parallel_block_forward.1} parent=0 // loop_header_branch
    %16 = sbr.rel (%p14) target = $region8
  $region5: #{parallel_block_forward.1} parent=0 // loop_body
    %s18 = ssub.s32 %s13, 1
    %s19 = ssub.s32 %s13, 2
    %s20 = sadd.s32 %s13, 1
    %s21 = ssub.s32 %s13, %s20
    %p22 = scmp.eq.s32.totalorder %s21, 0
    %s24 = sadd.s32 %s23, 1
    %s25 = scalar_select %p22, %s23, %s24
    %p28 = pneg %p22
    %p29 = scmp.eq.s32.totalorder %s13, 1
    %p30 = por %p28, %p29
    %p31 = scmp.ne.s32.totalorder %s23, %s26
    %p32 = scmp.eq.s32.totalorder %s13, 0
    %p33 = por %p31, %p32
    %p34 = scmp.ne.s32.totalorder %s23, %s26
    %p35 = scmp.eq.s32.totalorder %s18, 1
    %p36 = por %p34, %p35
    %p37 = scmp.ne.s32.totalorder %s26, %s27
    %p38 = scmp.eq.s32.totalorder %s18, 0
    %p39 = por %p37, %p38
    %p40 = scmp.ne.s32.totalorder %s26, %s27
    %p41 = scmp.eq.s32.totalorder %s19, 1
    %p42 = por %p40, %p41
    %p44 = scmp.ne.s32.totalorder %s27, %s43
    %p45 = scmp.eq.s32.totalorder %s19, 0
    %p46 = por %p44, %p45
    %s48 = sadd.s32 %s47, 1
    %p51 = scmp.eq.s32.totalorder %s13, 1
    %p52 = scmp.ne.s32.totalorder %s47, %s49
    %p53 = scmp.eq.s32.totalorder %s13, 0
    %p54 = por %p52, %p53
    %p55 = scmp.ne.s32.totalorder %s47, %s49
    %p56 = scmp.eq.s32.totalorder %s18, 1
    %p57 = por %p55, %p56
    %p58 = scmp.ne.s32.totalorder %s49, %s50
    %p59 = scmp.eq.s32.totalorder %s18, 0
    %p60 = por %p58, %p59
    %p61 = scmp.ne.s32.totalorder %s49, %s50
    %p62 = scmp.eq.s32.totalorder %s19, 1
    %p63 = por %p61, %p62
    %p65 = scmp.ne.s32.totalorder %s50, %s64
    %p66 = scmp.eq.s32.totalorder %s19, 0
    %p67 = por %p65, %p66
    %s69 = sadd.s32 %s68, 1
    %p72 = scmp.eq.s32.totalorder %s13, 1
    %p73 = scmp.ne.s32.totalorder %s68, %s70
    %p74 = scmp.eq.s32.totalorder %s13, 0
    %p75 = por %p73, %p74
    %p76 = scmp.ne.s32.totalorder %s68, %s70
    %p77 = scmp.eq.s32.totalorder %s18, 1
    %p78 = por %p76, %p77
    %p79 = scmp.ne.s32.totalorder %s70, %s71
    %p80 = scmp.eq.s32.totalorder %s18, 0
    %p81 = por %p79, %p80
    %p82 = scmp.ne.s32.totalorder %s70, %s71
    %p83 = scmp.eq.s32.totalorder %s19, 1
    %p84 = por %p82, %p83
    %p86 = scmp.ne.s32.totalorder %s71, %s85
    %p87 = scmp.eq.s32.totalorder %s19, 0
    %p88 = por %p86, %p87
    %s90 = sadd.s32 %s89, 1
    %p93 = scmp.eq.s32.totalorder %s13, 1
    %p94 = scmp.ne.s32.totalorder %s89, %s91
    %p95 = scmp.eq.s32.totalorder %s13, 0
    %p96 = por %p94, %p95
    %p97 = scmp.ne.s32.totalorder %s89, %s91
    %p98 = scmp.eq.s32.totalorder %s18, 1
    %p99 = por %p97, %p98
    %p100 = scmp.ne.s32.totalorder %s91, %s92
    %p101 = scmp.eq.s32.totalorder %s18, 0
    %p102 = por %p100, %p101
    %p103 = scmp.ne.s32.totalorder %s91, %s92
    %p104 = scmp.eq.s32.totalorder %s19, 1
    %p105 = por %p103, %p104
    %p107 = scmp.ne.s32.totalorder %s92, %s106
    %p108 = scmp.eq.s32.totalorder %s19, 0
    %p109 = por %p107, %p108
    %s111 = sadd.s32 %s110, 1
    %p114 = scmp.eq.s32.totalorder %s13, 1
    %p115 = scmp.ne.s32.totalorder %s110, %s112
    %p116 = scmp.eq.s32.totalorder %s13, 0
    %p117 = por %p115, %p116
    %p118 = scmp.ne.s32.totalorder %s110, %s112
    %p119 = scmp.eq.s32.totalorder %s18, 1
    %p120 = por %p118, %p119
    %p121 = scmp.ne.s32.totalorder %s112, %s113
    %p122 = scmp.eq.s32.totalorder %s18, 0
    %p123 = por %p121, %p122
    %p124 = scmp.ne.s32.totalorder %s112, %s113
    %p125 = scmp.eq.s32.totalorder %s19, 1
    %p126 = por %p124, %p125
    %p128 = scmp.ne.s32.totalorder %s113, %s127
    %p129 = scmp.eq.s32.totalorder %s19, 0
    %p130 = por %p128, %p129
    %s132 = sadd.s32 %s131, 1
    %p135 = scmp.eq.s32.totalorder %s13, 1
    %p136 = scmp.ne.s32.totalorder %s131, %s133
    %p137 = scmp.eq.s32.totalorder %s13, 0
    %p138 = por %p136, %p137
    %p139 = scmp.ne.s32.totalorder %s131, %s133
    %p140 = scmp.eq.s32.totalorder %s18, 1
    %p141 = por %p139, %p140
    %p142 = scmp.ne.s32.totalorder %s133, %s134
    %p143 = scmp.eq.s32.totalorder %s18, 0
    %p144 = por %p142, %p143
    %p145 = scmp.ne.s32.totalorder %s133, %s134
    %p146 = scmp.eq.s32.totalorder %s19, 1
    %p147 = por %p145, %p146
    %p149 = scmp.ne.s32.totalorder %s134, %s148
    %p150 = scmp.eq.s32.totalorder %s19, 0
    %p151 = por %p149, %p150
    %s153 = sadd.s32 %s152, 1
    %p156 = scmp.eq.s32.totalorder %s13, 1
    %p157 = scmp.ne.s32.totalorder %s152, %s154
    %p158 = scmp.eq.s32.totalorder %s13, 0
    %p159 = por %p157, %p158
    %p160 = scmp.ne.s32.totalorder %s152, %s154
    %p161 = scmp.eq.s32.totalorder %s18, 1
    %p162 = por %p160, %p161
    %p163 = scmp.ne.s32.totalorder %s154, %s155
    %p164 = scmp.eq.s32.totalorder %s18, 0
    %p165 = por %p163, %p164
    %p166 = scmp.ne.s32.totalorder %s154, %s155
    %p167 = scmp.eq.s32.totalorder %s19, 1
    %p168 = por %p166, %p167
    %p170 = scmp.ne.s32.totalorder %s155, %s169
    %p171 = scmp.eq.s32.totalorder %s19, 0
    %p172 = por %p170, %p171
    %s173 = ssub.s32 %s13, %s20
    %p174 = scmp.eq.s32.totalorder %s173, 0
    %s176 = sadd.s32 %s175, 1
    %s177 = scalar_select %p174, %s175, %s176
    %p180 = pneg %p174
    %p181 = scmp.eq.s32.totalorder %s13, 1
    %p182 = por %p180, %p181
    %p183 = scmp.ne.s32.totalorder %s175, %s178
    %p184 = scmp.eq.s32.totalorder %s13, 0
    %p185 = por %p183, %p184
    %p186 = scmp.ne.s32.totalorder %s175, %s178
    %p187 = scmp.eq.s32.totalorder %s18, 1
    %p188 = por %p186, %p187
    %p189 = scmp.ne.s32.totalorder %s178, %s179
    %p190 = scmp.eq.s32.totalorder %s18, 0
    %p191 = por %p189, %p190
    %p192 = scmp.ne.s32.totalorder %s178, %s179
    %p193 = scmp.eq.s32.totalorder %s19, 1
    %p194 = por %p192, %p193
    %p196 = scmp.ne.s32.totalorder %s179, %s195
    %p197 = scmp.eq.s32.totalorder %s19, 0
    %p198 = por %p196, %p197
    %p199 = scmp.le.s32.totalorder 1, %s13
    %p200 = scmp.lt.s32.totalorder %s13, 3
    %p201 = pnand %p199, %p200
    %p202 = pneg %p201
    // Predicated region
    $region9: #{parallel_block_forward.1} parent=5 // pred_check
      _
    $region10: #{parallel_block_forward.1} parent=5 // pred_check_branch
      %204 = sbr.rel (%p201) target = $region12
    $region11: #{parallel_block_forward.1} parent=5 // pred_region
      %s205 = ssub.s32 %s13, 1
      // Predicated region
      $region13: #{parallel_block_forward.1} parent=11 // pred_check
        %p206 = pneg %p60
      $region14: #{parallel_block_forward.1} parent=11 // pred_check_branch
        %208 = sbr.rel (%p206) target = $region16
      $region15: #{parallel_block_forward.1} parent=11 // pred_region
        _
      $region16: #{parallel_block_forward.1} parent=11 // pred_fallthru
        _
      // Predicated region
      $region17: #{parallel_block_forward.1} parent=11 // pred_check
        %p209 = pneg %p81
      $region18: #{parallel_block_forward.1} parent=11 // pred_check_branch
        %211 = sbr.rel (%p209) target = $region20
      $region19: #{parallel_block_forward.1} parent=11 // pred_region
        _
      $region20: #{parallel_block_forward.1} parent=11 // pred_fallthru
        _
      // Predicated region
      $region21: #{parallel_block_forward.1} parent=11 // pred_check
        %p212 = pneg %p102
      $region22: #{parallel_block_forward.1} parent=11 // pred_check_branch
        %214 = sbr.rel (%p212) target = $region24
      $region23: #{parallel_block_forward.1} parent=11 // pred_region
        _
      $region24: #{parallel_block_forward.1} parent=11 // pred_fallthru
        _
      // Predicated region
      $region25: #{parallel_block_forward.1} parent=11 // pred_check
        %p215 = pneg %p123
      $region26: #{parallel_block_forward.1} parent=11 // pred_check_branch
        %217 = sbr.rel (%p215) target = $region28
      $region27: #{parallel_block_forward.1} parent=11 // pred_region
        _
      $region28: #{parallel_block_forward.1} parent=11 // pred_fallthru
        _
      // Predicated region
      $region29: #{parallel_block_forward.1} parent=11 // pred_check
        %p218 = pneg %p144
      $region30: #{parallel_block_forward.1} parent=11 // pred_check_branch
        %220 = sbr.rel (%p218) target = $region32
      $region31: #{parallel_block_forward.1} parent=11 // pred_region
        _
      $region32: #{parallel_block_forward.1} parent=11 // pred_fallthru
        _
      // Predicated region
      $region33: #{parallel_block_forward.1} parent=11 // pred_check
        %p221 = pneg %p165
      $region34: #{parallel_block_forward.1} parent=11 // pred_check_branch
        %223 = sbr.rel (%p221) target = $region36
      $region35: #{parallel_block_forward.1} parent=11 // pred_region
        _
      $region36: #{parallel_block_forward.1} parent=11 // pred_fallthru
        _
    $region12: #{parallel_block_forward.1} parent=5 // pred_fallthru
      _
    %p224 = scmp.lt.s32.totalorder %s13, 2
    // Predicated region
    $region37: #{parallel_block_forward.1} parent=5 // pred_check
      %p225 = pneg %p224
    $region38: #{parallel_block_forward.1} parent=5 // pred_check_branch
      %227 = sbr.rel (%p225) target = $region40
    $region39: #{parallel_block_forward.1} parent=5 // pred_region
      // Predicated region
      $region41: #{parallel_block_forward.1} parent=39 // pred_check
        %p228 = pneg %p33
      $region42: #{parallel_block_forward.1} parent=39 // pred_check_branch
        %230 = sbr.rel (%p228) target = $region44
      $region43: #{parallel_block_forward.1} parent=39 // pred_region
        %p231 = scmp.lt.s32.totalorder %s13, 1
        %s232 = scalar_select %p231, %s13, 1
        %s233 = smul.addr %s232, 8
        %s234 = smul.addr %s233, 8
        %s235 = scalar_lea.vmem %s0, %s234
      $region44: #{parallel_block_forward.1} parent=39 // pred_fallthru
        _
    $region40: #{parallel_block_forward.1} parent=5 // pred_fallthru
      _
    %p236 = scmp.le.s32.totalorder 1, %s13
    %p237 = scmp.lt.s32.totalorder %s13, 3
    %p238 = pnand %p236, %p237
    %p239 = pneg %p238
    // Predicated region
    $region45: #{parallel_block_forward.1} parent=5 // pred_check
      _
    $region46: #{parallel_block_forward.1} parent=5 // pred_check_branch
      %241 = sbr.rel (%p238) target = $region48
    $region47: #{parallel_block_forward.1} parent=5 // pred_region
      %s242 = ssub.s32 %s13, 1
      %p243 = scmp.lt.s32.totalorder %s18, 1
      %s244 = scalar_select %p243, %s18, 1
      %s245 = smul.addr %s244, 8
      %s246 = smul.addr %s245, 8
      %s247 = scalar_lea.vmem %s0, %s246
      %p248 = pneg %p39
      %p249 = pneg %p36
      %p250 = pneg %p60
      %p251 = pneg %p57
      %p252 = pneg %p81
      %p253 = pneg %p78
      %p254 = pneg %p102
      %p255 = pneg %p99
      %p256 = pneg %p123
      %p257 = pneg %p120
      %p258 = pneg %p144
      %p259 = pneg %p141
      %p260 = pneg %p165
      %p261 = pneg %p162
      %p262 = pneg %p191
      %p263 = pneg %p188
      %p264 = scmp.lt.s32.totalorder %s18, 1
      %s265 = scalar_select %p264, %s18, 1
      %s266 = smul.addr %s265, 8
      %s267 = smul.addr %s266, 8
      %s268 = scalar_lea.vmem %s7, %s267
      %p269 = scmp.lt.s32.totalorder %s18, 1
      %s270 = scalar_select %p269, %s18, 1
      %s271 = smul.addr %s270, 8
      %s272 = smul.addr %s271, 8
      %s273 = scalar_lea.vmem %s0, %s272
      %p274 = scmp.lt.s32.totalorder %s18, 1
      %s275 = scalar_select %p274, %s18, 1
      %s276 = smul.addr %s275, 8
      %s277 = smul.addr %s276, 8
      %s278 = scalar_lea.vmem %s7, %s277
      %vm279 = vcmask 261120
      %280 = vst.msk [vmem:[#allocation2] sm:$0xff] %vm279, 0.0
      %281 = vst.msk [vmem:[#allocation2 + $0x8] sm:$0xff] %vm279, 0.0
      %282 = vst.msk [vmem:[#allocation2 + $0x10] sm:$0xff] %vm279, 0.0
      %283 = vst.msk [vmem:[#allocation2 + $0x18] sm:$0xff] %vm279, 0.0
      %284 = vst.msk [vmem:[#allocation2 + $0x60] sm:$0xff] %vm279, 0.0
      %285 = vst.msk [vmem:[#allocation2 + $0x68] sm:$0xff] %vm279, 0.0
      %286 = vst.msk [vmem:[#allocation2 + $0x70] sm:$0xff] %vm279, 0.0
      %287 = vst.msk [vmem:[#allocation2 + $0x78] sm:$0xff] %vm279, 0.0
      %288 = vst.msk [vmem:[#allocation3] sm:$0xff] %vm279, 0.0
      %289 = vst.msk [vmem:[#allocation3 + $0x8] sm:$0xff] %vm279, 0.0
      %290 = vst.msk [vmem:[#allocation3 + $0x10] sm:$0xff] %vm279, 0.0
      %291 = vst.msk [vmem:[#allocation3 + $0x18] sm:$0xff] %vm279, 0.0
      %292 = vst.msk [vmem:[#allocation3 + $0x60] sm:$0xff] %vm279, 0.0
      %293 = vst.msk [vmem:[#allocation3 + $0x68] sm:$0xff] %vm279, 0.0
      %294 = vst.msk [vmem:[#allocation3 + $0x70] sm:$0xff] %vm279, 0.0
      %295 = vst.msk [vmem:[#allocation3 + $0x78] sm:$0xff] %vm279, 0.0
      %296 = vst.msk [vmem:[#allocation4] sm:$0xff] %vm279, 0.0
      %297 = vst.msk [vmem:[#allocation4 + $0x8] sm:$0xff] %vm279, 0.0
      %298 = vst.msk [vmem:[#allocation4 + $0x10] sm:$0xff] %vm279, 0.0
      %299 = vst.msk [vmem:[#allocation4 + $0x18] sm:$0xff] %vm279, 0.0
      %300 = vst.msk [vmem:[#allocation4 + $0x60] sm:$0xff] %vm279, 0.0
      %301 = vst.msk [vmem:[#allocation4 + $0x68] sm:$0xff] %vm279, 0.0
      %302 = vst.msk [vmem:[#allocation4 + $0x70] sm:$0xff] %vm279, 0.0
      %303 = vst.msk [vmem:[#allocation4 + $0x78] sm:$0xff] %vm279, 0.0
      %v304 = vld [vmem:[%s273] sm:$0xff]
      %v305 = vld [vmem:[%s273 + $0x8] sm:$0xff]
      %v306 = vld [vmem:[%s273 + $0x10] sm:$0xff]
      %v307 = vld [vmem:[%s273 + $0x18] sm:$0xff]
      %v308 = vld [vmem:[%s273 + $0x20] sm:$0xff]
      %v309 = vld [vmem:[%s273 + $0x28] sm:$0xff]
      %v310 = vld [vmem:[%s273 + $0x30] sm:$0xff]
      %v311 = vld [vmem:[%s273 + $0x38] sm:$0xff]
      %v312 = vld [vmem:[%s1] sm:$0xff]
      %v313 = vld [vmem:[%s1 + $0x8] sm:$0xff]
      %v314 = vld [vmem:[%s1 + $0x10] sm:$0xff]
      %v315 = vld [vmem:[%s1 + $0x18] sm:$0xff]
      %v316 = vld [vmem:[%s1 + $0x20] sm:$0xff]
      %v317 = vld [vmem:[%s1 + $0x28] sm:$0xff]
      %v318 = vld [vmem:[%s1 + $0x30] sm:$0xff]
      %v319 = vld [vmem:[%s1 + $0x38] sm:$0xff]
      %v320 = vld [vmem:[%s1 + $0x40] sm:$0xff]
      %v321 = vld [vmem:[%s1 + $0x48] sm:$0xff]
      %v322 = vld [vmem:[%s1 + $0x50] sm:$0xff]
      %v323 = vld [vmem:[%s1 + $0x58] sm:$0xff]
      %v324 = vld [vmem:[%s2] sm:$0x1]
      %v325 = vxor.u32 %v304, 2147483648
      %v326 = vxor.u32 %v305, 2147483648
      %v327 = vxor.u32 %v306, 2147483648
      %v328 = vxor.u32 %v307, 2147483648
      %v329 = vxor.u32 %v308, 2147483648
      %v330 = vxor.u32 %v309, 2147483648
      %v331 = vxor.u32 %v310, 2147483648
      %v332 = vxor.u32 %v311, 2147483648
      %v333 = vmul.f32 %v325, 1.442695
      %v334 = vpow.pop %v333
      %v335 = vmul.f32 %v326, 1.442695
      %v336 = vpow.pop %v335
      %v337 = vmul.f32 %v327, 1.442695
      %v338 = vpow.pop %v337
      %v339 = vmul.f32 %v328, 1.442695
      %v340 = vpow.pop %v339
      %v341 = vmul.f32 %v329, 1.442695
      %v342 = vpow.pop %v341
      %v343 = vmul.f32 %v330, 1.442695
      %v344 = vpow.pop %v343
      %v345 = vmul.f32 %v331, 1.442695
      %v346 = vpow.pop %v345
      %v347 = vmul.f32 %v332, 1.442695
      %v348 = vpow.pop %v347
      %v349 = vadd.f32 %v334, 1.0
      %v350 = vadd.f32 %v336, 1.0
      %v351 = vadd.f32 %v338, 1.0
      %v352 = vadd.f32 %v340, 1.0
      %v353 = vadd.f32 %v342, 1.0
      %v354 = vadd.f32 %v344, 1.0
      %v355 = vadd.f32 %v346, 1.0
      %v356 = vadd.f32 %v348, 1.0
      %v357 = vrcp.pop %v349
      %v358 = vmul.f32 1.0, %v357
      %v359 = vrcp.pop %v350
      %v360 = vmul.f32 1.0, %v359
      %v361 = vrcp.pop %v351
      %v362 = vmul.f32 1.0, %v361
      %v363 = vrcp.pop %v352
      %v364 = vmul.f32 1.0, %v363
      %v365 = vrcp.pop %v353
      %v366 = vmul.f32 1.0, %v365
      %v367 = vrcp.pop %v354
      %v368 = vmul.f32 1.0, %v367
      %v369 = vrcp.pop %v355
      %v370 = vmul.f32 1.0, %v369
      %v371 = vrcp.pop %v356
      %v372 = vmul.f32 1.0, %v371
      %v373 = vmul.f32 %v304, %v358
      %v374 = vmul.f32 %v305, %v360
      %v375 = vmul.f32 %v306, %v362
      %v376 = vmul.f32 %v307, %v364
      %v377 = vmul.f32 %v308, %v366
      %v378 = vmul.f32 %v309, %v368
      %v379 = vmul.f32 %v310, %v370
      %v380 = vmul.f32 %v311, %v372
      %381 = vst.msk [vmem:[#allocation2 + $0x20] sm:$0xff] %vm279, %v373
      %382 = vst.msk [vmem:[#allocation2 + $0x28] sm:$0xff] %vm279, %v374
      %383 = vst.msk [vmem:[#allocation2 + $0x30] sm:$0xff] %vm279, %v375
      %384 = vst.msk [vmem:[#allocation2 + $0x38] sm:$0xff] %vm279, %v376
      %385 = vst.msk [vmem:[#allocation2 + $0x40] sm:$0xff] %vm279, %v377
      %386 = vst.msk [vmem:[#allocation2 + $0x48] sm:$0xff] %vm279, %v378
      %387 = vst.msk [vmem:[#allocation2 + $0x50] sm:$0xff] %vm279, %v379
      %388 = vst.msk [vmem:[#allocation2 + $0x58] sm:$0xff] %vm279, %v380
      %v389 = vld [vmem:[#allocation2 + $0x18] sm:$0xff]
      %v390 = vld [vmem:[#allocation2 + $0x20] sm:$0xff]
      %v391 = vld [vmem:[#allocation2 + $0x28] sm:$0xff]
      %v392 = vld [vmem:[#allocation2 + $0x30] sm:$0xff]
      %v393 = vld [vmem:[#allocation2 + $0x38] sm:$0xff]
      %v394 = vld [vmem:[#allocation2 + $0x40] sm:$0xff]
      %v395 = vld [vmem:[#allocation2 + $0x48] sm:$0xff]
      %v396 = vld [vmem:[#allocation2 + $0x50] sm:$0xff]
      %v397 = vld [vmem:[#allocation2 + $0x58] sm:$0xff]
      %v398 = vld [vmem:[#allocation2 + $0x60] sm:$0xff]
      %vm407 = vcmask 1046528
      %v408 = vrot.slane %v390, 1
      %v409 = vrot.slane %v391, 1
      %v410 = vsel %vm407, %v408, %v409
      %v411 = vrot.slane %v392, 1
      %v412 = vsel %vm407, %v409, %v411
      %v413 = vrot.slane %v393, 1
      %v414 = vsel %vm407, %v411, %v413
      %v415 = vrot.slane %v394, 1
      %v416 = vsel %vm407, %v413, %v415
      %v417 = vrot.slane %v395, 1
      %v418 = vsel %vm407, %v415, %v417
      %v419 = vrot.slane %v396, 1
      %v420 = vsel %vm407, %v417, %v419
      %v421 = vrot.slane %v397, 1
      %v422 = vsel %vm407, %v419, %v421
      %423 = vrot.lane.b32.xlu0 %v408, 32
      %v424 = vpop.permute.xlu0 %423
      %425 = vrot.lane.b32.xlu0 %v410, 32
      %v426 = vpop.permute.xlu0 %425
      %427 = vrot.lane.b32.xlu0 %v412, 32
      %v428 = vpop.permute.xlu0 %427
      %429 = vrot.lane.b32.xlu0 %v414, 32
      %v430 = vpop.permute.xlu0 %429
      %431 = vrot.lane.b32.xlu0 %v416, 32
      %v432 = vpop.permute.xlu0 %431
      %433 = vrot.lane.b32.xlu0 %v418, 32
      %v434 = vpop.permute.xlu0 %433
      %435 = vrot.lane.b32.xlu0 %v420, 32
      %v436 = vpop.permute.xlu0 %435
      %437 = vrot.lane.b32.xlu0 %v422, 32
      %v438 = vpop.permute.xlu0 %437
      %439 = vrot.lane.b32.xlu0 %v421, 32
      %v440 = vpop.permute.xlu0 %439
      %vm451 = vcmask 1045504
      %v452 = vrot.slane %v390, 2
      %v453 = vrot.slane %v391, 2
      %v454 = vsel %vm451, %v452, %v453
      %v455 = vrot.slane %v392, 2
      %v456 = vsel %vm451, %v453, %v455
      %v457 = vrot.slane %v393, 2
      %v458 = vsel %vm451, %v455, %v457
      %v459 = vrot.slane %v394, 2
      %v460 = vsel %vm451, %v457, %v459
      %v461 = vrot.slane %v395, 2
      %v462 = vsel %vm451, %v459, %v461
      %v463 = vrot.slane %v396, 2
      %v464 = vsel %vm451, %v461, %v463
      %v465 = vrot.slane %v397, 2
      %v466 = vsel %vm451, %v463, %v465
      %v467 = vrot.slane %v398, 2
      %v468 = vsel %vm451, %v465, %v467
      %469 = vrot.lane.b32.xlu0 %v452, 64
      %v470 = vpop.permute.xlu0 %469
      %471 = vrot.lane.b32.xlu0 %v454, 64
      %v472 = vpop.permute.xlu0 %471
      %473 = vrot.lane.b32.xlu0 %v456, 64
      %v474 = vpop.permute.xlu0 %473
      %475 = vrot.lane.b32.xlu0 %v458, 64
      %v476 = vpop.permute.xlu0 %475
      %477 = vrot.lane.b32.xlu0 %v460, 64
      %v478 = vpop.permute.xlu0 %477
      %479 = vrot.lane.b32.xlu0 %v462, 64
      %v480 = vpop.permute.xlu0 %479
      %481 = vrot.lane.b32.xlu0 %v464, 64
      %v482 = vpop.permute.xlu0 %481
      %483 = vrot.lane.b32.xlu0 %v466, 64
      %v484 = vpop.permute.xlu0 %483
      %485 = vrot.lane.b32.xlu0 %v468, 64
      %v486 = vpop.permute.xlu0 %485
      %v496 = vsel %vm279, %v389, %v424
      %v497 = vsel %vm279, %v390, %v426
      %v498 = vsel %vm279, %v391, %v428
      %v499 = vsel %vm279, %v392, %v430
      %v500 = vsel %vm279, %v393, %v432
      %v501 = vsel %vm279, %v394, %v434
      %v502 = vsel %vm279, %v395, %v436
      %v503 = vsel %vm279, %v396, %v438
      %v504 = vsel %vm279, %v397, %v440
      %vm505 = vcmask 523264
      %v506 = vsel %vm505, %v496, %v470
      %v507 = vsel %vm505, %v497, %v472
      %v508 = vsel %vm505, %v498, %v474
      %v509 = vsel %vm505, %v499, %v476
      %v510 = vsel %vm505, %v500, %v478
      %v511 = vsel %vm505, %v501, %v480
      %v512 = vsel %vm505, %v502, %v482
      %v513 = vsel %vm505, %v503, %v484
      %v514 = vsel %vm505, %v504, %v486
      %v516 = vlaneseq
      %v517 = vshrl.u32 %v516, 7
      %v518 = vsub.s32 0, %v517
      %v519 = vrot.slane %v324, %v518
      %vm530 = vcmask 1040384
      %v531 = vrot.slane %v506, 7
      %v532 = vrot.slane %v507, 7
      %v533 = vsel %vm530, %v531, %v532
      %v534 = vrot.slane %v508, 7
      %v535 = vsel %vm530, %v532, %v534
      %v536 = vrot.slane %v509, 7
      %v537 = vsel %vm530, %v534, %v536
      %v538 = vrot.slane %v510, 7
      %v539 = vsel %vm530, %v536, %v538
      %v540 = vrot.slane %v511, 7
      %v541 = vsel %vm530, %v538, %v540
      %v542 = vrot.slane %v512, 7
      %v543 = vsel %vm530, %v540, %v542
      %v544 = vrot.slane %v513, 7
      %v545 = vsel %vm530, %v542, %v544
      %v546 = vrot.slane %v514, 7
      %v547 = vsel %vm530, %v544, %v546
      %vm548 = vcmask 785408
      %v549 = vsel %vm548, %v533, 0
      %v551 = vsel %vm548, %v535, 0
      %v553 = vsel %vm548, %v537, 0
      %v555 = vsel %vm548, %v539, 0
      %v557 = vsel %vm548, %v541, 0
      %v559 = vsel %vm548, %v543, 0
      %v561 = vsel %vm548, %v545, 0
      %v563 = vsel %vm548, %v547, 0
      %565 = vmatprep.subr.mxu0 0.0
      %566 = vmatpush1.msra.mxu0 %v312
      %567 = vmatprep.subr.mxu0 0.0
      %568 = vmatpush1.msra.mxu0 %v313
      %569 = vmatprep.subr.mxu0 0.0
      %570 = vmatpush1.msra.mxu0 %v314
      %571 = vmatprep.subr.mxu0 0.0
      %572 = vmatpush1.msra.mxu0 %v315
      %573 = vmatprep.subr.mxu0 0.0
      %574 = vmatpush1.msra.mxu0 %v316
      %575 = vmatprep.subr.mxu0 0.0
      %576 = vmatpush1.msra.mxu0 %v317
      %577 = vmatprep.subr.mxu0 0.0
      %578 = vmatpush1.msra.mxu0 %v318
      %579 = vmatprep.subr.mxu0 0.0
      %580 = vmatpush1.msra.mxu0 %v319
      %581 = vmatprep.subr.mxu0 0.0
      %582 = vmatpush1.msra.mxu0 %v320
      %583 = vmatprep.subr.mxu0 0.0
      %584 = vmatpush1.msra.mxu0 %v321
      %585 = vmatprep.subr.mxu0 0.0
      %586 = vmatpush1.msra.mxu0 %v322
      %587 = vmatprep.subr.mxu0 0.0
      %588 = vmatpush1.msra.mxu0 %v323
      %589 = vmatprep.subr.mxu0 0.0
      %590 = vmatpush1.msra.mxu0 0.0
      %591 = vmatprep.subr.mxu0 0.0
      %592 = vmatpush1.msra.mxu0 0.0
      %593 = vmatprep.subr.mxu0 0.0
      %594 = vmatpush1.msra.mxu0 0.0
      %595 = vmatprep.subr.mxu0 0.0
      %596 = vmatpush1.msra.mxu0 0.0
      %597 = vmatprep.subr.mxu0 0.0
      %598 = vmatpush1.msra.mxu0 0.0
      %599 = vmatprep.subr.mxu0 0.0
      %600 = vmatpush1.msra.mxu0 0.0
      %601 = vmatprep.subr.mxu0 0.0
      %602 = vmatpush1.msra.mxu0 0.0
      %603 = vmatprep.subr.mxu0 0.0
      %604 = vmatpush1.msra.mxu0 0.0
      %605 = vmatprep.subr.mxu0 0.0
      %606 = vmatpush1.msra.mxu0 0.0
      %607 = vmatprep.subr.mxu0 0.0
      %608 = vmatpush1.msra.mxu0 0.0
      %609 = vmatprep.subr.mxu0 0.0
      %610 = vmatpush1.msra.mxu0 0.0
      %611 = vmatprep.subr.mxu0 0.0
      %612 = vmatpush1.msra.mxu0 0.0
      %613 = vmatprep.subr.mxu0 0.0
      %614 = vmatpush1.msra.mxu0 0.0
      %615 = vmatprep.subr.mxu0 0.0
      %616 = vmatpush1.msra.mxu0 0.0
      %617 = vmatprep.subr.mxu0 0.0
      %618 = vmatpush1.msra.mxu0 0.0
      %619 = vmatprep.subr.mxu0 0.0
      %620 = vmatpush1.msra.mxu0 0.0
      %621 = vmatprep.subr.mxu0 0.0
      %622 = vmatpush1.msra.mxu0 0.0
      %623 = vmatprep.subr.mxu0 0.0
      %624 = vmatpush1.msra.mxu0 0.0
      %625 = vmatprep.subr.mxu0 0.0
      %626 = vmatpush1.msra.mxu0 0.0
      %627 = vmatprep.subr.mxu0 0.0
      %628 = vmatpush1.msra.mxu0 0.0
      %629 = vmatprep.mubr.f32.mxu0 0.0
      %630 = vmatmul.mubr.f32.gmra.mrb[0].mxu0 %v549
      %v631 = vpop.f32.mrb[0].mxu0
      %v632 = vadd.f32 %v519, %v631
      %v633 = vpop.f32.mrb[0].mxu0
      %634 = vmatprep.mubr.f32.mxu0 0.0
      %635 = vmatmul.mubr.f32.gmra.mrb[0].mxu0 %v551
      %v636 = vpop.f32.mrb[0].mxu0
      %v637 = vadd.f32 %v519, %v636
      %v638 = vpop.f32.mrb[0].mxu0
      %639 = vmatprep.mubr.f32.mxu0 0.0
      %640 = vmatmul.mubr.f32.gmra.mrb[0].mxu0 %v553
      %v641 = vpop.f32.mrb[0].mxu0
      %v642 = vadd.f32 %v519, %v641
      %v643 = vpop.f32.mrb[0].mxu0
      %644 = vmatprep.mubr.f32.mxu0 0.0
      %645 = vmatmul.mubr.f32.gmra.mrb[0].mxu0 %v555
      %v646 = vpop.f32.mrb[0].mxu0
      %v647 = vadd.f32 %v519, %v646
      %v648 = vpop.f32.mrb[0].mxu0
      %649 = vmatprep.mubr.f32.mxu0 0.0
      %650 = vmatmul.mubr.f32.gmra.mrb[0].mxu0 %v557
      %v651 = vpop.f32.mrb[0].mxu0
      %v652 = vadd.f32 %v519, %v651
      %v653 = vpop.f32.mrb[0].mxu0
      %654 = vmatprep.mubr.f32.mxu0 0.0
      %655 = vmatmul.mubr.f32.gmra.mrb[0].mxu0 %v559
      %v656 = vpop.f32.mrb[0].mxu0
      %v657 = vadd.f32 %v519, %v656
      %v658 = vpop.f32.mrb[0].mxu0
      %659 = vmatprep.mubr.f32.mxu0 0.0
      %660 = vmatmul.mubr.f32.gmra.mrb[0].mxu0 %v561
      %v661 = vpop.f32.mrb[0].mxu0
      %v662 = vadd.f32 %v519, %v661
      %v663 = vpop.f32.mrb[0].mxu0
      %664 = vmatprep.mubr.f32.mxu0 0.0
      %665 = vmatmul.mubr.f32.gmra.mrb[0].mxu0 %v563
      %v666 = vpop.f32.mrb[0].mxu0
      %v667 = vadd.f32 %v519, %v666
      %v668 = vpop.f32.mrb[0].mxu0
      %669 = vdwg.mxu0
      %s670 = scalar_lea.vmem %s1, 96
      %v671 = vld [vmem:[%s670] sm:$0xff]
      %v672 = vld [vmem:[%s670 + $0x8] sm:$0xff]
      %v673 = vld [vmem:[%s670 + $0x10] sm:$0xff]
      %v674 = vld [vmem:[%s670 + $0x18] sm:$0xff]
      %v675 = vld [vmem:[%s670 + $0x20] sm:$0xff]
      %v676 = vld [vmem:[%s670 + $0x28] sm:$0xff]
      %v677 = vld [vmem:[%s670 + $0x30] sm:$0xff]
      %v678 = vld [vmem:[%s670 + $0x38] sm:$0xff]
      %v679 = vld [vmem:[%s670 + $0x40] sm:$0xff]
      %v680 = vld [vmem:[%s670 + $0x48] sm:$0xff]
      %v681 = vld [vmem:[%s670 + $0x50] sm:$0xff]
      %v682 = vld [vmem:[%s670 + $0x58] sm:$0xff]
      %s683 = scalar_lea.vmem %s2, 1
      %v684 = vld [vmem:[%s683] sm:$0x1]
      %v685 = vxor.u32 %v632, 2147483648
      %v686 = vxor.u32 %v637, 2147483648
      %v687 = vxor.u32 %v642, 2147483648
      %v688 = vxor.u32 %v647, 2147483648
      %v689 = vxor.u32 %v652, 2147483648
      %v690 = vxor.u32 %v657, 2147483648
      %v691 = vxor.u32 %v662, 2147483648
      %v692 = vxor.u32 %v667, 2147483648
      %v693 = vmul.f32 %v685, 1.442695
      %v694 = vpow.pop %v693
      %v695 = vmul.f32 %v686, 1.442695
      %v696 = vpow.pop %v695
      %v697 = vmul.f32 %v687, 1.442695
      %v698 = vpow.pop %v697
      %v699 = vmul.f32 %v688, 1.442695
      %v700 = vpow.pop %v699
      %v701 = vmul.f32 %v689, 1.442695
      %v702 = vpow.pop %v701
      %v703 = vmul.f32 %v690, 1.442695
      %v704 = vpow.pop %v703
      %v705 = vmul.f32 %v691, 1.442695
      %v706 = vpow.pop %v705
      %v707 = vmul.f32 %v692, 1.442695
      %v708 = vpow.pop %v707
      %v709 = vadd.f32 %v694, 1.0
      %v710 = vadd.f32 %v696, 1.0
      %v711 = vadd.f32 %v698, 1.0
      %v712 = vadd.f32 %v700, 1.0
      %v713 = vadd.f32 %v702, 1.0
      %v714 = vadd.f32 %v704, 1.0
      %v715 = vadd.f32 %v706, 1.0
      %v716 = vadd.f32 %v708, 1.0
      %v717 = vrcp.pop %v709
      %v718 = vmul.f32 1.0, %v717
      %v719 = vrcp.pop %v710
      %v720 = vmul.f32 1.0, %v719
      %v721 = vrcp.pop %v711
      %v722 = vmul.f32 1.0, %v721
      %v723 = vrcp.pop %v712
      %v724 = vmul.f32 1.0, %v723
      %v725 = vrcp.pop %v713
      %v726 = vmul.f32 1.0, %v725
      %v727 = vrcp.pop %v714
      %v728 = vmul.f32 1.0, %v727
      %v729 = vrcp.pop %v715
      %v730 = vmul.f32 1.0, %v729
      %v731 = vrcp.pop %v716
      %v732 = vmul.f32 1.0, %v731
      %v733 = vmul.f32 %v632, %v718
      %v734 = vmul.f32 %v637, %v720
      %v735 = vmul.f32 %v642, %v722
      %v736 = vmul.f32 %v647, %v724
      %v737 = vmul.f32 %v652, %v726
      %v738 = vmul.f32 %v657, %v728
      %v739 = vmul.f32 %v662, %v730
      %v740 = vmul.f32 %v667, %v732
      %741 = vst.msk [vmem:[#allocation2 + $0x20] sm:$0xff] %vm279, %v733
      %742 = vst.msk [vmem:[#allocation2 + $0x28] sm:$0xff] %vm279, %v734
      %743 = vst.msk [vmem:[#allocation2 + $0x30] sm:$0xff] %vm279, %v735
      %744 = vst.msk [vmem:[#allocation2 + $0x38] sm:$0xff] %vm279, %v736
      %745 = vst.msk [vmem:[#allocation2 + $0x40] sm:$0xff] %vm279, %v737
      %746 = vst.msk [vmem:[#allocation2 + $0x48] sm:$0xff] %vm279, %v738
      %747 = vst.msk [vmem:[#allocation2 + $0x50] sm:$0xff] %vm279, %v739
      %748 = vst.msk [vmem:[#allocation2 + $0x58] sm:$0xff] %vm279, %v740
      %v749 = vld [vmem:[#allocation2 + $0x18] sm:$0xff]
      %v750 = vld [vmem:[#allocation2 + $0x20] sm:$0xff]
      %v751 = vld [vmem:[#allocation2 + $0x28] sm:$0xff]
      %v752 = vld [vmem:[#allocation2 + $0x30] sm:$0xff]
      %v753 = vld [vmem:[#allocation2 + $0x38] sm:$0xff]
      %v754 = vld [vmem:[#allocation2 + $0x40] sm:$0xff]
      %v755 = vld [vmem:[#allocation2 + $0x48] sm:$0xff]
      %v756 = vld [vmem:[#allocation2 + $0x50] sm:$0xff]
      %v757 = vld [vmem:[#allocation2 + $0x58] sm:$0xff]
      %v758 = vld [vmem:[#allocation2 + $0x60] sm:$0xff]
      %v767 = vrot.slane %v750, 1
      %v768 = vrot.slane %v751, 1
      %v769 = vsel %vm407, %v767, %v768
      %v770 = vrot.slane %v752, 1
      %v771 = vsel %vm407, %v768, %v770
      %v772 = vrot.slane %v753, 1
      %v773 = vsel %vm407, %v770, %v772
      %v774 = vrot.slane %v754, 1
      %v775 = vsel %vm407, %v772, %v774
      %v776 = vrot.slane %v755, 1
      %v777 = vsel %vm407, %v774, %v776
      %v778 = vrot.slane %v756, 1
      %v779 = vsel %vm407, %v776, %v778
      %v780 = vrot.slane %v757, 1
      %v781 = vsel %vm407, %v778, %v780
      %782 = vrot.lane.b32.xlu0 %v767, 32
      %v783 = vpop.permute.xlu0 %782
      %784 = vrot.lane.b32.xlu0 %v769, 32
      %v785 = vpop.permute.xlu0 %784
      %786 = vrot.lane.b32.xlu0 %v771, 32
      %v787 = vpop.permute.xlu0 %786
      %788 = vrot.lane.b32.xlu0 %v773, 32
      %v789 = vpop.permute.xlu0 %788
      %790 = vrot.lane.b32.xlu0 %v775, 32
      %v791 = vpop.permute.xlu0 %790
      %792 = vrot.lane.b32.xlu0 %v777, 32
      %v793 = vpop.permute.xlu0 %792
      %794 = vrot.lane.b32.xlu0 %v779, 32
      %v795 = vpop.permute.xlu0 %794
      %796 = vrot.lane.b32.xlu0 %v781, 32
      %v797 = vpop.permute.xlu0 %796
      %798 = vrot.lane.b32.xlu0 %v780, 32
      %v799 = vpop.permute.xlu0 %798
      %v810 = vrot.slane %v750, 2
      %v811 = vrot.slane %v751, 2
      %v812 = vsel %vm451, %v810, %v811
      %v813 = vrot.slane %v752, 2
      %v814 = vsel %vm451, %v811, %v813
      %v815 = vrot.slane %v753, 2
      %v816 = vsel %vm451, %v813, %v815
      %v817 = vrot.slane %v754, 2
      %v818 = vsel %vm451, %v815, %v817
      %v819 = vrot.slane %v755, 2
      %v820 = vsel %vm451, %v817, %v819
      %v821 = vrot.slane %v756, 2
      %v822 = vsel %vm451, %v819, %v821
      %v823 = vrot.slane %v757, 2
      %v824 = vsel %vm451, %v821, %v823
      %v825 = vrot.slane %v758, 2
      %v826 = vsel %vm451, %v823, %v825
      %827 = vrot.lane.b32.xlu0 %v810, 64
      %v828 = vpop.permute.xlu0 %827
      %829 = vrot.lane.b32.xlu0 %v812, 64
      %v830 = vpop.permute.xlu0 %829
      %831 = vrot.lane.b32.xlu0 %v814, 64
      %v832 = vpop.permute.xlu0 %831
      %833 = vrot.lane.b32.xlu0 %v816, 64
      %v834 = vpop.permute.xlu0 %833
      %835 = vrot.lane.b32.xlu0 %v818, 64
      %v836 = vpop.permute.xlu0 %835
      %837 = vrot.lane.b32.xlu0 %v820, 64
      %v838 = vpop.permute.xlu0 %837
      %839 = vrot.lane.b32.xlu0 %v822, 64
      %v840 = vpop.permute.xlu0 %839
      %841 = vrot.lane.b32.xlu0 %v824, 64
      %v842 = vpop.permute.xlu0 %841
      %843 = vrot.lane.b32.xlu0 %v826, 64
      %v844 = vpop.permute.xlu0 %843
      %v854 = vsel %vm279, %v749, %v783
      %v855 = vsel %vm279, %v750, %v785
      %v856 = vsel %vm279, %v751, %v787
      %v857 = vsel %vm279, %v752, %v789
      %v858 = vsel %vm279, %v753, %v791
      %v859 = vsel %vm279, %v754, %v793
      %v860 = vsel %vm279, %v755, %v795
      %v861 = vsel %vm279, %v756, %v797
      %v862 = vsel %vm279, %v757, %v799
      %v863 = vsel %vm505, %v854, %v828
      %v864 = vsel %vm505, %v855, %v830
      %v865 = vsel %vm505, %v856, %v832
      %v866 = vsel %vm505, %v857, %v834
      %v867 = vsel %vm505, %v858, %v836
      %v868 = vsel %vm505, %v859, %v838
      %v869 = vsel %vm505, %v860, %v840
      %v870 = vsel %vm505, %v861, %v842
      %v871 = vsel %vm505, %v862, %v844
      %v873 = vlaneseq
      %v874 = vshrl.u32 %v873, 7
      %v875 = vsub.s32 0, %v874
      %v876 = vrot.slane %v684, %v875
      %v887 = vrot.slane %v863, 7
      %v888 = vrot.slane %v864, 7
      %v889 = vsel %vm530, %v887, %v888
      %v890 = vrot.slane %v865, 7
      %v891 = vsel %vm530, %v888, %v890
      %v892 = vrot.slane %v866, 7
      %v893 = vsel %vm530, %v890, %v892
      %v894 = vrot.slane %v867, 7
      %v895 = vsel %vm530, %v892, %v894
      %v896 = vrot.slane %v868, 7
      %v897 = vsel %vm530, %v894, %v896
      %v898 = vrot.slane %v869, 7
      %v899 = vsel %vm530, %v896, %v898
      %v900 = vrot.slane %v870, 7
      %v901 = vsel %vm530, %v898, %v900
      %v902 = vrot.slane %v871, 7
      %v903 = vsel %vm530, %v900, %v902
      %v904 = vsel %vm548, %v889, 0
      %v906 = vsel %vm548, %v891, 0
      %v908 = vsel %vm548, %v893, 0
      %v910 = vsel %vm548, %v895, 0
      %v912 = vsel %vm548, %v897, 0
      %v914 = vsel %vm548, %v899, 0
      %v916 = vsel %vm548, %v901, 0
      %v918 = vsel %vm548, %v903, 0
      %920 = vmatprep.subr.mxu0 0.0
      %921 = vmatpush1.msra.mxu0 %v671
      %922 = vmatprep.subr.mxu0 0.0
      %923 = vmatpush1.msra.mxu0 %v672
      %924 = vmatprep.subr.mxu0 0.0
      %925 = vmatpush1.msra.mxu0 %v673
      %926 = vmatprep.subr.mxu0 0.0
      %927 = vmatpush1.msra.mxu0 %v674
      %928 = vmatprep.subr.mxu0 0.0
      %929 = vmatpush1.msra.mxu0 %v675
      %930 = vmatprep.subr.mxu0 0.0
      %931 = vmatpush1.msra.mxu0 %v676
      %932 = vmatprep.subr.mxu0 0.0
      %933 = vmatpush1.msra.mxu0 %v677
      %934 = vmatprep.subr.mxu0 0.0
      %935 = vmatpush1.msra.mxu0 %v678
      %936 = vmatprep.subr.mxu0 0.0
      %937 = vmatpush1.msra.mxu0 %v679
      %938 = vmatprep.subr.mxu0 0.0
      %939 = vmatpush1.msra.mxu0 %v680
      %940 = vmatprep.subr.mxu0 0.0
      %941 = vmatpush1.msra.mxu0 %v681
      %942 = vmatprep.subr.mxu0 0.0
      %943 = vmatpush1.msra.mxu0 %v682
      %944 = vmatprep.subr.mxu0 0.0
      %945 = vmatpush1.msra.mxu0 0.0
      %946 = vmatprep.subr.mxu0 0.0
      %947 = vmatpush1.msra.mxu0 0.0
      %948 = vmatprep.subr.mxu0 0.0
      %949 = vmatpush1.msra.mxu0 0.0
      %950 = vmatprep.subr.mxu0 0.0
      %951 = vmatpush1.msra.mxu0 0.0
      %952 = vmatprep.subr.mxu0 0.0
      %953 = vmatpush1.msra.mxu0 0.0
      %954 = vmatprep.subr.mxu0 0.0
      %955 = vmatpush1.msra.mxu0 0.0
      %956 = vmatprep.subr.mxu0 0.0
      %957 = vmatpush1.msra.mxu0 0.0
      %958 = vmatprep.subr.mxu0 0.0
      %959 = vmatpush1.msra.mxu0 0.0
      %960 = vmatprep.subr.mxu0 0.0
      %961 = vmatpush1.msra.mxu0 0.0
      %962 = vmatprep.subr.mxu0 0.0
      %963 = vmatpush1.msra.mxu0 0.0
      %964 = vmatprep.subr.mxu0 0.0
      %965 = vmatpush1.msra.mxu0 0.0
      %966 = vmatprep.subr.mxu0 0.0
      %967 = vmatpush1.msra.mxu0 0.0
      %968 = vmatprep.subr.mxu0 0.0
      %969 = vmatpush1.msra.mxu0 0.0
      %970 = vmatprep.subr.mxu0 0.0
      %971 = vmatpush1.msra.mxu0 0.0
      %972 = vmatprep.subr.mxu0 0.0
      %973 = vmatpush1.msra.mxu0 0.0
      %974 = vmatprep.subr.mxu0 0.0
      %975 = vmatpush1.msra.mxu0 0.0
      %976 = vmatprep.subr.mxu0 0.0
      %977 = vmatpush1.msra.mxu0 0.0
      %978 = vmatprep.subr.mxu0 0.0
      %979 = vmatpush1.msra.mxu0 0.0
      %980 = vmatprep.subr.mxu0 0.0
      %981 = vmatpush1.msra.mxu0 0.0
      %982 = vmatprep.subr.mxu0 0.0
      %983 = vmatpush1.msra.mxu0 0.0
      %984 = vmatprep.mubr.f32.mxu0 0.0
      %985 = vmatmul.mubr.f32.gmra.mrb[0].mxu0 %v904
      %v986 = vpop.f32.mrb[0].mxu0
      %v987 = vadd.f32 %v876, %v986
      %v988 = vpop.f32.mrb[0].mxu0
      %989 = vmatprep.mubr.f32.mxu0 0.0
      %990 = vmatmul.mubr.f32.gmra.mrb[0].mxu0 %v906
      %v991 = vpop.f32.mrb[0].mxu0
      %v992 = vadd.f32 %v876, %v991
      %v993 = vpop.f32.mrb[0].mxu0
      %994 = vmatprep.mubr.f32.mxu0 0.0
      %995 = vmatmul.mubr.f32.gmra.mrb[0].mxu0 %v908
      %v996 = vpop.f32.mrb[0].mxu0
      %v997 = vadd.f32 %v876, %v996
      %v998 = vpop.f32.mrb[0].mxu0
      %999 = vmatprep.mubr.f32.mxu0 0.0
      %1000 = vmatmul.mubr.f32.gmra.mrb[0].mxu0 %v910
      %v1001 = vpop.f32.mrb[0].mxu0
      %v1002 = vadd.f32 %v876, %v1001
      %v1003 = vpop.f32.mrb[0].mxu0
      %1004 = vmatprep.mubr.f32.mxu0 0.0
      %1005 = vmatmul.mubr.f32.gmra.mrb[0].mxu0 %v912
      %v1006 = vpop.f32.mrb[0].mxu0
      %v1007 = vadd.f32 %v876, %v1006
      %v1008 = vpop.f32.mrb[0].mxu0
      %1009 = vmatprep.mubr.f32.mxu0 0.0
      %1010 = vmatmul.mubr.f32.gmra.mrb[0].mxu0 %v914
      %v1011 = vpop.f32.mrb[0].mxu0
      %v1012 = vadd.f32 %v876, %v1011
      %v1013 = vpop.f32.mrb[0].mxu0
      %1014 = vmatprep.mubr.f32.mxu0 0.0
      %1015 = vmatmul.mubr.f32.gmra.mrb[0].mxu0 %v916
      %v1016 = vpop.f32.mrb[0].mxu0
      %v1017 = vadd.f32 %v876, %v1016
      %v1018 = vpop.f32.mrb[0].mxu0
      %1019 = vmatprep.mubr.f32.mxu0 0.0
      %1020 = vmatmul.mubr.f32.gmra.mrb[0].mxu0 %v918
      %v1021 = vpop.f32.mrb[0].mxu0
      %v1022 = vadd.f32 %v876, %v1021
      %v1023 = vpop.f32.mrb[0].mxu0
      %1024 = vdwg.mxu0
      %v1025 = vadd.f32 %v987, %v304
      %v1026 = vadd.f32 %v992, %v305
      %v1027 = vadd.f32 %v997, %v306
      %v1028 = vadd.f32 %v1002, %v307
      %v1029 = vadd.f32 %v1007, %v308
      %v1030 = vadd.f32 %v1012, %v309
      %v1031 = vadd.f32 %v1017, %v310
      %v1032 = vadd.f32 %v1022, %v311
      %s1033 = scalar_lea.vmem %s1, 192
      %v1034 = vld [vmem:[%s1033] sm:$0xff]
      %v1035 = vld [vmem:[%s1033 + $0x8] sm:$0xff]
      %v1036 = vld [vmem:[%s1033 + $0x10] sm:$0xff]
      %v1037 = vld [vmem:[%s1033 + $0x18] sm:$0xff]
      %v1038 = vld [vmem:[%s1033 + $0x20] sm:$0xff]
      %v1039 = vld [vmem:[%s1033 + $0x28] sm:$0xff]
      %v1040 = vld [vmem:[%s1033 + $0x30] sm:$0xff]
      %v1041 = vld [vmem:[%s1033 + $0x38] sm:$0xff]
      %v1042 = vld [vmem:[%s1033 + $0x40] sm:$0xff]
      %v1043 = vld [vmem:[%s1033 + $0x48] sm:$0xff]
      %v1044 = vld [vmem:[%s1033 + $0x50] sm:$0xff]
      %v1045 = vld [vmem:[%s1033 + $0x58] sm:$0xff]
      %s1046 = scalar_lea.vmem %s2, 2
      %v1047 = vld [vmem:[%s1046] sm:$0x1]
      %v1048 = vxor.u32 %v1025, 2147483648
      %v1049 = vxor.u32 %v1026, 2147483648
      %v1050 = vxor.u32 %v1027, 2147483648
      %v1051 = vxor.u32 %v1028, 2147483648
      %v1052 = vxor.u32 %v1029, 2147483648
      %v1053 = vxor.u32 %v1030, 2147483648
      %v1054 = vxor.u32 %v1031, 2147483648
      %v1055 = vxor.u32 %v1032, 2147483648
      %v1056 = vmul.f32 %v1048, 1.442695
      %v1057 = vpow.pop %v1056
      %v1058 = vmul.f32 %v1049, 1.442695
      %v1059 = vpow.pop %v1058
      %v1060 = vmul.f32 %v1050, 1.442695
      %v1061 = vpow.pop %v1060
      %v1062 = vmul.f32 %v1051, 1.442695
      %v1063 = vpow.pop %v1062
      %v1064 = vmul.f32 %v1052, 1.442695
      %v1065 = vpow.pop %v1064
      %v1066 = vmul.f32 %v1053, 1.442695
      %v1067 = vpow.pop %v1066
      %v1068 = vmul.f32 %v1054, 1.442695
      %v1069 = vpow.pop %v1068
      %v1070 = vmul.f32 %v1055, 1.442695
      %v1071 = vpow.pop %v1070
      %v1072 = vadd.f32 %v1057, 1.0
      %v1073 = vadd.f32 %v1059, 1.0
      %v1074 = vadd.f32 %v1061, 1.0
      %v1075 = vadd.f32 %v1063, 1.0
      %v1076 = vadd.f32 %v1065, 1.0
      %v1077 = vadd.f32 %v1067, 1.0
      %v1078 = vadd.f32 %v1069, 1.0
      %v1079 = vadd.f32 %v1071, 1.0
      %v1080 = vrcp.pop %v1072
      %v1081 = vmul.f32 1.0, %v1080
      %v1082 = vrcp.pop %v1073
      %v1083 = vmul.f32 1.0, %v1082
      %v1084 = vrcp.pop %v1074
      %v1085 = vmul.f32 1.0, %v1084
      %v1086 = vrcp.pop %v1075
      %v1087 = vmul.f32 1.0, %v1086
      %v1088 = vrcp.pop %v1076
      %v1089 = vmul.f32 1.0, %v1088
      %v1090 = vrcp.pop %v1077
      %v1091 = vmul.f32 1.0, %v1090
      %v1092 = vrcp.pop %v1078
      %v1093 = vmul.f32 1.0, %v1092
      %v1094 = vrcp.pop %v1079
      %v1095 = vmul.f32 1.0, %v1094
      %v1096 = vmul.f32 %v1025, %v1081
      %v1097 = vmul.f32 %v1026, %v1083
      %v1098 = vmul.f32 %v1027, %v1085
      %v1099 = vmul.f32 %v1028, %v1087
      %v1100 = vmul.f32 %v1029, %v1089
      %v1101 = vmul.f32 %v1030, %v1091
      %v1102 = vmul.f32 %v1031, %v1093
      %v1103 = vmul.f32 %v1032, %v1095
      %1104 = vst.msk [vmem:[#allocation2 + $0x20] sm:$0xff] %vm279, %v1096
      %1105 = vst.msk [vmem:[#allocation2 + $0x28] sm:$0xff] %vm279, %v1097
      %1106 = vst.msk [vmem:[#allocation2 + $0x30] sm:$0xff] %vm279, %v1098
      %1107 = vst.msk [vmem:[#allocation2 + $0x38] sm:$0xff] %vm279, %v1099
      %1108 = vst.msk [vmem:[#allocation2 + $0x40] sm:$0xff] %vm279, %v1100
      %1109 = vst.msk [vmem:[#allocation2 + $0x48] sm:$0xff] %vm279, %v1101
      %1110 = vst.msk [vmem:[#allocation2 + $0x50] sm:$0xff] %vm279, %v1102
      %1111 = vst.msk [vmem:[#allocation2 + $0x58] sm:$0xff] %vm279, %v1103
      %v1112 = vld [vmem:[#allocation2 + $0x18] sm:$0xff]
      %v1113 = vld [vmem:[#allocation2 + $0x20] sm:$0xff]
      %v1114 = vld [vmem:[#allocation2 + $0x28] sm:$0xff]
      %v1115 = vld [vmem:[#allocation2 + $0x30] sm:$0xff]
      %v1116 = vld [vmem:[#allocation2 + $0x38] sm:$0xff]
      %v1117 = vld [vmem:[#allocation2 + $0x40] sm:$0xff]
      %v1118 = vld [vmem:[#allocation2 + $0x48] sm:$0xff]
      %v1119 = vld [vmem:[#allocation2 + $0x50] sm:$0xff]
      %v1120 = vld [vmem:[#allocation2 + $0x58] sm:$0xff]
      %v1121 = vld [vmem:[#allocation2 + $0x60] sm:$0xff]
      %vm1130 = vcmask 1044480
      %v1131 = vrot.slane %v1113, 3
      %v1132 = vrot.slane %v1114, 3
      %v1133 = vsel %vm1130, %v1131, %v1132
      %v1134 = vrot.slane %v1115, 3
      %v1135 = vsel %vm1130, %v1132, %v1134
      %v1136 = vrot.slane %v1116, 3
      %v1137 = vsel %vm1130, %v1134, %v1136
      %v1138 = vrot.slane %v1117, 3
      %v1139 = vsel %vm1130, %v1136, %v1138
      %v1140 = vrot.slane %v1118, 3
      %v1141 = vsel %vm1130, %v1138, %v1140
      %v1142 = vrot.slane %v1119, 3
      %v1143 = vsel %vm1130, %v1140, %v1142
      %v1144 = vrot.slane %v1120, 3
      %v1145 = vsel %vm1130, %v1142, %v1144
      %1146 = vrot.lane.b32.xlu0 %v1131, 32
      %v1147 = vpop.permute.xlu0 %1146
      %1148 = vrot.lane.b32.xlu0 %v1133, 32
      %v1149 = vpop.permute.xlu0 %1148
      %1150 = vrot.lane.b32.xlu0 %v1135, 32
      %v1151 = vpop.permute.xlu0 %1150
      %1152 = vrot.lane.b32.xlu0 %v1137, 32
      %v1153 = vpop.permute.xlu0 %1152
      %1154 = vrot.lane.b32.xlu0 %v1139, 32
      %v1155 = vpop.permute.xlu0 %1154
      %1156 = vrot.lane.b32.xlu0 %v1141, 32
      %v1157 = vpop.permute.xlu0 %1156
      %1158 = vrot.lane.b32.xlu0 %v1143, 32
      %v1159 = vpop.permute.xlu0 %1158
      %1160 = vrot.lane.b32.xlu0 %v1145, 32
      %v1161 = vpop.permute.xlu0 %1160
      %1162 = vrot.lane.b32.xlu0 %v1144, 32
      %v1163 = vpop.permute.xlu0 %1162
      %vm1174 = vcmask 1041408
      %v1175 = vrot.slane %v1113, 6
      %v1176 = vrot.slane %v1114, 6
      %v1177 = vsel %vm1174, %v1175, %v1176
      %v1178 = vrot.slane %v1115, 6
      %v1179 = vsel %vm1174, %v1176, %v1178
      %v1180 = vrot.slane %v1116, 6
      %v1181 = vsel %vm1174, %v1178, %v1180
      %v1182 = vrot.slane %v1117, 6
      %v1183 = vsel %vm1174, %v1180, %v1182
      %v1184 = vrot.slane %v1118, 6
      %v1185 = vsel %vm1174, %v1182, %v1184
      %v1186 = vrot.slane %v1119, 6
      %v1187 = vsel %vm1174, %v1184, %v1186
      %v1188 = vrot.slane %v1120, 6
      %v1189 = vsel %vm1174, %v1186, %v1188
      %v1190 = vrot.slane %v1121, 6
      %v1191 = vsel %vm1174, %v1188, %v1190
      %1192 = vrot.lane.b32.xlu0 %v1175, 64
      %v1193 = vpop.permute.xlu0 %1192
      %1194 = vrot.lane.b32.xlu0 %v1177, 64
      %v1195 = vpop.permute.xlu0 %1194
      %1196 = vrot.lane.b32.xlu0 %v1179, 64
      %v1197 = vpop.permute.xlu0 %1196
      %1198 = vrot.lane.b32.xlu0 %v1181, 64
      %v1199 = vpop.permute.xlu0 %1198
      %1200 = vrot.lane.b32.xlu0 %v1183, 64
      %v1201 = vpop.permute.xlu0 %1200
      %1202 = vrot.lane.b32.xlu0 %v1185, 64
      %v1203 = vpop.permute.xlu0 %1202
      %1204 = vrot.lane.b32.xlu0 %v1187, 64
      %v1205 = vpop.permute.xlu0 %1204
      %1206 = vrot.lane.b32.xlu0 %v1189, 64
      %v1207 = vpop.permute.xlu0 %1206
      %1208 = vrot.lane.b32.xlu0 %v1191, 64
      %v1209 = vpop.permute.xlu0 %1208
      %v1219 = vsel %vm279, %v1112, %v1147
      %v1220 = vsel %vm279, %v1113, %v1149
      %v1221 = vsel %vm279, %v1114, %v1151
      %v1222 = vsel %vm279, %v1115, %v1153
      %v1223 = vsel %vm279, %v1116, %v1155
      %v1224 = vsel %vm279, %v1117, %v1157
      %v1225 = vsel %vm279, %v1118, %v1159
      %v1226 = vsel %vm279, %v1119, %v1161
      %v1227 = vsel %vm279, %v1120, %v1163
      %v1228 = vsel %vm505, %v1219, %v1193
      %v1229 = vsel %vm505, %v1220, %v1195
      %v1230 = vsel %vm505, %v1221, %v1197
      %v1231 = vsel %vm505, %v1222, %v1199
      %v1232 = vsel %vm505, %v1223, %v1201
      %v1233 = vsel %vm505, %v1224, %v1203
      %v1234 = vsel %vm505, %v1225, %v1205
      %v1235 = vsel %vm505, %v1226, %v1207
      %v1236 = vsel %vm505, %v1227, %v1209
      %v1238 = vlaneseq
      %v1239 = vshrl.u32 %v1238, 7
      %v1240 = vsub.s32 0, %v1239
      %v1241 = vrot.slane %v1047, %v1240
      %vm1252 = vcmask 1042432
      %v1253 = vrot.slane %v1228, 5
      %v1254 = vrot.slane %v1229, 5
      %v1255 = vsel %vm1252, %v1253, %v1254
      %v1256 = vrot.slane %v1230, 5
      %v1257 = vsel %vm1252, %v1254, %v1256
      %v1258 = vrot.slane %v1231, 5
      %v1259 = vsel %vm1252, %v1256, %v1258
      %v1260 = vrot.slane %v1232, 5
      %v1261 = vsel %vm1252, %v1258, %v1260
      %v1262 = vrot.slane %v1233, 5
      %v1263 = vsel %vm1252, %v1260, %v1262
      %v1264 = vrot.slane %v1234, 5
      %v1265 = vsel %vm1252, %v1262, %v1264
      %v1266 = vrot.slane %v1235, 5
      %v1267 = vsel %vm1252, %v1264, %v1266
      %v1268 = vrot.slane %v1236, 5
      %v1269 = vsel %vm1252, %v1266, %v1268
      %v1270 = vsel %vm548, %v1255, 0
      %v1272 = vsel %vm548, %v1257, 0
      %v1274 = vsel %vm548, %v1259, 0
      %v1276 = vsel %vm548, %v1261, 0
      %v1278 = vsel %vm548, %v1263, 0
      %v1280 = vsel %vm548, %v1265, 0
      %v1282 = vsel %vm548, %v1267, 0
      %v1284 = vsel %vm548, %v1269, 0
      %1286 = vmatprep.subr.mxu0 0.0
      %1287 = vmatpush1.msra.mxu0 %v1034
      %1288 = vmatprep.subr.mxu0 0.0
      %1289 = vmatpush1.msra.mxu0 %v1035
      %1290 = vmatprep.subr.mxu0 0.0
      %1291 = vmatpush1.msra.mxu0 %v1036
      %1292 = vmatprep.subr.mxu0 0.0
      %1293 = vmatpush1.msra.mxu0 %v1037
      %1294 = vmatprep.subr.mxu0 0.0
      %1295 = vmatpush1.msra.mxu0 %v1038
      %1296 = vmatprep.subr.mxu0 0.0
      %1297 = vmatpush1.msra.mxu0 %v1039
      %1298 = vmatprep.subr.mxu0 0.0
      %1299 = vmatpush1.msra.mxu0 %v1040
      %1300 = vmatprep.subr.mxu0 0.0
      %1301 = vmatpush1.msra.mxu0 %v1041
      %1302 = vmatprep.subr.mxu0 0.0
      %1303 = vmatpush1.msra.mxu0 %v1042
      %1304 = vmatprep.subr.mxu0 0.0
      %1305 = vmatpush1.msra.mxu0 %v1043
      %1306 = vmatprep.subr.mxu0 0.0
      %1307 = vmatpush1.msra.mxu0 %v1044
      %1308 = vmatprep.subr.mxu0 0.0
      %1309 = vmatpush1.msra.mxu0 %v1045
      %1310 = vmatprep.subr.mxu0 0.0
      %1311 = vmatpush1.msra.mxu0 0.0
      %1312 = vmatprep.subr.mxu0 0.0
      %1313 = vmatpush1.msra.mxu0 0.0
      %1314 = vmatprep.subr.mxu0 0.0
      %1315 = vmatpush1.msra.mxu0 0.0
      %1316 = vmatprep.subr.mxu0 0.0
      %1317 = vmatpush1.msra.mxu0 0.0
      %1318 = vmatprep.subr.mxu0 0.0
      %1319 = vmatpush1.msra.mxu0 0.0
      %1320 = vmatprep.subr.mxu0 0.0
      %1321 = vmatpush1.msra.mxu0 0.0
      %1322 = vmatprep.subr.mxu0 0.0
      %1323 = vmatpush1.msra.mxu0 0.0
      %1324 = vmatprep.subr.mxu0 0.0
      %1325 = vmatpush1.msra.mxu0 0.0
      %1326 = vmatprep.subr.mxu0 0.0
      %1327 = vmatpush1.msra.mxu0 0.0
      %1328 = vmatprep.subr.mxu0 0.0
      %1329 = vmatpush1.msra.mxu0 0.0
      %1330 = vmatprep.subr.mxu0 0.0
      %1331 = vmatpush1.msra.mxu0 0.0
      %1332 = vmatprep.subr.mxu0 0.0
      %1333 = vmatpush1.msra.mxu0 0.0
      %1334 = vmatprep.subr.mxu0 0.0
      %1335 = vmatpush1.msra.mxu0 0.0
      %1336 = vmatprep.subr.mxu0 0.0
      %1337 = vmatpush1.msra.mxu0 0.0
      %1338 = vmatprep.subr.mxu0 0.0
      %1339 = vmatpush1.msra.mxu0 0.0
      %1340 = vmatprep.subr.mxu0 0.0
      %1341 = vmatpush1.msra.mxu0 0.0
      %1342 = vmatprep.subr.mxu0 0.0
      %1343 = vmatpush1.msra.mxu0 0.0
      %1344 = vmatprep.subr.mxu0 0.0
      %1345 = vmatpush1.msra.mxu0 0.0
      %1346 = vmatprep.subr.mxu0 0.0
      %1347 = vmatpush1.msra.mxu0 0.0
      %1348 = vmatprep.subr.mxu0 0.0
      %1349 = vmatpush1.msra.mxu0 0.0
      %1350 = vmatprep.mubr.f32.mxu0 0.0
      %1351 = vmatmul.mubr.f32.gmra.mrb[0].mxu0 %v1270
      %v1352 = vpop.f32.mrb[0].mxu0
      %v1353 = vadd.f32 %v1241, %v1352
      %v1354 = vpop.f32.mrb[0].mxu0
      %1355 = vmatprep.mubr.f32.mxu0 0.0
      %1356 = vmatmul.mubr.f32.gmra.mrb[0].mxu0 %v1272
      %v1357 = vpop.f32.mrb[0].mxu0
      %v1358 = vadd.f32 %v1241, %v1357
      %v1359 = vpop.f32.mrb[0].mxu0
      %1360 = vmatprep.mubr.f32.mxu0 0.0
      %1361 = vmatmul.mubr.f32.gmra.mrb[0].mxu0 %v1274
      %v1362 = vpop.f32.mrb[0].mxu0
      %v1363 = vadd.f32 %v1241, %v1362
      %v1364 = vpop.f32.mrb[0].mxu0
      %1365 = vmatprep.mubr.f32.mxu0 0.0
      %1366 = vmatmul.mubr.f32.gmra.mrb[0].mxu0 %v1276
      %v1367 = vpop.f32.mrb[0].mxu0
      %v1368 = vadd.f32 %v1241, %v1367
      %v1369 = vpop.f32.mrb[0].mxu0
      %1370 = vmatprep.mubr.f32.mxu0 0.0
      %1371 = vmatmul.mubr.f32.gmra.mrb[0].mxu0 %v1278
      %v1372 = vpop.f32.mrb[0].mxu0
      %v1373 = vadd.f32 %v1241, %v1372
      %v1374 = vpop.f32.mrb[0].mxu0
      %1375 = vmatprep.mubr.f32.mxu0 0.0
      %1376 = vmatmul.mubr.f32.gmra.mrb[0].mxu0 %v1280
      %v1377 = vpop.f32.mrb[0].mxu0
      %v1378 = vadd.f32 %v1241, %v1377
      %v1379 = vpop.f32.mrb[0].mxu0
      %1380 = vmatprep.mubr.f32.mxu0 0.0
      %1381 = vmatmul.mubr.f32.gmra.mrb[0].mxu0 %v1282
      %v1382 = vpop.f32.mrb[0].mxu0
      %v1383 = vadd.f32 %v1241, %v1382
      %v1384 = vpop.f32.mrb[0].mxu0
      %1385 = vmatprep.mubr.f32.mxu0 0.0
      %1386 = vmatmul.mubr.f32.gmra.mrb[0].mxu0 %v1284
      %v1387 = vpop.f32.mrb[0].mxu0
      %v1388 = vadd.f32 %v1241, %v1387
      %v1389 = vpop.f32.mrb[0].mxu0
      %1390 = vdwg.mxu0
      %s1391 = scalar_lea.vmem %s1, 288
      %v1392 = vld [vmem:[%s1391] sm:$0xff]
      %v1393 = vld [vmem:[%s1391 + $0x8] sm:$0xff]
      %v1394 = vld [vmem:[%s1391 + $0x10] sm:$0xff]
      %v1395 = vld [vmem:[%s1391 + $0x18] sm:$0xff]
      %v1396 = vld [vmem:[%s1391 + $0x20] sm:$0xff]
      %v1397 = vld [vmem:[%s1391 + $0x28] sm:$0xff]
      %v1398 = vld [vmem:[%s1391 + $0x30] sm:$0xff]
      %v1399 = vld [vmem:[%s1391 + $0x38] sm:$0xff]
      %v1400 = vld [vmem:[%s1391 + $0x40] sm:$0xff]
      %v1401 = vld [vmem:[%s1391 + $0x48] sm:$0xff]
      %v1402 = vld [vmem:[%s1391 + $0x50] sm:$0xff]
      %v1403 = vld [vmem:[%s1391 + $0x58] sm:$0xff]
      %s1404 = scalar_lea.vmem %s2, 3
      %v1405 = vld [vmem:[%s1404] sm:$0x1]
      %v1406 = vxor.u32 %v1353, 2147483648
      %v1407 = vxor.u32 %v1358, 2147483648
      %v1408 = vxor.u32 %v1363, 2147483648
      %v1409 = vxor.u32 %v1368, 2147483648
      %v1410 = vxor.u32 %v1373, 2147483648
      %v1411 = vxor.u32 %v1378, 2147483648
      %v1412 = vxor.u32 %v1383, 2147483648
      %v1413 = vxor.u32 %v1388, 2147483648
      %v1414 = vmul.f32 %v1406, 1.442695
      %v1415 = vpow.pop %v1414
      %v1416 = vmul.f32 %v1407, 1.442695
      %v1417 = vpow.pop %v1416
      %v1418 = vmul.f32 %v1408, 1.442695
      %v1419 = vpow.pop %v1418
      %v1420 = vmul.f32 %v1409, 1.442695
      %v1421 = vpow.pop %v1420
      %v1422 = vmul.f32 %v1410, 1.442695
      %v1423 = vpow.pop %v1422
      %v1424 = vmul.f32 %v1411, 1.442695
      %v1425 = vpow.pop %v1424
      %v1426 = vmul.f32 %v1412, 1.442695
      %v1427 = vpow.pop %v1426
      %v1428 = vmul.f32 %v1413, 1.442695
      %v1429 = vpow.pop %v1428
      %v1430 = vadd.f32 %v1415, 1.0
      %v1431 = vadd.f32 %v1417, 1.0
      %v1432 = vadd.f32 %v1419, 1.0
      %v1433 = vadd.f32 %v1421, 1.0
      %v1434 = vadd.f32 %v1423, 1.0
      %v1435 = vadd.f32 %v1425, 1.0
      %v1436 = vadd.f32 %v1427, 1.0
      %v1437 = vadd.f32 %v1429, 1.0
      %v1438 = vrcp.pop %v1430
      %v1439 = vmul.f32 1.0, %v1438
      %v1440 = vrcp.pop %v1431
      %v1441 = vmul.f32 1.0, %v1440
      %v1442 = vrcp.pop %v1432
      %v1443 = vmul.f32 1.0, %v1442
      %v1444 = vrcp.pop %v1433
      %v1445 = vmul.f32 1.0, %v1444
      %v1446 = vrcp.pop %v1434
      %v1447 = vmul.f32 1.0, %v1446
      %v1448 = vrcp.pop %v1435
      %v1449 = vmul.f32 1.0, %v1448
      %v1450 = vrcp.pop %v1436
      %v1451 = vmul.f32 1.0, %v1450
      %v1452 = vrcp.pop %v1437
      %v1453 = vmul.f32 1.0, %v1452
      %v1454 = vmul.f32 %v1353, %v1439
      %v1455 = vmul.f32 %v1358, %v1441
      %v1456 = vmul.f32 %v1363, %v1443
      %v1457 = vmul.f32 %v1368, %v1445
      %v1458 = vmul.f32 %v1373, %v1447
      %v1459 = vmul.f32 %v1378, %v1449
      %v1460 = vmul.f32 %v1383, %v1451
      %v1461 = vmul.f32 %v1388, %v1453
      %1462 = vst.msk [vmem:[#allocation2 + $0x20] sm:$0xff] %vm279, %v1454
      %1463 = vst.msk [vmem:[#allocation2 + $0x28] sm:$0xff] %vm279, %v1455
      %1464 = vst.msk [vmem:[#allocation2 + $0x30] sm:$0xff] %vm279, %v1456
      %1465 = vst.msk [vmem:[#allocation2 + $0x38] sm:$0xff] %vm279, %v1457
      %1466 = vst.msk [vmem:[#allocation2 + $0x40] sm:$0xff] %vm279, %v1458
      %1467 = vst.msk [vmem:[#allocation2 + $0x48] sm:$0xff] %vm279, %v1459
      %1468 = vst.msk [vmem:[#allocation2 + $0x50] sm:$0xff] %vm279, %v1460
      %1469 = vst.msk [vmem:[#allocation2 + $0x58] sm:$0xff] %vm279, %v1461
      %v1470 = vld [vmem:[#allocation2 + $0x18] sm:$0xff]
      %v1471 = vld [vmem:[#allocation2 + $0x20] sm:$0xff]
      %v1472 = vld [vmem:[#allocation2 + $0x28] sm:$0xff]
      %v1473 = vld [vmem:[#allocation2 + $0x30] sm:$0xff]
      %v1474 = vld [vmem:[#allocation2 + $0x38] sm:$0xff]
      %v1475 = vld [vmem:[#allocation2 + $0x40] sm:$0xff]
      %v1476 = vld [vmem:[#allocation2 + $0x48] sm:$0xff]
      %v1477 = vld [vmem:[#allocation2 + $0x50] sm:$0xff]
      %v1478 = vld [vmem:[#allocation2 + $0x58] sm:$0xff]
      %v1479 = vld [vmem:[#allocation2 + $0x60] sm:$0xff]
      %v1488 = vrot.slane %v1471, 1
      %v1489 = vrot.slane %v1472, 1
      %v1490 = vsel %vm407, %v1488, %v1489
      %v1491 = vrot.slane %v1473, 1
      %v1492 = vsel %vm407, %v1489, %v1491
      %v1493 = vrot.slane %v1474, 1
      %v1494 = vsel %vm407, %v1491, %v1493
      %v1495 = vrot.slane %v1475, 1
      %v1496 = vsel %vm407, %v1493, %v1495
      %v1497 = vrot.slane %v1476, 1
      %v1498 = vsel %vm407, %v1495, %v1497
      %v1499 = vrot.slane %v1477, 1
      %v1500 = vsel %vm407, %v1497, %v1499
      %v1501 = vrot.slane %v1478, 1
      %v1502 = vsel %vm407, %v1499, %v1501
      %1503 = vrot.lane.b32.xlu0 %v1488, 32
      %v1504 = vpop.permute.xlu0 %1503
      %1505 = vrot.lane.b32.xlu0 %v1490, 32
      %v1506 = vpop.permute.xlu0 %1505
      %1507 = vrot.lane.b32.xlu0 %v1492, 32
      %v1508 = vpop.permute.xlu0 %1507
      %1509 = vrot.lane.b32.xlu0 %v1494, 32
      %v1510 = vpop.permute.xlu0 %1509
      %1511 = vrot.lane.b32.xlu0 %v1496, 32
      %v1512 = vpop.permute.xlu0 %1511
      %1513 = vrot.lane.b32.xlu0 %v1498, 32
      %v1514 = vpop.permute.xlu0 %1513
      %1515 = vrot.lane.b32.xlu0 %v1500, 32
      %v1516 = vpop.permute.xlu0 %1515
      %1517 = vrot.lane.b32.xlu0 %v1502, 32
      %v1518 = vpop.permute.xlu0 %1517
      %1519 = vrot.lane.b32.xlu0 %v1501, 32
      %v1520 = vpop.permute.xlu0 %1519
      %v1531 = vrot.slane %v1471, 2
      %v1532 = vrot.slane %v1472, 2
      %v1533 = vsel %vm451, %v1531, %v1532
      %v1534 = vrot.slane %v1473, 2
      %v1535 = vsel %vm451, %v1532, %v1534
      %v1536 = vrot.slane %v1474, 2
      %v1537 = vsel %vm451, %v1534, %v1536
      %v1538 = vrot.slane %v1475, 2
      %v1539 = vsel %vm451, %v1536, %v1538
      %v1540 = vrot.slane %v1476, 2
      %v1541 = vsel %vm451, %v1538, %v1540
      %v1542 = vrot.slane %v1477, 2
      %v1543 = vsel %vm451, %v1540, %v1542
      %v1544 = vrot.slane %v1478, 2
      %v1545 = vsel %vm451, %v1542, %v1544
      %v1546 = vrot.slane %v1479, 2
      %v1547 = vsel %vm451, %v1544, %v1546
      %1548 = vrot.lane.b32.xlu0 %v1531, 64
      %v1549 = vpop.permute.xlu0 %1548
      %1550 = vrot.lane.b32.xlu0 %v1533, 64
      %v1551 = vpop.permute.xlu0 %1550
      %1552 = vrot.lane.b32.xlu0 %v1535, 64
      %v1553 = vpop.permute.xlu0 %1552
      %1554 = vrot.lane.b32.xlu0 %v1537, 64
      %v1555 = vpop.permute.xlu0 %1554
      %1556 = vrot.lane.b32.xlu0 %v1539, 64
      %v1557 = vpop.permute.xlu0 %1556
      %1558 = vrot.lane.b32.xlu0 %v1541, 64
      %v1559 = vpop.permute.xlu0 %1558
      %1560 = vrot.lane.b32.xlu0 %v1543, 64
      %v1561 = vpop.permute.xlu0 %1560
      %1562 = vrot.lane.b32.xlu0 %v1545, 64
      %v1563 = vpop.permute.xlu0 %1562
      %1564 = vrot.lane.b32.xlu0 %v1547, 64
      %v1565 = vpop.permute.xlu0 %1564
      %v1575 = vsel %vm279, %v1470, %v1504
      %v1576 = vsel %vm279, %v1471, %v1506
      %v1577 = vsel %vm279, %v1472, %v1508
      %v1578 = vsel %vm279, %v1473, %v1510
      %v1579 = vsel %vm279, %v1474, %v1512
      %v1580 = vsel %vm279, %v1475, %v1514
      %v1581 = vsel %vm279, %v1476, %v1516
      %v1582 = vsel %vm279, %v1477, %v1518
      %v1583 = vsel %vm279, %v1478, %v1520
      %v1584 = vsel %vm505, %v1575, %v1549
      %v1585 = vsel %vm505, %v1576, %v1551
      %v1586 = vsel %vm505, %v1577, %v1553
      %v1587 = vsel %vm505, %v1578, %v1555
      %v1588 = vsel %vm505, %v1579, %v1557
      %v1589 = vsel %vm505, %v1580, %v1559
      %v1590 = vsel %vm505, %v1581, %v1561
      %v1591 = vsel %vm505, %v1582, %v1563
      %v1592 = vsel %vm505, %v1583, %v1565
      %v1594 = vlaneseq
      %v1595 = vshrl.u32 %v1594, 7
      %v1596 = vsub.s32 0, %v1595
      %v1597 = vrot.slane %v1405, %v1596
      %v1608 = vrot.slane %v1584, 7
      %v1609 = vrot.slane %v1585, 7
      %v1610 = vsel %vm530, %v1608, %v1609
      %v1611 = vrot.slane %v1586, 7
      %v1612 = vsel %vm530, %v1609, %v1611
      %v1613 = vrot.slane %v1587, 7
      %v1614 = vsel %vm530, %v1611, %v1613
      %v1615 = vrot.slane %v1588, 7
      %v1616 = vsel %vm530, %v1613, %v1615
      %v1617 = vrot.slane %v1589, 7
      %v1618 = vsel %vm530, %v1615, %v1617
      %v1619 = vrot.slane %v1590, 7
      %v1620 = vsel %vm530, %v1617, %v1619
      %v1621 = vrot.slane %v1591, 7
      %v1622 = vsel %vm530, %v1619, %v1621
      %v1623 = vrot.slane %v1592, 7
      %v1624 = vsel %vm530, %v1621, %v1623
      %v1625 = vsel %vm548, %v1610, 0
      %v1627 = vsel %vm548, %v1612, 0
      %v1629 = vsel %vm548, %v1614, 0
      %v1631 = vsel %vm548, %v1616, 0
      %v1633 = vsel %vm548, %v1618, 0
      %v1635 = vsel %vm548, %v1620, 0
      %v1637 = vsel %vm548, %v1622, 0
      %v1639 = vsel %vm548, %v1624, 0
      %1641 = vmatprep.subr.mxu0 0.0
      %1642 = vmatpush1.msra.mxu0 %v1392
      %1643 = vmatprep.subr.mxu0 0.0
      %1644 = vmatpush1.msra.mxu0 %v1393
      %1645 = vmatprep.subr.mxu0 0.0
      %1646 = vmatpush1.msra.mxu0 %v1394
      %1647 = vmatprep.subr.mxu0 0.0
      %1648 = vmatpush1.msra.mxu0 %v1395
      %1649 = vmatprep.subr.mxu0 0.0
      %1650 = vmatpush1.msra.mxu0 %v1396
      %1651 = vmatprep.subr.mxu0 0.0
      %1652 = vmatpush1.msra.mxu0 %v1397
      %1653 = vmatprep.subr.mxu0 0.0
      %1654 = vmatpush1.msra.mxu0 %v1398
      %1655 = vmatprep.subr.mxu0 0.0
      %1656 = vmatpush1.msra.mxu0 %v1399
      %1657 = vmatprep.subr.mxu0 0.0
      %1658 = vmatpush1.msra.mxu0 %v1400
      %1659 = vmatprep.subr.mxu0 0.0
      %1660 = vmatpush1.msra.mxu0 %v1401
      %1661 = vmatprep.subr.mxu0 0.0
      %1662 = vmatpush1.msra.mxu0 %v1402
      %1663 = vmatprep.subr.mxu0 0.0
      %1664 = vmatpush1.msra.mxu0 %v1403
      %1665 = vmatprep.subr.mxu0 0.0
      %1666 = vmatpush1.msra.mxu0 0.0
      %1667 = vmatprep.subr.mxu0 0.0
      %1668 = vmatpush1.msra.mxu0 0.0
      %1669 = vmatprep.subr.mxu0 0.0
      %1670 = vmatpush1.msra.mxu0 0.0
      %1671 = vmatprep.subr.mxu0 0.0
      %1672 = vmatpush1.msra.mxu0 0.0
      %1673 = vmatprep.subr.mxu0 0.0
      %1674 = vmatpush1.msra.mxu0 0.0
      %1675 = vmatprep.subr.mxu0 0.0
      %1676 = vmatpush1.msra.mxu0 0.0
      %1677 = vmatprep.subr.mxu0 0.0
      %1678 = vmatpush1.msra.mxu0 0.0
      %1679 = vmatprep.subr.mxu0 0.0
      %1680 = vmatpush1.msra.mxu0 0.0
      %1681 = vmatprep.subr.mxu0 0.0
      %1682 = vmatpush1.msra.mxu0 0.0
      %1683 = vmatprep.subr.mxu0 0.0
      %1684 = vmatpush1.msra.mxu0 0.0
      %1685 = vmatprep.subr.mxu0 0.0
      %1686 = vmatpush1.msra.mxu0 0.0
      %1687 = vmatprep.subr.mxu0 0.0
      %1688 = vmatpush1.msra.mxu0 0.0
      %1689 = vmatprep.subr.mxu0 0.0
      %1690 = vmatpush1.msra.mxu0 0.0
      %1691 = vmatprep.subr.mxu0 0.0
      %1692 = vmatpush1.msra.mxu0 0.0
      %1693 = vmatprep.subr.mxu0 0.0
      %1694 = vmatpush1.msra.mxu0 0.0
      %1695 = vmatprep.subr.mxu0 0.0
      %1696 = vmatpush1.msra.mxu0 0.0
      %1697 = vmatprep.subr.mxu0 0.0
      %1698 = vmatpush1.msra.mxu0 0.0
      %1699 = vmatprep.subr.mxu0 0.0
      %1700 = vmatpush1.msra.mxu0 0.0
      %1701 = vmatprep.subr.mxu0 0.0
      %1702 = vmatpush1.msra.mxu0 0.0
      %1703 = vmatprep.subr.mxu0 0.0
      %1704 = vmatpush1.msra.mxu0 0.0
      %1705 = vmatprep.mubr.f32.mxu0 0.0
      %1706 = vmatmul.mubr.f32.gmra.mrb[0].mxu0 %v1625
      %v1707 = vpop.f32.mrb[0].mxu0
      %v1708 = vadd.f32 %v1597, %v1707
      %v1709 = vpop.f32.mrb[0].mxu0
      %1710 = vmatprep.mubr.f32.mxu0 0.0
      %1711 = vmatmul.mubr.f32.gmra.mrb[0].mxu0 %v1627
      %v1712 = vpop.f32.mrb[0].mxu0
      %v1713 = vadd.f32 %v1597, %v1712
      %v1714 = vpop.f32.mrb[0].mxu0
      %1715 = vmatprep.mubr.f32.mxu0 0.0
      %1716 = vmatmul.mubr.f32.gmra.mrb[0].mxu0 %v1629
      %v1717 = vpop.f32.mrb[0].mxu0
      %v1718 = vadd.f32 %v1597, %v1717
      %v1719 = vpop.f32.mrb[0].mxu0
      %1720 = vmatprep.mubr.f32.mxu0 0.0
      %1721 = vmatmul.mubr.f32.gmra.mrb[0].mxu0 %v1631
      %v1722 = vpop.f32.mrb[0].mxu0
      %v1723 = vadd.f32 %v1597, %v1722
      %v1724 = vpop.f32.mrb[0].mxu0
      %1725 = vmatprep.mubr.f32.mxu0 0.0
      %1726 = vmatmul.mubr.f32.gmra.mrb[0].mxu0 %v1633
      %v1727 = vpop.f32.mrb[0].mxu0
      %v1728 = vadd.f32 %v1597, %v1727
      %v1729 = vpop.f32.mrb[0].mxu0
      %1730 = vmatprep.mubr.f32.mxu0 0.0
      %1731 = vmatmul.mubr.f32.gmra.mrb[0].mxu0 %v1635
      %v1732 = vpop.f32.mrb[0].mxu0
      %v1733 = vadd.f32 %v1597, %v1732
      %v1734 = vpop.f32.mrb[0].mxu0
      %1735 = vmatprep.mubr.f32.mxu0 0.0
      %1736 = vmatmul.mubr.f32.gmra.mrb[0].mxu0 %v1637
      %v1737 = vpop.f32.mrb[0].mxu0
      %v1738 = vadd.f32 %v1597, %v1737
      %v1739 = vpop.f32.mrb[0].mxu0
      %1740 = vmatprep.mubr.f32.mxu0 0.0
      %1741 = vmatmul.mubr.f32.gmra.mrb[0].mxu0 %v1639
      %v1742 = vpop.f32.mrb[0].mxu0
      %v1743 = vadd.f32 %v1597, %v1742
      %v1744 = vpop.f32.mrb[0].mxu0
      %1745 = vdwg.mxu0
      %v1746 = vadd.f32 %v1708, %v1025
      %v1747 = vadd.f32 %v1713, %v1026
      %v1748 = vadd.f32 %v1718, %v1027
      %v1749 = vadd.f32 %v1723, %v1028
      %v1750 = vadd.f32 %v1728, %v1029
      %v1751 = vadd.f32 %v1733, %v1030
      %v1752 = vadd.f32 %v1738, %v1031
      %v1753 = vadd.f32 %v1743, %v1032
      %s1754 = scalar_lea.vmem %s1, 384
      %v1755 = vld [vmem:[%s1754] sm:$0xff]
      %v1756 = vld [vmem:[%s1754 + $0x8] sm:$0xff]
      %v1757 = vld [vmem:[%s1754 + $0x10] sm:$0xff]
      %v1758 = vld [vmem:[%s1754 + $0x18] sm:$0xff]
      %v1759 = vld [vmem:[%s1754 + $0x20] sm:$0xff]
      %v1760 = vld [vmem:[%s1754 + $0x28] sm:$0xff]
      %v1761 = vld [vmem:[%s1754 + $0x30] sm:$0xff]
      %v1762 = vld [vmem:[%s1754 + $0x38] sm:$0xff]
      %v1763 = vld [vmem:[%s1754 + $0x40] sm:$0xff]
      %v1764 = vld [vmem:[%s1754 + $0x48] sm:$0xff]
      %v1765 = vld [vmem:[%s1754 + $0x50] sm:$0xff]
      %v1766 = vld [vmem:[%s1754 + $0x58] sm:$0xff]
      %s1767 = scalar_lea.vmem %s2, 4
      %v1768 = vld [vmem:[%s1767] sm:$0x1]
      %v1769 = vxor.u32 %v1746, 2147483648
      %v1770 = vxor.u32 %v1747, 2147483648
      %v1771 = vxor.u32 %v1748, 2147483648
      %v1772 = vxor.u32 %v1749, 2147483648
      %v1773 = vxor.u32 %v1750, 2147483648
      %v1774 = vxor.u32 %v1751, 2147483648
      %v1775 = vxor.u32 %v1752, 2147483648
      %v1776 = vxor.u32 %v1753, 2147483648
      %v1777 = vmul.f32 %v1769, 1.442695
      %v1778 = vpow.pop %v1777
      %v1779 = vmul.f32 %v1770, 1.442695
      %v1780 = vpow.pop %v1779
      %v1781 = vmul.f32 %v1771, 1.442695
      %v1782 = vpow.pop %v1781
      %v1783 = vmul.f32 %v1772, 1.442695
      %v1784 = vpow.pop %v1783
      %v1785 = vmul.f32 %v1773, 1.442695
      %v1786 = vpow.pop %v1785
      %v1787 = vmul.f32 %v1774, 1.442695
      %v1788 = vpow.pop %v1787
      %v1789 = vmul.f32 %v1775, 1.442695
      %v1790 = vpow.pop %v1789
      %v1791 = vmul.f32 %v1776, 1.442695
      %v1792 = vpow.pop %v1791
      %v1793 = vadd.f32 %v1778, 1.0
      %v1794 = vadd.f32 %v1780, 1.0
      %v1795 = vadd.f32 %v1782, 1.0
      %v1796 = vadd.f32 %v1784, 1.0
      %v1797 = vadd.f32 %v1786, 1.0
      %v1798 = vadd.f32 %v1788, 1.0
      %v1799 = vadd.f32 %v1790, 1.0
      %v1800 = vadd.f32 %v1792, 1.0
      %v1801 = vrcp.pop %v1793
      %v1802 = vmul.f32 1.0, %v1801
      %v1803 = vrcp.pop %v1794
      %v1804 = vmul.f32 1.0, %v1803
      %v1805 = vrcp.pop %v1795
      %v1806 = vmul.f32 1.0, %v1805
      %v1807 = vrcp.pop %v1796
      %v1808 = vmul.f32 1.0, %v1807
      %v1809 = vrcp.pop %v1797
      %v1810 = vmul.f32 1.0, %v1809
      %v1811 = vrcp.pop %v1798
      %v1812 = vmul.f32 1.0, %v1811
      %v1813 = vrcp.pop %v1799
      %v1814 = vmul.f32 1.0, %v1813
      %v1815 = vrcp.pop %v1800
      %v1816 = vmul.f32 1.0, %v1815
      %v1817 = vmul.f32 %v1746, %v1802
      %v1818 = vmul.f32 %v1747, %v1804
      %v1819 = vmul.f32 %v1748, %v1806
      %v1820 = vmul.f32 %v1749, %v1808
      %v1821 = vmul.f32 %v1750, %v1810
      %v1822 = vmul.f32 %v1751, %v1812
      %v1823 = vmul.f32 %v1752, %v1814
      %v1824 = vmul.f32 %v1753, %v1816
      %1825 = vst.msk [vmem:[#allocation2 + $0x20] sm:$0xff] %vm279, %v1817
      %1826 = vst.msk [vmem:[#allocation2 + $0x28] sm:$0xff] %vm279, %v1818
      %1827 = vst.msk [vmem:[#allocation2 + $0x30] sm:$0xff] %vm279, %v1819
      %1828 = vst.msk [vmem:[#allocation2 + $0x38] sm:$0xff] %vm279, %v1820
      %1829 = vst.msk [vmem:[#allocation2 + $0x40] sm:$0xff] %vm279, %v1821
      %1830 = vst.msk [vmem:[#allocation2 + $0x48] sm:$0xff] %vm279, %v1822
      %1831 = vst.msk [vmem:[#allocation2 + $0x50] sm:$0xff] %vm279, %v1823
      %1832 = vst.msk [vmem:[#allocation2 + $0x58] sm:$0xff] %vm279, %v1824
      %v1833 = vld [vmem:[#allocation2 + $0x18] sm:$0xff]
      %v1834 = vld [vmem:[#allocation2 + $0x20] sm:$0xff]
      %v1835 = vld [vmem:[#allocation2 + $0x28] sm:$0xff]
      %v1836 = vld [vmem:[#allocation2 + $0x30] sm:$0xff]
      %v1837 = vld [vmem:[#allocation2 + $0x38] sm:$0xff]
      %v1838 = vld [vmem:[#allocation2 + $0x40] sm:$0xff]
      %v1839 = vld [vmem:[#allocation2 + $0x48] sm:$0xff]
      %v1840 = vld [vmem:[#allocation2 + $0x50] sm:$0xff]
      %v1841 = vld [vmem:[#allocation2 + $0x58] sm:$0xff]
      %v1842 = vld [vmem:[#allocation2 + $0x60] sm:$0xff]
      %v1851 = vrot.slane %v1834, 5
      %v1852 = vrot.slane %v1835, 5
      %v1853 = vsel %vm1252, %v1851, %v1852
      %v1854 = vrot.slane %v1836, 5
      %v1855 = vsel %vm1252, %v1852, %v1854
      %v1856 = vrot.slane %v1837, 5
      %v1857 = vsel %vm1252, %v1854, %v1856
      %v1858 = vrot.slane %v1838, 5
      %v1859 = vsel %vm1252, %v1856, %v1858
      %v1860 = vrot.slane %v1839, 5
      %v1861 = vsel %vm1252, %v1858, %v1860
      %v1862 = vrot.slane %v1840, 5
      %v1863 = vsel %vm1252, %v1860, %v1862
      %v1864 = vrot.slane %v1841, 5
      %v1865 = vsel %vm1252, %v1862, %v1864
      %1866 = vrot.lane.b32.xlu0 %v1851, 32
      %v1867 = vpop.permute.xlu0 %1866
      %1868 = vrot.lane.b32.xlu0 %v1853, 32
      %v1869 = vpop.permute.xlu0 %1868
      %1870 = vrot.lane.b32.xlu0 %v1855, 32
      %v1871 = vpop.permute.xlu0 %1870
      %1872 = vrot.lane.b32.xlu0 %v1857, 32
      %v1873 = vpop.permute.xlu0 %1872
      %1874 = vrot.lane.b32.xlu0 %v1859, 32
      %v1875 = vpop.permute.xlu0 %1874
      %1876 = vrot.lane.b32.xlu0 %v1861, 32
      %v1877 = vpop.permute.xlu0 %1876
      %1878 = vrot.lane.b32.xlu0 %v1863, 32
      %v1879 = vpop.permute.xlu0 %1878
      %1880 = vrot.lane.b32.xlu0 %v1865, 32
      %v1881 = vpop.permute.xlu0 %1880
      %1882 = vrot.lane.b32.xlu0 %v1864, 32
      %v1883 = vpop.permute.xlu0 %1882
      %v1894 = vrot.slane %v1834, 2
      %v1895 = vrot.slane %v1835, 2
      %v1896 = vsel %vm451, %v1894, %v1895
      %v1897 = vrot.slane %v1836, 2
      %v1898 = vsel %vm451, %v1895, %v1897
      %v1899 = vrot.slane %v1837, 2
      %v1900 = vsel %vm451, %v1897, %v1899
      %v1901 = vrot.slane %v1838, 2
      %v1902 = vsel %vm451, %v1899, %v1901
      %v1903 = vrot.slane %v1839, 2
      %v1904 = vsel %vm451, %v1901, %v1903
      %v1905 = vrot.slane %v1840, 2
      %v1906 = vsel %vm451, %v1903, %v1905
      %v1907 = vrot.slane %v1841, 2
      %v1908 = vsel %vm451, %v1905, %v1907
      %v1909 = vrot.slane %v1842, 2
      %v1910 = vsel %vm451, %v1907, %v1909
      %1911 = vrot.lane.b32.xlu0 %v1896, 64
      %v1912 = vpop.permute.xlu0 %1911
      %1913 = vrot.lane.b32.xlu0 %v1898, 64
      %v1914 = vpop.permute.xlu0 %1913
      %1915 = vrot.lane.b32.xlu0 %v1900, 64
      %v1916 = vpop.permute.xlu0 %1915
      %1917 = vrot.lane.b32.xlu0 %v1902, 64
      %v1918 = vpop.permute.xlu0 %1917
      %1919 = vrot.lane.b32.xlu0 %v1904, 64
      %v1920 = vpop.permute.xlu0 %1919
      %1921 = vrot.lane.b32.xlu0 %v1906, 64
      %v1922 = vpop.permute.xlu0 %1921
      %1923 = vrot.lane.b32.xlu0 %v1908, 64
      %v1924 = vpop.permute.xlu0 %1923
      %1925 = vrot.lane.b32.xlu0 %v1910, 64
      %v1926 = vpop.permute.xlu0 %1925
      %1927 = vrot.lane.b32.xlu0 %v1909, 64
      %v1928 = vpop.permute.xlu0 %1927
      %v1938 = vsel %vm279, %v1833, %v1867
      %v1939 = vsel %vm279, %v1834, %v1869
      %v1940 = vsel %vm279, %v1835, %v1871
      %v1941 = vsel %vm279, %v1836, %v1873
      %v1942 = vsel %vm279, %v1837, %v1875
      %v1943 = vsel %vm279, %v1838, %v1877
      %v1944 = vsel %vm279, %v1839, %v1879
      %v1945 = vsel %vm279, %v1840, %v1881
      %v1946 = vsel %vm279, %v1841, %v1883
      %v1947 = vsel %vm505, %v1938, %v1912
      %v1948 = vsel %vm505, %v1939, %v1914
      %v1949 = vsel %vm505, %v1940, %v1916
      %v1950 = vsel %vm505, %v1941, %v1918
      %v1951 = vsel %vm505, %v1942, %v1920
      %v1952 = vsel %vm505, %v1943, %v1922
      %v1953 = vsel %vm505, %v1944, %v1924
      %v1954 = vsel %vm505, %v1945, %v1926
      %v1955 = vsel %vm505, %v1946, %v1928
      %v1957 = vlaneseq
      %v1958 = vshrl.u32 %v1957, 7
      %v1959 = vsub.s32 0, %v1958
      %v1960 = vrot.slane %v1768, %v1959
      %v1971 = vrot.slane %v1947, 3
      %v1972 = vrot.slane %v1948, 3
      %v1973 = vsel %vm1130, %v1971, %v1972
      %v1974 = vrot.slane %v1949, 3
      %v1975 = vsel %vm1130, %v1972, %v1974
      %v1976 = vrot.slane %v1950, 3
      %v1977 = vsel %vm1130, %v1974, %v1976
      %v1978 = vrot.slane %v1951, 3
      %v1979 = vsel %vm1130, %v1976, %v1978
      %v1980 = vrot.slane %v1952, 3
      %v1981 = vsel %vm1130, %v1978, %v1980
      %v1982 = vrot.slane %v1953, 3
      %v1983 = vsel %vm1130, %v1980, %v1982
      %v1984 = vrot.slane %v1954, 3
      %v1985 = vsel %vm1130, %v1982, %v1984
      %v1986 = vrot.slane %v1955, 3
      %v1987 = vsel %vm1130, %v1984, %v1986
      %v1988 = vsel %vm548, %v1973, 0
      %v1990 = vsel %vm548, %v1975, 0
      %v1992 = vsel %vm548, %v1977, 0
      %v1994 = vsel %vm548, %v1979, 0
      %v1996 = vsel %vm548, %v1981, 0
      %v1998 = vsel %vm548, %v1983, 0
      %v2000 = vsel %vm548, %v1985, 0
      %v2002 = vsel %vm548, %v1987, 0
      %2004 = vmatprep.subr.mxu0 0.0
      %2005 = vmatpush1.msra.mxu0 %v1755
      %2006 = vmatprep.subr.mxu0 0.0
      %2007 = vmatpush1.msra.mxu0 %v1756
      %2008 = vmatprep.subr.mxu0 0.0
      %2009 = vmatpush1.msra.mxu0 %v1757
      %2010 = vmatprep.subr.mxu0 0.0
      %2011 = vmatpush1.msra.mxu0 %v1758
      %2012 = vmatprep.subr.mxu0 0.0
      %2013 = vmatpush1.msra.mxu0 %v1759
      %2014 = vmatprep.subr.mxu0 0.0
      %2015 = vmatpush1.msra.mxu0 %v1760
      %2016 = vmatprep.subr.mxu0 0.0
      %2017 = vmatpush1.msra.mxu0 %v1761
      %2018 = vmatprep.subr.mxu0 0.0
      %2019 = vmatpush1.msra.mxu0 %v1762
      %2020 = vmatprep.subr.mxu0 0.0
      %2021 = vmatpush1.msra.mxu0 %v1763
      %2022 = vmatprep.subr.mxu0 0.0
      %2023 = vmatpush1.msra.mxu0 %v1764
      %2024 = vmatprep.subr.mxu0 0.0
      %2025 = vmatpush1.msra.mxu0 %v1765
      %2026 = vmatprep.subr.mxu0 0.0
      %2027 = vmatpush1.msra.mxu0 %v1766
      %2028 = vmatprep.subr.mxu0 0.0
      %2029 = vmatpush1.msra.mxu0 0.0
      %2030 = vmatprep.subr.mxu0 0.0
      %2031 = vmatpush1.msra.mxu0 0.0
      %2032 = vmatprep.subr.mxu0 0.0
      %2033 = vmatpush1.msra.mxu0 0.0
      %2034 = vmatprep.subr.mxu0 0.0
      %2035 = vmatpush1.msra.mxu0 0.0
      %2036 = vmatprep.subr.mxu0 0.0
      %2037 = vmatpush1.msra.mxu0 0.0
      %2038 = vmatprep.subr.mxu0 0.0
      %2039 = vmatpush1.msra.mxu0 0.0
      %2040 = vmatprep.subr.mxu0 0.0
      %2041 = vmatpush1.msra.mxu0 0.0
      %2042 = vmatprep.subr.mxu0 0.0
      %2043 = vmatpush1.msra.mxu0 0.0
      %2044 = vmatprep.subr.mxu0 0.0
      %2045 = vmatpush1.msra.mxu0 0.0
      %2046 = vmatprep.subr.mxu0 0.0
      %2047 = vmatpush1.msra.mxu0 0.0
      %2048 = vmatprep.subr.mxu0 0.0
      %2049 = vmatpush1.msra.mxu0 0.0
      %2050 = vmatprep.subr.mxu0 0.0
      %2051 = vmatpush1.msra.mxu0 0.0
      %2052 = vmatprep.subr.mxu0 0.0
      %2053 = vmatpush1.msra.mxu0 0.0
      %2054 = vmatprep.subr.mxu0 0.0
      %2055 = vmatpush1.msra.mxu0 0.0
      %2056 = vmatprep.subr.mxu0 0.0
      %2057 = vmatpush1.msra.mxu0 0.0
      %2058 = vmatprep.subr.mxu0 0.0
      %2059 = vmatpush1.msra.mxu0 0.0
      %2060 = vmatprep.subr.mxu0 0.0
      %2061 = vmatpush1.msra.mxu0 0.0
      %2062 = vmatprep.subr.mxu0 0.0
      %2063 = vmatpush1.msra.mxu0 0.0
      %2064 = vmatprep.subr.mxu0 0.0
      %2065 = vmatpush1.msra.mxu0 0.0
      %2066 = vmatprep.subr.mxu0 0.0
      %2067 = vmatpush1.msra.mxu0 0.0
      %2068 = vmatprep.mubr.f32.mxu0 0.0
      %2069 = vmatmul.mubr.f32.gmra.mrb[0].mxu0 %v1988
      %v2070 = vpop.f32.mrb[0].mxu0
      %v2071 = vadd.f32 %v1960, %v2070
      %v2072 = vpop.f32.mrb[0].mxu0
      %2073 = vmatprep.mubr.f32.mxu0 0.0
      %2074 = vmatmul.mubr.f32.gmra.mrb[0].mxu0 %v1990
      %v2075 = vpop.f32.mrb[0].mxu0
      %v2076 = vadd.f32 %v1960, %v2075
      %v2077 = vpop.f32.mrb[0].mxu0
      %2078 = vmatprep.mubr.f32.mxu0 0.0
      %2079 = vmatmul.mubr.f32.gmra.mrb[0].mxu0 %v1992
      %v2080 = vpop.f32.mrb[0].mxu0
      %v2081 = vadd.f32 %v1960, %v2080
      %v2082 = vpop.f32.mrb[0].mxu0
      %2083 = vmatprep.mubr.f32.mxu0 0.0
      %2084 = vmatmul.mubr.f32.gmra.mrb[0].mxu0 %v1994
      %v2085 = vpop.f32.mrb[0].mxu0
      %v2086 = vadd.f32 %v1960, %v2085
      %v2087 = vpop.f32.mrb[0].mxu0
      %2088 = vmatprep.mubr.f32.mxu0 0.0
      %2089 = vmatmul.mubr.f32.gmra.mrb[0].mxu0 %v1996
      %v2090 = vpop.f32.mrb[0].mxu0
      %v2091 = vadd.f32 %v1960, %v2090
      %v2092 = vpop.f32.mrb[0].mxu0
      %2093 = vmatprep.mubr.f32.mxu0 0.0
      %2094 = vmatmul.mubr.f32.gmra.mrb[0].mxu0 %v1998
      %v2095 = vpop.f32.mrb[0].mxu0
      %v2096 = vadd.f32 %v1960, %v2095
      %v2097 = vpop.f32.mrb[0].mxu0
      %2098 = vmatprep.mubr.f32.mxu0 0.0
      %2099 = vmatmul.mubr.f32.gmra.mrb[0].mxu0 %v2000
      %v2100 = vpop.f32.mrb[0].mxu0
      %v2101 = vadd.f32 %v1960, %v2100
      %v2102 = vpop.f32.mrb[0].mxu0
      %2103 = vmatprep.mubr.f32.mxu0 0.0
      %2104 = vmatmul.mubr.f32.gmra.mrb[0].mxu0 %v2002
      %v2105 = vpop.f32.mrb[0].mxu0
      %v2106 = vadd.f32 %v1960, %v2105
      %v2107 = vpop.f32.mrb[0].mxu0
      %2108 = vdwg.mxu0
      %s2109 = scalar_lea.vmem %s1, 480
      %v2110 = vld [vmem:[%s2109] sm:$0xff]
      %v2111 = vld [vmem:[%s2109 + $0x8] sm:$0xff]
      %v2112 = vld [vmem:[%s2109 + $0x10] sm:$0xff]
      %v2113 = vld [vmem:[%s2109 + $0x18] sm:$0xff]
      %v2114 = vld [vmem:[%s2109 + $0x20] sm:$0xff]
      %v2115 = vld [vmem:[%s2109 + $0x28] sm:$0xff]
      %v2116 = vld [vmem:[%s2109 + $0x30] sm:$0xff]
      %v2117 = vld [vmem:[%s2109 + $0x38] sm:$0xff]
      %v2118 = vld [vmem:[%s2109 + $0x40] sm:$0xff]
      %v2119 = vld [vmem:[%s2109 + $0x48] sm:$0xff]
      %v2120 = vld [vmem:[%s2109 + $0x50] sm:$0xff]
      %v2121 = vld [vmem:[%s2109 + $0x58] sm:$0xff]
      %s2122 = scalar_lea.vmem %s2, 5
      %v2123 = vld [vmem:[%s2122] sm:$0x1]
      %v2124 = vxor.u32 %v2071, 2147483648
      %v2125 = vxor.u32 %v2076, 2147483648
      %v2126 = vxor.u32 %v2081, 2147483648
      %v2127 = vxor.u32 %v2086, 2147483648
      %v2128 = vxor.u32 %v2091, 2147483648
      %v2129 = vxor.u32 %v2096, 2147483648
      %v2130 = vxor.u32 %v2101, 2147483648
      %v2131 = vxor.u32 %v2106, 2147483648
      %v2132 = vmul.f32 %v2124, 1.442695
      %v2133 = vpow.pop %v2132
      %v2134 = vmul.f32 %v2125, 1.442695
      %v2135 = vpow.pop %v2134
      %v2136 = vmul.f32 %v2126, 1.442695
      %v2137 = vpow.pop %v2136
      %v2138 = vmul.f32 %v2127, 1.442695
      %v2139 = vpow.pop %v2138
      %v2140 = vmul.f32 %v2128, 1.442695
      %v2141 = vpow.pop %v2140
      %v2142 = vmul.f32 %v2129, 1.442695
      %v2143 = vpow.pop %v2142
      %v2144 = vmul.f32 %v2130, 1.442695
      %v2145 = vpow.pop %v2144
      %v2146 = vmul.f32 %v2131, 1.442695
      %v2147 = vpow.pop %v2146
      %v2148 = vadd.f32 %v2133, 1.0
      %v2149 = vadd.f32 %v2135, 1.0
      %v2150 = vadd.f32 %v2137, 1.0
      %v2151 = vadd.f32 %v2139, 1.0
      %v2152 = vadd.f32 %v2141, 1.0
      %v2153 = vadd.f32 %v2143, 1.0
      %v2154 = vadd.f32 %v2145, 1.0
      %v2155 = vadd.f32 %v2147, 1.0
      %v2156 = vrcp.pop %v2148
      %v2157 = vmul.f32 1.0, %v2156
      %v2158 = vrcp.pop %v2149
      %v2159 = vmul.f32 1.0, %v2158
      %v2160 = vrcp.pop %v2150
      %v2161 = vmul.f32 1.0, %v2160
      %v2162 = vrcp.pop %v2151
      %v2163 = vmul.f32 1.0, %v2162
      %v2164 = vrcp.pop %v2152
      %v2165 = vmul.f32 1.0, %v2164
      %v2166 = vrcp.pop %v2153
      %v2167 = vmul.f32 1.0, %v2166
      %v2168 = vrcp.pop %v2154
      %v2169 = vmul.f32 1.0, %v2168
      %v2170 = vrcp.pop %v2155
      %v2171 = vmul.f32 1.0, %v2170
      %v2172 = vmul.f32 %v2071, %v2157
      %v2173 = vmul.f32 %v2076, %v2159
      %v2174 = vmul.f32 %v2081, %v2161
      %v2175 = vmul.f32 %v2086, %v2163
      %v2176 = vmul.f32 %v2091, %v2165
      %v2177 = vmul.f32 %v2096, %v2167
      %v2178 = vmul.f32 %v2101, %v2169
      %v2179 = vmul.f32 %v2106, %v2171
      %2180 = vst.msk [vmem:[#allocation2 + $0x20] sm:$0xff] %vm279, %v2172
      %2181 = vst.msk [vmem:[#allocation2 + $0x28] sm:$0xff] %vm279, %v2173
      %2182 = vst.msk [vmem:[#allocation2 + $0x30] sm:$0xff] %vm279, %v2174
      %2183 = vst.msk [vmem:[#allocation2 + $0x38] sm:$0xff] %vm279, %v2175
      %2184 = vst.msk [vmem:[#allocation2 + $0x40] sm:$0xff] %vm279, %v2176
      %2185 = vst.msk [vmem:[#allocation2 + $0x48] sm:$0xff] %vm279, %v2177
      %2186 = vst.msk [vmem:[#allocation2 + $0x50] sm:$0xff] %vm279, %v2178
      %2187 = vst.msk [vmem:[#allocation2 + $0x58] sm:$0xff] %vm279, %v2179
      %v2188 = vld [vmem:[#allocation2 + $0x18] sm:$0xff]
      %v2189 = vld [vmem:[#allocation2 + $0x20] sm:$0xff]
      %v2190 = vld [vmem:[#allocation2 + $0x28] sm:$0xff]
      %v2191 = vld [vmem:[#allocation2 + $0x30] sm:$0xff]
      %v2192 = vld [vmem:[#allocation2 + $0x38] sm:$0xff]
      %v2193 = vld [vmem:[#allocation2 + $0x40] sm:$0xff]
      %v2194 = vld [vmem:[#allocation2 + $0x48] sm:$0xff]
      %v2195 = vld [vmem:[#allocation2 + $0x50] sm:$0xff]
      %v2196 = vld [vmem:[#allocation2 + $0x58] sm:$0xff]
      %v2197 = vld [vmem:[#allocation2 + $0x60] sm:$0xff]
      %v2206 = vrot.slane %v2189, 1
      %v2207 = vrot.slane %v2190, 1
      %v2208 = vsel %vm407, %v2206, %v2207
      %v2209 = vrot.slane %v2191, 1
      %v2210 = vsel %vm407, %v2207, %v2209
      %v2211 = vrot.slane %v2192, 1
      %v2212 = vsel %vm407, %v2209, %v2211
      %v2213 = vrot.slane %v2193, 1
      %v2214 = vsel %vm407, %v2211, %v2213
      %v2215 = vrot.slane %v2194, 1
      %v2216 = vsel %vm407, %v2213, %v2215
      %v2217 = vrot.slane %v2195, 1
      %v2218 = vsel %vm407, %v2215, %v2217
      %v2219 = vrot.slane %v2196, 1
      %v2220 = vsel %vm407, %v2217, %v2219
      %2221 = vrot.lane.b32.xlu0 %v2206, 32
      %v2222 = vpop.permute.xlu0 %2221
      %2223 = vrot.lane.b32.xlu0 %v2208, 32
      %v2224 = vpop.permute.xlu0 %2223
      %2225 = vrot.lane.b32.xlu0 %v2210, 32
      %v2226 = vpop.permute.xlu0 %2225
      %2227 = vrot.lane.b32.xlu0 %v2212, 32
      %v2228 = vpop.permute.xlu0 %2227
      %2229 = vrot.lane.b32.xlu0 %v2214, 32
      %v2230 = vpop.permute.xlu0 %2229
      %2231 = vrot.lane.b32.xlu0 %v2216, 32
      %v2232 = vpop.permute.xlu0 %2231
      %2233 = vrot.lane.b32.xlu0 %v2218, 32
      %v2234 = vpop.permute.xlu0 %2233
      %2235 = vrot.lane.b32.xlu0 %v2220, 32
      %v2236 = vpop.permute.xlu0 %2235
      %2237 = vrot.lane.b32.xlu0 %v2219, 32
      %v2238 = vpop.permute.xlu0 %2237
      %v2249 = vrot.slane %v2189, 2
      %v2250 = vrot.slane %v2190, 2
      %v2251 = vsel %vm451, %v2249, %v2250
      %v2252 = vrot.slane %v2191, 2
      %v2253 = vsel %vm451, %v2250, %v2252
      %v2254 = vrot.slane %v2192, 2
      %v2255 = vsel %vm451, %v2252, %v2254
      %v2256 = vrot.slane %v2193, 2
      %v2257 = vsel %vm451, %v2254, %v2256
      %v2258 = vrot.slane %v2194, 2
      %v2259 = vsel %vm451, %v2256, %v2258
      %v2260 = vrot.slane %v2195, 2
      %v2261 = vsel %vm451, %v2258, %v2260
      %v2262 = vrot.slane %v2196, 2
      %v2263 = vsel %vm451, %v2260, %v2262
      %v2264 = vrot.slane %v2197, 2
      %v2265 = vsel %vm451, %v2262, %v2264
      %2266 = vrot.lane.b32.xlu0 %v2249, 64
      %v2267 = vpop.permute.xlu0 %2266
      %2268 = vrot.lane.b32.xlu0 %v2251, 64
      %v2269 = vpop.permute.xlu0 %2268
      %2270 = vrot.lane.b32.xlu0 %v2253, 64
      %v2271 = vpop.permute.xlu0 %2270
      %2272 = vrot.lane.b32.xlu0 %v2255, 64
      %v2273 = vpop.permute.xlu0 %2272
      %2274 = vrot.lane.b32.xlu0 %v2257, 64
      %v2275 = vpop.permute.xlu0 %2274
      %2276 = vrot.lane.b32.xlu0 %v2259, 64
      %v2277 = vpop.permute.xlu0 %2276
      %2278 = vrot.lane.b32.xlu0 %v2261, 64
      %v2279 = vpop.permute.xlu0 %2278
      %2280 = vrot.lane.b32.xlu0 %v2263, 64
      %v2281 = vpop.permute.xlu0 %2280
      %2282 = vrot.lane.b32.xlu0 %v2265, 64
      %v2283 = vpop.permute.xlu0 %2282
      %v2293 = vsel %vm279, %v2188, %v2222
      %v2294 = vsel %vm279, %v2189, %v2224
      %v2295 = vsel %vm279, %v2190, %v2226
      %v2296 = vsel %vm279, %v2191, %v2228
      %v2297 = vsel %vm279, %v2192, %v2230
      %v2298 = vsel %vm279, %v2193, %v2232
      %v2299 = vsel %vm279, %v2194, %v2234
      %v2300 = vsel %vm279, %v2195, %v2236
      %v2301 = vsel %vm279, %v2196, %v2238
      %v2302 = vsel %vm505, %v2293, %v2267
      %v2303 = vsel %vm505, %v2294, %v2269
      %v2304 = vsel %vm505, %v2295, %v2271
      %v2305 = vsel %vm505, %v2296, %v2273
      %v2306 = vsel %vm505, %v2297, %v2275
      %v2307 = vsel %vm505, %v2298, %v2277
      %v2308 = vsel %vm505, %v2299, %v2279
      %v2309 = vsel %vm505, %v2300, %v2281
      %v2310 = vsel %vm505, %v2301, %v2283
      %v2312 = vlaneseq
      %v2313 = vshrl.u32 %v2312, 7
      %v2314 = vsub.s32 0, %v2313
      %v2315 = vrot.slane %v2123, %v2314
      %v2326 = vrot.slane %v2302, 7
      %v2327 = vrot.slane %v2303, 7
      %v2328 = vsel %vm530, %v2326, %v2327
      %v2329 = vrot.slane %v2304, 7
      %v2330 = vsel %vm530, %v2327, %v2329
      %v2331 = vrot.slane %v2305, 7
      %v2332 = vsel %vm530, %v2329, %v2331
      %v2333 = vrot.slane %v2306, 7
      %v2334 = vsel %vm530, %v2331, %v2333
      %v2335 = vrot.slane %v2307, 7
      %v2336 = vsel %vm530, %v2333, %v2335
      %v2337 = vrot.slane %v2308, 7
      %v2338 = vsel %vm530, %v2335, %v2337
      %v2339 = vrot.slane %v2309, 7
      %v2340 = vsel %vm530, %v2337, %v2339
      %v2341 = vrot.slane %v2310, 7
      %v2342 = vsel %vm530, %v2339, %v2341
      %v2343 = vsel %vm548, %v2328, 0
      %v2345 = vsel %vm548, %v2330, 0
      %v2347 = vsel %vm548, %v2332, 0
      %v2349 = vsel %vm548, %v2334, 0
      %v2351 = vsel %vm548, %v2336, 0
      %v2353 = vsel %vm548, %v2338, 0
      %v2355 = vsel %vm548, %v2340, 0
      %v2357 = vsel %vm548, %v2342, 0
      %2359 = vmatprep.subr.mxu0 0.0
      %2360 = vmatpush1.msra.mxu0 %v2110
      %2361 = vmatprep.subr.mxu0 0.0
      %2362 = vmatpush1.msra.mxu0 %v2111
      %2363 = vmatprep.subr.mxu0 0.0
      %2364 = vmatpush1.msra.mxu0 %v2112
      %2365 = vmatprep.subr.mxu0 0.0
      %2366 = vmatpush1.msra.mxu0 %v2113
      %2367 = vmatprep.subr.mxu0 0.0
      %2368 = vmatpush1.msra.mxu0 %v2114
      %2369 = vmatprep.subr.mxu0 0.0
      %2370 = vmatpush1.msra.mxu0 %v2115
      %2371 = vmatprep.subr.mxu0 0.0
      %2372 = vmatpush1.msra.mxu0 %v2116
      %2373 = vmatprep.subr.mxu0 0.0
      %2374 = vmatpush1.msra.mxu0 %v2117
      %2375 = vmatprep.subr.mxu0 0.0
      %2376 = vmatpush1.msra.mxu0 %v2118
      %2377 = vmatprep.subr.mxu0 0.0
      %2378 = vmatpush1.msra.mxu0 %v2119
      %2379 = vmatprep.subr.mxu0 0.0
      %2380 = vmatpush1.msra.mxu0 %v2120
      %2381 = vmatprep.subr.mxu0 0.0
      %2382 = vmatpush1.msra.mxu0 %v2121
      %2383 = vmatprep.subr.mxu0 0.0
      %2384 = vmatpush1.msra.mxu0 0.0
      %2385 = vmatprep.subr.mxu0 0.0
      %2386 = vmatpush1.msra.mxu0 0.0
      %2387 = vmatprep.subr.mxu0 0.0
      %2388 = vmatpush1.msra.mxu0 0.0
      %2389 = vmatprep.subr.mxu0 0.0
      %2390 = vmatpush1.msra.mxu0 0.0
      %2391 = vmatprep.subr.mxu0 0.0
      %2392 = vmatpush1.msra.mxu0 0.0
      %2393 = vmatprep.subr.mxu0 0.0
      %2394 = vmatpush1.msra.mxu0 0.0
      %2395 = vmatprep.subr.mxu0 0.0
      %2396 = vmatpush1.msra.mxu0 0.0
      %2397 = vmatprep.subr.mxu0 0.0
      %2398 = vmatpush1.msra.mxu0 0.0
      %2399 = vmatprep.subr.mxu0 0.0
      %2400 = vmatpush1.msra.mxu0 0.0
      %2401 = vmatprep.subr.mxu0 0.0
      %2402 = vmatpush1.msra.mxu0 0.0
      %2403 = vmatprep.subr.mxu0 0.0
      %2404 = vmatpush1.msra.mxu0 0.0
      %2405 = vmatprep.subr.mxu0 0.0
      %2406 = vmatpush1.msra.mxu0 0.0
      %2407 = vmatprep.subr.mxu0 0.0
      %2408 = vmatpush1.msra.mxu0 0.0
      %2409 = vmatprep.subr.mxu0 0.0
      %2410 = vmatpush1.msra.mxu0 0.0
      %2411 = vmatprep.subr.mxu0 0.0
      %2412 = vmatpush1.msra.mxu0 0.0
      %2413 = vmatprep.subr.mxu0 0.0
      %2414 = vmatpush1.msra.mxu0 0.0
      %2415 = vmatprep.subr.mxu0 0.0
      %2416 = vmatpush1.msra.mxu0 0.0
      %2417 = vmatprep.subr.mxu0 0.0
      %2418 = vmatpush1.msra.mxu0 0.0
      %2419 = vmatprep.subr.mxu0 0.0
      %2420 = vmatpush1.msra.mxu0 0.0
      %2421 = vmatprep.subr.mxu0 0.0
      %2422 = vmatpush1.msra.mxu0 0.0
      %2423 = vmatprep.mubr.f32.mxu0 0.0
      %2424 = vmatmul.mubr.f32.gmra.mrb[0].mxu0 %v2343
      %v2425 = vpop.f32.mrb[0].mxu0
      %v2426 = vadd.f32 %v2315, %v2425
      %v2427 = vpop.f32.mrb[0].mxu0
      %2428 = vmatprep.mubr.f32.mxu0 0.0
      %2429 = vmatmul.mubr.f32.gmra.mrb[0].mxu0 %v2345
      %v2430 = vpop.f32.mrb[0].mxu0
      %v2431 = vadd.f32 %v2315, %v2430
      %v2432 = vpop.f32.mrb[0].mxu0
      %2433 = vmatprep.mubr.f32.mxu0 0.0
      %2434 = vmatmul.mubr.f32.gmra.mrb[0].mxu0 %v2347
      %v2435 = vpop.f32.mrb[0].mxu0
      %v2436 = vadd.f32 %v2315, %v2435
      %v2437 = vpop.f32.mrb[0].mxu0
      %2438 = vmatprep.mubr.f32.mxu0 0.0
      %2439 = vmatmul.mubr.f32.gmra.mrb[0].mxu0 %v2349
      %v2440 = vpop.f32.mrb[0].mxu0
      %v2441 = vadd.f32 %v2315, %v2440
      %v2442 = vpop.f32.mrb[0].mxu0
      %2443 = vmatprep.mubr.f32.mxu0 0.0
      %2444 = vmatmul.mubr.f32.gmra.mrb[0].mxu0 %v2351
      %v2445 = vpop.f32.mrb[0].mxu0
      %v2446 = vadd.f32 %v2315, %v2445
      %v2447 = vpop.f32.mrb[0].mxu0
      %2448 = vmatprep.mubr.f32.mxu0 0.0
      %2449 = vmatmul.mubr.f32.gmra.mrb[0].mxu0 %v2353
      %v2450 = vpop.f32.mrb[0].mxu0
      %v2451 = vadd.f32 %v2315, %v2450
      %v2452 = vpop.f32.mrb[0].mxu0
      %2453 = vmatprep.mubr.f32.mxu0 0.0
      %2454 = vmatmul.mubr.f32.gmra.mrb[0].mxu0 %v2355
      %v2455 = vpop.f32.mrb[0].mxu0
      %v2456 = vadd.f32 %v2315, %v2455
      %v2457 = vpop.f32.mrb[0].mxu0
      %2458 = vmatprep.mubr.f32.mxu0 0.0
      %2459 = vmatmul.mubr.f32.gmra.mrb[0].mxu0 %v2357
      %v2460 = vpop.f32.mrb[0].mxu0
      %v2461 = vadd.f32 %v2315, %v2460
      %v2462 = vpop.f32.mrb[0].mxu0
      %2463 = vdwg.mxu0
      %v2464 = vadd.f32 %v2426, %v1746
      %v2465 = vadd.f32 %v2431, %v1747
      %v2466 = vadd.f32 %v2436, %v1748
      %v2467 = vadd.f32 %v2441, %v1749
      %v2468 = vadd.f32 %v2446, %v1750
      %v2469 = vadd.f32 %v2451, %v1751
      %v2470 = vadd.f32 %v2456, %v1752
      %v2471 = vadd.f32 %v2461, %v1753
      %v2472 = vadd.f32 %v2464, 0.0
      %v2473 = vadd.f32 %v2465, 0.0
      %v2474 = vadd.f32 %v2466, 0.0
      %v2475 = vadd.f32 %v2467, 0.0
      %v2476 = vadd.f32 %v2468, 0.0
      %v2477 = vadd.f32 %v2469, 0.0
      %v2478 = vadd.f32 %v2470, 0.0
      %v2479 = vadd.f32 %v2471, 0.0
      %v2480 = vld [vmem:[%s3] sm:$0xff]
      %v2481 = vld [vmem:[%s3 + $0x8] sm:$0xff]
      %v2482 = vld [vmem:[%s3 + $0x10] sm:$0xff]
      %v2483 = vld [vmem:[%s3 + $0x18] sm:$0xff]
      %v2484 = vld [vmem:[%s3 + $0x20] sm:$0xff]
      %v2485 = vld [vmem:[%s3 + $0x28] sm:$0xff]
      %v2486 = vld [vmem:[%s3 + $0x30] sm:$0xff]
      %v2487 = vld [vmem:[%s3 + $0x38] sm:$0xff]
      %v2488 = vld [vmem:[%s3 + $0x40] sm:$0xff]
      %v2489 = vld [vmem:[%s3 + $0x48] sm:$0xff]
      %v2490 = vld [vmem:[%s3 + $0x50] sm:$0xff]
      %v2491 = vld [vmem:[%s3 + $0x58] sm:$0xff]
      %v2492 = vld [vmem:[%s3 + $0x60] sm:$0xff]
      %v2493 = vld [vmem:[%s3 + $0x68] sm:$0xff]
      %v2494 = vld [vmem:[%s3 + $0x70] sm:$0xff]
      %v2495 = vld [vmem:[%s3 + $0x78] sm:$0xff]
      %v2496 = vld [vmem:[%s3 + $0x80] sm:$0xff]
      %v2497 = vld [vmem:[%s3 + $0x88] sm:$0xff]
      %v2498 = vld [vmem:[%s3 + $0x90] sm:$0xff]
      %v2499 = vld [vmem:[%s3 + $0x98] sm:$0xff]
      %v2500 = vld [vmem:[%s3 + $0xa0] sm:$0xff]
      %v2501 = vld [vmem:[%s3 + $0xa8] sm:$0xff]
      %v2502 = vld [vmem:[%s3 + $0xb0] sm:$0xff]
      %v2503 = vld [vmem:[%s3 + $0xb8] sm:$0xff]
      %v2504 = vld [vmem:[%s3 + $0xc0] sm:$0xff]
      %v2505 = vld [vmem:[%s3 + $0xc8] sm:$0xff]
      %v2506 = vld [vmem:[%s3 + $0xd0] sm:$0xff]
      %v2507 = vld [vmem:[%s3 + $0xd8] sm:$0xff]
      %v2508 = vld [vmem:[%s4] sm:$0x1]
      %2509 = vst.msk [vmem:[#allocation3 + $0x20] sm:$0xff] %vm279, %v373
      %2510 = vst.msk [vmem:[#allocation3 + $0x28] sm:$0xff] %vm279, %v374
      %2511 = vst.msk [vmem:[#allocation3 + $0x30] sm:$0xff] %vm279, %v375
      %2512 = vst.msk [vmem:[#allocation3 + $0x38] sm:$0xff] %vm279, %v376
      %2513 = vst.msk [vmem:[#allocation3 + $0x40] sm:$0xff] %vm279, %v377
      %2514 = vst.msk [vmem:[#allocation3 + $0x48] sm:$0xff] %vm279, %v378
      %2515 = vst.msk [vmem:[#allocation3 + $0x50] sm:$0xff] %vm279, %v379
      %2516 = vst.msk [vmem:[#allocation3 + $0x58] sm:$0xff] %vm279, %v380
      %v2517 = vld [vmem:[#allocation3 + $0x18] sm:$0xff]
      %v2518 = vld [vmem:[#allocation3 + $0x20] sm:$0xff]
      %v2519 = vld [vmem:[#allocation3 + $0x28] sm:$0xff]
      %v2520 = vld [vmem:[#allocation3 + $0x30] sm:$0xff]
      %v2521 = vld [vmem:[#allocation3 + $0x38] sm:$0xff]
      %v2522 = vld [vmem:[#allocation3 + $0x40] sm:$0xff]
      %v2523 = vld [vmem:[#allocation3 + $0x48] sm:$0xff]
      %v2524 = vld [vmem:[#allocation3 + $0x50] sm:$0xff]
      %v2525 = vld [vmem:[#allocation3 + $0x58] sm:$0xff]
      %v2526 = vld [vmem:[#allocation3 + $0x60] sm:$0xff]
      %v2536 = vrot.slane %v2517, 1
      %v2537 = vrot.slane %v2518, 1
      %v2538 = vsel %vm407, %v2536, %v2537
      %v2539 = vrot.slane %v2519, 1
      %v2540 = vsel %vm407, %v2537, %v2539
      %v2541 = vrot.slane %v2520, 1
      %v2542 = vsel %vm407, %v2539, %v2541
      %v2543 = vrot.slane %v2521, 1
      %v2544 = vsel %vm407, %v2541, %v2543
      %v2545 = vrot.slane %v2522, 1
      %v2546 = vsel %vm407, %v2543, %v2545
      %v2547 = vrot.slane %v2523, 1
      %v2548 = vsel %vm407, %v2545, %v2547
      %v2549 = vrot.slane %v2524, 1
      %v2550 = vsel %vm407, %v2547, %v2549
      %v2551 = vrot.slane %v2525, 1
      %v2552 = vsel %vm407, %v2549, %v2551
      %2553 = vrot.lane.b32.xlu0 %v2538, 32
      %v2554 = vpop.permute.xlu0 %2553
      %2555 = vrot.lane.b32.xlu0 %v2540, 32
      %v2556 = vpop.permute.xlu0 %2555
      %2557 = vrot.lane.b32.xlu0 %v2542, 32
      %v2558 = vpop.permute.xlu0 %2557
      %2559 = vrot.lane.b32.xlu0 %v2544, 32
      %v2560 = vpop.permute.xlu0 %2559
      %2561 = vrot.lane.b32.xlu0 %v2546, 32
      %v2562 = vpop.permute.xlu0 %2561
      %2563 = vrot.lane.b32.xlu0 %v2548, 32
      %v2564 = vpop.permute.xlu0 %2563
      %2565 = vrot.lane.b32.xlu0 %v2550, 32
      %v2566 = vpop.permute.xlu0 %2565
      %2567 = vrot.lane.b32.xlu0 %v2552, 32
      %v2568 = vpop.permute.xlu0 %2567
      %2569 = vrot.lane.b32.xlu0 %v2551, 32
      %v2570 = vpop.permute.xlu0 %2569
      %v2580 = vrot.slane %v2517, 2
      %v2581 = vrot.slane %v2518, 2
      %v2582 = vsel %vm451, %v2580, %v2581
      %v2583 = vrot.slane %v2519, 2
      %v2584 = vsel %vm451, %v2581, %v2583
      %v2585 = vrot.slane %v2520, 2
      %v2586 = vsel %vm451, %v2583, %v2585
      %v2587 = vrot.slane %v2521, 2
      %v2588 = vsel %vm451, %v2585, %v2587
      %v2589 = vrot.slane %v2522, 2
      %v2590 = vsel %vm451, %v2587, %v2589
      %v2591 = vrot.slane %v2523, 2
      %v2592 = vsel %vm451, %v2589, %v2591
      %v2593 = vrot.slane %v2524, 2
      %v2594 = vsel %vm451, %v2591, %v2593
      %v2595 = vrot.slane %v2525, 2
      %v2596 = vsel %vm451, %v2593, %v2595
      %2597 = vrot.lane.b32.xlu0 %v2582, 64
      %v2598 = vpop.permute.xlu0 %2597
      %2599 = vrot.lane.b32.xlu0 %v2584, 64
      %v2600 = vpop.permute.xlu0 %2599
      %2601 = vrot.lane.b32.xlu0 %v2586, 64
      %v2602 = vpop.permute.xlu0 %2601
      %2603 = vrot.lane.b32.xlu0 %v2588, 64
      %v2604 = vpop.permute.xlu0 %2603
      %2605 = vrot.lane.b32.xlu0 %v2590, 64
      %v2606 = vpop.permute.xlu0 %2605
      %2607 = vrot.lane.b32.xlu0 %v2592, 64
      %v2608 = vpop.permute.xlu0 %2607
      %2609 = vrot.lane.b32.xlu0 %v2594, 64
      %v2610 = vpop.permute.xlu0 %2609
      %2611 = vrot.lane.b32.xlu0 %v2596, 64
      %v2612 = vpop.permute.xlu0 %2611
      %2613 = vrot.lane.b32.xlu0 %v2595, 64
      %v2614 = vpop.permute.xlu0 %2613
      %v2624 = vrot.slane %v2518, 3
      %v2625 = vrot.slane %v2519, 3
      %v2626 = vsel %vm1130, %v2624, %v2625
      %v2627 = vrot.slane %v2520, 3
      %v2628 = vsel %vm1130, %v2625, %v2627
      %v2629 = vrot.slane %v2521, 3
      %v2630 = vsel %vm1130, %v2627, %v2629
      %v2631 = vrot.slane %v2522, 3
      %v2632 = vsel %vm1130, %v2629, %v2631
      %v2633 = vrot.slane %v2523, 3
      %v2634 = vsel %vm1130, %v2631, %v2633
      %v2635 = vrot.slane %v2524, 3
      %v2636 = vsel %vm1130, %v2633, %v2635
      %v2637 = vrot.slane %v2525, 3
      %v2638 = vsel %vm1130, %v2635, %v2637
      %2639 = vrot.lane.b32.xlu0 %v2624, 96
      %v2640 = vpop.permute.xlu0 %2639
      %2641 = vrot.lane.b32.xlu0 %v2626, 96
      %v2642 = vpop.permute.xlu0 %2641
      %2643 = vrot.lane.b32.xlu0 %v2628, 96
      %v2644 = vpop.permute.xlu0 %2643
      %2645 = vrot.lane.b32.xlu0 %v2630, 96
      %v2646 = vpop.permute.xlu0 %2645
      %2647 = vrot.lane.b32.xlu0 %v2632, 96
      %v2648 = vpop.permute.xlu0 %2647
      %2649 = vrot.lane.b32.xlu0 %v2634, 96
      %v2650 = vpop.permute.xlu0 %2649
      %2651 = vrot.lane.b32.xlu0 %v2636, 96
      %v2652 = vpop.permute.xlu0 %2651
      %2653 = vrot.lane.b32.xlu0 %v2638, 96
      %v2654 = vpop.permute.xlu0 %2653
      %2655 = vrot.lane.b32.xlu0 %v2637, 96
      %v2656 = vpop.permute.xlu0 %2655
      %vm2667 = vcmask 1043456
      %v2668 = vrot.slane %v2518, 4
      %v2669 = vrot.slane %v2519, 4
      %v2670 = vsel %vm2667, %v2668, %v2669
      %v2671 = vrot.slane %v2520, 4
      %v2672 = vsel %vm2667, %v2669, %v2671
      %v2673 = vrot.slane %v2521, 4
      %v2674 = vsel %vm2667, %v2671, %v2673
      %v2675 = vrot.slane %v2522, 4
      %v2676 = vsel %vm2667, %v2673, %v2675
      %v2677 = vrot.slane %v2523, 4
      %v2678 = vsel %vm2667, %v2675, %v2677
      %v2679 = vrot.slane %v2524, 4
      %v2680 = vsel %vm2667, %v2677, %v2679
      %v2681 = vrot.slane %v2525, 4
      %v2682 = vsel %vm2667, %v2679, %v2681
      %v2683 = vrot.slane %v2526, 4
      %v2684 = vsel %vm2667, %v2681, %v2683
      %v2694 = vrot.slane %v2518, 5
      %v2695 = vrot.slane %v2519, 5
      %v2696 = vsel %vm1252, %v2694, %v2695
      %v2697 = vrot.slane %v2520, 5
      %v2698 = vsel %vm1252, %v2695, %v2697
      %v2699 = vrot.slane %v2521, 5
      %v2700 = vsel %vm1252, %v2697, %v2699
      %v2701 = vrot.slane %v2522, 5
      %v2702 = vsel %vm1252, %v2699, %v2701
      %v2703 = vrot.slane %v2523, 5
      %v2704 = vsel %vm1252, %v2701, %v2703
      %v2705 = vrot.slane %v2524, 5
      %v2706 = vsel %vm1252, %v2703, %v2705
      %v2707 = vrot.slane %v2525, 5
      %v2708 = vsel %vm1252, %v2705, %v2707
      %v2709 = vrot.slane %v2526, 5
      %v2710 = vsel %vm1252, %v2707, %v2709
      %2711 = vrot.lane.b32.xlu0 %v2694, 32
      %v2712 = vpop.permute.xlu0 %2711
      %2713 = vrot.lane.b32.xlu0 %v2696, 32
      %v2714 = vpop.permute.xlu0 %2713
      %2715 = vrot.lane.b32.xlu0 %v2698, 32
      %v2716 = vpop.permute.xlu0 %2715
      %2717 = vrot.lane.b32.xlu0 %v2700, 32
      %v2718 = vpop.permute.xlu0 %2717
      %2719 = vrot.lane.b32.xlu0 %v2702, 32
      %v2720 = vpop.permute.xlu0 %2719
      %2721 = vrot.lane.b32.xlu0 %v2704, 32
      %v2722 = vpop.permute.xlu0 %2721
      %2723 = vrot.lane.b32.xlu0 %v2706, 32
      %v2724 = vpop.permute.xlu0 %2723
      %2725 = vrot.lane.b32.xlu0 %v2708, 32
      %v2726 = vpop.permute.xlu0 %2725
      %2727 = vrot.lane.b32.xlu0 %v2710, 32
      %v2728 = vpop.permute.xlu0 %2727
      %v2738 = vrot.slane %v2518, 6
      %v2739 = vrot.slane %v2519, 6
      %v2740 = vsel %vm1174, %v2738, %v2739
      %v2741 = vrot.slane %v2520, 6
      %v2742 = vsel %vm1174, %v2739, %v2741
      %v2743 = vrot.slane %v2521, 6
      %v2744 = vsel %vm1174, %v2741, %v2743
      %v2745 = vrot.slane %v2522, 6
      %v2746 = vsel %vm1174, %v2743, %v2745
      %v2747 = vrot.slane %v2523, 6
      %v2748 = vsel %vm1174, %v2745, %v2747
      %v2749 = vrot.slane %v2524, 6
      %v2750 = vsel %vm1174, %v2747, %v2749
      %v2751 = vrot.slane %v2525, 6
      %v2752 = vsel %vm1174, %v2749, %v2751
      %v2753 = vrot.slane %v2526, 6
      %v2754 = vsel %vm1174, %v2751, %v2753
      %2755 = vrot.lane.b32.xlu0 %v2738, 64
      %v2756 = vpop.permute.xlu0 %2755
      %2757 = vrot.lane.b32.xlu0 %v2740, 64
      %v2758 = vpop.permute.xlu0 %2757
      %2759 = vrot.lane.b32.xlu0 %v2742, 64
      %v2760 = vpop.permute.xlu0 %2759
      %2761 = vrot.lane.b32.xlu0 %v2744, 64
      %v2762 = vpop.permute.xlu0 %2761
      %2763 = vrot.lane.b32.xlu0 %v2746, 64
      %v2764 = vpop.permute.xlu0 %2763
      %2765 = vrot.lane.b32.xlu0 %v2748, 64
      %v2766 = vpop.permute.xlu0 %2765
      %2767 = vrot.lane.b32.xlu0 %v2750, 64
      %v2768 = vpop.permute.xlu0 %2767
      %2769 = vrot.lane.b32.xlu0 %v2752, 64
      %v2770 = vpop.permute.xlu0 %2769
      %2771 = vrot.lane.b32.xlu0 %v2754, 64
      %v2772 = vpop.permute.xlu0 %2771
      %v2782 = vsel %vm279, %v2517, %v2554
      %v2783 = vsel %vm279, %v2518, %v2556
      %v2784 = vsel %vm279, %v2519, %v2558
      %v2785 = vsel %vm279, %v2520, %v2560
      %v2786 = vsel %vm279, %v2521, %v2562
      %v2787 = vsel %vm279, %v2522, %v2564
      %v2788 = vsel %vm279, %v2523, %v2566
      %v2789 = vsel %vm279, %v2524, %v2568
      %v2790 = vsel %vm279, %v2525, %v2570
      %v2791 = vsel %vm505, %v2782, %v2598
      %v2792 = vsel %vm505, %v2783, %v2600
      %v2793 = vsel %vm505, %v2784, %v2602
      %v2794 = vsel %vm505, %v2785, %v2604
      %v2795 = vsel %vm505, %v2786, %v2606
      %v2796 = vsel %vm505, %v2787, %v2608
      %v2797 = vsel %vm505, %v2788, %v2610
      %v2798 = vsel %vm505, %v2789, %v2612
      %v2799 = vsel %vm505, %v2790, %v2614
      %v2800 = vsel %vm548, %v2791, %v2640
      %v2801 = vsel %vm548, %v2792, %v2642
      %v2802 = vsel %vm548, %v2793, %v2644
      %v2803 = vsel %vm548, %v2794, %v2646
      %v2804 = vsel %vm548, %v2795, %v2648
      %v2805 = vsel %vm548, %v2796, %v2650
      %v2806 = vsel %vm548, %v2797, %v2652
      %v2807 = vsel %vm548, %v2798, %v2654
      %v2808 = vsel %vm548, %v2799, %v2656
      %v2809 = vsel %vm279, %v2668, %v2712
      %v2810 = vsel %vm279, %v2670, %v2714
      %v2811 = vsel %vm279, %v2672, %v2716
      %v2812 = vsel %vm279, %v2674, %v2718
      %v2813 = vsel %vm279, %v2676, %v2720
      %v2814 = vsel %vm279, %v2678, %v2722
      %v2815 = vsel %vm279, %v2680, %v2724
      %v2816 = vsel %vm279, %v2682, %v2726
      %v2817 = vsel %vm279, %v2684, %v2728
      %v2818 = vsel %vm505, %v2809, %v2756
      %v2819 = vsel %vm505, %v2810, %v2758
      %v2820 = vsel %vm505, %v2811, %v2760
      %v2821 = vsel %vm505, %v2812, %v2762
      %v2822 = vsel %vm505, %v2813, %v2764
      %v2823 = vsel %vm505, %v2814, %v2766
      %v2824 = vsel %vm505, %v2815, %v2768
      %v2825 = vsel %vm505, %v2816, %v2770
      %v2826 = vsel %vm505, %v2817, %v2772
      %v2828 = vlaneseq
      %v2829 = vshrl.u32 %v2828, 7
      %v2830 = vsub.s32 0, %v2829
      %v2831 = vrot.slane %v2508, %v2830
      %v2851 = vrot.slane %v2800, 5
      %v2852 = vrot.slane %v2801, 5
      %v2853 = vsel %vm1252, %v2851, %v2852
      %v2854 = vrot.slane %v2818, 5
      %v2855 = vrot.slane %v2819, 5
      %v2856 = vsel %vm1252, %v2854, %v2855
      %v2857 = vrot.slane %v2802, 5
      %v2858 = vsel %vm1252, %v2852, %v2857
      %v2859 = vrot.slane %v2820, 5
      %v2860 = vsel %vm1252, %v2855, %v2859
      %v2861 = vrot.slane %v2803, 5
      %v2862 = vsel %vm1252, %v2857, %v2861
      %v2863 = vrot.slane %v2821, 5
      %v2864 = vsel %vm1252, %v2859, %v2863
      %v2865 = vrot.slane %v2804, 5
      %v2866 = vsel %vm1252, %v2861, %v2865
      %v2867 = vrot.slane %v2822, 5
      %v2868 = vsel %vm1252, %v2863, %v2867
      %v2869 = vrot.slane %v2805, 5
      %v2870 = vsel %vm1252, %v2865, %v2869
      %v2871 = vrot.slane %v2823, 5
      %v2872 = vsel %vm1252, %v2867, %v2871
      %v2873 = vrot.slane %v2806, 5
      %v2874 = vsel %vm1252, %v2869, %v2873
      %v2875 = vrot.slane %v2824, 5
      %v2876 = vsel %vm1252, %v2871, %v2875
      %v2877 = vrot.slane %v2807, 5
      %v2878 = vsel %vm1252, %v2873, %v2877
      %v2879 = vrot.slane %v2825, 5
      %v2880 = vsel %vm1252, %v2875, %v2879
      %v2881 = vrot.slane %v2808, 5
      %v2882 = vsel %vm1252, %v2877, %v2881
      %v2883 = vrot.slane %v2826, 5
      %v2884 = vsel %vm1252, %v2879, %v2883
      %v2893 = vsel %vm548, %v2856, 0
      %v2895 = vsel %vm548, %v2860, 0
      %v2897 = vsel %vm548, %v2864, 0
      %v2899 = vsel %vm548, %v2868, 0
      %v2901 = vsel %vm548, %v2872, 0
      %v2903 = vsel %vm548, %v2876, 0
      %v2905 = vsel %vm548, %v2880, 0
      %v2907 = vsel %vm548, %v2884, 0
      %2909 = vmatprep.subr.mxu0 0.0
      %2910 = vmatpush1.msra.mxu0 %v2480
      %2911 = vmatprep.subr.mxu0 0.0
      %2912 = vmatpush1.msra.mxu0 %v2481
      %2913 = vmatprep.subr.mxu0 0.0
      %2914 = vmatpush1.msra.mxu0 %v2482
      %2915 = vmatprep.subr.mxu0 0.0
      %2916 = vmatpush1.msra.mxu0 %v2483
      %2917 = vmatprep.subr.mxu0 0.0
      %2918 = vmatpush1.msra.mxu0 %v2484
      %2919 = vmatprep.subr.mxu0 0.0
      %2920 = vmatpush1.msra.mxu0 %v2485
      %2921 = vmatprep.subr.mxu0 0.0
      %2922 = vmatpush1.msra.mxu0 %v2486
      %2923 = vmatprep.subr.mxu0 0.0
      %2924 = vmatpush1.msra.mxu0 %v2487
      %2925 = vmatprep.subr.mxu0 0.0
      %2926 = vmatpush1.msra.mxu0 %v2488
      %2927 = vmatprep.subr.mxu0 0.0
      %2928 = vmatpush1.msra.mxu0 %v2489
      %2929 = vmatprep.subr.mxu0 0.0
      %2930 = vmatpush1.msra.mxu0 %v2490
      %2931 = vmatprep.subr.mxu0 0.0
      %2932 = vmatpush1.msra.mxu0 %v2491
      %2933 = vmatprep.subr.mxu0 0.0
      %2934 = vmatpush1.msra.mxu0 %v2492
      %2935 = vmatprep.subr.mxu0 0.0
      %2936 = vmatpush1.msra.mxu0 %v2493
      %2937 = vmatprep.subr.mxu0 0.0
      %2938 = vmatpush1.msra.mxu0 %v2494
      %2939 = vmatprep.subr.mxu0 0.0
      %2940 = vmatpush1.msra.mxu0 %v2495
      %2941 = vmatprep.subr.mxu0 0.0
      %2942 = vmatpush1.msra.mxu0 %v2496
      %2943 = vmatprep.subr.mxu0 0.0
      %2944 = vmatpush1.msra.mxu0 %v2497
      %2945 = vmatprep.subr.mxu0 0.0
      %2946 = vmatpush1.msra.mxu0 %v2498
      %2947 = vmatprep.subr.mxu0 0.0
      %2948 = vmatpush1.msra.mxu0 %v2499
      %2949 = vmatprep.subr.mxu0 0.0
      %2950 = vmatpush1.msra.mxu0 %v2500
      %2951 = vmatprep.subr.mxu0 0.0
      %2952 = vmatpush1.msra.mxu0 %v2501
      %2953 = vmatprep.subr.mxu0 0.0
      %2954 = vmatpush1.msra.mxu0 %v2502
      %2955 = vmatprep.subr.mxu0 0.0
      %2956 = vmatpush1.msra.mxu0 %v2503
      %2957 = vmatprep.subr.mxu0 0.0
      %2958 = vmatpush1.msra.mxu0 %v2504
      %2959 = vmatprep.subr.mxu0 0.0
      %2960 = vmatpush1.msra.mxu0 %v2505
      %2961 = vmatprep.subr.mxu0 0.0
      %2962 = vmatpush1.msra.mxu0 %v2506
      %2963 = vmatprep.subr.mxu0 0.0
      %2964 = vmatpush1.msra.mxu0 %v2507
      %2965 = vmatprep.subr.mxu0 0.0
      %2966 = vmatpush1.msra.mxu0 0.0
      %2967 = vmatprep.subr.mxu0 0.0
      %2968 = vmatpush1.msra.mxu0 0.0
      %2969 = vmatprep.subr.mxu0 0.0
      %2970 = vmatpush1.msra.mxu0 0.0
      %2971 = vmatprep.subr.mxu0 0.0
      %2972 = vmatpush1.msra.mxu0 0.0
      %2973 = vmatprep.mubr.f32.mxu0 %v2893
      %2974 = vmatmul.mubr.f32.gmra.mrb[0].mxu0 %v2853
      %v2975 = vpop.f32.mrb[0].mxu0
      %v2976 = vadd.f32 %v2831, %v2975
      %v2977 = vpop.f32.mrb[0].mxu0
      %2978 = vmatprep.mubr.f32.mxu0 %v2895
      %2979 = vmatmul.mubr.f32.gmra.mrb[0].mxu0 %v2858
      %v2980 = vpop.f32.mrb[0].mxu0
      %v2981 = vadd.f32 %v2831, %v2980
      %v2982 = vpop.f32.mrb[0].mxu0
      %2983 = vmatprep.mubr.f32.mxu0 %v2897
      %2984 = vmatmul.mubr.f32.gmra.mrb[0].mxu0 %v2862
      %v2985 = vpop.f32.mrb[0].mxu0
      %v2986 = vadd.f32 %v2831, %v2985
      %v2987 = vpop.f32.mrb[0].mxu0
      %2988 = vmatprep.mubr.f32.mxu0 %v2899
      %2989 = vmatmul.mubr.f32.gmra.mrb[0].mxu0 %v2866
      %v2990 = vpop.f32.mrb[0].mxu0
      %v2991 = vadd.f32 %v2831, %v2990
      %v2992 = vpop.f32.mrb[0].mxu0
      %2993 = vmatprep.mubr.f32.mxu0 %v2901
      %2994 = vmatmul.mubr.f32.gmra.mrb[0].mxu0 %v2870
      %v2995 = vpop.f32.mrb[0].mxu0
      %v2996 = vadd.f32 %v2831, %v2995
      %v2997 = vpop.f32.mrb[0].mxu0
      %2998 = vmatprep.mubr.f32.mxu0 %v2903
      %2999 = vmatmul.mubr.f32.gmra.mrb[0].mxu0 %v2874
      %v3000 = vpop.f32.mrb[0].mxu0
      %v3001 = vadd.f32 %v2831, %v3000
      %v3002 = vpop.f32.mrb[0].mxu0
      %3003 = vmatprep.mubr.f32.mxu0 %v2905
      %3004 = vmatmul.mubr.f32.gmra.mrb[0].mxu0 %v2878
      %v3005 = vpop.f32.mrb[0].mxu0
      %v3006 = vadd.f32 %v2831, %v3005
      %v3007 = vpop.f32.mrb[0].mxu0
      %3008 = vmatprep.mubr.f32.mxu0 %v2907
      %3009 = vmatmul.mubr.f32.gmra.mrb[0].mxu0 %v2882
      %v3010 = vpop.f32.mrb[0].mxu0
      %v3011 = vadd.f32 %v2831, %v3010
      %v3012 = vpop.f32.mrb[0].mxu0
      %3013 = vdwg.mxu0
      %s3014 = scalar_lea.vmem %s3, 224
      %v3015 = vld [vmem:[%s3014] sm:$0xff]
      %v3016 = vld [vmem:[%s3014 + $0x8] sm:$0xff]
      %v3017 = vld [vmem:[%s3014 + $0x10] sm:$0xff]
      %v3018 = vld [vmem:[%s3014 + $0x18] sm:$0xff]
      %v3019 = vld [vmem:[%s3014 + $0x20] sm:$0xff]
      %v3020 = vld [vmem:[%s3014 + $0x28] sm:$0xff]
      %v3021 = vld [vmem:[%s3014 + $0x30] sm:$0xff]
      %v3022 = vld [vmem:[%s3014 + $0x38] sm:$0xff]
      %v3023 = vld [vmem:[%s3014 + $0x40] sm:$0xff]
      %v3024 = vld [vmem:[%s3014 + $0x48] sm:$0xff]
      %v3025 = vld [vmem:[%s3014 + $0x50] sm:$0xff]
      %v3026 = vld [vmem:[%s3014 + $0x58] sm:$0xff]
      %v3027 = vld [vmem:[%s3014 + $0x60] sm:$0xff]
      %v3028 = vld [vmem:[%s3014 + $0x68] sm:$0xff]
      %v3029 = vld [vmem:[%s3014 + $0x70] sm:$0xff]
      %v3030 = vld [vmem:[%s3014 + $0x78] sm:$0xff]
      %v3031 = vld [vmem:[%s3014 + $0x80] sm:$0xff]
      %v3032 = vld [vmem:[%s3014 + $0x88] sm:$0xff]
      %v3033 = vld [vmem:[%s3014 + $0x90] sm:$0xff]
      %v3034 = vld [vmem:[%s3014 + $0x98] sm:$0xff]
      %v3035 = vld [vmem:[%s3014 + $0xa0] sm:$0xff]
      %v3036 = vld [vmem:[%s3014 + $0xa8] sm:$0xff]
      %v3037 = vld [vmem:[%s3014 + $0xb0] sm:$0xff]
      %v3038 = vld [vmem:[%s3014 + $0xb8] sm:$0xff]
      %v3039 = vld [vmem:[%s3014 + $0xc0] sm:$0xff]
      %v3040 = vld [vmem:[%s3014 + $0xc8] sm:$0xff]
      %v3041 = vld [vmem:[%s3014 + $0xd0] sm:$0xff]
      %v3042 = vld [vmem:[%s3014 + $0xd8] sm:$0xff]
      %s3043 = scalar_lea.vmem %s4, 1
      %v3044 = vld [vmem:[%s3043] sm:$0x1]
      %v3045 = vxor.u32 %v2976, 2147483648
      %v3046 = vxor.u32 %v2981, 2147483648
      %v3047 = vxor.u32 %v2986, 2147483648
      %v3048 = vxor.u32 %v2991, 2147483648
      %v3049 = vxor.u32 %v2996, 2147483648
      %v3050 = vxor.u32 %v3001, 2147483648
      %v3051 = vxor.u32 %v3006, 2147483648
      %v3052 = vxor.u32 %v3011, 2147483648
      %v3053 = vmul.f32 %v3045, 1.442695
      %v3054 = vpow.pop %v3053
      %v3055 = vmul.f32 %v3046, 1.442695
      %v3056 = vpow.pop %v3055
      %v3057 = vmul.f32 %v3047, 1.442695
      %v3058 = vpow.pop %v3057
      %v3059 = vmul.f32 %v3048, 1.442695
      %v3060 = vpow.pop %v3059
      %v3061 = vmul.f32 %v3049, 1.442695
      %v3062 = vpow.pop %v3061
      %v3063 = vmul.f32 %v3050, 1.442695
      %v3064 = vpow.pop %v3063
      %v3065 = vmul.f32 %v3051, 1.442695
      %v3066 = vpow.pop %v3065
      %v3067 = vmul.f32 %v3052, 1.442695
      %v3068 = vpow.pop %v3067
      %v3069 = vadd.f32 %v3054, 1.0
      %v3070 = vadd.f32 %v3056, 1.0
      %v3071 = vadd.f32 %v3058, 1.0
      %v3072 = vadd.f32 %v3060, 1.0
      %v3073 = vadd.f32 %v3062, 1.0
      %v3074 = vadd.f32 %v3064, 1.0
      %v3075 = vadd.f32 %v3066, 1.0
      %v3076 = vadd.f32 %v3068, 1.0
      %v3077 = vrcp.pop %v3069
      %v3078 = vmul.f32 1.0, %v3077
      %v3079 = vrcp.pop %v3070
      %v3080 = vmul.f32 1.0, %v3079
      %v3081 = vrcp.pop %v3071
      %v3082 = vmul.f32 1.0, %v3081
      %v3083 = vrcp.pop %v3072
      %v3084 = vmul.f32 1.0, %v3083
      %v3085 = vrcp.pop %v3073
      %v3086 = vmul.f32 1.0, %v3085
      %v3087 = vrcp.pop %v3074
      %v3088 = vmul.f32 1.0, %v3087
      %v3089 = vrcp.pop %v3075
      %v3090 = vmul.f32 1.0, %v3089
      %v3091 = vrcp.pop %v3076
      %v3092 = vmul.f32 1.0, %v3091
      %v3093 = vmul.f32 %v2976, %v3078
      %v3094 = vmul.f32 %v2981, %v3080
      %v3095 = vmul.f32 %v2986, %v3082
      %v3096 = vmul.f32 %v2991, %v3084
      %v3097 = vmul.f32 %v2996, %v3086
      %v3098 = vmul.f32 %v3001, %v3088
      %v3099 = vmul.f32 %v3006, %v3090
      %v3100 = vmul.f32 %v3011, %v3092
      %3101 = vst.msk [vmem:[#allocation3 + $0x20] sm:$0xff] %vm279, %v3093
      %3102 = vst.msk [vmem:[#allocation3 + $0x28] sm:$0xff] %vm279, %v3094
      %3103 = vst.msk [vmem:[#allocation3 + $0x30] sm:$0xff] %vm279, %v3095
      %3104 = vst.msk [vmem:[#allocation3 + $0x38] sm:$0xff] %vm279, %v3096
      %3105 = vst.msk [vmem:[#allocation3 + $0x40] sm:$0xff] %vm279, %v3097
      %3106 = vst.msk [vmem:[#allocation3 + $0x48] sm:$0xff] %vm279, %v3098
      %3107 = vst.msk [vmem:[#allocation3 + $0x50] sm:$0xff] %vm279, %v3099
      %3108 = vst.msk [vmem:[#allocation3 + $0x58] sm:$0xff] %vm279, %v3100
      %v3109 = vld [vmem:[#allocation3 + $0x18] sm:$0xff]
      %v3110 = vld [vmem:[#allocation3 + $0x20] sm:$0xff]
      %v3111 = vld [vmem:[#allocation3 + $0x28] sm:$0xff]
      %v3112 = vld [vmem:[#allocation3 + $0x30] sm:$0xff]
      %v3113 = vld [vmem:[#allocation3 + $0x38] sm:$0xff]
      %v3114 = vld [vmem:[#allocation3 + $0x40] sm:$0xff]
      %v3115 = vld [vmem:[#allocation3 + $0x48] sm:$0xff]
      %v3116 = vld [vmem:[#allocation3 + $0x50] sm:$0xff]
      %v3117 = vld [vmem:[#allocation3 + $0x58] sm:$0xff]
      %v3118 = vld [vmem:[#allocation3 + $0x60] sm:$0xff]
      %v3128 = vrot.slane %v3109, 1
      %v3129 = vrot.slane %v3110, 1
      %v3130 = vsel %vm407, %v3128, %v3129
      %v3131 = vrot.slane %v3111, 1
      %v3132 = vsel %vm407, %v3129, %v3131
      %v3133 = vrot.slane %v3112, 1
      %v3134 = vsel %vm407, %v3131, %v3133
      %v3135 = vrot.slane %v3113, 1
      %v3136 = vsel %vm407, %v3133, %v3135
      %v3137 = vrot.slane %v3114, 1
      %v3138 = vsel %vm407, %v3135, %v3137
      %v3139 = vrot.slane %v3115, 1
      %v3140 = vsel %vm407, %v3137, %v3139
      %v3141 = vrot.slane %v3116, 1
      %v3142 = vsel %vm407, %v3139, %v3141
      %v3143 = vrot.slane %v3117, 1
      %v3144 = vsel %vm407, %v3141, %v3143
      %3145 = vrot.lane.b32.xlu0 %v3130, 32
      %v3146 = vpop.permute.xlu0 %3145
      %3147 = vrot.lane.b32.xlu0 %v3132, 32
      %v3148 = vpop.permute.xlu0 %3147
      %3149 = vrot.lane.b32.xlu0 %v3134, 32
      %v3150 = vpop.permute.xlu0 %3149
      %3151 = vrot.lane.b32.xlu0 %v3136, 32
      %v3152 = vpop.permute.xlu0 %3151
      %3153 = vrot.lane.b32.xlu0 %v3138, 32
      %v3154 = vpop.permute.xlu0 %3153
      %3155 = vrot.lane.b32.xlu0 %v3140, 32
      %v3156 = vpop.permute.xlu0 %3155
      %3157 = vrot.lane.b32.xlu0 %v3142, 32
      %v3158 = vpop.permute.xlu0 %3157
      %3159 = vrot.lane.b32.xlu0 %v3144, 32
      %v3160 = vpop.permute.xlu0 %3159
      %3161 = vrot.lane.b32.xlu0 %v3143, 32
      %v3162 = vpop.permute.xlu0 %3161
      %v3172 = vrot.slane %v3109, 2
      %v3173 = vrot.slane %v3110, 2
      %v3174 = vsel %vm451, %v3172, %v3173
      %v3175 = vrot.slane %v3111, 2
      %v3176 = vsel %vm451, %v3173, %v3175
      %v3177 = vrot.slane %v3112, 2
      %v3178 = vsel %vm451, %v3175, %v3177
      %v3179 = vrot.slane %v3113, 2
      %v3180 = vsel %vm451, %v3177, %v3179
      %v3181 = vrot.slane %v3114, 2
      %v3182 = vsel %vm451, %v3179, %v3181
      %v3183 = vrot.slane %v3115, 2
      %v3184 = vsel %vm451, %v3181, %v3183
      %v3185 = vrot.slane %v3116, 2
      %v3186 = vsel %vm451, %v3183, %v3185
      %v3187 = vrot.slane %v3117, 2
      %v3188 = vsel %vm451, %v3185, %v3187
      %3189 = vrot.lane.b32.xlu0 %v3174, 64
      %v3190 = vpop.permute.xlu0 %3189
      %3191 = vrot.lane.b32.xlu0 %v3176, 64
      %v3192 = vpop.permute.xlu0 %3191
      %3193 = vrot.lane.b32.xlu0 %v3178, 64
      %v3194 = vpop.permute.xlu0 %3193
      %3195 = vrot.lane.b32.xlu0 %v3180, 64
      %v3196 = vpop.permute.xlu0 %3195
      %3197 = vrot.lane.b32.xlu0 %v3182, 64
      %v3198 = vpop.permute.xlu0 %3197
      %3199 = vrot.lane.b32.xlu0 %v3184, 64
      %v3200 = vpop.permute.xlu0 %3199
      %3201 = vrot.lane.b32.xlu0 %v3186, 64
      %v3202 = vpop.permute.xlu0 %3201
      %3203 = vrot.lane.b32.xlu0 %v3188, 64
      %v3204 = vpop.permute.xlu0 %3203
      %3205 = vrot.lane.b32.xlu0 %v3187, 64
      %v3206 = vpop.permute.xlu0 %3205
      %v3216 = vrot.slane %v3110, 3
      %v3217 = vrot.slane %v3111, 3
      %v3218 = vsel %vm1130, %v3216, %v3217
      %v3219 = vrot.slane %v3112, 3
      %v3220 = vsel %vm1130, %v3217, %v3219
      %v3221 = vrot.slane %v3113, 3
      %v3222 = vsel %vm1130, %v3219, %v3221
      %v3223 = vrot.slane %v3114, 3
      %v3224 = vsel %vm1130, %v3221, %v3223
      %v3225 = vrot.slane %v3115, 3
      %v3226 = vsel %vm1130, %v3223, %v3225
      %v3227 = vrot.slane %v3116, 3
      %v3228 = vsel %vm1130, %v3225, %v3227
      %v3229 = vrot.slane %v3117, 3
      %v3230 = vsel %vm1130, %v3227, %v3229
      %3231 = vrot.lane.b32.xlu0 %v3216, 96
      %v3232 = vpop.permute.xlu0 %3231
      %3233 = vrot.lane.b32.xlu0 %v3218, 96
      %v3234 = vpop.permute.xlu0 %3233
      %3235 = vrot.lane.b32.xlu0 %v3220, 96
      %v3236 = vpop.permute.xlu0 %3235
      %3237 = vrot.lane.b32.xlu0 %v3222, 96
      %v3238 = vpop.permute.xlu0 %3237
      %3239 = vrot.lane.b32.xlu0 %v3224, 96
      %v3240 = vpop.permute.xlu0 %3239
      %3241 = vrot.lane.b32.xlu0 %v3226, 96
      %v3242 = vpop.permute.xlu0 %3241
      %3243 = vrot.lane.b32.xlu0 %v3228, 96
      %v3244 = vpop.permute.xlu0 %3243
      %3245 = vrot.lane.b32.xlu0 %v3230, 96
      %v3246 = vpop.permute.xlu0 %3245
      %3247 = vrot.lane.b32.xlu0 %v3229, 96
      %v3248 = vpop.permute.xlu0 %3247
      %v3259 = vrot.slane %v3110, 4
      %v3260 = vrot.slane %v3111, 4
      %v3261 = vsel %vm2667, %v3259, %v3260
      %v3262 = vrot.slane %v3112, 4
      %v3263 = vsel %vm2667, %v3260, %v3262
      %v3264 = vrot.slane %v3113, 4
      %v3265 = vsel %vm2667, %v3262, %v3264
      %v3266 = vrot.slane %v3114, 4
      %v3267 = vsel %vm2667, %v3264, %v3266
      %v3268 = vrot.slane %v3115, 4
      %v3269 = vsel %vm2667, %v3266, %v3268
      %v3270 = vrot.slane %v3116, 4
      %v3271 = vsel %vm2667, %v3268, %v3270
      %v3272 = vrot.slane %v3117, 4
      %v3273 = vsel %vm2667, %v3270, %v3272
      %v3274 = vrot.slane %v3118, 4
      %v3275 = vsel %vm2667, %v3272, %v3274
      %v3285 = vrot.slane %v3110, 5
      %v3286 = vrot.slane %v3111, 5
      %v3287 = vsel %vm1252, %v3285, %v3286
      %v3288 = vrot.slane %v3112, 5
      %v3289 = vsel %vm1252, %v3286, %v3288
      %v3290 = vrot.slane %v3113, 5
      %v3291 = vsel %vm1252, %v3288, %v3290
      %v3292 = vrot.slane %v3114, 5
      %v3293 = vsel %vm1252, %v3290, %v3292
      %v3294 = vrot.slane %v3115, 5
      %v3295 = vsel %vm1252, %v3292, %v3294
      %v3296 = vrot.slane %v3116, 5
      %v3297 = vsel %vm1252, %v3294, %v3296
      %v3298 = vrot.slane %v3117, 5
      %v3299 = vsel %vm1252, %v3296, %v3298
      %v3300 = vrot.slane %v3118, 5
      %v3301 = vsel %vm1252, %v3298, %v3300
      %3302 = vrot.lane.b32.xlu0 %v3285, 32
      %v3303 = vpop.permute.xlu0 %3302
      %3304 = vrot.lane.b32.xlu0 %v3287, 32
      %v3305 = vpop.permute.xlu0 %3304
      %3306 = vrot.lane.b32.xlu0 %v3289, 32
      %v3307 = vpop.permute.xlu0 %3306
      %3308 = vrot.lane.b32.xlu0 %v3291, 32
      %v3309 = vpop.permute.xlu0 %3308
      %3310 = vrot.lane.b32.xlu0 %v3293, 32
      %v3311 = vpop.permute.xlu0 %3310
      %3312 = vrot.lane.b32.xlu0 %v3295, 32
      %v3313 = vpop.permute.xlu0 %3312
      %3314 = vrot.lane.b32.xlu0 %v3297, 32
      %v3315 = vpop.permute.xlu0 %3314
      %3316 = vrot.lane.b32.xlu0 %v3299, 32
      %v3317 = vpop.permute.xlu0 %3316
      %3318 = vrot.lane.b32.xlu0 %v3301, 32
      %v3319 = vpop.permute.xlu0 %3318
      %v3329 = vrot.slane %v3110, 6
      %v3330 = vrot.slane %v3111, 6
      %v3331 = vsel %vm1174, %v3329, %v3330
      %v3332 = vrot.slane %v3112, 6
      %v3333 = vsel %vm1174, %v3330, %v3332
      %v3334 = vrot.slane %v3113, 6
      %v3335 = vsel %vm1174, %v3332, %v3334
      %v3336 = vrot.slane %v3114, 6
      %v3337 = vsel %vm1174, %v3334, %v3336
      %v3338 = vrot.slane %v3115, 6
      %v3339 = vsel %vm1174, %v3336, %v3338
      %v3340 = vrot.slane %v3116, 6
      %v3341 = vsel %vm1174, %v3338, %v3340
      %v3342 = vrot.slane %v3117, 6
      %v3343 = vsel %vm1174, %v3340, %v3342
      %v3344 = vrot.slane %v3118, 6
      %v3345 = vsel %vm1174, %v3342, %v3344
      %3346 = vrot.lane.b32.xlu0 %v3329, 64
      %v3347 = vpop.permute.xlu0 %3346
      %3348 = vrot.lane.b32.xlu0 %v3331, 64
      %v3349 = vpop.permute.xlu0 %3348
      %3350 = vrot.lane.b32.xlu0 %v3333, 64
      %v3351 = vpop.permute.xlu0 %3350
      %3352 = vrot.lane.b32.xlu0 %v3335, 64
      %v3353 = vpop.permute.xlu0 %3352
      %3354 = vrot.lane.b32.xlu0 %v3337, 64
      %v3355 = vpop.permute.xlu0 %3354
      %3356 = vrot.lane.b32.xlu0 %v3339, 64
      %v3357 = vpop.permute.xlu0 %3356
      %3358 = vrot.lane.b32.xlu0 %v3341, 64
      %v3359 = vpop.permute.xlu0 %3358
      %3360 = vrot.lane.b32.xlu0 %v3343, 64
      %v3361 = vpop.permute.xlu0 %3360
      %3362 = vrot.lane.b32.xlu0 %v3345, 64
      %v3363 = vpop.permute.xlu0 %3362
      %v3373 = vsel %vm279, %v3109, %v3146
      %v3374 = vsel %vm279, %v3110, %v3148
      %v3375 = vsel %vm279, %v3111, %v3150
      %v3376 = vsel %vm279, %v3112, %v3152
      %v3377 = vsel %vm279, %v3113, %v3154
      %v3378 = vsel %vm279, %v3114, %v3156
      %v3379 = vsel %vm279, %v3115, %v3158
      %v3380 = vsel %vm279, %v3116, %v3160
      %v3381 = vsel %vm279, %v3117, %v3162
      %v3382 = vsel %vm505, %v3373, %v3190
      %v3383 = vsel %vm505, %v3374, %v3192
      %v3384 = vsel %vm505, %v3375, %v3194
      %v3385 = vsel %vm505, %v3376, %v3196
      %v3386 = vsel %vm505, %v3377, %v3198
      %v3387 = vsel %vm505, %v3378, %v3200
      %v3388 = vsel %vm505, %v3379, %v3202
      %v3389 = vsel %vm505, %v3380, %v3204
      %v3390 = vsel %vm505, %v3381, %v3206
      %v3391 = vsel %vm548, %v3382, %v3232
      %v3392 = vsel %vm548, %v3383, %v3234
      %v3393 = vsel %vm548, %v3384, %v3236
      %v3394 = vsel %vm548, %v3385, %v3238
      %v3395 = vsel %vm548, %v3386, %v3240
      %v3396 = vsel %vm548, %v3387, %v3242
      %v3397 = vsel %vm548, %v3388, %v3244
      %v3398 = vsel %vm548, %v3389, %v3246
      %v3399 = vsel %vm548, %v3390, %v3248
      %v3400 = vsel %vm279, %v3259, %v3303
      %v3401 = vsel %vm279, %v3261, %v3305
      %v3402 = vsel %vm279, %v3263, %v3307
      %v3403 = vsel %vm279, %v3265, %v3309
      %v3404 = vsel %vm279, %v3267, %v3311
      %v3405 = vsel %vm279, %v3269, %v3313
      %v3406 = vsel %vm279, %v3271, %v3315
      %v3407 = vsel %vm279, %v3273, %v3317
      %v3408 = vsel %vm279, %v3275, %v3319
      %v3409 = vsel %vm505, %v3400, %v3347
      %v3410 = vsel %vm505, %v3401, %v3349
      %v3411 = vsel %vm505, %v3402, %v3351
      %v3412 = vsel %vm505, %v3403, %v3353
      %v3413 = vsel %vm505, %v3404, %v3355
      %v3414 = vsel %vm505, %v3405, %v3357
      %v3415 = vsel %vm505, %v3406, %v3359
      %v3416 = vsel %vm505, %v3407, %v3361
      %v3417 = vsel %vm505, %v3408, %v3363
      %v3419 = vlaneseq
      %v3420 = vshrl.u32 %v3419, 7
      %v3421 = vsub.s32 0, %v3420
      %v3422 = vrot.slane %v3044, %v3421
      %v3442 = vrot.slane %v3391, 5
      %v3443 = vrot.slane %v3392, 5
      %v3444 = vsel %vm1252, %v3442, %v3443
      %v3445 = vrot.slane %v3409, 5
      %v3446 = vrot.slane %v3410, 5
      %v3447 = vsel %vm1252, %v3445, %v3446
      %v3448 = vrot.slane %v3393, 5
      %v3449 = vsel %vm1252, %v3443, %v3448
      %v3450 = vrot.slane %v3411, 5
      %v3451 = vsel %vm1252, %v3446, %v3450
      %v3452 = vrot.slane %v3394, 5
      %v3453 = vsel %vm1252, %v3448, %v3452
      %v3454 = vrot.slane %v3412, 5
      %v3455 = vsel %vm1252, %v3450, %v3454
      %v3456 = vrot.slane %v3395, 5
      %v3457 = vsel %vm1252, %v3452, %v3456
      %v3458 = vrot.slane %v3413, 5
      %v3459 = vsel %vm1252, %v3454, %v3458
      %v3460 = vrot.slane %v3396, 5
      %v3461 = vsel %vm1252, %v3456, %v3460
      %v3462 = vrot.slane %v3414, 5
      %v3463 = vsel %vm1252, %v3458, %v3462
      %v3464 = vrot.slane %v3397, 5
      %v3465 = vsel %vm1252, %v3460, %v3464
      %v3466 = vrot.slane %v3415, 5
      %v3467 = vsel %vm1252, %v3462, %v3466
      %v3468 = vrot.slane %v3398, 5
      %v3469 = vsel %vm1252, %v3464, %v3468
      %v3470 = vrot.slane %v3416, 5
      %v3471 = vsel %vm1252, %v3466, %v3470
      %v3472 = vrot.slane %v3399, 5
      %v3473 = vsel %vm1252, %v3468, %v3472
      %v3474 = vrot.slane %v3417, 5
      %v3475 = vsel %vm1252, %v3470, %v3474
      %v3484 = vsel %vm548, %v3447, 0
      %v3486 = vsel %vm548, %v3451, 0
      %v3488 = vsel %vm548, %v3455, 0
      %v3490 = vsel %vm548, %v3459, 0
      %v3492 = vsel %vm548, %v3463, 0
      %v3494 = vsel %vm548, %v3467, 0
      %v3496 = vsel %vm548, %v3471, 0
      %v3498 = vsel %vm548, %v3475, 0
      %3500 = vmatprep.subr.mxu0 0.0
      %3501 = vmatpush1.msra.mxu0 %v3015
      %3502 = vmatprep.subr.mxu0 0.0
      %3503 = vmatpush1.msra.mxu0 %v3016
      %3504 = vmatprep.subr.mxu0 0.0
      %3505 = vmatpush1.msra.mxu0 %v3017
      %3506 = vmatprep.subr.mxu0 0.0
      %3507 = vmatpush1.msra.mxu0 %v3018
      %3508 = vmatprep.subr.mxu0 0.0
      %3509 = vmatpush1.msra.mxu0 %v3019
      %3510 = vmatprep.subr.mxu0 0.0
      %3511 = vmatpush1.msra.mxu0 %v3020
      %3512 = vmatprep.subr.mxu0 0.0
      %3513 = vmatpush1.msra.mxu0 %v3021
      %3514 = vmatprep.subr.mxu0 0.0
      %3515 = vmatpush1.msra.mxu0 %v3022
      %3516 = vmatprep.subr.mxu0 0.0
      %3517 = vmatpush1.msra.mxu0 %v3023
      %3518 = vmatprep.subr.mxu0 0.0
      %3519 = vmatpush1.msra.mxu0 %v3024
      %3520 = vmatprep.subr.mxu0 0.0
      %3521 = vmatpush1.msra.mxu0 %v3025
      %3522 = vmatprep.subr.mxu0 0.0
      %3523 = vmatpush1.msra.mxu0 %v3026
      %3524 = vmatprep.subr.mxu0 0.0
      %3525 = vmatpush1.msra.mxu0 %v3027
      %3526 = vmatprep.subr.mxu0 0.0
      %3527 = vmatpush1.msra.mxu0 %v3028
      %3528 = vmatprep.subr.mxu0 0.0
      %3529 = vmatpush1.msra.mxu0 %v3029
      %3530 = vmatprep.subr.mxu0 0.0
      %3531 = vmatpush1.msra.mxu0 %v3030
      %3532 = vmatprep.subr.mxu0 0.0
      %3533 = vmatpush1.msra.mxu0 %v3031
      %3534 = vmatprep.subr.mxu0 0.0
      %3535 = vmatpush1.msra.mxu0 %v3032
      %3536 = vmatprep.subr.mxu0 0.0
      %3537 = vmatpush1.msra.mxu0 %v3033
      %3538 = vmatprep.subr.mxu0 0.0
      %3539 = vmatpush1.msra.mxu0 %v3034
      %3540 = vmatprep.subr.mxu0 0.0
      %3541 = vmatpush1.msra.mxu0 %v3035
      %3542 = vmatprep.subr.mxu0 0.0
      %3543 = vmatpush1.msra.mxu0 %v3036
      %3544 = vmatprep.subr.mxu0 0.0
      %3545 = vmatpush1.msra.mxu0 %v3037
      %3546 = vmatprep.subr.mxu0 0.0
      %3547 = vmatpush1.msra.mxu0 %v3038
      %3548 = vmatprep.subr.mxu0 0.0
      %3549 = vmatpush1.msra.mxu0 %v3039
      %3550 = vmatprep.subr.mxu0 0.0
      %3551 = vmatpush1.msra.mxu0 %v3040
      %3552 = vmatprep.subr.mxu0 0.0
      %3553 = vmatpush1.msra.mxu0 %v3041
      %3554 = vmatprep.subr.mxu0 0.0
      %3555 = vmatpush1.msra.mxu0 %v3042
      %3556 = vmatprep.subr.mxu0 0.0
      %3557 = vmatpush1.msra.mxu0 0.0
      %3558 = vmatprep.subr.mxu0 0.0
      %3559 = vmatpush1.msra.mxu0 0.0
      %3560 = vmatprep.subr.mxu0 0.0
      %3561 = vmatpush1.msra.mxu0 0.0
      %3562 = vmatprep.subr.mxu0 0.0
      %3563 = vmatpush1.msra.mxu0 0.0
      %3564 = vmatprep.mubr.f32.mxu0 %v3484
      %3565 = vmatmul.mubr.f32.gmra.mrb[0].mxu0 %v3444
      %v3566 = vpop.f32.mrb[0].mxu0
      %v3567 = vadd.f32 %v3422, %v3566
      %v3568 = vpop.f32.mrb[0].mxu0
      %3569 = vmatprep.mubr.f32.mxu0 %v3486
      %3570 = vmatmul.mubr.f32.gmra.mrb[0].mxu0 %v3449
      %v3571 = vpop.f32.mrb[0].mxu0
      %v3572 = vadd.f32 %v3422, %v3571
      %v3573 = vpop.f32.mrb[0].mxu0
      %3574 = vmatprep.mubr.f32.mxu0 %v3488
      %3575 = vmatmul.mubr.f32.gmra.mrb[0].mxu0 %v3453
      %v3576 = vpop.f32.mrb[0].mxu0
      %v3577 = vadd.f32 %v3422, %v3576
      %v3578 = vpop.f32.mrb[0].mxu0
      %3579 = vmatprep.mubr.f32.mxu0 %v3490
      %3580 = vmatmul.mubr.f32.gmra.mrb[0].mxu0 %v3457
      %v3581 = vpop.f32.mrb[0].mxu0
      %v3582 = vadd.f32 %v3422, %v3581
      %v3583 = vpop.f32.mrb[0].mxu0
      %3584 = vmatprep.mubr.f32.mxu0 %v3492
      %3585 = vmatmul.mubr.f32.gmra.mrb[0].mxu0 %v3461
      %v3586 = vpop.f32.mrb[0].mxu0
      %v3587 = vadd.f32 %v3422, %v3586
      %v3588 = vpop.f32.mrb[0].mxu0
      %3589 = vmatprep.mubr.f32.mxu0 %v3494
      %3590 = vmatmul.mubr.f32.gmra.mrb[0].mxu0 %v3465
      %v3591 = vpop.f32.mrb[0].mxu0
      %v3592 = vadd.f32 %v3422, %v3591
      %v3593 = vpop.f32.mrb[0].mxu0
      %3594 = vmatprep.mubr.f32.mxu0 %v3496
      %3595 = vmatmul.mubr.f32.gmra.mrb[0].mxu0 %v3469
      %v3596 = vpop.f32.mrb[0].mxu0
      %v3597 = vadd.f32 %v3422, %v3596
      %v3598 = vpop.f32.mrb[0].mxu0
      %3599 = vmatprep.mubr.f32.mxu0 %v3498
      %3600 = vmatmul.mubr.f32.gmra.mrb[0].mxu0 %v3473
      %v3601 = vpop.f32.mrb[0].mxu0
      %v3602 = vadd.f32 %v3422, %v3601
      %v3603 = vpop.f32.mrb[0].mxu0
      %3604 = vdwg.mxu0
      %v3605 = vadd.f32 %v3567, %v304
      %v3606 = vadd.f32 %v3572, %v305
      %v3607 = vadd.f32 %v3577, %v306
      %v3608 = vadd.f32 %v3582, %v307
      %v3609 = vadd.f32 %v3587, %v308
      %v3610 = vadd.f32 %v3592, %v309
      %v3611 = vadd.f32 %v3597, %v310
      %v3612 = vadd.f32 %v3602, %v311
      %s3613 = scalar_lea.vmem %s3, 448
      %v3614 = vld [vmem:[%s3613] sm:$0xff]
      %v3615 = vld [vmem:[%s3613 + $0x8] sm:$0xff]
      %v3616 = vld [vmem:[%s3613 + $0x10] sm:$0xff]
      %v3617 = vld [vmem:[%s3613 + $0x18] sm:$0xff]
      %v3618 = vld [vmem:[%s3613 + $0x20] sm:$0xff]
      %v3619 = vld [vmem:[%s3613 + $0x28] sm:$0xff]
      %v3620 = vld [vmem:[%s3613 + $0x30] sm:$0xff]
      %v3621 = vld [vmem:[%s3613 + $0x38] sm:$0xff]
      %v3622 = vld [vmem:[%s3613 + $0x40] sm:$0xff]
      %v3623 = vld [vmem:[%s3613 + $0x48] sm:$0xff]
      %v3624 = vld [vmem:[%s3613 + $0x50] sm:$0xff]
      %v3625 = vld [vmem:[%s3613 + $0x58] sm:$0xff]
      %v3626 = vld [vmem:[%s3613 + $0x60] sm:$0xff]
      %v3627 = vld [vmem:[%s3613 + $0x68] sm:$0xff]
      %v3628 = vld [vmem:[%s3613 + $0x70] sm:$0xff]
      %v3629 = vld [vmem:[%s3613 + $0x78] sm:$0xff]
      %v3630 = vld [vmem:[%s3613 + $0x80] sm:$0xff]
      %v3631 = vld [vmem:[%s3613 + $0x88] sm:$0xff]
      %v3632 = vld [vmem:[%s3613 + $0x90] sm:$0xff]
      %v3633 = vld [vmem:[%s3613 + $0x98] sm:$0xff]
      %v3634 = vld [vmem:[%s3613 + $0xa0] sm:$0xff]
      %v3635 = vld [vmem:[%s3613 + $0xa8] sm:$0xff]
      %v3636 = vld [vmem:[%s3613 + $0xb0] sm:$0xff]
      %v3637 = vld [vmem:[%s3613 + $0xb8] sm:$0xff]
      %v3638 = vld [vmem:[%s3613 + $0xc0] sm:$0xff]
      %v3639 = vld [vmem:[%s3613 + $0xc8] sm:$0xff]
      %v3640 = vld [vmem:[%s3613 + $0xd0] sm:$0xff]
      %v3641 = vld [vmem:[%s3613 + $0xd8] sm:$0xff]
      %s3642 = scalar_lea.vmem %s4, 2
      %v3643 = vld [vmem:[%s3642] sm:$0x1]
      %v3644 = vxor.u32 %v3605, 2147483648
      %v3645 = vxor.u32 %v3606, 2147483648
      %v3646 = vxor.u32 %v3607, 2147483648
      %v3647 = vxor.u32 %v3608, 2147483648
      %v3648 = vxor.u32 %v3609, 2147483648
      %v3649 = vxor.u32 %v3610, 2147483648
      %v3650 = vxor.u32 %v3611, 2147483648
      %v3651 = vxor.u32 %v3612, 2147483648
      %v3652 = vmul.f32 %v3644, 1.442695
      %v3653 = vpow.pop %v3652
      %v3654 = vmul.f32 %v3645, 1.442695
      %v3655 = vpow.pop %v3654
      %v3656 = vmul.f32 %v3646, 1.442695
      %v3657 = vpow.pop %v3656
      %v3658 = vmul.f32 %v3647, 1.442695
      %v3659 = vpow.pop %v3658
      %v3660 = vmul.f32 %v3648, 1.442695
      %v3661 = vpow.pop %v3660
      %v3662 = vmul.f32 %v3649, 1.442695
      %v3663 = vpow.pop %v3662
      %v3664 = vmul.f32 %v3650, 1.442695
      %v3665 = vpow.pop %v3664
      %v3666 = vmul.f32 %v3651, 1.442695
      %v3667 = vpow.pop %v3666
      %v3668 = vadd.f32 %v3653, 1.0
      %v3669 = vadd.f32 %v3655, 1.0
      %v3670 = vadd.f32 %v3657, 1.0
      %v3671 = vadd.f32 %v3659, 1.0
      %v3672 = vadd.f32 %v3661, 1.0
      %v3673 = vadd.f32 %v3663, 1.0
      %v3674 = vadd.f32 %v3665, 1.0
      %v3675 = vadd.f32 %v3667, 1.0
      %v3676 = vrcp.pop %v3668
      %v3677 = vmul.f32 1.0, %v3676
      %v3678 = vrcp.pop %v3669
      %v3679 = vmul.f32 1.0, %v3678
      %v3680 = vrcp.pop %v3670
      %v3681 = vmul.f32 1.0, %v3680
      %v3682 = vrcp.pop %v3671
      %v3683 = vmul.f32 1.0, %v3682
      %v3684 = vrcp.pop %v3672
      %v3685 = vmul.f32 1.0, %v3684
      %v3686 = vrcp.pop %v3673
      %v3687 = vmul.f32 1.0, %v3686
      %v3688 = vrcp.pop %v3674
      %v3689 = vmul.f32 1.0, %v3688
      %v3690 = vrcp.pop %v3675
      %v3691 = vmul.f32 1.0, %v3690
      %v3692 = vmul.f32 %v3605, %v3677
      %v3693 = vmul.f32 %v3606, %v3679
      %v3694 = vmul.f32 %v3607, %v3681
      %v3695 = vmul.f32 %v3608, %v3683
      %v3696 = vmul.f32 %v3609, %v3685
      %v3697 = vmul.f32 %v3610, %v3687
      %v3698 = vmul.f32 %v3611, %v3689
      %v3699 = vmul.f32 %v3612, %v3691
      %3700 = vst.msk [vmem:[#allocation3 + $0x20] sm:$0xff] %vm279, %v3692
      %3701 = vst.msk [vmem:[#allocation3 + $0x28] sm:$0xff] %vm279, %v3693
      %3702 = vst.msk [vmem:[#allocation3 + $0x30] sm:$0xff] %vm279, %v3694
      %3703 = vst.msk [vmem:[#allocation3 + $0x38] sm:$0xff] %vm279, %v3695
      %3704 = vst.msk [vmem:[#allocation3 + $0x40] sm:$0xff] %vm279, %v3696
      %3705 = vst.msk [vmem:[#allocation3 + $0x48] sm:$0xff] %vm279, %v3697
      %3706 = vst.msk [vmem:[#allocation3 + $0x50] sm:$0xff] %vm279, %v3698
      %3707 = vst.msk [vmem:[#allocation3 + $0x58] sm:$0xff] %vm279, %v3699
      %v3708 = vld [vmem:[#allocation3 + $0x10] sm:$0xff]
      %v3709 = vld [vmem:[#allocation3 + $0x18] sm:$0xff]
      %v3710 = vld [vmem:[#allocation3 + $0x20] sm:$0xff]
      %v3711 = vld [vmem:[#allocation3 + $0x28] sm:$0xff]
      %v3712 = vld [vmem:[#allocation3 + $0x30] sm:$0xff]
      %v3713 = vld [vmem:[#allocation3 + $0x38] sm:$0xff]
      %v3714 = vld [vmem:[#allocation3 + $0x40] sm:$0xff]
      %v3715 = vld [vmem:[#allocation3 + $0x48] sm:$0xff]
      %v3716 = vld [vmem:[#allocation3 + $0x50] sm:$0xff]
      %v3717 = vld [vmem:[#allocation3 + $0x58] sm:$0xff]
      %v3718 = vld [vmem:[#allocation3 + $0x60] sm:$0xff]
      %v3719 = vld [vmem:[#allocation3 + $0x68] sm:$0xff]
      %v3729 = vrot.slane %v3709, 3
      %v3730 = vrot.slane %v3710, 3
      %v3731 = vsel %vm1130, %v3729, %v3730
      %v3732 = vrot.slane %v3711, 3
      %v3733 = vsel %vm1130, %v3730, %v3732
      %v3734 = vrot.slane %v3712, 3
      %v3735 = vsel %vm1130, %v3732, %v3734
      %v3736 = vrot.slane %v3713, 3
      %v3737 = vsel %vm1130, %v3734, %v3736
      %v3738 = vrot.slane %v3714, 3
      %v3739 = vsel %vm1130, %v3736, %v3738
      %v3740 = vrot.slane %v3715, 3
      %v3741 = vsel %vm1130, %v3738, %v3740
      %v3742 = vrot.slane %v3716, 3
      %v3743 = vsel %vm1130, %v3740, %v3742
      %v3744 = vrot.slane %v3717, 3
      %v3745 = vsel %vm1130, %v3742, %v3744
      %3746 = vrot.lane.b32.xlu0 %v3729, 32
      %v3747 = vpop.permute.xlu0 %3746
      %3748 = vrot.lane.b32.xlu0 %v3731, 32
      %v3749 = vpop.permute.xlu0 %3748
      %3750 = vrot.lane.b32.xlu0 %v3733, 32
      %v3751 = vpop.permute.xlu0 %3750
      %3752 = vrot.lane.b32.xlu0 %v3735, 32
      %v3753 = vpop.permute.xlu0 %3752
      %3754 = vrot.lane.b32.xlu0 %v3737, 32
      %v3755 = vpop.permute.xlu0 %3754
      %3756 = vrot.lane.b32.xlu0 %v3739, 32
      %v3757 = vpop.permute.xlu0 %3756
      %3758 = vrot.lane.b32.xlu0 %v3741, 32
      %v3759 = vpop.permute.xlu0 %3758
      %3760 = vrot.lane.b32.xlu0 %v3743, 32
      %v3761 = vpop.permute.xlu0 %3760
      %3762 = vrot.lane.b32.xlu0 %v3745, 32
      %v3763 = vpop.permute.xlu0 %3762
      %v3773 = vrot.slane %v3709, 6
      %v3774 = vrot.slane %v3710, 6
      %v3775 = vsel %vm1174, %v3773, %v3774
      %v3776 = vrot.slane %v3711, 6
      %v3777 = vsel %vm1174, %v3774, %v3776
      %v3778 = vrot.slane %v3712, 6
      %v3779 = vsel %vm1174, %v3776, %v3778
      %v3780 = vrot.slane %v3713, 6
      %v3781 = vsel %vm1174, %v3778, %v3780
      %v3782 = vrot.slane %v3714, 6
      %v3783 = vsel %vm1174, %v3780, %v3782
      %v3784 = vrot.slane %v3715, 6
      %v3785 = vsel %vm1174, %v3782, %v3784
      %v3786 = vrot.slane %v3716, 6
      %v3787 = vsel %vm1174, %v3784, %v3786
      %v3788 = vrot.slane %v3717, 6
      %v3789 = vsel %vm1174, %v3786, %v3788
      %3790 = vrot.lane.b32.xlu0 %v3773, 64
      %v3791 = vpop.permute.xlu0 %3790
      %3792 = vrot.lane.b32.xlu0 %v3775, 64
      %v3793 = vpop.permute.xlu0 %3792
      %3794 = vrot.lane.b32.xlu0 %v3777, 64
      %v3795 = vpop.permute.xlu0 %3794
      %3796 = vrot.lane.b32.xlu0 %v3779, 64
      %v3797 = vpop.permute.xlu0 %3796
      %3798 = vrot.lane.b32.xlu0 %v3781, 64
      %v3799 = vpop.permute.xlu0 %3798
      %3800 = vrot.lane.b32.xlu0 %v3783, 64
      %v3801 = vpop.permute.xlu0 %3800
      %3802 = vrot.lane.b32.xlu0 %v3785, 64
      %v3803 = vpop.permute.xlu0 %3802
      %3804 = vrot.lane.b32.xlu0 %v3787, 64
      %v3805 = vpop.permute.xlu0 %3804
      %3806 = vrot.lane.b32.xlu0 %v3789, 64
      %v3807 = vpop.permute.xlu0 %3806
      %v3817 = vrot.slane %v3710, 1
      %v3818 = vrot.slane %v3711, 1
      %v3819 = vsel %vm407, %v3817, %v3818
      %v3820 = vrot.slane %v3712, 1
      %v3821 = vsel %vm407, %v3818, %v3820
      %v3822 = vrot.slane %v3713, 1
      %v3823 = vsel %vm407, %v3820, %v3822
      %v3824 = vrot.slane %v3714, 1
      %v3825 = vsel %vm407, %v3822, %v3824
      %v3826 = vrot.slane %v3715, 1
      %v3827 = vsel %vm407, %v3824, %v3826
      %v3828 = vrot.slane %v3716, 1
      %v3829 = vsel %vm407, %v3826, %v3828
      %v3830 = vrot.slane %v3717, 1
      %v3831 = vsel %vm407, %v3828, %v3830
      %3832 = vrot.lane.b32.xlu0 %v3817, 96
      %v3833 = vpop.permute.xlu0 %3832
      %3834 = vrot.lane.b32.xlu0 %v3819, 96
      %v3835 = vpop.permute.xlu0 %3834
      %3836 = vrot.lane.b32.xlu0 %v3821, 96
      %v3837 = vpop.permute.xlu0 %3836
      %3838 = vrot.lane.b32.xlu0 %v3823, 96
      %v3839 = vpop.permute.xlu0 %3838
      %3840 = vrot.lane.b32.xlu0 %v3825, 96
      %v3841 = vpop.permute.xlu0 %3840
      %3842 = vrot.lane.b32.xlu0 %v3827, 96
      %v3843 = vpop.permute.xlu0 %3842
      %3844 = vrot.lane.b32.xlu0 %v3829, 96
      %v3845 = vpop.permute.xlu0 %3844
      %3846 = vrot.lane.b32.xlu0 %v3831, 96
      %v3847 = vpop.permute.xlu0 %3846
      %3848 = vrot.lane.b32.xlu0 %v3830, 96
      %v3849 = vpop.permute.xlu0 %3848
      %v3860 = vrot.slane %v3710, 4
      %v3861 = vrot.slane %v3711, 4
      %v3862 = vsel %vm2667, %v3860, %v3861
      %v3863 = vrot.slane %v3712, 4
      %v3864 = vsel %vm2667, %v3861, %v3863
      %v3865 = vrot.slane %v3713, 4
      %v3866 = vsel %vm2667, %v3863, %v3865
      %v3867 = vrot.slane %v3714, 4
      %v3868 = vsel %vm2667, %v3865, %v3867
      %v3869 = vrot.slane %v3715, 4
      %v3870 = vsel %vm2667, %v3867, %v3869
      %v3871 = vrot.slane %v3716, 4
      %v3872 = vsel %vm2667, %v3869, %v3871
      %v3873 = vrot.slane %v3717, 4
      %v3874 = vsel %vm2667, %v3871, %v3873
      %v3875 = vrot.slane %v3718, 4
      %v3876 = vsel %vm2667, %v3873, %v3875
      %v3886 = vrot.slane %v3710, 7
      %v3887 = vrot.slane %v3711, 7
      %v3888 = vsel %vm530, %v3886, %v3887
      %v3889 = vrot.slane %v3712, 7
      %v3890 = vsel %vm530, %v3887, %v3889
      %v3891 = vrot.slane %v3713, 7
      %v3892 = vsel %vm530, %v3889, %v3891
      %v3893 = vrot.slane %v3714, 7
      %v3894 = vsel %vm530, %v3891, %v3893
      %v3895 = vrot.slane %v3715, 7
      %v3896 = vsel %vm530, %v3893, %v3895
      %v3897 = vrot.slane %v3716, 7
      %v3898 = vsel %vm530, %v3895, %v3897
      %v3899 = vrot.slane %v3717, 7
      %v3900 = vsel %vm530, %v3897, %v3899
      %v3901 = vrot.slane %v3718, 7
      %v3902 = vsel %vm530, %v3899, %v3901
      %3903 = vrot.lane.b32.xlu0 %v3886, 32
      %v3904 = vpop.permute.xlu0 %3903
      %3905 = vrot.lane.b32.xlu0 %v3888, 32
      %v3906 = vpop.permute.xlu0 %3905
      %3907 = vrot.lane.b32.xlu0 %v3890, 32
      %v3908 = vpop.permute.xlu0 %3907
      %3909 = vrot.lane.b32.xlu0 %v3892, 32
      %v3910 = vpop.permute.xlu0 %3909
      %3911 = vrot.lane.b32.xlu0 %v3894, 32
      %v3912 = vpop.permute.xlu0 %3911
      %3913 = vrot.lane.b32.xlu0 %v3896, 32
      %v3914 = vpop.permute.xlu0 %3913
      %3915 = vrot.lane.b32.xlu0 %v3898, 32
      %v3916 = vpop.permute.xlu0 %3915
      %3917 = vrot.lane.b32.xlu0 %v3900, 32
      %v3918 = vpop.permute.xlu0 %3917
      %3919 = vrot.lane.b32.xlu0 %v3902, 32
      %v3920 = vpop.permute.xlu0 %3919
      %v3931 = vrot.slane %v3711, 2
      %v3932 = vrot.slane %v3712, 2
      %v3933 = vsel %vm451, %v3931, %v3932
      %v3934 = vrot.slane %v3713, 2
      %v3935 = vsel %vm451, %v3932, %v3934
      %v3936 = vrot.slane %v3714, 2
      %v3937 = vsel %vm451, %v3934, %v3936
      %v3938 = vrot.slane %v3715, 2
      %v3939 = vsel %vm451, %v3936, %v3938
      %v3940 = vrot.slane %v3716, 2
      %v3941 = vsel %vm451, %v3938, %v3940
      %v3942 = vrot.slane %v3717, 2
      %v3943 = vsel %vm451, %v3940, %v3942
      %v3944 = vrot.slane %v3718, 2
      %v3945 = vsel %vm451, %v3942, %v3944
      %v3946 = vrot.slane %v3719, 2
      %v3947 = vsel %vm451, %v3944, %v3946
      %3948 = vrot.lane.b32.xlu0 %v3931, 64
      %v3949 = vpop.permute.xlu0 %3948
      %3950 = vrot.lane.b32.xlu0 %v3933, 64
      %v3951 = vpop.permute.xlu0 %3950
      %3952 = vrot.lane.b32.xlu0 %v3935, 64
      %v3953 = vpop.permute.xlu0 %3952
      %3954 = vrot.lane.b32.xlu0 %v3937, 64
      %v3955 = vpop.permute.xlu0 %3954
      %3956 = vrot.lane.b32.xlu0 %v3939, 64
      %v3957 = vpop.permute.xlu0 %3956
      %3958 = vrot.lane.b32.xlu0 %v3941, 64
      %v3959 = vpop.permute.xlu0 %3958
      %3960 = vrot.lane.b32.xlu0 %v3943, 64
      %v3961 = vpop.permute.xlu0 %3960
      %3962 = vrot.lane.b32.xlu0 %v3945, 64
      %v3963 = vpop.permute.xlu0 %3962
      %3964 = vrot.lane.b32.xlu0 %v3947, 64
      %v3965 = vpop.permute.xlu0 %3964
      %v3975 = vsel %vm279, %v3708, %v3747
      %v3976 = vsel %vm279, %v3709, %v3749
      %v3977 = vsel %vm279, %v3710, %v3751
      %v3978 = vsel %vm279, %v3711, %v3753
      %v3979 = vsel %vm279, %v3712, %v3755
      %v3980 = vsel %vm279, %v3713, %v3757
      %v3981 = vsel %vm279, %v3714, %v3759
      %v3982 = vsel %vm279, %v3715, %v3761
      %v3983 = vsel %vm279, %v3716, %v3763
      %v3984 = vsel %vm505, %v3975, %v3791
      %v3985 = vsel %vm505, %v3976, %v3793
      %v3986 = vsel %vm505, %v3977, %v3795
      %v3987 = vsel %vm505, %v3978, %v3797
      %v3988 = vsel %vm505, %v3979, %v3799
      %v3989 = vsel %vm505, %v3980, %v3801
      %v3990 = vsel %vm505, %v3981, %v3803
      %v3991 = vsel %vm505, %v3982, %v3805
      %v3992 = vsel %vm505, %v3983, %v3807
      %v3993 = vsel %vm548, %v3984, %v3833
      %v3994 = vsel %vm548, %v3985, %v3835
      %v3995 = vsel %vm548, %v3986, %v3837
      %v3996 = vsel %vm548, %v3987, %v3839
      %v3997 = vsel %vm548, %v3988, %v3841
      %v3998 = vsel %vm548, %v3989, %v3843
      %v3999 = vsel %vm548, %v3990, %v3845
      %v4000 = vsel %vm548, %v3991, %v3847
      %v4001 = vsel %vm548, %v3992, %v3849
      %v4002 = vsel %vm279, %v3860, %v3904
      %v4003 = vsel %vm279, %v3862, %v3906
      %v4004 = vsel %vm279, %v3864, %v3908
      %v4005 = vsel %vm279, %v3866, %v3910
      %v4006 = vsel %vm279, %v3868, %v3912
      %v4007 = vsel %vm279, %v3870, %v3914
      %v4008 = vsel %vm279, %v3872, %v3916
      %v4009 = vsel %vm279, %v3874, %v3918
      %v4010 = vsel %vm279, %v3876, %v3920
      %v4011 = vsel %vm505, %v4002, %v3949
      %v4012 = vsel %vm505, %v4003, %v3951
      %v4013 = vsel %vm505, %v4004, %v3953
      %v4014 = vsel %vm505, %v4005, %v3955
      %v4015 = vsel %vm505, %v4006, %v3957
      %v4016 = vsel %vm505, %v4007, %v3959
      %v4017 = vsel %vm505, %v4008, %v3961
      %v4018 = vsel %vm505, %v4009, %v3963
      %v4019 = vsel %vm505, %v4010, %v3965
      %v4021 = vlaneseq
      %v4022 = vshrl.u32 %v4021, 7
      %v4023 = vsub.s32 0, %v4022
      %v4024 = vrot.slane %v3643, %v4023
      %v4044 = vrot.slane %v3993, 7
      %v4045 = vrot.slane %v3994, 7
      %v4046 = vsel %vm530, %v4044, %v4045
      %v4047 = vrot.slane %v4011, 7
      %v4048 = vrot.slane %v4012, 7
      %v4049 = vsel %vm530, %v4047, %v4048
      %v4050 = vrot.slane %v3995, 7
      %v4051 = vsel %vm530, %v4045, %v4050
      %v4052 = vrot.slane %v4013, 7
      %v4053 = vsel %vm530, %v4048, %v4052
      %v4054 = vrot.slane %v3996, 7
      %v4055 = vsel %vm530, %v4050, %v4054
      %v4056 = vrot.slane %v4014, 7
      %v4057 = vsel %vm530, %v4052, %v4056
      %v4058 = vrot.slane %v3997, 7
      %v4059 = vsel %vm530, %v4054, %v4058
      %v4060 = vrot.slane %v4015, 7
      %v4061 = vsel %vm530, %v4056, %v4060
      %v4062 = vrot.slane %v3998, 7
      %v4063 = vsel %vm530, %v4058, %v4062
      %v4064 = vrot.slane %v4016, 7
      %v4065 = vsel %vm530, %v4060, %v4064
      %v4066 = vrot.slane %v3999, 7
      %v4067 = vsel %vm530, %v4062, %v4066
      %v4068 = vrot.slane %v4017, 7
      %v4069 = vsel %vm530, %v4064, %v4068
      %v4070 = vrot.slane %v4000, 7
      %v4071 = vsel %vm530, %v4066, %v4070
      %v4072 = vrot.slane %v4018, 7
      %v4073 = vsel %vm530, %v4068, %v4072
      %v4074 = vrot.slane %v4001, 7
      %v4075 = vsel %vm530, %v4070, %v4074
      %v4076 = vrot.slane %v4019, 7
      %v4077 = vsel %vm530, %v4072, %v4076
      %v4086 = vsel %vm548, %v4049, 0
      %v4088 = vsel %vm548, %v4053, 0
      %v4090 = vsel %vm548, %v4057, 0
      %v4092 = vsel %vm548, %v4061, 0
      %v4094 = vsel %vm548, %v4065, 0
      %v4096 = vsel %vm548, %v4069, 0
      %v4098 = vsel %vm548, %v4073, 0
      %v4100 = vsel %vm548, %v4077, 0
      %4102 = vmatprep.subr.mxu0 0.0
      %4103 = vmatpush1.msra.mxu0 %v3614
      %4104 = vmatprep.subr.mxu0 0.0
      %4105 = vmatpush1.msra.mxu0 %v3615
      %4106 = vmatprep.subr.mxu0 0.0
      %4107 = vmatpush1.msra.mxu0 %v3616
      %4108 = vmatprep.subr.mxu0 0.0
      %4109 = vmatpush1.msra.mxu0 %v3617
      %4110 = vmatprep.subr.mxu0 0.0
      %4111 = vmatpush1.msra.mxu0 %v3618
      %4112 = vmatprep.subr.mxu0 0.0
      %4113 = vmatpush1.msra.mxu0 %v3619
      %4114 = vmatprep.subr.mxu0 0.0
      %4115 = vmatpush1.msra.mxu0 %v3620
      %4116 = vmatprep.subr.mxu0 0.0
      %4117 = vmatpush1.msra.mxu0 %v3621
      %4118 = vmatprep.subr.mxu0 0.0
      %4119 = vmatpush1.msra.mxu0 %v3622
      %4120 = vmatprep.subr.mxu0 0.0
      %4121 = vmatpush1.msra.mxu0 %v3623
      %4122 = vmatprep.subr.mxu0 0.0
      %4123 = vmatpush1.msra.mxu0 %v3624
      %4124 = vmatprep.subr.mxu0 0.0
      %4125 = vmatpush1.msra.mxu0 %v3625
      %4126 = vmatprep.subr.mxu0 0.0
      %4127 = vmatpush1.msra.mxu0 %v3626
      %4128 = vmatprep.subr.mxu0 0.0
      %4129 = vmatpush1.msra.mxu0 %v3627
      %4130 = vmatprep.subr.mxu0 0.0
      %4131 = vmatpush1.msra.mxu0 %v3628
      %4132 = vmatprep.subr.mxu0 0.0
      %4133 = vmatpush1.msra.mxu0 %v3629
      %4134 = vmatprep.subr.mxu0 0.0
      %4135 = vmatpush1.msra.mxu0 %v3630
      %4136 = vmatprep.subr.mxu0 0.0
      %4137 = vmatpush1.msra.mxu0 %v3631
      %4138 = vmatprep.subr.mxu0 0.0
      %4139 = vmatpush1.msra.mxu0 %v3632
      %4140 = vmatprep.subr.mxu0 0.0
      %4141 = vmatpush1.msra.mxu0 %v3633
      %4142 = vmatprep.subr.mxu0 0.0
      %4143 = vmatpush1.msra.mxu0 %v3634
      %4144 = vmatprep.subr.mxu0 0.0
      %4145 = vmatpush1.msra.mxu0 %v3635
      %4146 = vmatprep.subr.mxu0 0.0
      %4147 = vmatpush1.msra.mxu0 %v3636
      %4148 = vmatprep.subr.mxu0 0.0
      %4149 = vmatpush1.msra.mxu0 %v3637
      %4150 = vmatprep.subr.mxu0 0.0
      %4151 = vmatpush1.msra.mxu0 %v3638
      %4152 = vmatprep.subr.mxu0 0.0
      %4153 = vmatpush1.msra.mxu0 %v3639
      %4154 = vmatprep.subr.mxu0 0.0
      %4155 = vmatpush1.msra.mxu0 %v3640
      %4156 = vmatprep.subr.mxu0 0.0
      %4157 = vmatpush1.msra.mxu0 %v3641
      %4158 = vmatprep.subr.mxu0 0.0
      %4159 = vmatpush1.msra.mxu0 0.0
      %4160 = vmatprep.subr.mxu0 0.0
      %4161 = vmatpush1.msra.mxu0 0.0
      %4162 = vmatprep.subr.mxu0 0.0
      %4163 = vmatpush1.msra.mxu0 0.0
      %4164 = vmatprep.subr.mxu0 0.0
      %4165 = vmatpush1.msra.mxu0 0.0
      %4166 = vmatprep.mubr.f32.mxu0 %v4086
      %4167 = vmatmul.mubr.f32.gmra.mrb[0].mxu0 %v4046
      %v4168 = vpop.f32.mrb[0].mxu0
      %v4169 = vadd.f32 %v4024, %v4168
      %v4170 = vpop.f32.mrb[0].mxu0
      %4171 = vmatprep.mubr.f32.mxu0 %v4088
      %4172 = vmatmul.mubr.f32.gmra.mrb[0].mxu0 %v4051
      %v4173 = vpop.f32.mrb[0].mxu0
      %v4174 = vadd.f32 %v4024, %v4173
      %v4175 = vpop.f32.mrb[0].mxu0
      %4176 = vmatprep.mubr.f32.mxu0 %v4090
      %4177 = vmatmul.mubr.f32.gmra.mrb[0].mxu0 %v4055
      %v4178 = vpop.f32.mrb[0].mxu0
      %v4179 = vadd.f32 %v4024, %v4178
      %v4180 = vpop.f32.mrb[0].mxu0
      %4181 = vmatprep.mubr.f32.mxu0 %v4092
      %4182 = vmatmul.mubr.f32.gmra.mrb[0].mxu0 %v4059
      %v4183 = vpop.f32.mrb[0].mxu0
      %v4184 = vadd.f32 %v4024, %v4183
      %v4185 = vpop.f32.mrb[0].mxu0
      %4186 = vmatprep.mubr.f32.mxu0 %v4094
      %4187 = vmatmul.mubr.f32.gmra.mrb[0].mxu0 %v4063
      %v4188 = vpop.f32.mrb[0].mxu0
      %v4189 = vadd.f32 %v4024, %v4188
      %v4190 = vpop.f32.mrb[0].mxu0
      %4191 = vmatprep.mubr.f32.mxu0 %v4096
      %4192 = vmatmul.mubr.f32.gmra.mrb[0].mxu0 %v4067
      %v4193 = vpop.f32.mrb[0].mxu0
      %v4194 = vadd.f32 %v4024, %v4193
      %v4195 = vpop.f32.mrb[0].mxu0
      %4196 = vmatprep.mubr.f32.mxu0 %v4098
      %4197 = vmatmul.mubr.f32.gmra.mrb[0].mxu0 %v4071
      %v4198 = vpop.f32.mrb[0].mxu0
      %v4199 = vadd.f32 %v4024, %v4198
      %v4200 = vpop.f32.mrb[0].mxu0
      %4201 = vmatprep.mubr.f32.mxu0 %v4100
      %4202 = vmatmul.mubr.f32.gmra.mrb[0].mxu0 %v4075
      %v4203 = vpop.f32.mrb[0].mxu0
      %v4204 = vadd.f32 %v4024, %v4203
      %v4205 = vpop.f32.mrb[0].mxu0
      %4206 = vdwg.mxu0
      %s4207 = scalar_lea.vmem %s3, 672
      %v4208 = vld [vmem:[%s4207] sm:$0xff]
      %v4209 = vld [vmem:[%s4207 + $0x8] sm:$0xff]
      %v4210 = vld [vmem:[%s4207 + $0x10] sm:$0xff]
      %v4211 = vld [vmem:[%s4207 + $0x18] sm:$0xff]
      %v4212 = vld [vmem:[%s4207 + $0x20] sm:$0xff]
      %v4213 = vld [vmem:[%s4207 + $0x28] sm:$0xff]
      %v4214 = vld [vmem:[%s4207 + $0x30] sm:$0xff]
      %v4215 = vld [vmem:[%s4207 + $0x38] sm:$0xff]
      %v4216 = vld [vmem:[%s4207 + $0x40] sm:$0xff]
      %v4217 = vld [vmem:[%s4207 + $0x48] sm:$0xff]
      %v4218 = vld [vmem:[%s4207 + $0x50] sm:$0xff]
      %v4219 = vld [vmem:[%s4207 + $0x58] sm:$0xff]
      %v4220 = vld [vmem:[%s4207 + $0x60] sm:$0xff]
      %v4221 = vld [vmem:[%s4207 + $0x68] sm:$0xff]
      %v4222 = vld [vmem:[%s4207 + $0x70] sm:$0xff]
      %v4223 = vld [vmem:[%s4207 + $0x78] sm:$0xff]
      %v4224 = vld [vmem:[%s4207 + $0x80] sm:$0xff]
      %v4225 = vld [vmem:[%s4207 + $0x88] sm:$0xff]
      %v4226 = vld [vmem:[%s4207 + $0x90] sm:$0xff]
      %v4227 = vld [vmem:[%s4207 + $0x98] sm:$0xff]
      %v4228 = vld [vmem:[%s4207 + $0xa0] sm:$0xff]
      %v4229 = vld [vmem:[%s4207 + $0xa8] sm:$0xff]
      %v4230 = vld [vmem:[%s4207 + $0xb0] sm:$0xff]
      %v4231 = vld [vmem:[%s4207 + $0xb8] sm:$0xff]
      %v4232 = vld [vmem:[%s4207 + $0xc0] sm:$0xff]
      %v4233 = vld [vmem:[%s4207 + $0xc8] sm:$0xff]
      %v4234 = vld [vmem:[%s4207 + $0xd0] sm:$0xff]
      %v4235 = vld [vmem:[%s4207 + $0xd8] sm:$0xff]
      %s4236 = scalar_lea.vmem %s4, 3
      %v4237 = vld [vmem:[%s4236] sm:$0x1]
      %v4238 = vxor.u32 %v4169, 2147483648
      %v4239 = vxor.u32 %v4174, 2147483648
      %v4240 = vxor.u32 %v4179, 2147483648
      %v4241 = vxor.u32 %v4184, 2147483648
      %v4242 = vxor.u32 %v4189, 2147483648
      %v4243 = vxor.u32 %v4194, 2147483648
      %v4244 = vxor.u32 %v4199, 2147483648
      %v4245 = vxor.u32 %v4204, 2147483648
      %v4246 = vmul.f32 %v4238, 1.442695
      %v4247 = vpow.pop %v4246
      %v4248 = vmul.f32 %v4239, 1.442695
      %v4249 = vpow.pop %v4248
      %v4250 = vmul.f32 %v4240, 1.442695
      %v4251 = vpow.pop %v4250
      %v4252 = vmul.f32 %v4241, 1.442695
      %v4253 = vpow.pop %v4252
      %v4254 = vmul.f32 %v4242, 1.442695
      %v4255 = vpow.pop %v4254
      %v4256 = vmul.f32 %v4243, 1.442695
      %v4257 = vpow.pop %v4256
      %v4258 = vmul.f32 %v4244, 1.442695
      %v4259 = vpow.pop %v4258
      %v4260 = vmul.f32 %v4245, 1.442695
      %v4261 = vpow.pop %v4260
      %v4262 = vadd.f32 %v4247, 1.0
      %v4263 = vadd.f32 %v4249, 1.0
      %v4264 = vadd.f32 %v4251, 1.0
      %v4265 = vadd.f32 %v4253, 1.0
      %v4266 = vadd.f32 %v4255, 1.0
      %v4267 = vadd.f32 %v4257, 1.0
      %v4268 = vadd.f32 %v4259, 1.0
      %v4269 = vadd.f32 %v4261, 1.0
      %v4270 = vrcp.pop %v4262
      %v4271 = vmul.f32 1.0, %v4270
      %v4272 = vrcp.pop %v4263
      %v4273 = vmul.f32 1.0, %v4272
      %v4274 = vrcp.pop %v4264
      %v4275 = vmul.f32 1.0, %v4274
      %v4276 = vrcp.pop %v4265
      %v4277 = vmul.f32 1.0, %v4276
      %v4278 = vrcp.pop %v4266
      %v4279 = vmul.f32 1.0, %v4278
      %v4280 = vrcp.pop %v4267
      %v4281 = vmul.f32 1.0, %v4280
      %v4282 = vrcp.pop %v4268
      %v4283 = vmul.f32 1.0, %v4282
      %v4284 = vrcp.pop %v4269
      %v4285 = vmul.f32 1.0, %v4284
      %v4286 = vmul.f32 %v4169, %v4271
      %v4287 = vmul.f32 %v4174, %v4273
      %v4288 = vmul.f32 %v4179, %v4275
      %v4289 = vmul.f32 %v4184, %v4277
      %v4290 = vmul.f32 %v4189, %v4279
      %v4291 = vmul.f32 %v4194, %v4281
      %v4292 = vmul.f32 %v4199, %v4283
      %v4293 = vmul.f32 %v4204, %v4285
      %4294 = vst.msk [vmem:[#allocation3 + $0x20] sm:$0xff] %vm279, %v4286
      %4295 = vst.msk [vmem:[#allocation3 + $0x28] sm:$0xff] %vm279, %v4287
      %4296 = vst.msk [vmem:[#allocation3 + $0x30] sm:$0xff] %vm279, %v4288
      %4297 = vst.msk [vmem:[#allocation3 + $0x38] sm:$0xff] %vm279, %v4289
      %4298 = vst.msk [vmem:[#allocation3 + $0x40] sm:$0xff] %vm279, %v4290
      %4299 = vst.msk [vmem:[#allocation3 + $0x48] sm:$0xff] %vm279, %v4291
      %4300 = vst.msk [vmem:[#allocation3 + $0x50] sm:$0xff] %vm279, %v4292
      %4301 = vst.msk [vmem:[#allocation3 + $0x58] sm:$0xff] %vm279, %v4293
      %v4302 = vld [vmem:[#allocation3 + $0x18] sm:$0xff]
      %v4303 = vld [vmem:[#allocation3 + $0x20] sm:$0xff]
      %v4304 = vld [vmem:[#allocation3 + $0x28] sm:$0xff]
      %v4305 = vld [vmem:[#allocation3 + $0x30] sm:$0xff]
      %v4306 = vld [vmem:[#allocation3 + $0x38] sm:$0xff]
      %v4307 = vld [vmem:[#allocation3 + $0x40] sm:$0xff]
      %v4308 = vld [vmem:[#allocation3 + $0x48] sm:$0xff]
      %v4309 = vld [vmem:[#allocation3 + $0x50] sm:$0xff]
      %v4310 = vld [vmem:[#allocation3 + $0x58] sm:$0xff]
      %v4311 = vld [vmem:[#allocation3 + $0x60] sm:$0xff]
      %v4321 = vrot.slane %v4302, 1
      %v4322 = vrot.slane %v4303, 1
      %v4323 = vsel %vm407, %v4321, %v4322
      %v4324 = vrot.slane %v4304, 1
      %v4325 = vsel %vm407, %v4322, %v4324
      %v4326 = vrot.slane %v4305, 1
      %v4327 = vsel %vm407, %v4324, %v4326
      %v4328 = vrot.slane %v4306, 1
      %v4329 = vsel %vm407, %v4326, %v4328
      %v4330 = vrot.slane %v4307, 1
      %v4331 = vsel %vm407, %v4328, %v4330
      %v4332 = vrot.slane %v4308, 1
      %v4333 = vsel %vm407, %v4330, %v4332
      %v4334 = vrot.slane %v4309, 1
      %v4335 = vsel %vm407, %v4332, %v4334
      %v4336 = vrot.slane %v4310, 1
      %v4337 = vsel %vm407, %v4334, %v4336
      %4338 = vrot.lane.b32.xlu0 %v4323, 32
      %v4339 = vpop.permute.xlu0 %4338
      %4340 = vrot.lane.b32.xlu0 %v4325, 32
      %v4341 = vpop.permute.xlu0 %4340
      %4342 = vrot.lane.b32.xlu0 %v4327, 32
      %v4343 = vpop.permute.xlu0 %4342
      %4344 = vrot.lane.b32.xlu0 %v4329, 32
      %v4345 = vpop.permute.xlu0 %4344
      %4346 = vrot.lane.b32.xlu0 %v4331, 32
      %v4347 = vpop.permute.xlu0 %4346
      %4348 = vrot.lane.b32.xlu0 %v4333, 32
      %v4349 = vpop.permute.xlu0 %4348
      %4350 = vrot.lane.b32.xlu0 %v4335, 32
      %v4351 = vpop.permute.xlu0 %4350
      %4352 = vrot.lane.b32.xlu0 %v4337, 32
      %v4353 = vpop.permute.xlu0 %4352
      %4354 = vrot.lane.b32.xlu0 %v4336, 32
      %v4355 = vpop.permute.xlu0 %4354
      %v4365 = vrot.slane %v4302, 2
      %v4366 = vrot.slane %v4303, 2
      %v4367 = vsel %vm451, %v4365, %v4366
      %v4368 = vrot.slane %v4304, 2
      %v4369 = vsel %vm451, %v4366, %v4368
      %v4370 = vrot.slane %v4305, 2
      %v4371 = vsel %vm451, %v4368, %v4370
      %v4372 = vrot.slane %v4306, 2
      %v4373 = vsel %vm451, %v4370, %v4372
      %v4374 = vrot.slane %v4307, 2
      %v4375 = vsel %vm451, %v4372, %v4374
      %v4376 = vrot.slane %v4308, 2
      %v4377 = vsel %vm451, %v4374, %v4376
      %v4378 = vrot.slane %v4309, 2
      %v4379 = vsel %vm451, %v4376, %v4378
      %v4380 = vrot.slane %v4310, 2
      %v4381 = vsel %vm451, %v4378, %v4380
      %4382 = vrot.lane.b32.xlu0 %v4367, 64
      %v4383 = vpop.permute.xlu0 %4382
      %4384 = vrot.lane.b32.xlu0 %v4369, 64
      %v4385 = vpop.permute.xlu0 %4384
      %4386 = vrot.lane.b32.xlu0 %v4371, 64
      %v4387 = vpop.permute.xlu0 %4386
      %4388 = vrot.lane.b32.xlu0 %v4373, 64
      %v4389 = vpop.permute.xlu0 %4388
      %4390 = vrot.lane.b32.xlu0 %v4375, 64
      %v4391 = vpop.permute.xlu0 %4390
      %4392 = vrot.lane.b32.xlu0 %v4377, 64
      %v4393 = vpop.permute.xlu0 %4392
      %4394 = vrot.lane.b32.xlu0 %v4379, 64
      %v4395 = vpop.permute.xlu0 %4394
      %4396 = vrot.lane.b32.xlu0 %v4381, 64
      %v4397 = vpop.permute.xlu0 %4396
      %4398 = vrot.lane.b32.xlu0 %v4380, 64
      %v4399 = vpop.permute.xlu0 %4398
      %v4409 = vrot.slane %v4303, 3
      %v4410 = vrot.slane %v4304, 3
      %v4411 = vsel %vm1130, %v4409, %v4410
      %v4412 = vrot.slane %v4305, 3
      %v4413 = vsel %vm1130, %v4410, %v4412
      %v4414 = vrot.slane %v4306, 3
      %v4415 = vsel %vm1130, %v4412, %v4414
      %v4416 = vrot.slane %v4307, 3
      %v4417 = vsel %vm1130, %v4414, %v4416
      %v4418 = vrot.slane %v4308, 3
      %v4419 = vsel %vm1130, %v4416, %v4418
      %v4420 = vrot.slane %v4309, 3
      %v4421 = vsel %vm1130, %v4418, %v4420
      %v4422 = vrot.slane %v4310, 3
      %v4423 = vsel %vm1130, %v4420, %v4422
      %4424 = vrot.lane.b32.xlu0 %v4409, 96
      %v4425 = vpop.permute.xlu0 %4424
      %4426 = vrot.lane.b32.xlu0 %v4411, 96
      %v4427 = vpop.permute.xlu0 %4426
      %4428 = vrot.lane.b32.xlu0 %v4413, 96
      %v4429 = vpop.permute.xlu0 %4428
      %4430 = vrot.lane.b32.xlu0 %v4415, 96
      %v4431 = vpop.permute.xlu0 %4430
      %4432 = vrot.lane.b32.xlu0 %v4417, 96
      %v4433 = vpop.permute.xlu0 %4432
      %4434 = vrot.lane.b32.xlu0 %v4419, 96
      %v4435 = vpop.permute.xlu0 %4434
      %4436 = vrot.lane.b32.xlu0 %v4421, 96
      %v4437 = vpop.permute.xlu0 %4436
      %4438 = vrot.lane.b32.xlu0 %v4423, 96
      %v4439 = vpop.permute.xlu0 %4438
      %4440 = vrot.lane.b32.xlu0 %v4422, 96
      %v4441 = vpop.permute.xlu0 %4440
      %v4452 = vrot.slane %v4303, 4
      %v4453 = vrot.slane %v4304, 4
      %v4454 = vsel %vm2667, %v4452, %v4453
      %v4455 = vrot.slane %v4305, 4
      %v4456 = vsel %vm2667, %v4453, %v4455
      %v4457 = vrot.slane %v4306, 4
      %v4458 = vsel %vm2667, %v4455, %v4457
      %v4459 = vrot.slane %v4307, 4
      %v4460 = vsel %vm2667, %v4457, %v4459
      %v4461 = vrot.slane %v4308, 4
      %v4462 = vsel %vm2667, %v4459, %v4461
      %v4463 = vrot.slane %v4309, 4
      %v4464 = vsel %vm2667, %v4461, %v4463
      %v4465 = vrot.slane %v4310, 4
      %v4466 = vsel %vm2667, %v4463, %v4465
      %v4467 = vrot.slane %v4311, 4
      %v4468 = vsel %vm2667, %v4465, %v4467
      %v4478 = vrot.slane %v4303, 5
      %v4479 = vrot.slane %v4304, 5
      %v4480 = vsel %vm1252, %v4478, %v4479
      %v4481 = vrot.slane %v4305, 5
      %v4482 = vsel %vm1252, %v4479, %v4481
      %v4483 = vrot.slane %v4306, 5
      %v4484 = vsel %vm1252, %v4481, %v4483
      %v4485 = vrot.slane %v4307, 5
      %v4486 = vsel %vm1252, %v4483, %v4485
      %v4487 = vrot.slane %v4308, 5
      %v4488 = vsel %vm1252, %v4485, %v4487
      %v4489 = vrot.slane %v4309, 5
      %v4490 = vsel %vm1252, %v4487, %v4489
      %v4491 = vrot.slane %v4310, 5
      %v4492 = vsel %vm1252, %v4489, %v4491
      %v4493 = vrot.slane %v4311, 5
      %v4494 = vsel %vm1252, %v4491, %v4493
      %4495 = vrot.lane.b32.xlu0 %v4478, 32
      %v4496 = vpop.permute.xlu0 %4495
      %4497 = vrot.lane.b32.xlu0 %v4480, 32
      %v4498 = vpop.permute.xlu0 %4497
      %4499 = vrot.lane.b32.xlu0 %v4482, 32
      %v4500 = vpop.permute.xlu0 %4499
      %4501 = vrot.lane.b32.xlu0 %v4484, 32
      %v4502 = vpop.permute.xlu0 %4501
      %4503 = vrot.lane.b32.xlu0 %v4486, 32
      %v4504 = vpop.permute.xlu0 %4503
      %4505 = vrot.lane.b32.xlu0 %v4488, 32
      %v4506 = vpop.permute.xlu0 %4505
      %4507 = vrot.lane.b32.xlu0 %v4490, 32
      %v4508 = vpop.permute.xlu0 %4507
      %4509 = vrot.lane.b32.xlu0 %v4492, 32
      %v4510 = vpop.permute.xlu0 %4509
      %4511 = vrot.lane.b32.xlu0 %v4494, 32
      %v4512 = vpop.permute.xlu0 %4511
      %v4522 = vrot.slane %v4303, 6
      %v4523 = vrot.slane %v4304, 6
      %v4524 = vsel %vm1174, %v4522, %v4523
      %v4525 = vrot.slane %v4305, 6
      %v4526 = vsel %vm1174, %v4523, %v4525
      %v4527 = vrot.slane %v4306, 6
      %v4528 = vsel %vm1174, %v4525, %v4527
      %v4529 = vrot.slane %v4307, 6
      %v4530 = vsel %vm1174, %v4527, %v4529
      %v4531 = vrot.slane %v4308, 6
      %v4532 = vsel %vm1174, %v4529, %v4531
      %v4533 = vrot.slane %v4309, 6
      %v4534 = vsel %vm1174, %v4531, %v4533
      %v4535 = vrot.slane %v4310, 6
      %v4536 = vsel %vm1174, %v4533, %v4535
      %v4537 = vrot.slane %v4311, 6
      %v4538 = vsel %vm1174, %v4535, %v4537
      %4539 = vrot.lane.b32.xlu0 %v4522, 64
      %v4540 = vpop.permute.xlu0 %4539
      %4541 = vrot.lane.b32.xlu0 %v4524, 64
      %v4542 = vpop.permute.xlu0 %4541
      %4543 = vrot.lane.b32.xlu0 %v4526, 64
      %v4544 = vpop.permute.xlu0 %4543
      %4545 = vrot.lane.b32.xlu0 %v4528, 64
      %v4546 = vpop.permute.xlu0 %4545
      %4547 = vrot.lane.b32.xlu0 %v4530, 64
      %v4548 = vpop.permute.xlu0 %4547
      %4549 = vrot.lane.b32.xlu0 %v4532, 64
      %v4550 = vpop.permute.xlu0 %4549
      %4551 = vrot.lane.b32.xlu0 %v4534, 64
      %v4552 = vpop.permute.xlu0 %4551
      %4553 = vrot.lane.b32.xlu0 %v4536, 64
      %v4554 = vpop.permute.xlu0 %4553
      %4555 = vrot.lane.b32.xlu0 %v4538, 64
      %v4556 = vpop.permute.xlu0 %4555
      %v4566 = vsel %vm279, %v4302, %v4339
      %v4567 = vsel %vm279, %v4303, %v4341
      %v4568 = vsel %vm279, %v4304, %v4343
      %v4569 = vsel %vm279, %v4305, %v4345
      %v4570 = vsel %vm279, %v4306, %v4347
      %v4571 = vsel %vm279, %v4307, %v4349
      %v4572 = vsel %vm279, %v4308, %v4351
      %v4573 = vsel %vm279, %v4309, %v4353
      %v4574 = vsel %vm279, %v4310, %v4355
      %v4575 = vsel %vm505, %v4566, %v4383
      %v4576 = vsel %vm505, %v4567, %v4385
      %v4577 = vsel %vm505, %v4568, %v4387
      %v4578 = vsel %vm505, %v4569, %v4389
      %v4579 = vsel %vm505, %v4570, %v4391
      %v4580 = vsel %vm505, %v4571, %v4393
      %v4581 = vsel %vm505, %v4572, %v4395
      %v4582 = vsel %vm505, %v4573, %v4397
      %v4583 = vsel %vm505, %v4574, %v4399
      %v4584 = vsel %vm548, %v4575, %v4425
      %v4585 = vsel %vm548, %v4576, %v4427
      %v4586 = vsel %vm548, %v4577, %v4429
      %v4587 = vsel %vm548, %v4578, %v4431
      %v4588 = vsel %vm548, %v4579, %v4433
      %v4589 = vsel %vm548, %v4580, %v4435
      %v4590 = vsel %vm548, %v4581, %v4437
      %v4591 = vsel %vm548, %v4582, %v4439
      %v4592 = vsel %vm548, %v4583, %v4441
      %v4593 = vsel %vm279, %v4452, %v4496
      %v4594 = vsel %vm279, %v4454, %v4498
      %v4595 = vsel %vm279, %v4456, %v4500
      %v4596 = vsel %vm279, %v4458, %v4502
      %v4597 = vsel %vm279, %v4460, %v4504
      %v4598 = vsel %vm279, %v4462, %v4506
      %v4599 = vsel %vm279, %v4464, %v4508
      %v4600 = vsel %vm279, %v4466, %v4510
      %v4601 = vsel %vm279, %v4468, %v4512
      %v4602 = vsel %vm505, %v4593, %v4540
      %v4603 = vsel %vm505, %v4594, %v4542
      %v4604 = vsel %vm505, %v4595, %v4544
      %v4605 = vsel %vm505, %v4596, %v4546
      %v4606 = vsel %vm505, %v4597, %v4548
      %v4607 = vsel %vm505, %v4598, %v4550
      %v4608 = vsel %vm505, %v4599, %v4552
      %v4609 = vsel %vm505, %v4600, %v4554
      %v4610 = vsel %vm505, %v4601, %v4556
      %v4612 = vlaneseq
      %v4613 = vshrl.u32 %v4612, 7
      %v4614 = vsub.s32 0, %v4613
      %v4615 = vrot.slane %v4237, %v4614
      %v4635 = vrot.slane %v4584, 5
      %v4636 = vrot.slane %v4585, 5
      %v4637 = vsel %vm1252, %v4635, %v4636
      %v4638 = vrot.slane %v4602, 5
      %v4639 = vrot.slane %v4603, 5
      %v4640 = vsel %vm1252, %v4638, %v4639
      %v4641 = vrot.slane %v4586, 5
      %v4642 = vsel %vm1252, %v4636, %v4641
      %v4643 = vrot.slane %v4604, 5
      %v4644 = vsel %vm1252, %v4639, %v4643
      %v4645 = vrot.slane %v4587, 5
      %v4646 = vsel %vm1252, %v4641, %v4645
      %v4647 = vrot.slane %v4605, 5
      %v4648 = vsel %vm1252, %v4643, %v4647
      %v4649 = vrot.slane %v4588, 5
      %v4650 = vsel %vm1252, %v4645, %v4649
      %v4651 = vrot.slane %v4606, 5
      %v4652 = vsel %vm1252, %v4647, %v4651
      %v4653 = vrot.slane %v4589, 5
      %v4654 = vsel %vm1252, %v4649, %v4653
      %v4655 = vrot.slane %v4607, 5
      %v4656 = vsel %vm1252, %v4651, %v4655
      %v4657 = vrot.slane %v4590, 5
      %v4658 = vsel %vm1252, %v4653, %v4657
      %v4659 = vrot.slane %v4608, 5
      %v4660 = vsel %vm1252, %v4655, %v4659
      %v4661 = vrot.slane %v4591, 5
      %v4662 = vsel %vm1252, %v4657, %v4661
      %v4663 = vrot.slane %v4609, 5
      %v4664 = vsel %vm1252, %v4659, %v4663
      %v4665 = vrot.slane %v4592, 5
      %v4666 = vsel %vm1252, %v4661, %v4665
      %v4667 = vrot.slane %v4610, 5
      %v4668 = vsel %vm1252, %v4663, %v4667
      %v4677 = vsel %vm548, %v4640, 0
      %v4679 = vsel %vm548, %v4644, 0
      %v4681 = vsel %vm548, %v4648, 0
      %v4683 = vsel %vm548, %v4652, 0
      %v4685 = vsel %vm548, %v4656, 0
      %v4687 = vsel %vm548, %v4660, 0
      %v4689 = vsel %vm548, %v4664, 0
      %v4691 = vsel %vm548, %v4668, 0
      %4693 = vmatprep.subr.mxu0 0.0
      %4694 = vmatpush1.msra.mxu0 %v4208
      %4695 = vmatprep.subr.mxu0 0.0
      %4696 = vmatpush1.msra.mxu0 %v4209
      %4697 = vmatprep.subr.mxu0 0.0
      %4698 = vmatpush1.msra.mxu0 %v4210
      %4699 = vmatprep.subr.mxu0 0.0
      %4700 = vmatpush1.msra.mxu0 %v4211
      %4701 = vmatprep.subr.mxu0 0.0
      %4702 = vmatpush1.msra.mxu0 %v4212
      %4703 = vmatprep.subr.mxu0 0.0
      %4704 = vmatpush1.msra.mxu0 %v4213
      %4705 = vmatprep.subr.mxu0 0.0
      %4706 = vmatpush1.msra.mxu0 %v4214
      %4707 = vmatprep.subr.mxu0 0.0
      %4708 = vmatpush1.msra.mxu0 %v4215
      %4709 = vmatprep.subr.mxu0 0.0
      %4710 = vmatpush1.msra.mxu0 %v4216
      %4711 = vmatprep.subr.mxu0 0.0
      %4712 = vmatpush1.msra.mxu0 %v4217
      %4713 = vmatprep.subr.mxu0 0.0
      %4714 = vmatpush1.msra.mxu0 %v4218
      %4715 = vmatprep.subr.mxu0 0.0
      %4716 = vmatpush1.msra.mxu0 %v4219
      %4717 = vmatprep.subr.mxu0 0.0
      %4718 = vmatpush1.msra.mxu0 %v4220
      %4719 = vmatprep.subr.mxu0 0.0
      %4720 = vmatpush1.msra.mxu0 %v4221
      %4721 = vmatprep.subr.mxu0 0.0
      %4722 = vmatpush1.msra.mxu0 %v4222
      %4723 = vmatprep.subr.mxu0 0.0
      %4724 = vmatpush1.msra.mxu0 %v4223
      %4725 = vmatprep.subr.mxu0 0.0
      %4726 = vmatpush1.msra.mxu0 %v4224
      %4727 = vmatprep.subr.mxu0 0.0
      %4728 = vmatpush1.msra.mxu0 %v4225
      %4729 = vmatprep.subr.mxu0 0.0
      %4730 = vmatpush1.msra.mxu0 %v4226
      %4731 = vmatprep.subr.mxu0 0.0
      %4732 = vmatpush1.msra.mxu0 %v4227
      %4733 = vmatprep.subr.mxu0 0.0
      %4734 = vmatpush1.msra.mxu0 %v4228
      %4735 = vmatprep.subr.mxu0 0.0
      %4736 = vmatpush1.msra.mxu0 %v4229
      %4737 = vmatprep.subr.mxu0 0.0
      %4738 = vmatpush1.msra.mxu0 %v4230
      %4739 = vmatprep.subr.mxu0 0.0
      %4740 = vmatpush1.msra.mxu0 %v4231
      %4741 = vmatprep.subr.mxu0 0.0
      %4742 = vmatpush1.msra.mxu0 %v4232
      %4743 = vmatprep.subr.mxu0 0.0
      %4744 = vmatpush1.msra.mxu0 %v4233
      %4745 = vmatprep.subr.mxu0 0.0
      %4746 = vmatpush1.msra.mxu0 %v4234
      %4747 = vmatprep.subr.mxu0 0.0
      %4748 = vmatpush1.msra.mxu0 %v4235
      %4749 = vmatprep.subr.mxu0 0.0
      %4750 = vmatpush1.msra.mxu0 0.0
      %4751 = vmatprep.subr.mxu0 0.0
      %4752 = vmatpush1.msra.mxu0 0.0
      %4753 = vmatprep.subr.mxu0 0.0
      %4754 = vmatpush1.msra.mxu0 0.0
      %4755 = vmatprep.subr.mxu0 0.0
      %4756 = vmatpush1.msra.mxu0 0.0
      %4757 = vmatprep.mubr.f32.mxu0 %v4677
      %4758 = vmatmul.mubr.f32.gmra.mrb[0].mxu0 %v4637
      %v4759 = vpop.f32.mrb[0].mxu0
      %v4760 = vadd.f32 %v4615, %v4759
      %v4761 = vpop.f32.mrb[0].mxu0
      %4762 = vmatprep.mubr.f32.mxu0 %v4679
      %4763 = vmatmul.mubr.f32.gmra.mrb[0].mxu0 %v4642
      %v4764 = vpop.f32.mrb[0].mxu0
      %v4765 = vadd.f32 %v4615, %v4764
      %v4766 = vpop.f32.mrb[0].mxu0
      %4767 = vmatprep.mubr.f32.mxu0 %v4681
      %4768 = vmatmul.mubr.f32.gmra.mrb[0].mxu0 %v4646
      %v4769 = vpop.f32.mrb[0].mxu0
      %v4770 = vadd.f32 %v4615, %v4769
      %v4771 = vpop.f32.mrb[0].mxu0
      %4772 = vmatprep.mubr.f32.mxu0 %v4683
      %4773 = vmatmul.mubr.f32.gmra.mrb[0].mxu0 %v4650
      %v4774 = vpop.f32.mrb[0].mxu0
      %v4775 = vadd.f32 %v4615, %v4774
      %v4776 = vpop.f32.mrb[0].mxu0
      %4777 = vmatprep.mubr.f32.mxu0 %v4685
      %4778 = vmatmul.mubr.f32.gmra.mrb[0].mxu0 %v4654
      %v4779 = vpop.f32.mrb[0].mxu0
      %v4780 = vadd.f32 %v4615, %v4779
      %v4781 = vpop.f32.mrb[0].mxu0
      %4782 = vmatprep.mubr.f32.mxu0 %v4687
      %4783 = vmatmul.mubr.f32.gmra.mrb[0].mxu0 %v4658
      %v4784 = vpop.f32.mrb[0].mxu0
      %v4785 = vadd.f32 %v4615, %v4784
      %v4786 = vpop.f32.mrb[0].mxu0
      %4787 = vmatprep.mubr.f32.mxu0 %v4689
      %4788 = vmatmul.mubr.f32.gmra.mrb[0].mxu0 %v4662
      %v4789 = vpop.f32.mrb[0].mxu0
      %v4790 = vadd.f32 %v4615, %v4789
      %v4791 = vpop.f32.mrb[0].mxu0
      %4792 = vmatprep.mubr.f32.mxu0 %v4691
      %4793 = vmatmul.mubr.f32.gmra.mrb[0].mxu0 %v4666
      %v4794 = vpop.f32.mrb[0].mxu0
      %v4795 = vadd.f32 %v4615, %v4794
      %v4796 = vpop.f32.mrb[0].mxu0
      %4797 = vdwg.mxu0
      %v4798 = vadd.f32 %v4760, %v3605
      %v4799 = vadd.f32 %v4765, %v3606
      %v4800 = vadd.f32 %v4770, %v3607
      %v4801 = vadd.f32 %v4775, %v3608
      %v4802 = vadd.f32 %v4780, %v3609
      %v4803 = vadd.f32 %v4785, %v3610
      %v4804 = vadd.f32 %v4790, %v3611
      %v4805 = vadd.f32 %v4795, %v3612
      %s4806 = scalar_lea.vmem %s3, 896
      %v4807 = vld [vmem:[%s4806] sm:$0xff]
      %v4808 = vld [vmem:[%s4806 + $0x8] sm:$0xff]
      %v4809 = vld [vmem:[%s4806 + $0x10] sm:$0xff]
      %v4810 = vld [vmem:[%s4806 + $0x18] sm:$0xff]
      %v4811 = vld [vmem:[%s4806 + $0x20] sm:$0xff]
      %v4812 = vld [vmem:[%s4806 + $0x28] sm:$0xff]
      %v4813 = vld [vmem:[%s4806 + $0x30] sm:$0xff]
      %v4814 = vld [vmem:[%s4806 + $0x38] sm:$0xff]
      %v4815 = vld [vmem:[%s4806 + $0x40] sm:$0xff]
      %v4816 = vld [vmem:[%s4806 + $0x48] sm:$0xff]
      %v4817 = vld [vmem:[%s4806 + $0x50] sm:$0xff]
      %v4818 = vld [vmem:[%s4806 + $0x58] sm:$0xff]
      %v4819 = vld [vmem:[%s4806 + $0x60] sm:$0xff]
      %v4820 = vld [vmem:[%s4806 + $0x68] sm:$0xff]
      %v4821 = vld [vmem:[%s4806 + $0x70] sm:$0xff]
      %v4822 = vld [vmem:[%s4806 + $0x78] sm:$0xff]
      %v4823 = vld [vmem:[%s4806 + $0x80] sm:$0xff]
      %v4824 = vld [vmem:[%s4806 + $0x88] sm:$0xff]
      %v4825 = vld [vmem:[%s4806 + $0x90] sm:$0xff]
      %v4826 = vld [vmem:[%s4806 + $0x98] sm:$0xff]
      %v4827 = vld [vmem:[%s4806 + $0xa0] sm:$0xff]
      %v4828 = vld [vmem:[%s4806 + $0xa8] sm:$0xff]
      %v4829 = vld [vmem:[%s4806 + $0xb0] sm:$0xff]
      %v4830 = vld [vmem:[%s4806 + $0xb8] sm:$0xff]
      %v4831 = vld [vmem:[%s4806 + $0xc0] sm:$0xff]
      %v4832 = vld [vmem:[%s4806 + $0xc8] sm:$0xff]
      %v4833 = vld [vmem:[%s4806 + $0xd0] sm:$0xff]
      %v4834 = vld [vmem:[%s4806 + $0xd8] sm:$0xff]
      %s4835 = scalar_lea.vmem %s4, 4
      %v4836 = vld [vmem:[%s4835] sm:$0x1]
      %v4837 = vxor.u32 %v4798, 2147483648
      %v4838 = vxor.u32 %v4799, 2147483648
      %v4839 = vxor.u32 %v4800, 2147483648
      %v4840 = vxor.u32 %v4801, 2147483648
      %v4841 = vxor.u32 %v4802, 2147483648
      %v4842 = vxor.u32 %v4803, 2147483648
      %v4843 = vxor.u32 %v4804, 2147483648
      %v4844 = vxor.u32 %v4805, 2147483648
      %v4845 = vmul.f32 %v4837, 1.442695
      %v4846 = vpow.pop %v4845
      %v4847 = vmul.f32 %v4838, 1.442695
      %v4848 = vpow.pop %v4847
      %v4849 = vmul.f32 %v4839, 1.442695
      %v4850 = vpow.pop %v4849
      %v4851 = vmul.f32 %v4840, 1.442695
      %v4852 = vpow.pop %v4851
      %v4853 = vmul.f32 %v4841, 1.442695
      %v4854 = vpow.pop %v4853
      %v4855 = vmul.f32 %v4842, 1.442695
      %v4856 = vpow.pop %v4855
      %v4857 = vmul.f32 %v4843, 1.442695
      %v4858 = vpow.pop %v4857
      %v4859 = vmul.f32 %v4844, 1.442695
      %v4860 = vpow.pop %v4859
      %v4861 = vadd.f32 %v4846, 1.0
      %v4862 = vadd.f32 %v4848, 1.0
      %v4863 = vadd.f32 %v4850, 1.0
      %v4864 = vadd.f32 %v4852, 1.0
      %v4865 = vadd.f32 %v4854, 1.0
      %v4866 = vadd.f32 %v4856, 1.0
      %v4867 = vadd.f32 %v4858, 1.0
      %v4868 = vadd.f32 %v4860, 1.0
      %v4869 = vrcp.pop %v4861
      %v4870 = vmul.f32 1.0, %v4869
      %v4871 = vrcp.pop %v4862
      %v4872 = vmul.f32 1.0, %v4871
      %v4873 = vrcp.pop %v4863
      %v4874 = vmul.f32 1.0, %v4873
      %v4875 = vrcp.pop %v4864
      %v4876 = vmul.f32 1.0, %v4875
      %v4877 = vrcp.pop %v4865
      %v4878 = vmul.f32 1.0, %v4877
      %v4879 = vrcp.pop %v4866
      %v4880 = vmul.f32 1.0, %v4879
      %v4881 = vrcp.pop %v4867
      %v4882 = vmul.f32 1.0, %v4881
      %v4883 = vrcp.pop %v4868
      %v4884 = vmul.f32 1.0, %v4883
      %v4885 = vmul.f32 %v4798, %v4870
      %v4886 = vmul.f32 %v4799, %v4872
      %v4887 = vmul.f32 %v4800, %v4874
      %v4888 = vmul.f32 %v4801, %v4876
      %v4889 = vmul.f32 %v4802, %v4878
      %v4890 = vmul.f32 %v4803, %v4880
      %v4891 = vmul.f32 %v4804, %v4882
      %v4892 = vmul.f32 %v4805, %v4884
      %4893 = vst.msk [vmem:[#allocation3 + $0x20] sm:$0xff] %vm279, %v4885
      %4894 = vst.msk [vmem:[#allocation3 + $0x28] sm:$0xff] %vm279, %v4886
      %4895 = vst.msk [vmem:[#allocation3 + $0x30] sm:$0xff] %vm279, %v4887
      %4896 = vst.msk [vmem:[#allocation3 + $0x38] sm:$0xff] %vm279, %v4888
      %4897 = vst.msk [vmem:[#allocation3 + $0x40] sm:$0xff] %vm279, %v4889
      %4898 = vst.msk [vmem:[#allocation3 + $0x48] sm:$0xff] %vm279, %v4890
      %4899 = vst.msk [vmem:[#allocation3 + $0x50] sm:$0xff] %vm279, %v4891
      %4900 = vst.msk [vmem:[#allocation3 + $0x58] sm:$0xff] %vm279, %v4892
      %v4901 = vld [vmem:[#allocation3 + $0x10] sm:$0xff]
      %v4902 = vld [vmem:[#allocation3 + $0x18] sm:$0xff]
      %v4903 = vld [vmem:[#allocation3 + $0x20] sm:$0xff]
      %v4904 = vld [vmem:[#allocation3 + $0x28] sm:$0xff]
      %v4905 = vld [vmem:[#allocation3 + $0x30] sm:$0xff]
      %v4906 = vld [vmem:[#allocation3 + $0x38] sm:$0xff]
      %v4907 = vld [vmem:[#allocation3 + $0x40] sm:$0xff]
      %v4908 = vld [vmem:[#allocation3 + $0x48] sm:$0xff]
      %v4909 = vld [vmem:[#allocation3 + $0x50] sm:$0xff]
      %v4910 = vld [vmem:[#allocation3 + $0x58] sm:$0xff]
      %v4911 = vld [vmem:[#allocation3 + $0x60] sm:$0xff]
      %v4912 = vld [vmem:[#allocation3 + $0x68] sm:$0xff]
      %v4922 = vrot.slane %v4901, 5
      %v4923 = vrot.slane %v4902, 5
      %v4924 = vsel %vm1252, %v4922, %v4923
      %v4925 = vrot.slane %v4903, 5
      %v4926 = vsel %vm1252, %v4923, %v4925
      %v4927 = vrot.slane %v4904, 5
      %v4928 = vsel %vm1252, %v4925, %v4927
      %v4929 = vrot.slane %v4905, 5
      %v4930 = vsel %vm1252, %v4927, %v4929
      %v4931 = vrot.slane %v4906, 5
      %v4932 = vsel %vm1252, %v4929, %v4931
      %v4933 = vrot.slane %v4907, 5
      %v4934 = vsel %vm1252, %v4931, %v4933
      %v4935 = vrot.slane %v4908, 5
      %v4936 = vsel %vm1252, %v4933, %v4935
      %v4937 = vrot.slane %v4909, 5
      %v4938 = vsel %vm1252, %v4935, %v4937
      %4939 = vrot.lane.b32.xlu0 %v4924, 32
      %v4940 = vpop.permute.xlu0 %4939
      %4941 = vrot.lane.b32.xlu0 %v4926, 32
      %v4942 = vpop.permute.xlu0 %4941
      %4943 = vrot.lane.b32.xlu0 %v4928, 32
      %v4944 = vpop.permute.xlu0 %4943
      %4945 = vrot.lane.b32.xlu0 %v4930, 32
      %v4946 = vpop.permute.xlu0 %4945
      %4947 = vrot.lane.b32.xlu0 %v4932, 32
      %v4948 = vpop.permute.xlu0 %4947
      %4949 = vrot.lane.b32.xlu0 %v4934, 32
      %v4950 = vpop.permute.xlu0 %4949
      %4951 = vrot.lane.b32.xlu0 %v4936, 32
      %v4952 = vpop.permute.xlu0 %4951
      %4953 = vrot.lane.b32.xlu0 %v4938, 32
      %v4954 = vpop.permute.xlu0 %4953
      %4955 = vrot.lane.b32.xlu0 %v4937, 32
      %v4956 = vpop.permute.xlu0 %4955
      %v4967 = vrot.slane %v4902, 2
      %v4968 = vrot.slane %v4903, 2
      %v4969 = vsel %vm451, %v4967, %v4968
      %v4970 = vrot.slane %v4904, 2
      %v4971 = vsel %vm451, %v4968, %v4970
      %v4972 = vrot.slane %v4905, 2
      %v4973 = vsel %vm451, %v4970, %v4972
      %v4974 = vrot.slane %v4906, 2
      %v4975 = vsel %vm451, %v4972, %v4974
      %v4976 = vrot.slane %v4907, 2
      %v4977 = vsel %vm451, %v4974, %v4976
      %v4978 = vrot.slane %v4908, 2
      %v4979 = vsel %vm451, %v4976, %v4978
      %v4980 = vrot.slane %v4909, 2
      %v4981 = vsel %vm451, %v4978, %v4980
      %v4982 = vrot.slane %v4910, 2
      %v4983 = vsel %vm451, %v4980, %v4982
      %4984 = vrot.lane.b32.xlu0 %v4969, 64
      %v4985 = vpop.permute.xlu0 %4984
      %4986 = vrot.lane.b32.xlu0 %v4971, 64
      %v4987 = vpop.permute.xlu0 %4986
      %4988 = vrot.lane.b32.xlu0 %v4973, 64
      %v4989 = vpop.permute.xlu0 %4988
      %4990 = vrot.lane.b32.xlu0 %v4975, 64
      %v4991 = vpop.permute.xlu0 %4990
      %4992 = vrot.lane.b32.xlu0 %v4977, 64
      %v4993 = vpop.permute.xlu0 %4992
      %4994 = vrot.lane.b32.xlu0 %v4979, 64
      %v4995 = vpop.permute.xlu0 %4994
      %4996 = vrot.lane.b32.xlu0 %v4981, 64
      %v4997 = vpop.permute.xlu0 %4996
      %4998 = vrot.lane.b32.xlu0 %v4983, 64
      %v4999 = vpop.permute.xlu0 %4998
      %5000 = vrot.lane.b32.xlu0 %v4982, 64
      %v5001 = vpop.permute.xlu0 %5000
      %v5011 = vrot.slane %v4903, 7
      %v5012 = vrot.slane %v4904, 7
      %v5013 = vsel %vm530, %v5011, %v5012
      %v5014 = vrot.slane %v4905, 7
      %v5015 = vsel %vm530, %v5012, %v5014
      %v5016 = vrot.slane %v4906, 7
      %v5017 = vsel %vm530, %v5014, %v5016
      %v5018 = vrot.slane %v4907, 7
      %v5019 = vsel %vm530, %v5016, %v5018
      %v5020 = vrot.slane %v4908, 7
      %v5021 = vsel %vm530, %v5018, %v5020
      %v5022 = vrot.slane %v4909, 7
      %v5023 = vsel %vm530, %v5020, %v5022
      %v5024 = vrot.slane %v4910, 7
      %v5025 = vsel %vm530, %v5022, %v5024
      %5026 = vrot.lane.b32.xlu0 %v5011, 96
      %v5027 = vpop.permute.xlu0 %5026
      %5028 = vrot.lane.b32.xlu0 %v5013, 96
      %v5029 = vpop.permute.xlu0 %5028
      %5030 = vrot.lane.b32.xlu0 %v5015, 96
      %v5031 = vpop.permute.xlu0 %5030
      %5032 = vrot.lane.b32.xlu0 %v5017, 96
      %v5033 = vpop.permute.xlu0 %5032
      %5034 = vrot.lane.b32.xlu0 %v5019, 96
      %v5035 = vpop.permute.xlu0 %5034
      %5036 = vrot.lane.b32.xlu0 %v5021, 96
      %v5037 = vpop.permute.xlu0 %5036
      %5038 = vrot.lane.b32.xlu0 %v5023, 96
      %v5039 = vpop.permute.xlu0 %5038
      %5040 = vrot.lane.b32.xlu0 %v5025, 96
      %v5041 = vpop.permute.xlu0 %5040
      %5042 = vrot.lane.b32.xlu0 %v5024, 96
      %v5043 = vpop.permute.xlu0 %5042
      %v5054 = vrot.slane %v4903, 4
      %v5055 = vrot.slane %v4904, 4
      %v5056 = vsel %vm2667, %v5054, %v5055
      %v5057 = vrot.slane %v4905, 4
      %v5058 = vsel %vm2667, %v5055, %v5057
      %v5059 = vrot.slane %v4906, 4
      %v5060 = vsel %vm2667, %v5057, %v5059
      %v5061 = vrot.slane %v4907, 4
      %v5062 = vsel %vm2667, %v5059, %v5061
      %v5063 = vrot.slane %v4908, 4
      %v5064 = vsel %vm2667, %v5061, %v5063
      %v5065 = vrot.slane %v4909, 4
      %v5066 = vsel %vm2667, %v5063, %v5065
      %v5067 = vrot.slane %v4910, 4
      %v5068 = vsel %vm2667, %v5065, %v5067
      %v5069 = vrot.slane %v4911, 4
      %v5070 = vsel %vm2667, %v5067, %v5069
      %v5081 = vrot.slane %v4904, 1
      %v5082 = vrot.slane %v4905, 1
      %v5083 = vsel %vm407, %v5081, %v5082
      %v5084 = vrot.slane %v4906, 1
      %v5085 = vsel %vm407, %v5082, %v5084
      %v5086 = vrot.slane %v4907, 1
      %v5087 = vsel %vm407, %v5084, %v5086
      %v5088 = vrot.slane %v4908, 1
      %v5089 = vsel %vm407, %v5086, %v5088
      %v5090 = vrot.slane %v4909, 1
      %v5091 = vsel %vm407, %v5088, %v5090
      %v5092 = vrot.slane %v4910, 1
      %v5093 = vsel %vm407, %v5090, %v5092
      %v5094 = vrot.slane %v4911, 1
      %v5095 = vsel %vm407, %v5092, %v5094
      %v5096 = vrot.slane %v4912, 1
      %v5097 = vsel %vm407, %v5094, %v5096
      %5098 = vrot.lane.b32.xlu0 %v5083, 32
      %v5099 = vpop.permute.xlu0 %5098
      %5100 = vrot.lane.b32.xlu0 %v5085, 32
      %v5101 = vpop.permute.xlu0 %5100
      %5102 = vrot.lane.b32.xlu0 %v5087, 32
      %v5103 = vpop.permute.xlu0 %5102
      %5104 = vrot.lane.b32.xlu0 %v5089, 32
      %v5105 = vpop.permute.xlu0 %5104
      %5106 = vrot.lane.b32.xlu0 %v5091, 32
      %v5107 = vpop.permute.xlu0 %5106
      %5108 = vrot.lane.b32.xlu0 %v5093, 32
      %v5109 = vpop.permute.xlu0 %5108
      %5110 = vrot.lane.b32.xlu0 %v5095, 32
      %v5111 = vpop.permute.xlu0 %5110
      %5112 = vrot.lane.b32.xlu0 %v5097, 32
      %v5113 = vpop.permute.xlu0 %5112
      %5114 = vrot.lane.b32.xlu0 %v5096, 32
      %v5115 = vpop.permute.xlu0 %5114
      %v5125 = vrot.slane %v4904, 6
      %v5126 = vrot.slane %v4905, 6
      %v5127 = vsel %vm1174, %v5125, %v5126
      %v5128 = vrot.slane %v4906, 6
      %v5129 = vsel %vm1174, %v5126, %v5128
      %v5130 = vrot.slane %v4907, 6
      %v5131 = vsel %vm1174, %v5128, %v5130
      %v5132 = vrot.slane %v4908, 6
      %v5133 = vsel %vm1174, %v5130, %v5132
      %v5134 = vrot.slane %v4909, 6
      %v5135 = vsel %vm1174, %v5132, %v5134
      %v5136 = vrot.slane %v4910, 6
      %v5137 = vsel %vm1174, %v5134, %v5136
      %v5138 = vrot.slane %v4911, 6
      %v5139 = vsel %vm1174, %v5136, %v5138
      %v5140 = vrot.slane %v4912, 6
      %v5141 = vsel %vm1174, %v5138, %v5140
      %5142 = vrot.lane.b32.xlu0 %v5127, 64
      %v5143 = vpop.permute.xlu0 %5142
      %5144 = vrot.lane.b32.xlu0 %v5129, 64
      %v5145 = vpop.permute.xlu0 %5144
      %5146 = vrot.lane.b32.xlu0 %v5131, 64
      %v5147 = vpop.permute.xlu0 %5146
      %5148 = vrot.lane.b32.xlu0 %v5133, 64
      %v5149 = vpop.permute.xlu0 %5148
      %5150 = vrot.lane.b32.xlu0 %v5135, 64
      %v5151 = vpop.permute.xlu0 %5150
      %5152 = vrot.lane.b32.xlu0 %v5137, 64
      %v5153 = vpop.permute.xlu0 %5152
      %5154 = vrot.lane.b32.xlu0 %v5139, 64
      %v5155 = vpop.permute.xlu0 %5154
      %5156 = vrot.lane.b32.xlu0 %v5141, 64
      %v5157 = vpop.permute.xlu0 %5156
      %5158 = vrot.lane.b32.xlu0 %v5140, 64
      %v5159 = vpop.permute.xlu0 %5158
      %v5169 = vsel %vm279, %v4901, %v4940
      %v5170 = vsel %vm279, %v4902, %v4942
      %v5171 = vsel %vm279, %v4903, %v4944
      %v5172 = vsel %vm279, %v4904, %v4946
      %v5173 = vsel %vm279, %v4905, %v4948
      %v5174 = vsel %vm279, %v4906, %v4950
      %v5175 = vsel %vm279, %v4907, %v4952
      %v5176 = vsel %vm279, %v4908, %v4954
      %v5177 = vsel %vm279, %v4909, %v4956
      %v5178 = vsel %vm505, %v5169, %v4985
      %v5179 = vsel %vm505, %v5170, %v4987
      %v5180 = vsel %vm505, %v5171, %v4989
      %v5181 = vsel %vm505, %v5172, %v4991
      %v5182 = vsel %vm505, %v5173, %v4993
      %v5183 = vsel %vm505, %v5174, %v4995
      %v5184 = vsel %vm505, %v5175, %v4997
      %v5185 = vsel %vm505, %v5176, %v4999
      %v5186 = vsel %vm505, %v5177, %v5001
      %v5187 = vsel %vm548, %v5178, %v5027
      %v5188 = vsel %vm548, %v5179, %v5029
      %v5189 = vsel %vm548, %v5180, %v5031
      %v5190 = vsel %vm548, %v5181, %v5033
      %v5191 = vsel %vm548, %v5182, %v5035
      %v5192 = vsel %vm548, %v5183, %v5037
      %v5193 = vsel %vm548, %v5184, %v5039
      %v5194 = vsel %vm548, %v5185, %v5041
      %v5195 = vsel %vm548, %v5186, %v5043
      %v5196 = vsel %vm279, %v5056, %v5099
      %v5197 = vsel %vm279, %v5058, %v5101
      %v5198 = vsel %vm279, %v5060, %v5103
      %v5199 = vsel %vm279, %v5062, %v5105
      %v5200 = vsel %vm279, %v5064, %v5107
      %v5201 = vsel %vm279, %v5066, %v5109
      %v5202 = vsel %vm279, %v5068, %v5111
      %v5203 = vsel %vm279, %v5070, %v5113
      %v5204 = vsel %vm279, %v5069, %v5115
      %v5205 = vsel %vm505, %v5196, %v5143
      %v5206 = vsel %vm505, %v5197, %v5145
      %v5207 = vsel %vm505, %v5198, %v5147
      %v5208 = vsel %vm505, %v5199, %v5149
      %v5209 = vsel %vm505, %v5200, %v5151
      %v5210 = vsel %vm505, %v5201, %v5153
      %v5211 = vsel %vm505, %v5202, %v5155
      %v5212 = vsel %vm505, %v5203, %v5157
      %v5213 = vsel %vm505, %v5204, %v5159
      %v5215 = vlaneseq
      %v5216 = vshrl.u32 %v5215, 7
      %v5217 = vsub.s32 0, %v5216
      %v5218 = vrot.slane %v4836, %v5217
      %v5238 = vrot.slane %v5187, 1
      %v5239 = vrot.slane %v5188, 1
      %v5240 = vsel %vm407, %v5238, %v5239
      %v5241 = vrot.slane %v5205, 1
      %v5242 = vrot.slane %v5206, 1
      %v5243 = vsel %vm407, %v5241, %v5242
      %v5244 = vrot.slane %v5189, 1
      %v5245 = vsel %vm407, %v5239, %v5244
      %v5246 = vrot.slane %v5207, 1
      %v5247 = vsel %vm407, %v5242, %v5246
      %v5248 = vrot.slane %v5190, 1
      %v5249 = vsel %vm407, %v5244, %v5248
      %v5250 = vrot.slane %v5208, 1
      %v5251 = vsel %vm407, %v5246, %v5250
      %v5252 = vrot.slane %v5191, 1
      %v5253 = vsel %vm407, %v5248, %v5252
      %v5254 = vrot.slane %v5209, 1
      %v5255 = vsel %vm407, %v5250, %v5254
      %v5256 = vrot.slane %v5192, 1
      %v5257 = vsel %vm407, %v5252, %v5256
      %v5258 = vrot.slane %v5210, 1
      %v5259 = vsel %vm407, %v5254, %v5258
      %v5260 = vrot.slane %v5193, 1
      %v5261 = vsel %vm407, %v5256, %v5260
      %v5262 = vrot.slane %v5211, 1
      %v5263 = vsel %vm407, %v5258, %v5262
      %v5264 = vrot.slane %v5194, 1
      %v5265 = vsel %vm407, %v5260, %v5264
      %v5266 = vrot.slane %v5212, 1
      %v5267 = vsel %vm407, %v5262, %v5266
      %v5268 = vrot.slane %v5195, 1
      %v5269 = vsel %vm407, %v5264, %v5268
      %v5270 = vrot.slane %v5213, 1
      %v5271 = vsel %vm407, %v5266, %v5270
      %v5280 = vsel %vm548, %v5243, 0
      %v5282 = vsel %vm548, %v5247, 0
      %v5284 = vsel %vm548, %v5251, 0
      %v5286 = vsel %vm548, %v5255, 0
      %v5288 = vsel %vm548, %v5259, 0
      %v5290 = vsel %vm548, %v5263, 0
      %v5292 = vsel %vm548, %v5267, 0
      %v5294 = vsel %vm548, %v5271, 0
      %5296 = vmatprep.subr.mxu0 0.0
      %5297 = vmatpush1.msra.mxu0 %v4807
      %5298 = vmatprep.subr.mxu0 0.0
      %5299 = vmatpush1.msra.mxu0 %v4808
      %5300 = vmatprep.subr.mxu0 0.0
      %5301 = vmatpush1.msra.mxu0 %v4809
      %5302 = vmatprep.subr.mxu0 0.0
      %5303 = vmatpush1.msra.mxu0 %v4810
      %5304 = vmatprep.subr.mxu0 0.0
      %5305 = vmatpush1.msra.mxu0 %v4811
      %5306 = vmatprep.subr.mxu0 0.0
      %5307 = vmatpush1.msra.mxu0 %v4812
      %5308 = vmatprep.subr.mxu0 0.0
      %5309 = vmatpush1.msra.mxu0 %v4813
      %5310 = vmatprep.subr.mxu0 0.0
      %5311 = vmatpush1.msra.mxu0 %v4814
      %5312 = vmatprep.subr.mxu0 0.0
      %5313 = vmatpush1.msra.mxu0 %v4815
      %5314 = vmatprep.subr.mxu0 0.0
      %5315 = vmatpush1.msra.mxu0 %v4816
      %5316 = vmatprep.subr.mxu0 0.0
      %5317 = vmatpush1.msra.mxu0 %v4817
      %5318 = vmatprep.subr.mxu0 0.0
      %5319 = vmatpush1.msra.mxu0 %v4818
      %5320 = vmatprep.subr.mxu0 0.0
      %5321 = vmatpush1.msra.mxu0 %v4819
      %5322 = vmatprep.subr.mxu0 0.0
      %5323 = vmatpush1.msra.mxu0 %v4820
      %5324 = vmatprep.subr.mxu0 0.0
      %5325 = vmatpush1.msra.mxu0 %v4821
      %5326 = vmatprep.subr.mxu0 0.0
      %5327 = vmatpush1.msra.mxu0 %v4822
      %5328 = vmatprep.subr.mxu0 0.0
      %5329 = vmatpush1.msra.mxu0 %v4823
      %5330 = vmatprep.subr.mxu0 0.0
      %5331 = vmatpush1.msra.mxu0 %v4824
      %5332 = vmatprep.subr.mxu0 0.0
      %5333 = vmatpush1.msra.mxu0 %v4825
      %5334 = vmatprep.subr.mxu0 0.0
      %5335 = vmatpush1.msra.mxu0 %v4826
      %5336 = vmatprep.subr.mxu0 0.0
      %5337 = vmatpush1.msra.mxu0 %v4827
      %5338 = vmatprep.subr.mxu0 0.0
      %5339 = vmatpush1.msra.mxu0 %v4828
      %5340 = vmatprep.subr.mxu0 0.0
      %5341 = vmatpush1.msra.mxu0 %v4829
      %5342 = vmatprep.subr.mxu0 0.0
      %5343 = vmatpush1.msra.mxu0 %v4830
      %5344 = vmatprep.subr.mxu0 0.0
      %5345 = vmatpush1.msra.mxu0 %v4831
      %5346 = vmatprep.subr.mxu0 0.0
      %5347 = vmatpush1.msra.mxu0 %v4832
      %5348 = vmatprep.subr.mxu0 0.0
      %5349 = vmatpush1.msra.mxu0 %v4833
      %5350 = vmatprep.subr.mxu0 0.0
      %5351 = vmatpush1.msra.mxu0 %v4834
      %5352 = vmatprep.subr.mxu0 0.0
      %5353 = vmatpush1.msra.mxu0 0.0
      %5354 = vmatprep.subr.mxu0 0.0
      %5355 = vmatpush1.msra.mxu0 0.0
      %5356 = vmatprep.subr.mxu0 0.0
      %5357 = vmatpush1.msra.mxu0 0.0
      %5358 = vmatprep.subr.mxu0 0.0
      %5359 = vmatpush1.msra.mxu0 0.0
      %5360 = vmatprep.mubr.f32.mxu0 %v5280
      %5361 = vmatmul.mubr.f32.gmra.mrb[0].mxu0 %v5240
      %v5362 = vpop.f32.mrb[0].mxu0
      %v5363 = vadd.f32 %v5218, %v5362
      %v5364 = vpop.f32.mrb[0].mxu0
      %5365 = vmatprep.mubr.f32.mxu0 %v5282
      %5366 = vmatmul.mubr.f32.gmra.mrb[0].mxu0 %v5245
      %v5367 = vpop.f32.mrb[0].mxu0
      %v5368 = vadd.f32 %v5218, %v5367
      %v5369 = vpop.f32.mrb[0].mxu0
      %5370 = vmatprep.mubr.f32.mxu0 %v5284
      %5371 = vmatmul.mubr.f32.gmra.mrb[0].mxu0 %v5249
      %v5372 = vpop.f32.mrb[0].mxu0
      %v5373 = vadd.f32 %v5218, %v5372
      %v5374 = vpop.f32.mrb[0].mxu0
      %5375 = vmatprep.mubr.f32.mxu0 %v5286
      %5376 = vmatmul.mubr.f32.gmra.mrb[0].mxu0 %v5253
      %v5377 = vpop.f32.mrb[0].mxu0
      %v5378 = vadd.f32 %v5218, %v5377
      %v5379 = vpop.f32.mrb[0].mxu0
      %5380 = vmatprep.mubr.f32.mxu0 %v5288
      %5381 = vmatmul.mubr.f32.gmra.mrb[0].mxu0 %v5257
      %v5382 = vpop.f32.mrb[0].mxu0
      %v5383 = vadd.f32 %v5218, %v5382
      %v5384 = vpop.f32.mrb[0].mxu0
      %5385 = vmatprep.mubr.f32.mxu0 %v5290
      %5386 = vmatmul.mubr.f32.gmra.mrb[0].mxu0 %v5261
      %v5387 = vpop.f32.mrb[0].mxu0
      %v5388 = vadd.f32 %v5218, %v5387
      %v5389 = vpop.f32.mrb[0].mxu0
      %5390 = vmatprep.mubr.f32.mxu0 %v5292
      %5391 = vmatmul.mubr.f32.gmra.mrb[0].mxu0 %v5265
      %v5392 = vpop.f32.mrb[0].mxu0
      %v5393 = vadd.f32 %v5218, %v5392
      %v5394 = vpop.f32.mrb[0].mxu0
      %5395 = vmatprep.mubr.f32.mxu0 %v5294
      %5396 = vmatmul.mubr.f32.gmra.mrb[0].mxu0 %v5269
      %v5397 = vpop.f32.mrb[0].mxu0
      %v5398 = vadd.f32 %v5218, %v5397
      %v5399 = vpop.f32.mrb[0].mxu0
      %5400 = vdwg.mxu0
      %s5401 = scalar_lea.vmem %s3, 1120
      %v5402 = vld [vmem:[%s5401] sm:$0xff]
      %v5403 = vld [vmem:[%s5401 + $0x8] sm:$0xff]
      %v5404 = vld [vmem:[%s5401 + $0x10] sm:$0xff]
      %v5405 = vld [vmem:[%s5401 + $0x18] sm:$0xff]
      %v5406 = vld [vmem:[%s5401 + $0x20] sm:$0xff]
      %v5407 = vld [vmem:[%s5401 + $0x28] sm:$0xff]
      %v5408 = vld [vmem:[%s5401 + $0x30] sm:$0xff]
      %v5409 = vld [vmem:[%s5401 + $0x38] sm:$0xff]
      %v5410 = vld [vmem:[%s5401 + $0x40] sm:$0xff]
      %v5411 = vld [vmem:[%s5401 + $0x48] sm:$0xff]
      %v5412 = vld [vmem:[%s5401 + $0x50] sm:$0xff]
      %v5413 = vld [vmem:[%s5401 + $0x58] sm:$0xff]
      %v5414 = vld [vmem:[%s5401 + $0x60] sm:$0xff]
      %v5415 = vld [vmem:[%s5401 + $0x68] sm:$0xff]
      %v5416 = vld [vmem:[%s5401 + $0x70] sm:$0xff]
      %v5417 = vld [vmem:[%s5401 + $0x78] sm:$0xff]
      %v5418 = vld [vmem:[%s5401 + $0x80] sm:$0xff]
      %v5419 = vld [vmem:[%s5401 + $0x88] sm:$0xff]
      %v5420 = vld [vmem:[%s5401 + $0x90] sm:$0xff]
      %v5421 = vld [vmem:[%s5401 + $0x98] sm:$0xff]
      %v5422 = vld [vmem:[%s5401 + $0xa0] sm:$0xff]
      %v5423 = vld [vmem:[%s5401 + $0xa8] sm:$0xff]
      %v5424 = vld [vmem:[%s5401 + $0xb0] sm:$0xff]
      %v5425 = vld [vmem:[%s5401 + $0xb8] sm:$0xff]
      %v5426 = vld [vmem:[%s5401 + $0xc0] sm:$0xff]
      %v5427 = vld [vmem:[%s5401 + $0xc8] sm:$0xff]
      %v5428 = vld [vmem:[%s5401 + $0xd0] sm:$0xff]
      %v5429 = vld [vmem:[%s5401 + $0xd8] sm:$0xff]
      %s5430 = scalar_lea.vmem %s4, 5
      %v5431 = vld [vmem:[%s5430] sm:$0x1]
      %v5432 = vxor.u32 %v5363, 2147483648
      %v5433 = vxor.u32 %v5368, 2147483648
      %v5434 = vxor.u32 %v5373, 2147483648
      %v5435 = vxor.u32 %v5378, 2147483648
      %v5436 = vxor.u32 %v5383, 2147483648
      %v5437 = vxor.u32 %v5388, 2147483648
      %v5438 = vxor.u32 %v5393, 2147483648
      %v5439 = vxor.u32 %v5398, 2147483648
      %v5440 = vmul.f32 %v5432, 1.442695
      %v5441 = vpow.pop %v5440
      %v5442 = vmul.f32 %v5433, 1.442695
      %v5443 = vpow.pop %v5442
      %v5444 = vmul.f32 %v5434, 1.442695
      %v5445 = vpow.pop %v5444
      %v5446 = vmul.f32 %v5435, 1.442695
      %v5447 = vpow.pop %v5446
      %v5448 = vmul.f32 %v5436, 1.442695
      %v5449 = vpow.pop %v5448
      %v5450 = vmul.f32 %v5437, 1.442695
      %v5451 = vpow.pop %v5450
      %v5452 = vmul.f32 %v5438, 1.442695
      %v5453 = vpow.pop %v5452
      %v5454 = vmul.f32 %v5439, 1.442695
      %v5455 = vpow.pop %v5454
      %v5456 = vadd.f32 %v5441, 1.0
      %v5457 = vadd.f32 %v5443, 1.0
      %v5458 = vadd.f32 %v5445, 1.0
      %v5459 = vadd.f32 %v5447, 1.0
      %v5460 = vadd.f32 %v5449, 1.0
      %v5461 = vadd.f32 %v5451, 1.0
      %v5462 = vadd.f32 %v5453, 1.0
      %v5463 = vadd.f32 %v5455, 1.0
      %v5464 = vrcp.pop %v5456
      %v5465 = vmul.f32 1.0, %v5464
      %v5466 = vrcp.pop %v5457
      %v5467 = vmul.f32 1.0, %v5466
      %v5468 = vrcp.pop %v5458
      %v5469 = vmul.f32 1.0, %v5468
      %v5470 = vrcp.pop %v5459
      %v5471 = vmul.f32 1.0, %v5470
      %v5472 = vrcp.pop %v5460
      %v5473 = vmul.f32 1.0, %v5472
      %v5474 = vrcp.pop %v5461
      %v5475 = vmul.f32 1.0, %v5474
      %v5476 = vrcp.pop %v5462
      %v5477 = vmul.f32 1.0, %v5476
      %v5478 = vrcp.pop %v5463
      %v5479 = vmul.f32 1.0, %v5478
      %v5480 = vmul.f32 %v5363, %v5465
      %v5481 = vmul.f32 %v5368, %v5467
      %v5482 = vmul.f32 %v5373, %v5469
      %v5483 = vmul.f32 %v5378, %v5471
      %v5484 = vmul.f32 %v5383, %v5473
      %v5485 = vmul.f32 %v5388, %v5475
      %v5486 = vmul.f32 %v5393, %v5477
      %v5487 = vmul.f32 %v5398, %v5479
      %5488 = vst.msk [vmem:[#allocation3 + $0x20] sm:$0xff] %vm279, %v5480
      %5489 = vst.msk [vmem:[#allocation3 + $0x28] sm:$0xff] %vm279, %v5481
      %5490 = vst.msk [vmem:[#allocation3 + $0x30] sm:$0xff] %vm279, %v5482
      %5491 = vst.msk [vmem:[#allocation3 + $0x38] sm:$0xff] %vm279, %v5483
      %5492 = vst.msk [vmem:[#allocation3 + $0x40] sm:$0xff] %vm279, %v5484
      %5493 = vst.msk [vmem:[#allocation3 + $0x48] sm:$0xff] %vm279, %v5485
      %5494 = vst.msk [vmem:[#allocation3 + $0x50] sm:$0xff] %vm279, %v5486
      %5495 = vst.msk [vmem:[#allocation3 + $0x58] sm:$0xff] %vm279, %v5487
      %v5496 = vld [vmem:[#allocation3 + $0x18] sm:$0xff]
      %v5497 = vld [vmem:[#allocation3 + $0x20] sm:$0xff]
      %v5498 = vld [vmem:[#allocation3 + $0x28] sm:$0xff]
      %v5499 = vld [vmem:[#allocation3 + $0x30] sm:$0xff]
      %v5500 = vld [vmem:[#allocation3 + $0x38] sm:$0xff]
      %v5501 = vld [vmem:[#allocation3 + $0x40] sm:$0xff]
      %v5502 = vld [vmem:[#allocation3 + $0x48] sm:$0xff]
      %v5503 = vld [vmem:[#allocation3 + $0x50] sm:$0xff]
      %v5504 = vld [vmem:[#allocation3 + $0x58] sm:$0xff]
      %v5505 = vld [vmem:[#allocation3 + $0x60] sm:$0xff]
      %v5515 = vrot.slane %v5496, 1
      %v5516 = vrot.slane %v5497, 1
      %v5517 = vsel %vm407, %v5515, %v5516
      %v5518 = vrot.slane %v5498, 1
      %v5519 = vsel %vm407, %v5516, %v5518
      %v5520 = vrot.slane %v5499, 1
      %v5521 = vsel %vm407, %v5518, %v5520
      %v5522 = vrot.slane %v5500, 1
      %v5523 = vsel %vm407, %v5520, %v5522
      %v5524 = vrot.slane %v5501, 1
      %v5525 = vsel %vm407, %v5522, %v5524
      %v5526 = vrot.slane %v5502, 1
      %v5527 = vsel %vm407, %v5524, %v5526
      %v5528 = vrot.slane %v5503, 1
      %v5529 = vsel %vm407, %v5526, %v5528
      %v5530 = vrot.slane %v5504, 1
      %v5531 = vsel %vm407, %v5528, %v5530
      %5532 = vrot.lane.b32.xlu0 %v5517, 32
      %v5533 = vpop.permute.xlu0 %5532
      %5534 = vrot.lane.b32.xlu0 %v5519, 32
      %v5535 = vpop.permute.xlu0 %5534
      %5536 = vrot.lane.b32.xlu0 %v5521, 32
      %v5537 = vpop.permute.xlu0 %5536
      %5538 = vrot.lane.b32.xlu0 %v5523, 32
      %v5539 = vpop.permute.xlu0 %5538
      %5540 = vrot.lane.b32.xlu0 %v5525, 32
      %v5541 = vpop.permute.xlu0 %5540
      %5542 = vrot.lane.b32.xlu0 %v5527, 32
      %v5543 = vpop.permute.xlu0 %5542
      %5544 = vrot.lane.b32.xlu0 %v5529, 32
      %v5545 = vpop.permute.xlu0 %5544
      %5546 = vrot.lane.b32.xlu0 %v5531, 32
      %v5547 = vpop.permute.xlu0 %5546
      %5548 = vrot.lane.b32.xlu0 %v5530, 32
      %v5549 = vpop.permute.xlu0 %5548
      %v5559 = vrot.slane %v5496, 2
      %v5560 = vrot.slane %v5497, 2
      %v5561 = vsel %vm451, %v5559, %v5560
      %v5562 = vrot.slane %v5498, 2
      %v5563 = vsel %vm451, %v5560, %v5562
      %v5564 = vrot.slane %v5499, 2
      %v5565 = vsel %vm451, %v5562, %v5564
      %v5566 = vrot.slane %v5500, 2
      %v5567 = vsel %vm451, %v5564, %v5566
      %v5568 = vrot.slane %v5501, 2
      %v5569 = vsel %vm451, %v5566, %v5568
      %v5570 = vrot.slane %v5502, 2
      %v5571 = vsel %vm451, %v5568, %v5570
      %v5572 = vrot.slane %v5503, 2
      %v5573 = vsel %vm451, %v5570, %v5572
      %v5574 = vrot.slane %v5504, 2
      %v5575 = vsel %vm451, %v5572, %v5574
      %5576 = vrot.lane.b32.xlu0 %v5561, 64
      %v5577 = vpop.permute.xlu0 %5576
      %5578 = vrot.lane.b32.xlu0 %v5563, 64
      %v5579 = vpop.permute.xlu0 %5578
      %5580 = vrot.lane.b32.xlu0 %v5565, 64
      %v5581 = vpop.permute.xlu0 %5580
      %5582 = vrot.lane.b32.xlu0 %v5567, 64
      %v5583 = vpop.permute.xlu0 %5582
      %5584 = vrot.lane.b32.xlu0 %v5569, 64
      %v5585 = vpop.permute.xlu0 %5584
      %5586 = vrot.lane.b32.xlu0 %v5571, 64
      %v5587 = vpop.permute.xlu0 %5586
      %5588 = vrot.lane.b32.xlu0 %v5573, 64
      %v5589 = vpop.permute.xlu0 %5588
      %5590 = vrot.lane.b32.xlu0 %v5575, 64
      %v5591 = vpop.permute.xlu0 %5590
      %5592 = vrot.lane.b32.xlu0 %v5574, 64
      %v5593 = vpop.permute.xlu0 %5592
      %v5603 = vrot.slane %v5497, 3
      %v5604 = vrot.slane %v5498, 3
      %v5605 = vsel %vm1130, %v5603, %v5604
      %v5606 = vrot.slane %v5499, 3
      %v5607 = vsel %vm1130, %v5604, %v5606
      %v5608 = vrot.slane %v5500, 3
      %v5609 = vsel %vm1130, %v5606, %v5608
      %v5610 = vrot.slane %v5501, 3
      %v5611 = vsel %vm1130, %v5608, %v5610
      %v5612 = vrot.slane %v5502, 3
      %v5613 = vsel %vm1130, %v5610, %v5612
      %v5614 = vrot.slane %v5503, 3
      %v5615 = vsel %vm1130, %v5612, %v5614
      %v5616 = vrot.slane %v5504, 3
      %v5617 = vsel %vm1130, %v5614, %v5616
      %5618 = vrot.lane.b32.xlu0 %v5603, 96
      %v5619 = vpop.permute.xlu0 %5618
      %5620 = vrot.lane.b32.xlu0 %v5605, 96
      %v5621 = vpop.permute.xlu0 %5620
      %5622 = vrot.lane.b32.xlu0 %v5607, 96
      %v5623 = vpop.permute.xlu0 %5622
      %5624 = vrot.lane.b32.xlu0 %v5609, 96
      %v5625 = vpop.permute.xlu0 %5624
      %5626 = vrot.lane.b32.xlu0 %v5611, 96
      %v5627 = vpop.permute.xlu0 %5626
      %5628 = vrot.lane.b32.xlu0 %v5613, 96
      %v5629 = vpop.permute.xlu0 %5628
      %5630 = vrot.lane.b32.xlu0 %v5615, 96
      %v5631 = vpop.permute.xlu0 %5630
      %5632 = vrot.lane.b32.xlu0 %v5617, 96
      %v5633 = vpop.permute.xlu0 %5632
      %5634 = vrot.lane.b32.xlu0 %v5616, 96
      %v5635 = vpop.permute.xlu0 %5634
      %v5646 = vrot.slane %v5497, 4
      %v5647 = vrot.slane %v5498, 4
      %v5648 = vsel %vm2667, %v5646, %v5647
      %v5649 = vrot.slane %v5499, 4
      %v5650 = vsel %vm2667, %v5647, %v5649
      %v5651 = vrot.slane %v5500, 4
      %v5652 = vsel %vm2667, %v5649, %v5651
      %v5653 = vrot.slane %v5501, 4
      %v5654 = vsel %vm2667, %v5651, %v5653
      %v5655 = vrot.slane %v5502, 4
      %v5656 = vsel %vm2667, %v5653, %v5655
      %v5657 = vrot.slane %v5503, 4
      %v5658 = vsel %vm2667, %v5655, %v5657
      %v5659 = vrot.slane %v5504, 4
      %v5660 = vsel %vm2667, %v5657, %v5659
      %v5661 = vrot.slane %v5505, 4
      %v5662 = vsel %vm2667, %v5659, %v5661
      %v5672 = vrot.slane %v5497, 5
      %v5673 = vrot.slane %v5498, 5
      %v5674 = vsel %vm1252, %v5672, %v5673
      %v5675 = vrot.slane %v5499, 5
      %v5676 = vsel %vm1252, %v5673, %v5675
      %v5677 = vrot.slane %v5500, 5
      %v5678 = vsel %vm1252, %v5675, %v5677
      %v5679 = vrot.slane %v5501, 5
      %v5680 = vsel %vm1252, %v5677, %v5679
      %v5681 = vrot.slane %v5502, 5
      %v5682 = vsel %vm1252, %v5679, %v5681
      %v5683 = vrot.slane %v5503, 5
      %v5684 = vsel %vm1252, %v5681, %v5683
      %v5685 = vrot.slane %v5504, 5
      %v5686 = vsel %vm1252, %v5683, %v5685
      %v5687 = vrot.slane %v5505, 5
      %v5688 = vsel %vm1252, %v5685, %v5687
      %5689 = vrot.lane.b32.xlu0 %v5672, 32
      %v5690 = vpop.permute.xlu0 %5689
      %5691 = vrot.lane.b32.xlu0 %v5674, 32
      %v5692 = vpop.permute.xlu0 %5691
      %5693 = vrot.lane.b32.xlu0 %v5676, 32
      %v5694 = vpop.permute.xlu0 %5693
      %5695 = vrot.lane.b32.xlu0 %v5678, 32
      %v5696 = vpop.permute.xlu0 %5695
      %5697 = vrot.lane.b32.xlu0 %v5680, 32
      %v5698 = vpop.permute.xlu0 %5697
      %5699 = vrot.lane.b32.xlu0 %v5682, 32
      %v5700 = vpop.permute.xlu0 %5699
      %5701 = vrot.lane.b32.xlu0 %v5684, 32
      %v5702 = vpop.permute.xlu0 %5701
      %5703 = vrot.lane.b32.xlu0 %v5686, 32
      %v5704 = vpop.permute.xlu0 %5703
      %5705 = vrot.lane.b32.xlu0 %v5688, 32
      %v5706 = vpop.permute.xlu0 %5705
      %v5716 = vrot.slane %v5497, 6
      %v5717 = vrot.slane %v5498, 6
      %v5718 = vsel %vm1174, %v5716, %v5717
      %v5719 = vrot.slane %v5499, 6
      %v5720 = vsel %vm1174, %v5717, %v5719
      %v5721 = vrot.slane %v5500, 6
      %v5722 = vsel %vm1174, %v5719, %v5721
      %v5723 = vrot.slane %v5501, 6
      %v5724 = vsel %vm1174, %v5721, %v5723
      %v5725 = vrot.slane %v5502, 6
      %v5726 = vsel %vm1174, %v5723, %v5725
      %v5727 = vrot.slane %v5503, 6
      %v5728 = vsel %vm1174, %v5725, %v5727
      %v5729 = vrot.slane %v5504, 6
      %v5730 = vsel %vm1174, %v5727, %v5729
      %v5731 = vrot.slane %v5505, 6
      %v5732 = vsel %vm1174, %v5729, %v5731
      %5733 = vrot.lane.b32.xlu0 %v5716, 64
      %v5734 = vpop.permute.xlu0 %5733
      %5735 = vrot.lane.b32.xlu0 %v5718, 64
      %v5736 = vpop.permute.xlu0 %5735
      %5737 = vrot.lane.b32.xlu0 %v5720, 64
      %v5738 = vpop.permute.xlu0 %5737
      %5739 = vrot.lane.b32.xlu0 %v5722, 64
      %v5740 = vpop.permute.xlu0 %5739
      %5741 = vrot.lane.b32.xlu0 %v5724, 64
      %v5742 = vpop.permute.xlu0 %5741
      %5743 = vrot.lane.b32.xlu0 %v5726, 64
      %v5744 = vpop.permute.xlu0 %5743
      %5745 = vrot.lane.b32.xlu0 %v5728, 64
      %v5746 = vpop.permute.xlu0 %5745
      %5747 = vrot.lane.b32.xlu0 %v5730, 64
      %v5748 = vpop.permute.xlu0 %5747
      %5749 = vrot.lane.b32.xlu0 %v5732, 64
      %v5750 = vpop.permute.xlu0 %5749
      %v5760 = vsel %vm279, %v5496, %v5533
      %v5761 = vsel %vm279, %v5497, %v5535
      %v5762 = vsel %vm279, %v5498, %v5537
      %v5763 = vsel %vm279, %v5499, %v5539
      %v5764 = vsel %vm279, %v5500, %v5541
      %v5765 = vsel %vm279, %v5501, %v5543
      %v5766 = vsel %vm279, %v5502, %v5545
      %v5767 = vsel %vm279, %v5503, %v5547
      %v5768 = vsel %vm279, %v5504, %v5549
      %v5769 = vsel %vm505, %v5760, %v5577
      %v5770 = vsel %vm505, %v5761, %v5579
      %v5771 = vsel %vm505, %v5762, %v5581
      %v5772 = vsel %vm505, %v5763, %v5583
      %v5773 = vsel %vm505, %v5764, %v5585
      %v5774 = vsel %vm505, %v5765, %v5587
      %v5775 = vsel %vm505, %v5766, %v5589
      %v5776 = vsel %vm505, %v5767, %v5591
      %v5777 = vsel %vm505, %v5768, %v5593
      %v5778 = vsel %vm548, %v5769, %v5619
      %v5779 = vsel %vm548, %v5770, %v5621
      %v5780 = vsel %vm548, %v5771, %v5623
      %v5781 = vsel %vm548, %v5772, %v5625
      %v5782 = vsel %vm548, %v5773, %v5627
      %v5783 = vsel %vm548, %v5774, %v5629
      %v5784 = vsel %vm548, %v5775, %v5631
      %v5785 = vsel %vm548, %v5776, %v5633
      %v5786 = vsel %vm548, %v5777, %v5635
      %v5787 = vsel %vm279, %v5646, %v5690
      %v5788 = vsel %vm279, %v5648, %v5692
      %v5789 = vsel %vm279, %v5650, %v5694
      %v5790 = vsel %vm279, %v5652, %v5696
      %v5791 = vsel %vm279, %v5654, %v5698
      %v5792 = vsel %vm279, %v5656, %v5700
      %v5793 = vsel %vm279, %v5658, %v5702
      %v5794 = vsel %vm279, %v5660, %v5704
      %v5795 = vsel %vm279, %v5662, %v5706
      %v5796 = vsel %vm505, %v5787, %v5734
      %v5797 = vsel %vm505, %v5788, %v5736
      %v5798 = vsel %vm505, %v5789, %v5738
      %v5799 = vsel %vm505, %v5790, %v5740
      %v5800 = vsel %vm505, %v5791, %v5742
      %v5801 = vsel %vm505, %v5792, %v5744
      %v5802 = vsel %vm505, %v5793, %v5746
      %v5803 = vsel %vm505, %v5794, %v5748
      %v5804 = vsel %vm505, %v5795, %v5750
      %v5806 = vlaneseq
      %v5807 = vshrl.u32 %v5806, 7
      %v5808 = vsub.s32 0, %v5807
      %v5809 = vrot.slane %v5431, %v5808
      %v5829 = vrot.slane %v5778, 5
      %v5830 = vrot.slane %v5779, 5
      %v5831 = vsel %vm1252, %v5829, %v5830
      %v5832 = vrot.slane %v5796, 5
      %v5833 = vrot.slane %v5797, 5
      %v5834 = vsel %vm1252, %v5832, %v5833
      %v5835 = vrot.slane %v5780, 5
      %v5836 = vsel %vm1252, %v5830, %v5835
      %v5837 = vrot.slane %v5798, 5
      %v5838 = vsel %vm1252, %v5833, %v5837
      %v5839 = vrot.slane %v5781, 5
      %v5840 = vsel %vm1252, %v5835, %v5839
      %v5841 = vrot.slane %v5799, 5
      %v5842 = vsel %vm1252, %v5837, %v5841
      %v5843 = vrot.slane %v5782, 5
      %v5844 = vsel %vm1252, %v5839, %v5843
      %v5845 = vrot.slane %v5800, 5
      %v5846 = vsel %vm1252, %v5841, %v5845
      %v5847 = vrot.slane %v5783, 5
      %v5848 = vsel %vm1252, %v5843, %v5847
      %v5849 = vrot.slane %v5801, 5
      %v5850 = vsel %vm1252, %v5845, %v5849
      %v5851 = vrot.slane %v5784, 5
      %v5852 = vsel %vm1252, %v5847, %v5851
      %v5853 = vrot.slane %v5802, 5
      %v5854 = vsel %vm1252, %v5849, %v5853
      %v5855 = vrot.slane %v5785, 5
      %v5856 = vsel %vm1252, %v5851, %v5855
      %v5857 = vrot.slane %v5803, 5
      %v5858 = vsel %vm1252, %v5853, %v5857
      %v5859 = vrot.slane %v5786, 5
      %v5860 = vsel %vm1252, %v5855, %v5859
      %v5861 = vrot.slane %v5804, 5
      %v5862 = vsel %vm1252, %v5857, %v5861
      %v5871 = vsel %vm548, %v5834, 0
      %v5873 = vsel %vm548, %v5838, 0
      %v5875 = vsel %vm548, %v5842, 0
      %v5877 = vsel %vm548, %v5846, 0
      %v5879 = vsel %vm548, %v5850, 0
      %v5881 = vsel %vm548, %v5854, 0
      %v5883 = vsel %vm548, %v5858, 0
      %v5885 = vsel %vm548, %v5862, 0
      %5887 = vmatprep.subr.mxu0 0.0
      %5888 = vmatpush1.msra.mxu0 %v5402
      %5889 = vmatprep.subr.mxu0 0.0
      %5890 = vmatpush1.msra.mxu0 %v5403
      %5891 = vmatprep.subr.mxu0 0.0
      %5892 = vmatpush1.msra.mxu0 %v5404
      %5893 = vmatprep.subr.mxu0 0.0
      %5894 = vmatpush1.msra.mxu0 %v5405
      %5895 = vmatprep.subr.mxu0 0.0
      %5896 = vmatpush1.msra.mxu0 %v5406
      %5897 = vmatprep.subr.mxu0 0.0
      %5898 = vmatpush1.msra.mxu0 %v5407
      %5899 = vmatprep.subr.mxu0 0.0
      %5900 = vmatpush1.msra.mxu0 %v5408
      %5901 = vmatprep.subr.mxu0 0.0
      %5902 = vmatpush1.msra.mxu0 %v5409
      %5903 = vmatprep.subr.mxu0 0.0
      %5904 = vmatpush1.msra.mxu0 %v5410
      %5905 = vmatprep.subr.mxu0 0.0
      %5906 = vmatpush1.msra.mxu0 %v5411
      %5907 = vmatprep.subr.mxu0 0.0
      %5908 = vmatpush1.msra.mxu0 %v5412
      %5909 = vmatprep.subr.mxu0 0.0
      %5910 = vmatpush1.msra.mxu0 %v5413
      %5911 = vmatprep.subr.mxu0 0.0
      %5912 = vmatpush1.msra.mxu0 %v5414
      %5913 = vmatprep.subr.mxu0 0.0
      %5914 = vmatpush1.msra.mxu0 %v5415
      %5915 = vmatprep.subr.mxu0 0.0
      %5916 = vmatpush1.msra.mxu0 %v5416
      %5917 = vmatprep.subr.mxu0 0.0
      %5918 = vmatpush1.msra.mxu0 %v5417
      %5919 = vmatprep.subr.mxu0 0.0
      %5920 = vmatpush1.msra.mxu0 %v5418
      %5921 = vmatprep.subr.mxu0 0.0
      %5922 = vmatpush1.msra.mxu0 %v5419
      %5923 = vmatprep.subr.mxu0 0.0
      %5924 = vmatpush1.msra.mxu0 %v5420
      %5925 = vmatprep.subr.mxu0 0.0
      %5926 = vmatpush1.msra.mxu0 %v5421
      %5927 = vmatprep.subr.mxu0 0.0
      %5928 = vmatpush1.msra.mxu0 %v5422
      %5929 = vmatprep.subr.mxu0 0.0
      %5930 = vmatpush1.msra.mxu0 %v5423
      %5931 = vmatprep.subr.mxu0 0.0
      %5932 = vmatpush1.msra.mxu0 %v5424
      %5933 = vmatprep.subr.mxu0 0.0
      %5934 = vmatpush1.msra.mxu0 %v5425
      %5935 = vmatprep.subr.mxu0 0.0
      %5936 = vmatpush1.msra.mxu0 %v5426
      %5937 = vmatprep.subr.mxu0 0.0
      %5938 = vmatpush1.msra.mxu0 %v5427
      %5939 = vmatprep.subr.mxu0 0.0
      %5940 = vmatpush1.msra.mxu0 %v5428
      %5941 = vmatprep.subr.mxu0 0.0
      %5942 = vmatpush1.msra.mxu0 %v5429
      %5943 = vmatprep.subr.mxu0 0.0
      %5944 = vmatpush1.msra.mxu0 0.0
      %5945 = vmatprep.subr.mxu0 0.0
      %5946 = vmatpush1.msra.mxu0 0.0
      %5947 = vmatprep.subr.mxu0 0.0
      %5948 = vmatpush1.msra.mxu0 0.0
      %5949 = vmatprep.subr.mxu0 0.0
      %5950 = vmatpush1.msra.mxu0 0.0
      %5951 = vmatprep.mubr.f32.mxu0 %v5871
      %5952 = vmatmul.mubr.f32.gmra.mrb[0].mxu0 %v5831
      %v5953 = vpop.f32.mrb[0].mxu0
      %v5954 = vadd.f32 %v5809, %v5953
      %v5955 = vpop.f32.mrb[0].mxu0
      %5956 = vmatprep.mubr.f32.mxu0 %v5873
      %5957 = vmatmul.mubr.f32.gmra.mrb[0].mxu0 %v5836
      %v5958 = vpop.f32.mrb[0].mxu0
      %v5959 = vadd.f32 %v5809, %v5958
      %v5960 = vpop.f32.mrb[0].mxu0
      %5961 = vmatprep.mubr.f32.mxu0 %v5875
      %5962 = vmatmul.mubr.f32.gmra.mrb[0].mxu0 %v5840
      %v5963 = vpop.f32.mrb[0].mxu0
      %v5964 = vadd.f32 %v5809, %v5963
      %v5965 = vpop.f32.mrb[0].mxu0
      %5966 = vmatprep.mubr.f32.mxu0 %v5877
      %5967 = vmatmul.mubr.f32.gmra.mrb[0].mxu0 %v5844
      %v5968 = vpop.f32.mrb[0].mxu0
      %v5969 = vadd.f32 %v5809, %v5968
      %v5970 = vpop.f32.mrb[0].mxu0
      %5971 = vmatprep.mubr.f32.mxu0 %v5879
      %5972 = vmatmul.mubr.f32.gmra.mrb[0].mxu0 %v5848
      %v5973 = vpop.f32.mrb[0].mxu0
      %v5974 = vadd.f32 %v5809, %v5973
      %v5975 = vpop.f32.mrb[0].mxu0
      %5976 = vmatprep.mubr.f32.mxu0 %v5881
      %5977 = vmatmul.mubr.f32.gmra.mrb[0].mxu0 %v5852
      %v5978 = vpop.f32.mrb[0].mxu0
      %v5979 = vadd.f32 %v5809, %v5978
      %v5980 = vpop.f32.mrb[0].mxu0
      %5981 = vmatprep.mubr.f32.mxu0 %v5883
      %5982 = vmatmul.mubr.f32.gmra.mrb[0].mxu0 %v5856
      %v5983 = vpop.f32.mrb[0].mxu0
      %v5984 = vadd.f32 %v5809, %v5983
      %v5985 = vpop.f32.mrb[0].mxu0
      %5986 = vmatprep.mubr.f32.mxu0 %v5885
      %5987 = vmatmul.mubr.f32.gmra.mrb[0].mxu0 %v5860
      %v5988 = vpop.f32.mrb[0].mxu0
      %v5989 = vadd.f32 %v5809, %v5988
      %v5990 = vpop.f32.mrb[0].mxu0
      %5991 = vdwg.mxu0
      %v5992 = vadd.f32 %v5954, %v4798
      %v5993 = vadd.f32 %v5959, %v4799
      %v5994 = vadd.f32 %v5964, %v4800
      %v5995 = vadd.f32 %v5969, %v4801
      %v5996 = vadd.f32 %v5974, %v4802
      %v5997 = vadd.f32 %v5979, %v4803
      %v5998 = vadd.f32 %v5984, %v4804
      %v5999 = vadd.f32 %v5989, %v4805
      %v6000 = vadd.f32 %v2472, %v5992
      %v6001 = vadd.f32 %v2473, %v5993
      %v6002 = vadd.f32 %v2474, %v5994
      %v6003 = vadd.f32 %v2475, %v5995
      %v6004 = vadd.f32 %v2476, %v5996
      %v6005 = vadd.f32 %v2477, %v5997
      %v6006 = vadd.f32 %v2478, %v5998
      %v6007 = vadd.f32 %v2479, %v5999
      %v6008 = vld [vmem:[%s5] sm:$0xff]
      %v6009 = vld [vmem:[%s5 + $0x8] sm:$0xff]
      %v6010 = vld [vmem:[%s5 + $0x10] sm:$0xff]
      %v6011 = vld [vmem:[%s5 + $0x18] sm:$0xff]
      %v6012 = vld [vmem:[%s5 + $0x20] sm:$0xff]
      %v6013 = vld [vmem:[%s5 + $0x28] sm:$0xff]
      %v6014 = vld [vmem:[%s5 + $0x30] sm:$0xff]
      %v6015 = vld [vmem:[%s5 + $0x38] sm:$0xff]
      %v6016 = vld [vmem:[%s5 + $0x40] sm:$0xff]
      %v6017 = vld [vmem:[%s5 + $0x48] sm:$0xff]
      %v6018 = vld [vmem:[%s5 + $0x50] sm:$0xff]
      %v6019 = vld [vmem:[%s5 + $0x58] sm:$0xff]
      %v6020 = vld [vmem:[%s5 + $0x60] sm:$0xff]
      %v6021 = vld [vmem:[%s5 + $0x68] sm:$0xff]
      %v6022 = vld [vmem:[%s5 + $0x70] sm:$0xff]
      %v6023 = vld [vmem:[%s5 + $0x78] sm:$0xff]
      %v6024 = vld [vmem:[%s5 + $0x80] sm:$0xff]
      %v6025 = vld [vmem:[%s5 + $0x88] sm:$0xff]
      %v6026 = vld [vmem:[%s5 + $0x90] sm:$0xff]
      %v6027 = vld [vmem:[%s5 + $0x98] sm:$0xff]
      %v6028 = vld [vmem:[%s5 + $0xa0] sm:$0xff]
      %v6029 = vld [vmem:[%s5 + $0xa8] sm:$0xff]
      %v6030 = vld [vmem:[%s5 + $0xb0] sm:$0xff]
      %v6031 = vld [vmem:[%s5 + $0xb8] sm:$0xff]
      %v6032 = vld [vmem:[%s5 + $0xc0] sm:$0xff]
      %v6033 = vld [vmem:[%s5 + $0xc8] sm:$0xff]
      %v6034 = vld [vmem:[%s5 + $0xd0] sm:$0xff]
      %v6035 = vld [vmem:[%s5 + $0xd8] sm:$0xff]
      %v6036 = vld [vmem:[%s5 + $0xe0] sm:$0xff]
      %v6037 = vld [vmem:[%s5 + $0xe8] sm:$0xff]
      %v6038 = vld [vmem:[%s5 + $0xf0] sm:$0xff]
      %v6039 = vld [vmem:[%s5 + $0xf8] sm:$0xff]
      %v6040 = vld [vmem:[%s5 + $0x100] sm:$0xff]
      %v6041 = vld [vmem:[%s5 + $0x108] sm:$0xff]
      %v6042 = vld [vmem:[%s5 + $0x110] sm:$0xff]
      %v6043 = vld [vmem:[%s5 + $0x118] sm:$0xff]
      %v6044 = vld [vmem:[%s5 + $0x120] sm:$0xff]
      %v6045 = vld [vmem:[%s5 + $0x128] sm:$0xff]
      %v6046 = vld [vmem:[%s5 + $0x130] sm:$0xff]
      %v6047 = vld [vmem:[%s5 + $0x138] sm:$0xff]
      %v6048 = vld [vmem:[%s5 + $0x140] sm:$0xff]
      %v6049 = vld [vmem:[%s5 + $0x148] sm:$0xff]
      %v6050 = vld [vmem:[%s5 + $0x150] sm:$0xff]
      %v6051 = vld [vmem:[%s5 + $0x158] sm:$0xff]
      %v6052 = vld [vmem:[%s6] sm:$0x1]
      %6053 = vst.msk [vmem:[#allocation4 + $0x20] sm:$0xff] %vm279, %v373
      %6054 = vst.msk [vmem:[#allocation4 + $0x28] sm:$0xff] %vm279, %v374
      %6055 = vst.msk [vmem:[#allocation4 + $0x30] sm:$0xff] %vm279, %v375
      %6056 = vst.msk [vmem:[#allocation4 + $0x38] sm:$0xff] %vm279, %v376
      %6057 = vst.msk [vmem:[#allocation4 + $0x40] sm:$0xff] %vm279, %v377
      %6058 = vst.msk [vmem:[#allocation4 + $0x48] sm:$0xff] %vm279, %v378
      %6059 = vst.msk [vmem:[#allocation4 + $0x50] sm:$0xff] %vm279, %v379
      %6060 = vst.msk [vmem:[#allocation4 + $0x58] sm:$0xff] %vm279, %v380
      %v6061 = vld [vmem:[#allocation4 + $0x18] sm:$0xff]
      %v6062 = vld [vmem:[#allocation4 + $0x20] sm:$0xff]
      %v6063 = vld [vmem:[#allocation4 + $0x28] sm:$0xff]
      %v6064 = vld [vmem:[#allocation4 + $0x30] sm:$0xff]
      %v6065 = vld [vmem:[#allocation4 + $0x38] sm:$0xff]
      %v6066 = vld [vmem:[#allocation4 + $0x40] sm:$0xff]
      %v6067 = vld [vmem:[#allocation4 + $0x48] sm:$0xff]
      %v6068 = vld [vmem:[#allocation4 + $0x50] sm:$0xff]
      %v6069 = vld [vmem:[#allocation4 + $0x58] sm:$0xff]
      %v6070 = vld [vmem:[#allocation4 + $0x60] sm:$0xff]
      %v6080 = vrot.slane %v6061, 1
      %v6081 = vrot.slane %v6062, 1
      %v6082 = vsel %vm407, %v6080, %v6081
      %v6083 = vrot.slane %v6063, 1
      %v6084 = vsel %vm407, %v6081, %v6083
      %v6085 = vrot.slane %v6064, 1
      %v6086 = vsel %vm407, %v6083, %v6085
      %v6087 = vrot.slane %v6065, 1
      %v6088 = vsel %vm407, %v6085, %v6087
      %v6089 = vrot.slane %v6066, 1
      %v6090 = vsel %vm407, %v6087, %v6089
      %v6091 = vrot.slane %v6067, 1
      %v6092 = vsel %vm407, %v6089, %v6091
      %v6093 = vrot.slane %v6068, 1
      %v6094 = vsel %vm407, %v6091, %v6093
      %v6095 = vrot.slane %v6069, 1
      %v6096 = vsel %vm407, %v6093, %v6095
      %6097 = vrot.lane.b32.xlu0 %v6082, 32
      %v6098 = vpop.permute.xlu0 %6097
      %6099 = vrot.lane.b32.xlu0 %v6084, 32
      %v6100 = vpop.permute.xlu0 %6099
      %6101 = vrot.lane.b32.xlu0 %v6086, 32
      %v6102 = vpop.permute.xlu0 %6101
      %6103 = vrot.lane.b32.xlu0 %v6088, 32
      %v6104 = vpop.permute.xlu0 %6103
      %6105 = vrot.lane.b32.xlu0 %v6090, 32
      %v6106 = vpop.permute.xlu0 %6105
      %6107 = vrot.lane.b32.xlu0 %v6092, 32
      %v6108 = vpop.permute.xlu0 %6107
      %6109 = vrot.lane.b32.xlu0 %v6094, 32
      %v6110 = vpop.permute.xlu0 %6109
      %6111 = vrot.lane.b32.xlu0 %v6096, 32
      %v6112 = vpop.permute.xlu0 %6111
      %6113 = vrot.lane.b32.xlu0 %v6095, 32
      %v6114 = vpop.permute.xlu0 %6113
      %v6124 = vrot.slane %v6061, 2
      %v6125 = vrot.slane %v6062, 2
      %v6126 = vsel %vm451, %v6124, %v6125
      %v6127 = vrot.slane %v6063, 2
      %v6128 = vsel %vm451, %v6125, %v6127
      %v6129 = vrot.slane %v6064, 2
      %v6130 = vsel %vm451, %v6127, %v6129
      %v6131 = vrot.slane %v6065, 2
      %v6132 = vsel %vm451, %v6129, %v6131
      %v6133 = vrot.slane %v6066, 2
      %v6134 = vsel %vm451, %v6131, %v6133
      %v6135 = vrot.slane %v6067, 2
      %v6136 = vsel %vm451, %v6133, %v6135
      %v6137 = vrot.slane %v6068, 2
      %v6138 = vsel %vm451, %v6135, %v6137
      %v6139 = vrot.slane %v6069, 2
      %v6140 = vsel %vm451, %v6137, %v6139
      %6141 = vrot.lane.b32.xlu0 %v6126, 64
      %v6142 = vpop.permute.xlu0 %6141
      %6143 = vrot.lane.b32.xlu0 %v6128, 64
      %v6144 = vpop.permute.xlu0 %6143
      %6145 = vrot.lane.b32.xlu0 %v6130, 64
      %v6146 = vpop.permute.xlu0 %6145
      %6147 = vrot.lane.b32.xlu0 %v6132, 64
      %v6148 = vpop.permute.xlu0 %6147
      %6149 = vrot.lane.b32.xlu0 %v6134, 64
      %v6150 = vpop.permute.xlu0 %6149
      %6151 = vrot.lane.b32.xlu0 %v6136, 64
      %v6152 = vpop.permute.xlu0 %6151
      %6153 = vrot.lane.b32.xlu0 %v6138, 64
      %v6154 = vpop.permute.xlu0 %6153
      %6155 = vrot.lane.b32.xlu0 %v6140, 64
      %v6156 = vpop.permute.xlu0 %6155
      %6157 = vrot.lane.b32.xlu0 %v6139, 64
      %v6158 = vpop.permute.xlu0 %6157
      %v6168 = vrot.slane %v6061, 3
      %v6169 = vrot.slane %v6062, 3
      %v6170 = vsel %vm1130, %v6168, %v6169
      %v6171 = vrot.slane %v6063, 3
      %v6172 = vsel %vm1130, %v6169, %v6171
      %v6173 = vrot.slane %v6064, 3
      %v6174 = vsel %vm1130, %v6171, %v6173
      %v6175 = vrot.slane %v6065, 3
      %v6176 = vsel %vm1130, %v6173, %v6175
      %v6177 = vrot.slane %v6066, 3
      %v6178 = vsel %vm1130, %v6175, %v6177
      %v6179 = vrot.slane %v6067, 3
      %v6180 = vsel %vm1130, %v6177, %v6179
      %v6181 = vrot.slane %v6068, 3
      %v6182 = vsel %vm1130, %v6179, %v6181
      %v6183 = vrot.slane %v6069, 3
      %v6184 = vsel %vm1130, %v6181, %v6183
      %6185 = vrot.lane.b32.xlu0 %v6170, 96
      %v6186 = vpop.permute.xlu0 %6185
      %6187 = vrot.lane.b32.xlu0 %v6172, 96
      %v6188 = vpop.permute.xlu0 %6187
      %6189 = vrot.lane.b32.xlu0 %v6174, 96
      %v6190 = vpop.permute.xlu0 %6189
      %6191 = vrot.lane.b32.xlu0 %v6176, 96
      %v6192 = vpop.permute.xlu0 %6191
      %6193 = vrot.lane.b32.xlu0 %v6178, 96
      %v6194 = vpop.permute.xlu0 %6193
      %6195 = vrot.lane.b32.xlu0 %v6180, 96
      %v6196 = vpop.permute.xlu0 %6195
      %6197 = vrot.lane.b32.xlu0 %v6182, 96
      %v6198 = vpop.permute.xlu0 %6197
      %6199 = vrot.lane.b32.xlu0 %v6184, 96
      %v6200 = vpop.permute.xlu0 %6199
      %6201 = vrot.lane.b32.xlu0 %v6183, 96
      %v6202 = vpop.permute.xlu0 %6201
      %v6212 = vrot.slane %v6061, 4
      %v6213 = vrot.slane %v6062, 4
      %v6214 = vsel %vm2667, %v6212, %v6213
      %v6215 = vrot.slane %v6063, 4
      %v6216 = vsel %vm2667, %v6213, %v6215
      %v6217 = vrot.slane %v6064, 4
      %v6218 = vsel %vm2667, %v6215, %v6217
      %v6219 = vrot.slane %v6065, 4
      %v6220 = vsel %vm2667, %v6217, %v6219
      %v6221 = vrot.slane %v6066, 4
      %v6222 = vsel %vm2667, %v6219, %v6221
      %v6223 = vrot.slane %v6067, 4
      %v6224 = vsel %vm2667, %v6221, %v6223
      %v6225 = vrot.slane %v6068, 4
      %v6226 = vsel %vm2667, %v6223, %v6225
      %v6227 = vrot.slane %v6069, 4
      %v6228 = vsel %vm2667, %v6225, %v6227
      %v6238 = vrot.slane %v6062, 5
      %v6239 = vrot.slane %v6063, 5
      %v6240 = vsel %vm1252, %v6238, %v6239
      %v6241 = vrot.slane %v6064, 5
      %v6242 = vsel %vm1252, %v6239, %v6241
      %v6243 = vrot.slane %v6065, 5
      %v6244 = vsel %vm1252, %v6241, %v6243
      %v6245 = vrot.slane %v6066, 5
      %v6246 = vsel %vm1252, %v6243, %v6245
      %v6247 = vrot.slane %v6067, 5
      %v6248 = vsel %vm1252, %v6245, %v6247
      %v6249 = vrot.slane %v6068, 5
      %v6250 = vsel %vm1252, %v6247, %v6249
      %v6251 = vrot.slane %v6069, 5
      %v6252 = vsel %vm1252, %v6249, %v6251
      %6253 = vrot.lane.b32.xlu0 %v6238, 32
      %v6254 = vpop.permute.xlu0 %6253
      %6255 = vrot.lane.b32.xlu0 %v6240, 32
      %v6256 = vpop.permute.xlu0 %6255
      %6257 = vrot.lane.b32.xlu0 %v6242, 32
      %v6258 = vpop.permute.xlu0 %6257
      %6259 = vrot.lane.b32.xlu0 %v6244, 32
      %v6260 = vpop.permute.xlu0 %6259
      %6261 = vrot.lane.b32.xlu0 %v6246, 32
      %v6262 = vpop.permute.xlu0 %6261
      %6263 = vrot.lane.b32.xlu0 %v6248, 32
      %v6264 = vpop.permute.xlu0 %6263
      %6265 = vrot.lane.b32.xlu0 %v6250, 32
      %v6266 = vpop.permute.xlu0 %6265
      %6267 = vrot.lane.b32.xlu0 %v6252, 32
      %v6268 = vpop.permute.xlu0 %6267
      %6269 = vrot.lane.b32.xlu0 %v6251, 32
      %v6270 = vpop.permute.xlu0 %6269
      %v6281 = vrot.slane %v6062, 6
      %v6282 = vrot.slane %v6063, 6
      %v6283 = vsel %vm1174, %v6281, %v6282
      %v6284 = vrot.slane %v6064, 6
      %v6285 = vsel %vm1174, %v6282, %v6284
      %v6286 = vrot.slane %v6065, 6
      %v6287 = vsel %vm1174, %v6284, %v6286
      %v6288 = vrot.slane %v6066, 6
      %v6289 = vsel %vm1174, %v6286, %v6288
      %v6290 = vrot.slane %v6067, 6
      %v6291 = vsel %vm1174, %v6288, %v6290
      %v6292 = vrot.slane %v6068, 6
      %v6293 = vsel %vm1174, %v6290, %v6292
      %v6294 = vrot.slane %v6069, 6
      %v6295 = vsel %vm1174, %v6292, %v6294
      %v6296 = vrot.slane %v6070, 6
      %v6297 = vsel %vm1174, %v6294, %v6296
      %6298 = vrot.lane.b32.xlu0 %v6281, 64
      %v6299 = vpop.permute.xlu0 %6298
      %6300 = vrot.lane.b32.xlu0 %v6283, 64
      %v6301 = vpop.permute.xlu0 %6300
      %6302 = vrot.lane.b32.xlu0 %v6285, 64
      %v6303 = vpop.permute.xlu0 %6302
      %6304 = vrot.lane.b32.xlu0 %v6287, 64
      %v6305 = vpop.permute.xlu0 %6304
      %6306 = vrot.lane.b32.xlu0 %v6289, 64
      %v6307 = vpop.permute.xlu0 %6306
      %6308 = vrot.lane.b32.xlu0 %v6291, 64
      %v6309 = vpop.permute.xlu0 %6308
      %6310 = vrot.lane.b32.xlu0 %v6293, 64
      %v6311 = vpop.permute.xlu0 %6310
      %6312 = vrot.lane.b32.xlu0 %v6295, 64
      %v6313 = vpop.permute.xlu0 %6312
      %6314 = vrot.lane.b32.xlu0 %v6297, 64
      %v6315 = vpop.permute.xlu0 %6314
      %v6325 = vrot.slane %v6062, 7
      %v6326 = vrot.slane %v6063, 7
      %v6327 = vsel %vm530, %v6325, %v6326
      %v6328 = vrot.slane %v6064, 7
      %v6329 = vsel %vm530, %v6326, %v6328
      %v6330 = vrot.slane %v6065, 7
      %v6331 = vsel %vm530, %v6328, %v6330
      %v6332 = vrot.slane %v6066, 7
      %v6333 = vsel %vm530, %v6330, %v6332
      %v6334 = vrot.slane %v6067, 7
      %v6335 = vsel %vm530, %v6332, %v6334
      %v6336 = vrot.slane %v6068, 7
      %v6337 = vsel %vm530, %v6334, %v6336
      %v6338 = vrot.slane %v6069, 7
      %v6339 = vsel %vm530, %v6336, %v6338
      %v6340 = vrot.slane %v6070, 7
      %v6341 = vsel %vm530, %v6338, %v6340
      %6342 = vrot.lane.b32.xlu0 %v6325, 96
      %v6343 = vpop.permute.xlu0 %6342
      %6344 = vrot.lane.b32.xlu0 %v6327, 96
      %v6345 = vpop.permute.xlu0 %6344
      %6346 = vrot.lane.b32.xlu0 %v6329, 96
      %v6347 = vpop.permute.xlu0 %6346
      %6348 = vrot.lane.b32.xlu0 %v6331, 96
      %v6349 = vpop.permute.xlu0 %6348
      %6350 = vrot.lane.b32.xlu0 %v6333, 96
      %v6351 = vpop.permute.xlu0 %6350
      %6352 = vrot.lane.b32.xlu0 %v6335, 96
      %v6353 = vpop.permute.xlu0 %6352
      %6354 = vrot.lane.b32.xlu0 %v6337, 96
      %v6355 = vpop.permute.xlu0 %6354
      %6356 = vrot.lane.b32.xlu0 %v6339, 96
      %v6357 = vpop.permute.xlu0 %6356
      %6358 = vrot.lane.b32.xlu0 %v6341, 96
      %v6359 = vpop.permute.xlu0 %6358
      %v6369 = vrot.slane %v6070, 1
      %v6370 = vsel %vm407, %v6095, %v6369
      %6371 = vrot.lane.b32.xlu0 %v6370, 32
      %v6372 = vpop.permute.xlu0 %6371
      %6373 = vrot.lane.b32.xlu0 %v6369, 32
      %v6374 = vpop.permute.xlu0 %6373
      %v6377 = vrot.slane %v6070, 2
      %v6378 = vsel %vm451, %v6139, %v6377
      %6379 = vrot.lane.b32.xlu0 %v6378, 64
      %v6380 = vpop.permute.xlu0 %6379
      %6381 = vrot.lane.b32.xlu0 %v6377, 64
      %v6382 = vpop.permute.xlu0 %6381
      %v6385 = vsel %vm279, %v6061, %v6098
      %v6386 = vsel %vm279, %v6062, %v6100
      %v6387 = vsel %vm279, %v6063, %v6102
      %v6388 = vsel %vm279, %v6064, %v6104
      %v6389 = vsel %vm279, %v6065, %v6106
      %v6390 = vsel %vm279, %v6066, %v6108
      %v6391 = vsel %vm279, %v6067, %v6110
      %v6392 = vsel %vm279, %v6068, %v6112
      %v6393 = vsel %vm279, %v6069, %v6114
      %v6394 = vsel %vm505, %v6385, %v6142
      %v6395 = vsel %vm505, %v6386, %v6144
      %v6396 = vsel %vm505, %v6387, %v6146
      %v6397 = vsel %vm505, %v6388, %v6148
      %v6398 = vsel %vm505, %v6389, %v6150
      %v6399 = vsel %vm505, %v6390, %v6152
      %v6400 = vsel %vm505, %v6391, %v6154
      %v6401 = vsel %vm505, %v6392, %v6156
      %v6402 = vsel %vm505, %v6393, %v6158
      %v6403 = vsel %vm548, %v6394, %v6186
      %v6404 = vsel %vm548, %v6395, %v6188
      %v6405 = vsel %vm548, %v6396, %v6190
      %v6406 = vsel %vm548, %v6397, %v6192
      %v6407 = vsel %vm548, %v6398, %v6194
      %v6408 = vsel %vm548, %v6399, %v6196
      %v6409 = vsel %vm548, %v6400, %v6198
      %v6410 = vsel %vm548, %v6401, %v6200
      %v6411 = vsel %vm548, %v6402, %v6202
      %v6412 = vsel %vm279, %v6214, %v6254
      %v6413 = vsel %vm279, %v6216, %v6256
      %v6414 = vsel %vm279, %v6218, %v6258
      %v6415 = vsel %vm279, %v6220, %v6260
      %v6416 = vsel %vm279, %v6222, %v6262
      %v6417 = vsel %vm279, %v6224, %v6264
      %v6418 = vsel %vm279, %v6226, %v6266
      %v6419 = vsel %vm279, %v6228, %v6268
      %v6420 = vsel %vm279, %v6227, %v6270
      %v6421 = vsel %vm505, %v6412, %v6299
      %v6422 = vsel %vm505, %v6413, %v6301
      %v6423 = vsel %vm505, %v6414, %v6303
      %v6424 = vsel %vm505, %v6415, %v6305
      %v6425 = vsel %vm505, %v6416, %v6307
      %v6426 = vsel %vm505, %v6417, %v6309
      %v6427 = vsel %vm505, %v6418, %v6311
      %v6428 = vsel %vm505, %v6419, %v6313
      %v6429 = vsel %vm505, %v6420, %v6315
      %v6430 = vsel %vm548, %v6421, %v6343
      %v6431 = vsel %vm548, %v6422, %v6345
      %v6432 = vsel %vm548, %v6423, %v6347
      %v6433 = vsel %vm548, %v6424, %v6349
      %v6434 = vsel %vm548, %v6425, %v6351
      %v6435 = vsel %vm548, %v6426, %v6353
      %v6436 = vsel %vm548, %v6427, %v6355
      %v6437 = vsel %vm548, %v6428, %v6357
      %v6438 = vsel %vm548, %v6429, %v6359
      %v6439 = vsel %vm279, %v6069, %v6372
      %v6440 = vsel %vm279, %v6070, %v6374
      %v6441 = vsel %vm505, %v6439, %v6380
      %v6442 = vsel %vm505, %v6440, %v6382
      %v6444 = vlaneseq
      %v6445 = vshrl.u32 %v6444, 7
      %v6446 = vsub.s32 0, %v6445
      %v6447 = vrot.slane %v6052, %v6446
      %v6476 = vrot.slane %v6403, 3
      %v6477 = vrot.slane %v6404, 3
      %v6478 = vsel %vm1130, %v6476, %v6477
      %v6479 = vrot.slane %v6430, 3
      %v6480 = vrot.slane %v6431, 3
      %v6481 = vsel %vm1130, %v6479, %v6480
      %v6482 = vrot.slane %v6395, 3
      %v6483 = vrot.slane %v6396, 3
      %v6484 = vsel %vm1130, %v6482, %v6483
      %v6485 = vrot.slane %v6405, 3
      %v6486 = vsel %vm1130, %v6477, %v6485
      %v6487 = vrot.slane %v6432, 3
      %v6488 = vsel %vm1130, %v6480, %v6487
      %v6489 = vrot.slane %v6397, 3
      %v6490 = vsel %vm1130, %v6483, %v6489
      %v6491 = vrot.slane %v6406, 3
      %v6492 = vsel %vm1130, %v6485, %v6491
      %v6493 = vrot.slane %v6433, 3
      %v6494 = vsel %vm1130, %v6487, %v6493
      %v6495 = vrot.slane %v6398, 3
      %v6496 = vsel %vm1130, %v6489, %v6495
      %v6497 = vrot.slane %v6407, 3
      %v6498 = vsel %vm1130, %v6491, %v6497
      %v6499 = vrot.slane %v6434, 3
      %v6500 = vsel %vm1130, %v6493, %v6499
      %v6501 = vrot.slane %v6399, 3
      %v6502 = vsel %vm1130, %v6495, %v6501
      %v6503 = vrot.slane %v6408, 3
      %v6504 = vsel %vm1130, %v6497, %v6503
      %v6505 = vrot.slane %v6435, 3
      %v6506 = vsel %vm1130, %v6499, %v6505
      %v6507 = vrot.slane %v6400, 3
      %v6508 = vsel %vm1130, %v6501, %v6507
      %v6509 = vrot.slane %v6409, 3
      %v6510 = vsel %vm1130, %v6503, %v6509
      %v6511 = vrot.slane %v6436, 3
      %v6512 = vsel %vm1130, %v6505, %v6511
      %v6513 = vrot.slane %v6401, 3
      %v6514 = vsel %vm1130, %v6507, %v6513
      %v6515 = vrot.slane %v6410, 3
      %v6516 = vsel %vm1130, %v6509, %v6515
      %v6517 = vrot.slane %v6437, 3
      %v6518 = vsel %vm1130, %v6511, %v6517
      %v6519 = vrot.slane %v6441, 3
      %v6520 = vsel %vm1130, %v6513, %v6519
      %v6521 = vrot.slane %v6411, 3
      %v6522 = vsel %vm1130, %v6515, %v6521
      %v6523 = vrot.slane %v6438, 3
      %v6524 = vsel %vm1130, %v6517, %v6523
      %v6525 = vrot.slane %v6442, 3
      %v6526 = vsel %vm1130, %v6519, %v6525
      %v6543 = vsel %vm548, %v6484, 0
      %v6545 = vsel %vm548, %v6490, 0
      %v6547 = vsel %vm548, %v6496, 0
      %v6549 = vsel %vm548, %v6502, 0
      %v6551 = vsel %vm548, %v6508, 0
      %v6553 = vsel %vm548, %v6514, 0
      %v6555 = vsel %vm548, %v6520, 0
      %v6557 = vsel %vm548, %v6526, 0
      %6559 = vmatprep.subr.mxu0 0.0
      %6560 = vmatpush1.msra.mxu0 %v6008
      %6561 = vmatprep.subr.mxu0 0.0
      %6562 = vmatpush1.msra.mxu0 %v6009
      %6563 = vmatprep.subr.mxu0 0.0
      %6564 = vmatpush1.msra.mxu0 %v6010
      %6565 = vmatprep.subr.mxu0 0.0
      %6566 = vmatpush1.msra.mxu0 %v6011
      %6567 = vmatprep.subr.mxu0 0.0
      %6568 = vmatpush1.msra.mxu0 %v6012
      %6569 = vmatprep.subr.mxu0 0.0
      %6570 = vmatpush1.msra.mxu0 %v6013
      %6571 = vmatprep.subr.mxu0 0.0
      %6572 = vmatpush1.msra.mxu0 %v6014
      %6573 = vmatprep.subr.mxu0 0.0
      %6574 = vmatpush1.msra.mxu0 %v6015
      %6575 = vmatprep.subr.mxu0 0.0
      %6576 = vmatpush1.msra.mxu0 %v6016
      %6577 = vmatprep.subr.mxu0 0.0
      %6578 = vmatpush1.msra.mxu0 %v6017
      %6579 = vmatprep.subr.mxu0 0.0
      %6580 = vmatpush1.msra.mxu0 %v6018
      %6581 = vmatprep.subr.mxu0 0.0
      %6582 = vmatpush1.msra.mxu0 %v6019
      %6583 = vmatprep.subr.mxu0 0.0
      %6584 = vmatpush1.msra.mxu0 %v6020
      %6585 = vmatprep.subr.mxu0 0.0
      %6586 = vmatpush1.msra.mxu0 %v6021
      %6587 = vmatprep.subr.mxu0 0.0
      %6588 = vmatpush1.msra.mxu0 %v6022
      %6589 = vmatprep.subr.mxu0 0.0
      %6590 = vmatpush1.msra.mxu0 %v6023
      %6591 = vmatprep.subr.mxu0 0.0
      %6592 = vmatpush1.msra.mxu0 %v6024
      %6593 = vmatprep.subr.mxu0 0.0
      %6594 = vmatpush1.msra.mxu0 %v6025
      %6595 = vmatprep.subr.mxu0 0.0
      %6596 = vmatpush1.msra.mxu0 %v6026
      %6597 = vmatprep.subr.mxu0 0.0
      %6598 = vmatpush1.msra.mxu0 %v6027
      %6599 = vmatprep.subr.mxu0 0.0
      %6600 = vmatpush1.msra.mxu0 %v6028
      %6601 = vmatprep.subr.mxu0 0.0
      %6602 = vmatpush1.msra.mxu0 %v6029
      %6603 = vmatprep.subr.mxu0 0.0
      %6604 = vmatpush1.msra.mxu0 %v6030
      %6605 = vmatprep.subr.mxu0 0.0
      %6606 = vmatpush1.msra.mxu0 %v6031
      %6607 = vmatprep.subr.mxu0 0.0
      %6608 = vmatpush1.msra.mxu0 %v6032
      %6609 = vmatprep.subr.mxu0 0.0
      %6610 = vmatpush1.msra.mxu0 %v6033
      %6611 = vmatprep.subr.mxu0 0.0
      %6612 = vmatpush1.msra.mxu0 %v6034
      %6613 = vmatprep.subr.mxu0 0.0
      %6614 = vmatpush1.msra.mxu0 %v6035
      %6615 = vmatprep.subr.mxu0 0.0
      %6616 = vmatpush1.msra.mxu0 %v6036
      %6617 = vmatprep.subr.mxu0 0.0
      %6618 = vmatpush1.msra.mxu0 %v6037
      %6619 = vmatprep.subr.mxu0 0.0
      %6620 = vmatpush1.msra.mxu0 %v6038
      %6621 = vmatprep.subr.mxu0 0.0
      %6622 = vmatpush1.msra.mxu0 %v6039
      %6623 = vmatprep.mubr.f32.mxu0 %v6481
      %6624 = vmatmul.mubr.f32.gmra.mrb[0].mxu0 %v6478
      %v6625 = vpop.f32.mrb[0].mxu0
      %v6626 = vadd.f32 %v6447, %v6625
      %v6627 = vpop.f32.mrb[0].mxu0
      %6628 = vmatprep.mubr.f32.mxu0 %v6488
      %6629 = vmatmul.mubr.f32.gmra.mrb[0].mxu0 %v6486
      %v6630 = vpop.f32.mrb[0].mxu0
      %v6631 = vadd.f32 %v6447, %v6630
      %v6632 = vpop.f32.mrb[0].mxu0
      %6633 = vmatprep.mubr.f32.mxu0 %v6494
      %6634 = vmatmul.mubr.f32.gmra.mrb[0].mxu0 %v6492
      %v6635 = vpop.f32.mrb[0].mxu0
      %v6636 = vadd.f32 %v6447, %v6635
      %v6637 = vpop.f32.mrb[0].mxu0
      %6638 = vmatprep.mubr.f32.mxu0 %v6500
      %6639 = vmatmul.mubr.f32.gmra.mrb[0].mxu0 %v6498
      %v6640 = vpop.f32.mrb[0].mxu0
      %v6641 = vadd.f32 %v6447, %v6640
      %v6642 = vpop.f32.mrb[0].mxu0
      %6643 = vmatprep.mubr.f32.mxu0 %v6506
      %6644 = vmatmul.mubr.f32.gmra.mrb[0].mxu0 %v6504
      %v6645 = vpop.f32.mrb[0].mxu0
      %v6646 = vadd.f32 %v6447, %v6645
      %v6647 = vpop.f32.mrb[0].mxu0
      %6648 = vmatprep.mubr.f32.mxu0 %v6512
      %6649 = vmatmul.mubr.f32.gmra.mrb[0].mxu0 %v6510
      %v6650 = vpop.f32.mrb[0].mxu0
      %v6651 = vadd.f32 %v6447, %v6650
      %v6652 = vpop.f32.mrb[0].mxu0
      %6653 = vmatprep.mubr.f32.mxu0 %v6518
      %6654 = vmatmul.mubr.f32.gmra.mrb[0].mxu0 %v6516
      %v6655 = vpop.f32.mrb[0].mxu0
      %v6656 = vadd.f32 %v6447, %v6655
      %v6657 = vpop.f32.mrb[0].mxu0
      %6658 = vmatprep.mubr.f32.mxu0 %v6524
      %6659 = vmatmul.mubr.f32.gmra.mrb[0].mxu0 %v6522
      %v6660 = vpop.f32.mrb[0].mxu0
      %v6661 = vadd.f32 %v6447, %v6660
      %v6662 = vpop.f32.mrb[0].mxu0
      %6663 = vdwg.mxu0
      %6664 = vmatprep.subr.mxu0 0.0
      %6665 = vmatpush1.msra.mxu0 %v6040
      %6666 = vmatprep.subr.mxu0 0.0
      %6667 = vmatpush1.msra.mxu0 %v6041
      %6668 = vmatprep.subr.mxu0 0.0
      %6669 = vmatpush1.msra.mxu0 %v6042
      %6670 = vmatprep.subr.mxu0 0.0
      %6671 = vmatpush1.msra.mxu0 %v6043
      %6672 = vmatprep.subr.mxu0 0.0
      %6673 = vmatpush1.msra.mxu0 %v6044
      %6674 = vmatprep.subr.mxu0 0.0
      %6675 = vmatpush1.msra.mxu0 %v6045
      %6676 = vmatprep.subr.mxu0 0.0
      %6677 = vmatpush1.msra.mxu0 %v6046
      %6678 = vmatprep.subr.mxu0 0.0
      %6679 = vmatpush1.msra.mxu0 %v6047
      %6680 = vmatprep.subr.mxu0 0.0
      %6681 = vmatpush1.msra.mxu0 %v6048
      %6682 = vmatprep.subr.mxu0 0.0
      %6683 = vmatpush1.msra.mxu0 %v6049
      %6684 = vmatprep.subr.mxu0 0.0
      %6685 = vmatpush1.msra.mxu0 %v6050
      %6686 = vmatprep.subr.mxu0 0.0
      %6687 = vmatpush1.msra.mxu0 %v6051
      %6688 = vmatprep.subr.mxu0 0.0
      %6689 = vmatpush1.msra.mxu0 0.0
      %6690 = vmatprep.subr.mxu0 0.0
      %6691 = vmatpush1.msra.mxu0 0.0
      %6692 = vmatprep.subr.mxu0 0.0
      %6693 = vmatpush1.msra.mxu0 0.0
      %6694 = vmatprep.subr.mxu0 0.0
      %6695 = vmatpush1.msra.mxu0 0.0
      %6696 = vmatprep.subr.mxu0 0.0
      %6697 = vmatpush1.msra.mxu0 0.0
      %6698 = vmatprep.subr.mxu0 0.0
      %6699 = vmatpush1.msra.mxu0 0.0
      %6700 = vmatprep.subr.mxu0 0.0
      %6701 = vmatpush1.msra.mxu0 0.0
      %6702 = vmatprep.subr.mxu0 0.0
      %6703 = vmatpush1.msra.mxu0 0.0
      %6704 = vmatprep.subr.mxu0 0.0
      %6705 = vmatpush1.msra.mxu0 0.0
      %6706 = vmatprep.subr.mxu0 0.0
      %6707 = vmatpush1.msra.mxu0 0.0
      %6708 = vmatprep.subr.mxu0 0.0
      %6709 = vmatpush1.msra.mxu0 0.0
      %6710 = vmatprep.subr.mxu0 0.0
      %6711 = vmatpush1.msra.mxu0 0.0
      %6712 = vmatprep.subr.mxu0 0.0
      %6713 = vmatpush1.msra.mxu0 0.0
      %6714 = vmatprep.subr.mxu0 0.0
      %6715 = vmatpush1.msra.mxu0 0.0
      %6716 = vmatprep.subr.mxu0 0.0
      %6717 = vmatpush1.msra.mxu0 0.0
      %6718 = vmatprep.subr.mxu0 0.0
      %6719 = vmatpush1.msra.mxu0 0.0
      %6720 = vmatprep.subr.mxu0 0.0
      %6721 = vmatpush1.msra.mxu0 0.0
      %6722 = vmatprep.subr.mxu0 0.0
      %6723 = vmatpush1.msra.mxu0 0.0
      %6724 = vmatprep.subr.mxu0 0.0
      %6725 = vmatpush1.msra.mxu0 0.0
      %6726 = vmatprep.subr.mxu0 0.0
      %6727 = vmatpush1.msra.mxu0 0.0
      %6728 = vmatprep.mubr.f32.mxu0 0.0
      %6729 = vmatmul.mubr.f32.gmra.mrb[0].mxu0 %v6543
      %v6730 = vpop.f32.mrb[0].mxu0
      %v6731 = vadd.f32 %v6626, %v6730
      %v6732 = vpop.f32.mrb[0].mxu0
      %6733 = vmatprep.mubr.f32.mxu0 0.0
      %6734 = vmatmul.mubr.f32.gmra.mrb[0].mxu0 %v6545
      %v6735 = vpop.f32.mrb[0].mxu0
      %v6736 = vadd.f32 %v6631, %v6735
      %v6737 = vpop.f32.mrb[0].mxu0
      %6738 = vmatprep.mubr.f32.mxu0 0.0
      %6739 = vmatmul.mubr.f32.gmra.mrb[0].mxu0 %v6547
      %v6740 = vpop.f32.mrb[0].mxu0
      %v6741 = vadd.f32 %v6636, %v6740
      %v6742 = vpop.f32.mrb[0].mxu0
      %6743 = vmatprep.mubr.f32.mxu0 0.0
      %6744 = vmatmul.mubr.f32.gmra.mrb[0].mxu0 %v6549
      %v6745 = vpop.f32.mrb[0].mxu0
      %v6746 = vadd.f32 %v6641, %v6745
      %v6747 = vpop.f32.mrb[0].mxu0
      %6748 = vmatprep.mubr.f32.mxu0 0.0
      %6749 = vmatmul.mubr.f32.gmra.mrb[0].mxu0 %v6551
      %v6750 = vpop.f32.mrb[0].mxu0
      %v6751 = vadd.f32 %v6646, %v6750
      %v6752 = vpop.f32.mrb[0].mxu0
      %6753 = vmatprep.mubr.f32.mxu0 0.0
      %6754 = vmatmul.mubr.f32.gmra.mrb[0].mxu0 %v6553
      %v6755 = vpop.f32.mrb[0].mxu0
      %v6756 = vadd.f32 %v6651, %v6755
      %v6757 = vpop.f32.mrb[0].mxu0
      %6758 = vmatprep.mubr.f32.mxu0 0.0
      %6759 = vmatmul.mubr.f32.gmra.mrb[0].mxu0 %v6555
      %v6760 = vpop.f32.mrb[0].mxu0
      %v6761 = vadd.f32 %v6656, %v6760
      %v6762 = vpop.f32.mrb[0].mxu0
      %6763 = vmatprep.mubr.f32.mxu0 0.0
      %6764 = vmatmul.mubr.f32.gmra.mrb[0].mxu0 %v6557
      %v6765 = vpop.f32.mrb[0].mxu0
      %v6766 = vadd.f32 %v6661, %v6765
      %v6767 = vpop.f32.mrb[0].mxu0
      %6768 = vdwg.mxu0
      %s6769 = scalar_lea.vmem %s5, 352
      %v6770 = vld [vmem:[%s6769] sm:$0xff]
      %v6771 = vld [vmem:[%s6769 + $0x8] sm:$0xff]
      %v6772 = vld [vmem:[%s6769 + $0x10] sm:$0xff]
      %v6773 = vld [vmem:[%s6769 + $0x18] sm:$0xff]
      %v6774 = vld [vmem:[%s6769 + $0x20] sm:$0xff]
      %v6775 = vld [vmem:[%s6769 + $0x28] sm:$0xff]
      %v6776 = vld [vmem:[%s6769 + $0x30] sm:$0xff]
      %v6777 = vld [vmem:[%s6769 + $0x38] sm:$0xff]
      %v6778 = vld [vmem:[%s6769 + $0x40] sm:$0xff]
      %v6779 = vld [vmem:[%s6769 + $0x48] sm:$0xff]
      %v6780 = vld [vmem:[%s6769 + $0x50] sm:$0xff]
      %v6781 = vld [vmem:[%s6769 + $0x58] sm:$0xff]
      %v6782 = vld [vmem:[%s6769 + $0x60] sm:$0xff]
      %v6783 = vld [vmem:[%s6769 + $0x68] sm:$0xff]
      %v6784 = vld [vmem:[%s6769 + $0x70] sm:$0xff]
      %v6785 = vld [vmem:[%s6769 + $0x78] sm:$0xff]
      %v6786 = vld [vmem:[%s6769 + $0x80] sm:$0xff]
      %v6787 = vld [vmem:[%s6769 + $0x88] sm:$0xff]
      %v6788 = vld [vmem:[%s6769 + $0x90] sm:$0xff]
      %v6789 = vld [vmem:[%s6769 + $0x98] sm:$0xff]
      %v6790 = vld [vmem:[%s6769 + $0xa0] sm:$0xff]
      %v6791 = vld [vmem:[%s6769 + $0xa8] sm:$0xff]
      %v6792 = vld [vmem:[%s6769 + $0xb0] sm:$0xff]
      %v6793 = vld [vmem:[%s6769 + $0xb8] sm:$0xff]
      %v6794 = vld [vmem:[%s6769 + $0xc0] sm:$0xff]
      %v6795 = vld [vmem:[%s6769 + $0xc8] sm:$0xff]
      %v6796 = vld [vmem:[%s6769 + $0xd0] sm:$0xff]
      %v6797 = vld [vmem:[%s6769 + $0xd8] sm:$0xff]
      %v6798 = vld [vmem:[%s6769 + $0xe0] sm:$0xff]
      %v6799 = vld [vmem:[%s6769 + $0xe8] sm:$0xff]
      %v6800 = vld [vmem:[%s6769 + $0xf0] sm:$0xff]
      %v6801 = vld [vmem:[%s6769 + $0xf8] sm:$0xff]
      %v6802 = vld [vmem:[%s6769 + $0x100] sm:$0xff]
      %v6803 = vld [vmem:[%s6769 + $0x108] sm:$0xff]
      %v6804 = vld [vmem:[%s6769 + $0x110] sm:$0xff]
      %v6805 = vld [vmem:[%s6769 + $0x118] sm:$0xff]
      %v6806 = vld [vmem:[%s6769 + $0x120] sm:$0xff]
      %v6807 = vld [vmem:[%s6769 + $0x128] sm:$0xff]
      %v6808 = vld [vmem:[%s6769 + $0x130] sm:$0xff]
      %v6809 = vld [vmem:[%s6769 + $0x138] sm:$0xff]
      %v6810 = vld [vmem:[%s6769 + $0x140] sm:$0xff]
      %v6811 = vld [vmem:[%s6769 + $0x148] sm:$0xff]
      %v6812 = vld [vmem:[%s6769 + $0x150] sm:$0xff]
      %v6813 = vld [vmem:[%s6769 + $0x158] sm:$0xff]
      %s6814 = scalar_lea.vmem %s6, 1
      %v6815 = vld [vmem:[%s6814] sm:$0x1]
      %v6816 = vxor.u32 %v6731, 2147483648
      %v6817 = vxor.u32 %v6736, 2147483648
      %v6818 = vxor.u32 %v6741, 2147483648
      %v6819 = vxor.u32 %v6746, 2147483648
      %v6820 = vxor.u32 %v6751, 2147483648
      %v6821 = vxor.u32 %v6756, 2147483648
      %v6822 = vxor.u32 %v6761, 2147483648
      %v6823 = vxor.u32 %v6766, 2147483648
      %v6824 = vmul.f32 %v6816, 1.442695
      %v6825 = vpow.pop %v6824
      %v6826 = vmul.f32 %v6817, 1.442695
      %v6827 = vpow.pop %v6826
      %v6828 = vmul.f32 %v6818, 1.442695
      %v6829 = vpow.pop %v6828
      %v6830 = vmul.f32 %v6819, 1.442695
      %v6831 = vpow.pop %v6830
      %v6832 = vmul.f32 %v6820, 1.442695
      %v6833 = vpow.pop %v6832
      %v6834 = vmul.f32 %v6821, 1.442695
      %v6835 = vpow.pop %v6834
      %v6836 = vmul.f32 %v6822, 1.442695
      %v6837 = vpow.pop %v6836
      %v6838 = vmul.f32 %v6823, 1.442695
      %v6839 = vpow.pop %v6838
      %v6840 = vadd.f32 %v6825, 1.0
      %v6841 = vadd.f32 %v6827, 1.0
      %v6842 = vadd.f32 %v6829, 1.0
      %v6843 = vadd.f32 %v6831, 1.0
      %v6844 = vadd.f32 %v6833, 1.0
      %v6845 = vadd.f32 %v6835, 1.0
      %v6846 = vadd.f32 %v6837, 1.0
      %v6847 = vadd.f32 %v6839, 1.0
      %v6848 = vrcp.pop %v6840
      %v6849 = vmul.f32 1.0, %v6848
      %v6850 = vrcp.pop %v6841
      %v6851 = vmul.f32 1.0, %v6850
      %v6852 = vrcp.pop %v6842
      %v6853 = vmul.f32 1.0, %v6852
      %v6854 = vrcp.pop %v6843
      %v6855 = vmul.f32 1.0, %v6854
      %v6856 = vrcp.pop %v6844
      %v6857 = vmul.f32 1.0, %v6856
      %v6858 = vrcp.pop %v6845
      %v6859 = vmul.f32 1.0, %v6858
      %v6860 = vrcp.pop %v6846
      %v6861 = vmul.f32 1.0, %v6860
      %v6862 = vrcp.pop %v6847
      %v6863 = vmul.f32 1.0, %v6862
      %v6864 = vmul.f32 %v6731, %v6849
      %v6865 = vmul.f32 %v6736, %v6851
      %v6866 = vmul.f32 %v6741, %v6853
      %v6867 = vmul.f32 %v6746, %v6855
      %v6868 = vmul.f32 %v6751, %v6857
      %v6869 = vmul.f32 %v6756, %v6859
      %v6870 = vmul.f32 %v6761, %v6861
      %v6871 = vmul.f32 %v6766, %v6863
      %6872 = vst.msk [vmem:[#allocation4 + $0x20] sm:$0xff] %vm279, %v6864
      %6873 = vst.msk [vmem:[#allocation4 + $0x28] sm:$0xff] %vm279, %v6865
      %6874 = vst.msk [vmem:[#allocation4 + $0x30] sm:$0xff] %vm279, %v6866
      %6875 = vst.msk [vmem:[#allocation4 + $0x38] sm:$0xff] %vm279, %v6867
      %6876 = vst.msk [vmem:[#allocation4 + $0x40] sm:$0xff] %vm279, %v6868
      %6877 = vst.msk [vmem:[#allocation4 + $0x48] sm:$0xff] %vm279, %v6869
      %6878 = vst.msk [vmem:[#allocation4 + $0x50] sm:$0xff] %vm279, %v6870
      %6879 = vst.msk [vmem:[#allocation4 + $0x58] sm:$0xff] %vm279, %v6871
      %v6880 = vld [vmem:[#allocation4 + $0x18] sm:$0xff]
      %v6881 = vld [vmem:[#allocation4 + $0x20] sm:$0xff]
      %v6882 = vld [vmem:[#allocation4 + $0x28] sm:$0xff]
      %v6883 = vld [vmem:[#allocation4 + $0x30] sm:$0xff]
      %v6884 = vld [vmem:[#allocation4 + $0x38] sm:$0xff]
      %v6885 = vld [vmem:[#allocation4 + $0x40] sm:$0xff]
      %v6886 = vld [vmem:[#allocation4 + $0x48] sm:$0xff]
      %v6887 = vld [vmem:[#allocation4 + $0x50] sm:$0xff]
      %v6888 = vld [vmem:[#allocation4 + $0x58] sm:$0xff]
      %v6889 = vld [vmem:[#allocation4 + $0x60] sm:$0xff]
      %v6899 = vrot.slane %v6880, 1
      %v6900 = vrot.slane %v6881, 1
      %v6901 = vsel %vm407, %v6899, %v6900
      %v6902 = vrot.slane %v6882, 1
      %v6903 = vsel %vm407, %v6900, %v6902
      %v6904 = vrot.slane %v6883, 1
      %v6905 = vsel %vm407, %v6902, %v6904
      %v6906 = vrot.slane %v6884, 1
      %v6907 = vsel %vm407, %v6904, %v6906
      %v6908 = vrot.slane %v6885, 1
      %v6909 = vsel %vm407, %v6906, %v6908
      %v6910 = vrot.slane %v6886, 1
      %v6911 = vsel %vm407, %v6908, %v6910
      %v6912 = vrot.slane %v6887, 1
      %v6913 = vsel %vm407, %v6910, %v6912
      %v6914 = vrot.slane %v6888, 1
      %v6915 = vsel %vm407, %v6912, %v6914
      %6916 = vrot.lane.b32.xlu0 %v6901, 32
      %v6917 = vpop.permute.xlu0 %6916
      %6918 = vrot.lane.b32.xlu0 %v6903, 32
      %v6919 = vpop.permute.xlu0 %6918
      %6920 = vrot.lane.b32.xlu0 %v6905, 32
      %v6921 = vpop.permute.xlu0 %6920
      %6922 = vrot.lane.b32.xlu0 %v6907, 32
      %v6923 = vpop.permute.xlu0 %6922
      %6924 = vrot.lane.b32.xlu0 %v6909, 32
      %v6925 = vpop.permute.xlu0 %6924
      %6926 = vrot.lane.b32.xlu0 %v6911, 32
      %v6927 = vpop.permute.xlu0 %6926
      %6928 = vrot.lane.b32.xlu0 %v6913, 32
      %v6929 = vpop.permute.xlu0 %6928
      %6930 = vrot.lane.b32.xlu0 %v6915, 32
      %v6931 = vpop.permute.xlu0 %6930
      %6932 = vrot.lane.b32.xlu0 %v6914, 32
      %v6933 = vpop.permute.xlu0 %6932
      %v6943 = vrot.slane %v6880, 2
      %v6944 = vrot.slane %v6881, 2
      %v6945 = vsel %vm451, %v6943, %v6944
      %v6946 = vrot.slane %v6882, 2
      %v6947 = vsel %vm451, %v6944, %v6946
      %v6948 = vrot.slane %v6883, 2
      %v6949 = vsel %vm451, %v6946, %v6948
      %v6950 = vrot.slane %v6884, 2
      %v6951 = vsel %vm451, %v6948, %v6950
      %v6952 = vrot.slane %v6885, 2
      %v6953 = vsel %vm451, %v6950, %v6952
      %v6954 = vrot.slane %v6886, 2
      %v6955 = vsel %vm451, %v6952, %v6954
      %v6956 = vrot.slane %v6887, 2
      %v6957 = vsel %vm451, %v6954, %v6956
      %v6958 = vrot.slane %v6888, 2
      %v6959 = vsel %vm451, %v6956, %v6958
      %6960 = vrot.lane.b32.xlu0 %v6945, 64
      %v6961 = vpop.permute.xlu0 %6960
      %6962 = vrot.lane.b32.xlu0 %v6947, 64
      %v6963 = vpop.permute.xlu0 %6962
      %6964 = vrot.lane.b32.xlu0 %v6949, 64
      %v6965 = vpop.permute.xlu0 %6964
      %6966 = vrot.lane.b32.xlu0 %v6951, 64
      %v6967 = vpop.permute.xlu0 %6966
      %6968 = vrot.lane.b32.xlu0 %v6953, 64
      %v6969 = vpop.permute.xlu0 %6968
      %6970 = vrot.lane.b32.xlu0 %v6955, 64
      %v6971 = vpop.permute.xlu0 %6970
      %6972 = vrot.lane.b32.xlu0 %v6957, 64
      %v6973 = vpop.permute.xlu0 %6972
      %6974 = vrot.lane.b32.xlu0 %v6959, 64
      %v6975 = vpop.permute.xlu0 %6974
      %6976 = vrot.lane.b32.xlu0 %v6958, 64
      %v6977 = vpop.permute.xlu0 %6976
      %v6987 = vrot.slane %v6880, 3
      %v6988 = vrot.slane %v6881, 3
      %v6989 = vsel %vm1130, %v6987, %v6988
      %v6990 = vrot.slane %v6882, 3
      %v6991 = vsel %vm1130, %v6988, %v6990
      %v6992 = vrot.slane %v6883, 3
      %v6993 = vsel %vm1130, %v6990, %v6992
      %v6994 = vrot.slane %v6884, 3
      %v6995 = vsel %vm1130, %v6992, %v6994
      %v6996 = vrot.slane %v6885, 3
      %v6997 = vsel %vm1130, %v6994, %v6996
      %v6998 = vrot.slane %v6886, 3
      %v6999 = vsel %vm1130, %v6996, %v6998
      %v7000 = vrot.slane %v6887, 3
      %v7001 = vsel %vm1130, %v6998, %v7000
      %v7002 = vrot.slane %v6888, 3
      %v7003 = vsel %vm1130, %v7000, %v7002
      %7004 = vrot.lane.b32.xlu0 %v6989, 96
      %v7005 = vpop.permute.xlu0 %7004
      %7006 = vrot.lane.b32.xlu0 %v6991, 96
      %v7007 = vpop.permute.xlu0 %7006
      %7008 = vrot.lane.b32.xlu0 %v6993, 96
      %v7009 = vpop.permute.xlu0 %7008
      %7010 = vrot.lane.b32.xlu0 %v6995, 96
      %v7011 = vpop.permute.xlu0 %7010
      %7012 = vrot.lane.b32.xlu0 %v6997, 96
      %v7013 = vpop.permute.xlu0 %7012
      %7014 = vrot.lane.b32.xlu0 %v6999, 96
      %v7015 = vpop.permute.xlu0 %7014
      %7016 = vrot.lane.b32.xlu0 %v7001, 96
      %v7017 = vpop.permute.xlu0 %7016
      %7018 = vrot.lane.b32.xlu0 %v7003, 96
      %v7019 = vpop.permute.xlu0 %7018
      %7020 = vrot.lane.b32.xlu0 %v7002, 96
      %v7021 = vpop.permute.xlu0 %7020
      %v7031 = vrot.slane %v6880, 4
      %v7032 = vrot.slane %v6881, 4
      %v7033 = vsel %vm2667, %v7031, %v7032
      %v7034 = vrot.slane %v6882, 4
      %v7035 = vsel %vm2667, %v7032, %v7034
      %v7036 = vrot.slane %v6883, 4
      %v7037 = vsel %vm2667, %v7034, %v7036
      %v7038 = vrot.slane %v6884, 4
      %v7039 = vsel %vm2667, %v7036, %v7038
      %v7040 = vrot.slane %v6885, 4
      %v7041 = vsel %vm2667, %v7038, %v7040
      %v7042 = vrot.slane %v6886, 4
      %v7043 = vsel %vm2667, %v7040, %v7042
      %v7044 = vrot.slane %v6887, 4
      %v7045 = vsel %vm2667, %v7042, %v7044
      %v7046 = vrot.slane %v6888, 4
      %v7047 = vsel %vm2667, %v7044, %v7046
      %v7057 = vrot.slane %v6881, 5
      %v7058 = vrot.slane %v6882, 5
      %v7059 = vsel %vm1252, %v7057, %v7058
      %v7060 = vrot.slane %v6883, 5
      %v7061 = vsel %vm1252, %v7058, %v7060
      %v7062 = vrot.slane %v6884, 5
      %v7063 = vsel %vm1252, %v7060, %v7062
      %v7064 = vrot.slane %v6885, 5
      %v7065 = vsel %vm1252, %v7062, %v7064
      %v7066 = vrot.slane %v6886, 5
      %v7067 = vsel %vm1252, %v7064, %v7066
      %v7068 = vrot.slane %v6887, 5
      %v7069 = vsel %vm1252, %v7066, %v7068
      %v7070 = vrot.slane %v6888, 5
      %v7071 = vsel %vm1252, %v7068, %v7070
      %7072 = vrot.lane.b32.xlu0 %v7057, 32
      %v7073 = vpop.permute.xlu0 %7072
      %7074 = vrot.lane.b32.xlu0 %v7059, 32
      %v7075 = vpop.permute.xlu0 %7074
      %7076 = vrot.lane.b32.xlu0 %v7061, 32
      %v7077 = vpop.permute.xlu0 %7076
      %7078 = vrot.lane.b32.xlu0 %v7063, 32
      %v7079 = vpop.permute.xlu0 %7078
      %7080 = vrot.lane.b32.xlu0 %v7065, 32
      %v7081 = vpop.permute.xlu0 %7080
      %7082 = vrot.lane.b32.xlu0 %v7067, 32
      %v7083 = vpop.permute.xlu0 %7082
      %7084 = vrot.lane.b32.xlu0 %v7069, 32
      %v7085 = vpop.permute.xlu0 %7084
      %7086 = vrot.lane.b32.xlu0 %v7071, 32
      %v7087 = vpop.permute.xlu0 %7086
      %7088 = vrot.lane.b32.xlu0 %v7070, 32
      %v7089 = vpop.permute.xlu0 %7088
      %v7100 = vrot.slane %v6881, 6
      %v7101 = vrot.slane %v6882, 6
      %v7102 = vsel %vm1174, %v7100, %v7101
      %v7103 = vrot.slane %v6883, 6
      %v7104 = vsel %vm1174, %v7101, %v7103
      %v7105 = vrot.slane %v6884, 6
      %v7106 = vsel %vm1174, %v7103, %v7105
      %v7107 = vrot.slane %v6885, 6
      %v7108 = vsel %vm1174, %v7105, %v7107
      %v7109 = vrot.slane %v6886, 6
      %v7110 = vsel %vm1174, %v7107, %v7109
      %v7111 = vrot.slane %v6887, 6
      %v7112 = vsel %vm1174, %v7109, %v7111
      %v7113 = vrot.slane %v6888, 6
      %v7114 = vsel %vm1174, %v7111, %v7113
      %v7115 = vrot.slane %v6889, 6
      %v7116 = vsel %vm1174, %v7113, %v7115
      %7117 = vrot.lane.b32.xlu0 %v7100, 64
      %v7118 = vpop.permute.xlu0 %7117
      %7119 = vrot.lane.b32.xlu0 %v7102, 64
      %v7120 = vpop.permute.xlu0 %7119
      %7121 = vrot.lane.b32.xlu0 %v7104, 64
      %v7122 = vpop.permute.xlu0 %7121
      %7123 = vrot.lane.b32.xlu0 %v7106, 64
      %v7124 = vpop.permute.xlu0 %7123
      %7125 = vrot.lane.b32.xlu0 %v7108, 64
      %v7126 = vpop.permute.xlu0 %7125
      %7127 = vrot.lane.b32.xlu0 %v7110, 64
      %v7128 = vpop.permute.xlu0 %7127
      %7129 = vrot.lane.b32.xlu0 %v7112, 64
      %v7130 = vpop.permute.xlu0 %7129
      %7131 = vrot.lane.b32.xlu0 %v7114, 64
      %v7132 = vpop.permute.xlu0 %7131
      %7133 = vrot.lane.b32.xlu0 %v7116, 64
      %v7134 = vpop.permute.xlu0 %7133
      %v7144 = vrot.slane %v6881, 7
      %v7145 = vrot.slane %v6882, 7
      %v7146 = vsel %vm530, %v7144, %v7145
      %v7147 = vrot.slane %v6883, 7
      %v7148 = vsel %vm530, %v7145, %v7147
      %v7149 = vrot.slane %v6884, 7
      %v7150 = vsel %vm530, %v7147, %v7149
      %v7151 = vrot.slane %v6885, 7
      %v7152 = vsel %vm530, %v7149, %v7151
      %v7153 = vrot.slane %v6886, 7
      %v7154 = vsel %vm530, %v7151, %v7153
      %v7155 = vrot.slane %v6887, 7
      %v7156 = vsel %vm530, %v7153, %v7155
      %v7157 = vrot.slane %v6888, 7
      %v7158 = vsel %vm530, %v7155, %v7157
      %v7159 = vrot.slane %v6889, 7
      %v7160 = vsel %vm530, %v7157, %v7159
      %7161 = vrot.lane.b32.xlu0 %v7144, 96
      %v7162 = vpop.permute.xlu0 %7161
      %7163 = vrot.lane.b32.xlu0 %v7146, 96
      %v7164 = vpop.permute.xlu0 %7163
      %7165 = vrot.lane.b32.xlu0 %v7148, 96
      %v7166 = vpop.permute.xlu0 %7165
      %7167 = vrot.lane.b32.xlu0 %v7150, 96
      %v7168 = vpop.permute.xlu0 %7167
      %7169 = vrot.lane.b32.xlu0 %v7152, 96
      %v7170 = vpop.permute.xlu0 %7169
      %7171 = vrot.lane.b32.xlu0 %v7154, 96
      %v7172 = vpop.permute.xlu0 %7171
      %7173 = vrot.lane.b32.xlu0 %v7156, 96
      %v7174 = vpop.permute.xlu0 %7173
      %7175 = vrot.lane.b32.xlu0 %v7158, 96
      %v7176 = vpop.permute.xlu0 %7175
      %7177 = vrot.lane.b32.xlu0 %v7160, 96
      %v7178 = vpop.permute.xlu0 %7177
      %v7188 = vrot.slane %v6889, 1
      %v7189 = vsel %vm407, %v6914, %v7188
      %7190 = vrot.lane.b32.xlu0 %v7189, 32
      %v7191 = vpop.permute.xlu0 %7190
      %7192 = vrot.lane.b32.xlu0 %v7188, 32
      %v7193 = vpop.permute.xlu0 %7192
      %v7196 = vrot.slane %v6889, 2
      %v7197 = vsel %vm451, %v6958, %v7196
      %7198 = vrot.lane.b32.xlu0 %v7197, 64
      %v7199 = vpop.permute.xlu0 %7198
      %7200 = vrot.lane.b32.xlu0 %v7196, 64
      %v7201 = vpop.permute.xlu0 %7200
      %v7204 = vsel %vm279, %v6880, %v6917
      %v7205 = vsel %vm279, %v6881, %v6919
      %v7206 = vsel %vm279, %v6882, %v6921
      %v7207 = vsel %vm279, %v6883, %v6923
      %v7208 = vsel %vm279, %v6884, %v6925
      %v7209 = vsel %vm279, %v6885, %v6927
      %v7210 = vsel %vm279, %v6886, %v6929
      %v7211 = vsel %vm279, %v6887, %v6931
      %v7212 = vsel %vm279, %v6888, %v6933
      %v7213 = vsel %vm505, %v7204, %v6961
      %v7214 = vsel %vm505, %v7205, %v6963
      %v7215 = vsel %vm505, %v7206, %v6965
      %v7216 = vsel %vm505, %v7207, %v6967
      %v7217 = vsel %vm505, %v7208, %v6969
      %v7218 = vsel %vm505, %v7209, %v6971
      %v7219 = vsel %vm505, %v7210, %v6973
      %v7220 = vsel %vm505, %v7211, %v6975
      %v7221 = vsel %vm505, %v7212, %v6977
      %v7222 = vsel %vm548, %v7213, %v7005
      %v7223 = vsel %vm548, %v7214, %v7007
      %v7224 = vsel %vm548, %v7215, %v7009
      %v7225 = vsel %vm548, %v7216, %v7011
      %v7226 = vsel %vm548, %v7217, %v7013
      %v7227 = vsel %vm548, %v7218, %v7015
      %v7228 = vsel %vm548, %v7219, %v7017
      %v7229 = vsel %vm548, %v7220, %v7019
      %v7230 = vsel %vm548, %v7221, %v7021
      %v7231 = vsel %vm279, %v7033, %v7073
      %v7232 = vsel %vm279, %v7035, %v7075
      %v7233 = vsel %vm279, %v7037, %v7077
      %v7234 = vsel %vm279, %v7039, %v7079
      %v7235 = vsel %vm279, %v7041, %v7081
      %v7236 = vsel %vm279, %v7043, %v7083
      %v7237 = vsel %vm279, %v7045, %v7085
      %v7238 = vsel %vm279, %v7047, %v7087
      %v7239 = vsel %vm279, %v7046, %v7089
      %v7240 = vsel %vm505, %v7231, %v7118
      %v7241 = vsel %vm505, %v7232, %v7120
      %v7242 = vsel %vm505, %v7233, %v7122
      %v7243 = vsel %vm505, %v7234, %v7124
      %v7244 = vsel %vm505, %v7235, %v7126
      %v7245 = vsel %vm505, %v7236, %v7128
      %v7246 = vsel %vm505, %v7237, %v7130
      %v7247 = vsel %vm505, %v7238, %v7132
      %v7248 = vsel %vm505, %v7239, %v7134
      %v7249 = vsel %vm548, %v7240, %v7162
      %v7250 = vsel %vm548, %v7241, %v7164
      %v7251 = vsel %vm548, %v7242, %v7166
      %v7252 = vsel %vm548, %v7243, %v7168
      %v7253 = vsel %vm548, %v7244, %v7170
      %v7254 = vsel %vm548, %v7245, %v7172
      %v7255 = vsel %vm548, %v7246, %v7174
      %v7256 = vsel %vm548, %v7247, %v7176
      %v7257 = vsel %vm548, %v7248, %v7178
      %v7258 = vsel %vm279, %v6888, %v7191
      %v7259 = vsel %vm279, %v6889, %v7193
      %v7260 = vsel %vm505, %v7258, %v7199
      %v7261 = vsel %vm505, %v7259, %v7201
      %v7263 = vlaneseq
      %v7264 = vshrl.u32 %v7263, 7
      %v7265 = vsub.s32 0, %v7264
      %v7266 = vrot.slane %v6815, %v7265
      %v7295 = vrot.slane %v7222, 3
      %v7296 = vrot.slane %v7223, 3
      %v7297 = vsel %vm1130, %v7295, %v7296
      %v7298 = vrot.slane %v7249, 3
      %v7299 = vrot.slane %v7250, 3
      %v7300 = vsel %vm1130, %v7298, %v7299
      %v7301 = vrot.slane %v7214, 3
      %v7302 = vrot.slane %v7215, 3
      %v7303 = vsel %vm1130, %v7301, %v7302
      %v7304 = vrot.slane %v7224, 3
      %v7305 = vsel %vm1130, %v7296, %v7304
      %v7306 = vrot.slane %v7251, 3
      %v7307 = vsel %vm1130, %v7299, %v7306
      %v7308 = vrot.slane %v7216, 3
      %v7309 = vsel %vm1130, %v7302, %v7308
      %v7310 = vrot.slane %v7225, 3
      %v7311 = vsel %vm1130, %v7304, %v7310
      %v7312 = vrot.slane %v7252, 3
      %v7313 = vsel %vm1130, %v7306, %v7312
      %v7314 = vrot.slane %v7217, 3
      %v7315 = vsel %vm1130, %v7308, %v7314
      %v7316 = vrot.slane %v7226, 3
      %v7317 = vsel %vm1130, %v7310, %v7316
      %v7318 = vrot.slane %v7253, 3
      %v7319 = vsel %vm1130, %v7312, %v7318
      %v7320 = vrot.slane %v7218, 3
      %v7321 = vsel %vm1130, %v7314, %v7320
      %v7322 = vrot.slane %v7227, 3
      %v7323 = vsel %vm1130, %v7316, %v7322
      %v7324 = vrot.slane %v7254, 3
      %v7325 = vsel %vm1130, %v7318, %v7324
      %v7326 = vrot.slane %v7219, 3
      %v7327 = vsel %vm1130, %v7320, %v7326
      %v7328 = vrot.slane %v7228, 3
      %v7329 = vsel %vm1130, %v7322, %v7328
      %v7330 = vrot.slane %v7255, 3
      %v7331 = vsel %vm1130, %v7324, %v7330
      %v7332 = vrot.slane %v7220, 3
      %v7333 = vsel %vm1130, %v7326, %v7332
      %v7334 = vrot.slane %v7229, 3
      %v7335 = vsel %vm1130, %v7328, %v7334
      %v7336 = vrot.slane %v7256, 3
      %v7337 = vsel %vm1130, %v7330, %v7336
      %v7338 = vrot.slane %v7260, 3
      %v7339 = vsel %vm1130, %v7332, %v7338
      %v7340 = vrot.slane %v7230, 3
      %v7341 = vsel %vm1130, %v7334, %v7340
      %v7342 = vrot.slane %v7257, 3
      %v7343 = vsel %vm1130, %v7336, %v7342
      %v7344 = vrot.slane %v7261, 3
      %v7345 = vsel %vm1130, %v7338, %v7344
      %v7362 = vsel %vm548, %v7303, 0
      %v7364 = vsel %vm548, %v7309, 0
      %v7366 = vsel %vm548, %v7315, 0
      %v7368 = vsel %vm548, %v7321, 0
      %v7370 = vsel %vm548, %v7327, 0
      %v7372 = vsel %vm548, %v7333, 0
      %v7374 = vsel %vm548, %v7339, 0
      %v7376 = vsel %vm548, %v7345, 0
      %7378 = vmatprep.subr.mxu0 0.0
      %7379 = vmatpush1.msra.mxu0 %v6770
      %7380 = vmatprep.subr.mxu0 0.0
      %7381 = vmatpush1.msra.mxu0 %v6771
      %7382 = vmatprep.subr.mxu0 0.0
      %7383 = vmatpush1.msra.mxu0 %v6772
      %7384 = vmatprep.subr.mxu0 0.0
      %7385 = vmatpush1.msra.mxu0 %v6773
      %7386 = vmatprep.subr.mxu0 0.0
      %7387 = vmatpush1.msra.mxu0 %v6774
      %7388 = vmatprep.subr.mxu0 0.0
      %7389 = vmatpush1.msra.mxu0 %v6775
      %7390 = vmatprep.subr.mxu0 0.0
      %7391 = vmatpush1.msra.mxu0 %v6776
      %7392 = vmatprep.subr.mxu0 0.0
      %7393 = vmatpush1.msra.mxu0 %v6777
      %7394 = vmatprep.subr.mxu0 0.0
      %7395 = vmatpush1.msra.mxu0 %v6778
      %7396 = vmatprep.subr.mxu0 0.0
      %7397 = vmatpush1.msra.mxu0 %v6779
      %7398 = vmatprep.subr.mxu0 0.0
      %7399 = vmatpush1.msra.mxu0 %v6780
      %7400 = vmatprep.subr.mxu0 0.0
      %7401 = vmatpush1.msra.mxu0 %v6781
      %7402 = vmatprep.subr.mxu0 0.0
      %7403 = vmatpush1.msra.mxu0 %v6782
      %7404 = vmatprep.subr.mxu0 0.0
      %7405 = vmatpush1.msra.mxu0 %v6783
      %7406 = vmatprep.subr.mxu0 0.0
      %7407 = vmatpush1.msra.mxu0 %v6784
      %7408 = vmatprep.subr.mxu0 0.0
      %7409 = vmatpush1.msra.mxu0 %v6785
      %7410 = vmatprep.subr.mxu0 0.0
      %7411 = vmatpush1.msra.mxu0 %v6786
      %7412 = vmatprep.subr.mxu0 0.0
      %7413 = vmatpush1.msra.mxu0 %v6787
      %7414 = vmatprep.subr.mxu0 0.0
      %7415 = vmatpush1.msra.mxu0 %v6788
      %7416 = vmatprep.subr.mxu0 0.0
      %7417 = vmatpush1.msra.mxu0 %v6789
      %7418 = vmatprep.subr.mxu0 0.0
      %7419 = vmatpush1.msra.mxu0 %v6790
      %7420 = vmatprep.subr.mxu0 0.0
      %7421 = vmatpush1.msra.mxu0 %v6791
      %7422 = vmatprep.subr.mxu0 0.0
      %7423 = vmatpush1.msra.mxu0 %v6792
      %7424 = vmatprep.subr.mxu0 0.0
      %7425 = vmatpush1.msra.mxu0 %v6793
      %7426 = vmatprep.subr.mxu0 0.0
      %7427 = vmatpush1.msra.mxu0 %v6794
      %7428 = vmatprep.subr.mxu0 0.0
      %7429 = vmatpush1.msra.mxu0 %v6795
      %7430 = vmatprep.subr.mxu0 0.0
      %7431 = vmatpush1.msra.mxu0 %v6796
      %7432 = vmatprep.subr.mxu0 0.0
      %7433 = vmatpush1.msra.mxu0 %v6797
      %7434 = vmatprep.subr.mxu0 0.0
      %7435 = vmatpush1.msra.mxu0 %v6798
      %7436 = vmatprep.subr.mxu0 0.0
      %7437 = vmatpush1.msra.mxu0 %v6799
      %7438 = vmatprep.subr.mxu0 0.0
      %7439 = vmatpush1.msra.mxu0 %v6800
      %7440 = vmatprep.subr.mxu0 0.0
      %7441 = vmatpush1.msra.mxu0 %v6801
      %7442 = vmatprep.mubr.f32.mxu0 %v7300
      %7443 = vmatmul.mubr.f32.gmra.mrb[0].mxu0 %v7297
      %v7444 = vpop.f32.mrb[0].mxu0
      %v7445 = vadd.f32 %v7266, %v7444
      %v7446 = vpop.f32.mrb[0].mxu0
      %7447 = vmatprep.mubr.f32.mxu0 %v7307
      %7448 = vmatmul.mubr.f32.gmra.mrb[0].mxu0 %v7305
      %v7449 = vpop.f32.mrb[0].mxu0
      %v7450 = vadd.f32 %v7266, %v7449
      %v7451 = vpop.f32.mrb[0].mxu0
      %7452 = vmatprep.mubr.f32.mxu0 %v7313
      %7453 = vmatmul.mubr.f32.gmra.mrb[0].mxu0 %v7311
      %v7454 = vpop.f32.mrb[0].mxu0
      %v7455 = vadd.f32 %v7266, %v7454
      %v7456 = vpop.f32.mrb[0].mxu0
      %7457 = vmatprep.mubr.f32.mxu0 %v7319
      %7458 = vmatmul.mubr.f32.gmra.mrb[0].mxu0 %v7317
      %v7459 = vpop.f32.mrb[0].mxu0
      %v7460 = vadd.f32 %v7266, %v7459
      %v7461 = vpop.f32.mrb[0].mxu0
      %7462 = vmatprep.mubr.f32.mxu0 %v7325
      %7463 = vmatmul.mubr.f32.gmra.mrb[0].mxu0 %v7323
      %v7464 = vpop.f32.mrb[0].mxu0
      %v7465 = vadd.f32 %v7266, %v7464
      %v7466 = vpop.f32.mrb[0].mxu0
      %7467 = vmatprep.mubr.f32.mxu0 %v7331
      %7468 = vmatmul.mubr.f32.gmra.mrb[0].mxu0 %v7329
      %v7469 = vpop.f32.mrb[0].mxu0
      %v7470 = vadd.f32 %v7266, %v7469
      %v7471 = vpop.f32.mrb[0].mxu0
      %7472 = vmatprep.mubr.f32.mxu0 %v7337
      %7473 = vmatmul.mubr.f32.gmra.mrb[0].mxu0 %v7335
      %v7474 = vpop.f32.mrb[0].mxu0
      %v7475 = vadd.f32 %v7266, %v7474
      %v7476 = vpop.f32.mrb[0].mxu0
      %7477 = vmatprep.mubr.f32.mxu0 %v7343
      %7478 = vmatmul.mubr.f32.gmra.mrb[0].mxu0 %v7341
      %v7479 = vpop.f32.mrb[0].mxu0
      %v7480 = vadd.f32 %v7266, %v7479
      %v7481 = vpop.f32.mrb[0].mxu0
      %7482 = vdwg.mxu0
      %7483 = vmatprep.subr.mxu0 0.0
      %7484 = vmatpush1.msra.mxu0 %v6802
      %7485 = vmatprep.subr.mxu0 0.0
      %7486 = vmatpush1.msra.mxu0 %v6803
      %7487 = vmatprep.subr.mxu0 0.0
      %7488 = vmatpush1.msra.mxu0 %v6804
      %7489 = vmatprep.subr.mxu0 0.0
      %7490 = vmatpush1.msra.mxu0 %v6805
      %7491 = vmatprep.subr.mxu0 0.0
      %7492 = vmatpush1.msra.mxu0 %v6806
      %7493 = vmatprep.subr.mxu0 0.0
      %7494 = vmatpush1.msra.mxu0 %v6807
      %7495 = vmatprep.subr.mxu0 0.0
      %7496 = vmatpush1.msra.mxu0 %v6808
      %7497 = vmatprep.subr.mxu0 0.0
      %7498 = vmatpush1.msra.mxu0 %v6809
      %7499 = vmatprep.subr.mxu0 0.0
      %7500 = vmatpush1.msra.mxu0 %v6810
      %7501 = vmatprep.subr.mxu0 0.0
      %7502 = vmatpush1.msra.mxu0 %v6811
      %7503 = vmatprep.subr.mxu0 0.0
      %7504 = vmatpush1.msra.mxu0 %v6812
      %7505 = vmatprep.subr.mxu0 0.0
      %7506 = vmatpush1.msra.mxu0 %v6813
      %7507 = vmatprep.subr.mxu0 0.0
      %7508 = vmatpush1.msra.mxu0 0.0
      %7509 = vmatprep.subr.mxu0 0.0
      %7510 = vmatpush1.msra.mxu0 0.0
      %7511 = vmatprep.subr.mxu0 0.0
      %7512 = vmatpush1.msra.mxu0 0.0
      %7513 = vmatprep.subr.mxu0 0.0
      %7514 = vmatpush1.msra.mxu0 0.0
      %7515 = vmatprep.subr.mxu0 0.0
      %7516 = vmatpush1.msra.mxu0 0.0
      %7517 = vmatprep.subr.mxu0 0.0
      %7518 = vmatpush1.msra.mxu0 0.0
      %7519 = vmatprep.subr.mxu0 0.0
      %7520 = vmatpush1.msra.mxu0 0.0
      %7521 = vmatprep.subr.mxu0 0.0
      %7522 = vmatpush1.msra.mxu0 0.0
      %7523 = vmatprep.subr.mxu0 0.0
      %7524 = vmatpush1.msra.mxu0 0.0
      %7525 = vmatprep.subr.mxu0 0.0
      %7526 = vmatpush1.msra.mxu0 0.0
      %7527 = vmatprep.subr.mxu0 0.0
      %7528 = vmatpush1.msra.mxu0 0.0
      %7529 = vmatprep.subr.mxu0 0.0
      %7530 = vmatpush1.msra.mxu0 0.0
      %7531 = vmatprep.subr.mxu0 0.0
      %7532 = vmatpush1.msra.mxu0 0.0
      %7533 = vmatprep.subr.mxu0 0.0
      %7534 = vmatpush1.msra.mxu0 0.0
      %7535 = vmatprep.subr.mxu0 0.0
      %7536 = vmatpush1.msra.mxu0 0.0
      %7537 = vmatprep.subr.mxu0 0.0
      %7538 = vmatpush1.msra.mxu0 0.0
      %7539 = vmatprep.subr.mxu0 0.0
      %7540 = vmatpush1.msra.mxu0 0.0
      %7541 = vmatprep.subr.mxu0 0.0
      %7542 = vmatpush1.msra.mxu0 0.0
      %7543 = vmatprep.subr.mxu0 0.0
      %7544 = vmatpush1.msra.mxu0 0.0
      %7545 = vmatprep.subr.mxu0 0.0
      %7546 = vmatpush1.msra.mxu0 0.0
      %7547 = vmatprep.mubr.f32.mxu0 0.0
      %7548 = vmatmul.mubr.f32.gmra.mrb[0].mxu0 %v7362
      %v7549 = vpop.f32.mrb[0].mxu0
      %v7550 = vadd.f32 %v7445, %v7549
      %v7551 = vpop.f32.mrb[0].mxu0
      %7552 = vmatprep.mubr.f32.mxu0 0.0
      %7553 = vmatmul.mubr.f32.gmra.mrb[0].mxu0 %v7364
      %v7554 = vpop.f32.mrb[0].mxu0
      %v7555 = vadd.f32 %v7450, %v7554
      %v7556 = vpop.f32.mrb[0].mxu0
      %7557 = vmatprep.mubr.f32.mxu0 0.0
      %7558 = vmatmul.mubr.f32.gmra.mrb[0].mxu0 %v7366
      %v7559 = vpop.f32.mrb[0].mxu0
      %v7560 = vadd.f32 %v7455, %v7559
      %v7561 = vpop.f32.mrb[0].mxu0
      %7562 = vmatprep.mubr.f32.mxu0 0.0
      %7563 = vmatmul.mubr.f32.gmra.mrb[0].mxu0 %v7368
      %v7564 = vpop.f32.mrb[0].mxu0
      %v7565 = vadd.f32 %v7460, %v7564
      %v7566 = vpop.f32.mrb[0].mxu0
      %7567 = vmatprep.mubr.f32.mxu0 0.0
      %7568 = vmatmul.mubr.f32.gmra.mrb[0].mxu0 %v7370
      %v7569 = vpop.f32.mrb[0].mxu0
      %v7570 = vadd.f32 %v7465, %v7569
      %v7571 = vpop.f32.mrb[0].mxu0
      %7572 = vmatprep.mubr.f32.mxu0 0.0
      %7573 = vmatmul.mubr.f32.gmra.mrb[0].mxu0 %v7372
      %v7574 = vpop.f32.mrb[0].mxu0
      %v7575 = vadd.f32 %v7470, %v7574
      %v7576 = vpop.f32.mrb[0].mxu0
      %7577 = vmatprep.mubr.f32.mxu0 0.0
      %7578 = vmatmul.mubr.f32.gmra.mrb[0].mxu0 %v7374
      %v7579 = vpop.f32.mrb[0].mxu0
      %v7580 = vadd.f32 %v7475, %v7579
      %v7581 = vpop.f32.mrb[0].mxu0
      %7582 = vmatprep.mubr.f32.mxu0 0.0
      %7583 = vmatmul.mubr.f32.gmra.mrb[0].mxu0 %v7376
      %v7584 = vpop.f32.mrb[0].mxu0
      %v7585 = vadd.f32 %v7480, %v7584
      %v7586 = vpop.f32.mrb[0].mxu0
      %7587 = vdwg.mxu0
      %v7588 = vadd.f32 %v7550, %v304
      %v7589 = vadd.f32 %v7555, %v305
      %v7590 = vadd.f32 %v7560, %v306
      %v7591 = vadd.f32 %v7565, %v307
      %v7592 = vadd.f32 %v7570, %v308
      %v7593 = vadd.f32 %v7575, %v309
      %v7594 = vadd.f32 %v7580, %v310
      %v7595 = vadd.f32 %v7585, %v311
      %s7596 = scalar_lea.vmem %s5, 704
      %v7597 = vld [vmem:[%s7596] sm:$0xff]
      %v7598 = vld [vmem:[%s7596 + $0x8] sm:$0xff]
      %v7599 = vld [vmem:[%s7596 + $0x10] sm:$0xff]
      %v7600 = vld [vmem:[%s7596 + $0x18] sm:$0xff]
      %v7601 = vld [vmem:[%s7596 + $0x20] sm:$0xff]
      %v7602 = vld [vmem:[%s7596 + $0x28] sm:$0xff]
      %v7603 = vld [vmem:[%s7596 + $0x30] sm:$0xff]
      %v7604 = vld [vmem:[%s7596 + $0x38] sm:$0xff]
      %v7605 = vld [vmem:[%s7596 + $0x40] sm:$0xff]
      %v7606 = vld [vmem:[%s7596 + $0x48] sm:$0xff]
      %v7607 = vld [vmem:[%s7596 + $0x50] sm:$0xff]
      %v7608 = vld [vmem:[%s7596 + $0x58] sm:$0xff]
      %v7609 = vld [vmem:[%s7596 + $0x60] sm:$0xff]
      %v7610 = vld [vmem:[%s7596 + $0x68] sm:$0xff]
      %v7611 = vld [vmem:[%s7596 + $0x70] sm:$0xff]
      %v7612 = vld [vmem:[%s7596 + $0x78] sm:$0xff]
      %v7613 = vld [vmem:[%s7596 + $0x80] sm:$0xff]
      %v7614 = vld [vmem:[%s7596 + $0x88] sm:$0xff]
      %v7615 = vld [vmem:[%s7596 + $0x90] sm:$0xff]
      %v7616 = vld [vmem:[%s7596 + $0x98] sm:$0xff]
      %v7617 = vld [vmem:[%s7596 + $0xa0] sm:$0xff]
      %v7618 = vld [vmem:[%s7596 + $0xa8] sm:$0xff]
      %v7619 = vld [vmem:[%s7596 + $0xb0] sm:$0xff]
      %v7620 = vld [vmem:[%s7596 + $0xb8] sm:$0xff]
      %v7621 = vld [vmem:[%s7596 + $0xc0] sm:$0xff]
      %v7622 = vld [vmem:[%s7596 + $0xc8] sm:$0xff]
      %v7623 = vld [vmem:[%s7596 + $0xd0] sm:$0xff]
      %v7624 = vld [vmem:[%s7596 + $0xd8] sm:$0xff]
      %v7625 = vld [vmem:[%s7596 + $0xe0] sm:$0xff]
      %v7626 = vld [vmem:[%s7596 + $0xe8] sm:$0xff]
      %v7627 = vld [vmem:[%s7596 + $0xf0] sm:$0xff]
      %v7628 = vld [vmem:[%s7596 + $0xf8] sm:$0xff]
      %v7629 = vld [vmem:[%s7596 + $0x100] sm:$0xff]
      %v7630 = vld [vmem:[%s7596 + $0x108] sm:$0xff]
      %v7631 = vld [vmem:[%s7596 + $0x110] sm:$0xff]
      %v7632 = vld [vmem:[%s7596 + $0x118] sm:$0xff]
      %v7633 = vld [vmem:[%s7596 + $0x120] sm:$0xff]
      %v7634 = vld [vmem:[%s7596 + $0x128] sm:$0xff]
      %v7635 = vld [vmem:[%s7596 + $0x130] sm:$0xff]
      %v7636 = vld [vmem:[%s7596 + $0x138] sm:$0xff]
      %v7637 = vld [vmem:[%s7596 + $0x140] sm:$0xff]
      %v7638 = vld [vmem:[%s7596 + $0x148] sm:$0xff]
      %v7639 = vld [vmem:[%s7596 + $0x150] sm:$0xff]
      %v7640 = vld [vmem:[%s7596 + $0x158] sm:$0xff]
      %s7641 = scalar_lea.vmem %s6, 2
      %v7642 = vld [vmem:[%s7641] sm:$0x1]
      %v7643 = vxor.u32 %v7588, 2147483648
      %v7644 = vxor.u32 %v7589, 2147483648
      %v7645 = vxor.u32 %v7590, 2147483648
      %v7646 = vxor.u32 %v7591, 2147483648
      %v7647 = vxor.u32 %v7592, 2147483648
      %v7648 = vxor.u32 %v7593, 2147483648
      %v7649 = vxor.u32 %v7594, 2147483648
      %v7650 = vxor.u32 %v7595, 2147483648
      %v7651 = vmul.f32 %v7643, 1.442695
      %v7652 = vpow.pop %v7651
      %v7653 = vmul.f32 %v7644, 1.442695
      %v7654 = vpow.pop %v7653
      %v7655 = vmul.f32 %v7645, 1.442695
      %v7656 = vpow.pop %v7655
      %v7657 = vmul.f32 %v7646, 1.442695
      %v7658 = vpow.pop %v7657
      %v7659 = vmul.f32 %v7647, 1.442695
      %v7660 = vpow.pop %v7659
      %v7661 = vmul.f32 %v7648, 1.442695
      %v7662 = vpow.pop %v7661
      %v7663 = vmul.f32 %v7649, 1.442695
      %v7664 = vpow.pop %v7663
      %v7665 = vmul.f32 %v7650, 1.442695
      %v7666 = vpow.pop %v7665
      %v7667 = vadd.f32 %v7652, 1.0
      %v7668 = vadd.f32 %v7654, 1.0
      %v7669 = vadd.f32 %v7656, 1.0
      %v7670 = vadd.f32 %v7658, 1.0
      %v7671 = vadd.f32 %v7660, 1.0
      %v7672 = vadd.f32 %v7662, 1.0
      %v7673 = vadd.f32 %v7664, 1.0
      %v7674 = vadd.f32 %v7666, 1.0
      %v7675 = vrcp.pop %v7667
      %v7676 = vmul.f32 1.0, %v7675
      %v7677 = vrcp.pop %v7668
      %v7678 = vmul.f32 1.0, %v7677
      %v7679 = vrcp.pop %v7669
      %v7680 = vmul.f32 1.0, %v7679
      %v7681 = vrcp.pop %v7670
      %v7682 = vmul.f32 1.0, %v7681
      %v7683 = vrcp.pop %v7671
      %v7684 = vmul.f32 1.0, %v7683
      %v7685 = vrcp.pop %v7672
      %v7686 = vmul.f32 1.0, %v7685
      %v7687 = vrcp.pop %v7673
      %v7688 = vmul.f32 1.0, %v7687
      %v7689 = vrcp.pop %v7674
      %v7690 = vmul.f32 1.0, %v7689
      %v7691 = vmul.f32 %v7588, %v7676
      %v7692 = vmul.f32 %v7589, %v7678
      %v7693 = vmul.f32 %v7590, %v7680
      %v7694 = vmul.f32 %v7591, %v7682
      %v7695 = vmul.f32 %v7592, %v7684
      %v7696 = vmul.f32 %v7593, %v7686
      %v7697 = vmul.f32 %v7594, %v7688
      %v7698 = vmul.f32 %v7595, %v7690
      %7699 = vst.msk [vmem:[#allocation4 + $0x20] sm:$0xff] %vm279, %v7691
      %7700 = vst.msk [vmem:[#allocation4 + $0x28] sm:$0xff] %vm279, %v7692
      %7701 = vst.msk [vmem:[#allocation4 + $0x30] sm:$0xff] %vm279, %v7693
      %7702 = vst.msk [vmem:[#allocation4 + $0x38] sm:$0xff] %vm279, %v7694
      %7703 = vst.msk [vmem:[#allocation4 + $0x40] sm:$0xff] %vm279, %v7695
      %7704 = vst.msk [vmem:[#allocation4 + $0x48] sm:$0xff] %vm279, %v7696
      %7705 = vst.msk [vmem:[#allocation4 + $0x50] sm:$0xff] %vm279, %v7697
      %7706 = vst.msk [vmem:[#allocation4 + $0x58] sm:$0xff] %vm279, %v7698
      %v7707 = vld [vmem:[#allocation4 + $0x10] sm:$0xff]
      %v7708 = vld [vmem:[#allocation4 + $0x18] sm:$0xff]
      %v7709 = vld [vmem:[#allocation4 + $0x20] sm:$0xff]
      %v7710 = vld [vmem:[#allocation4 + $0x28] sm:$0xff]
      %v7711 = vld [vmem:[#allocation4 + $0x30] sm:$0xff]
      %v7712 = vld [vmem:[#allocation4 + $0x38] sm:$0xff]
      %v7713 = vld [vmem:[#allocation4 + $0x40] sm:$0xff]
      %v7714 = vld [vmem:[#allocation4 + $0x48] sm:$0xff]
      %v7715 = vld [vmem:[#allocation4 + $0x50] sm:$0xff]
      %v7716 = vld [vmem:[#allocation4 + $0x58] sm:$0xff]
      %v7717 = vld [vmem:[#allocation4 + $0x60] sm:$0xff]
      %v7718 = vld [vmem:[#allocation4 + $0x68] sm:$0xff]
      %v7728 = vrot.slane %v7707, 3
      %v7729 = vrot.slane %v7708, 3
      %v7730 = vsel %vm1130, %v7728, %v7729
      %v7731 = vrot.slane %v7709, 3
      %v7732 = vsel %vm1130, %v7729, %v7731
      %v7733 = vrot.slane %v7710, 3
      %v7734 = vsel %vm1130, %v7731, %v7733
      %v7735 = vrot.slane %v7711, 3
      %v7736 = vsel %vm1130, %v7733, %v7735
      %v7737 = vrot.slane %v7712, 3
      %v7738 = vsel %vm1130, %v7735, %v7737
      %v7739 = vrot.slane %v7713, 3
      %v7740 = vsel %vm1130, %v7737, %v7739
      %v7741 = vrot.slane %v7714, 3
      %v7742 = vsel %vm1130, %v7739, %v7741
      %v7743 = vrot.slane %v7715, 3
      %v7744 = vsel %vm1130, %v7741, %v7743
      %7745 = vrot.lane.b32.xlu0 %v7730, 32
      %v7746 = vpop.permute.xlu0 %7745
      %7747 = vrot.lane.b32.xlu0 %v7732, 32
      %v7748 = vpop.permute.xlu0 %7747
      %7749 = vrot.lane.b32.xlu0 %v7734, 32
      %v7750 = vpop.permute.xlu0 %7749
      %7751 = vrot.lane.b32.xlu0 %v7736, 32
      %v7752 = vpop.permute.xlu0 %7751
      %7753 = vrot.lane.b32.xlu0 %v7738, 32
      %v7754 = vpop.permute.xlu0 %7753
      %7755 = vrot.lane.b32.xlu0 %v7740, 32
      %v7756 = vpop.permute.xlu0 %7755
      %7757 = vrot.lane.b32.xlu0 %v7742, 32
      %v7758 = vpop.permute.xlu0 %7757
      %7759 = vrot.lane.b32.xlu0 %v7744, 32
      %v7760 = vpop.permute.xlu0 %7759
      %7761 = vrot.lane.b32.xlu0 %v7743, 32
      %v7762 = vpop.permute.xlu0 %7761
      %v7772 = vrot.slane %v7707, 6
      %v7773 = vrot.slane %v7708, 6
      %v7774 = vsel %vm1174, %v7772, %v7773
      %v7775 = vrot.slane %v7709, 6
      %v7776 = vsel %vm1174, %v7773, %v7775
      %v7777 = vrot.slane %v7710, 6
      %v7778 = vsel %vm1174, %v7775, %v7777
      %v7779 = vrot.slane %v7711, 6
      %v7780 = vsel %vm1174, %v7777, %v7779
      %v7781 = vrot.slane %v7712, 6
      %v7782 = vsel %vm1174, %v7779, %v7781
      %v7783 = vrot.slane %v7713, 6
      %v7784 = vsel %vm1174, %v7781, %v7783
      %v7785 = vrot.slane %v7714, 6
      %v7786 = vsel %vm1174, %v7783, %v7785
      %v7787 = vrot.slane %v7715, 6
      %v7788 = vsel %vm1174, %v7785, %v7787
      %7789 = vrot.lane.b32.xlu0 %v7774, 64
      %v7790 = vpop.permute.xlu0 %7789
      %7791 = vrot.lane.b32.xlu0 %v7776, 64
      %v7792 = vpop.permute.xlu0 %7791
      %7793 = vrot.lane.b32.xlu0 %v7778, 64
      %v7794 = vpop.permute.xlu0 %7793
      %7795 = vrot.lane.b32.xlu0 %v7780, 64
      %v7796 = vpop.permute.xlu0 %7795
      %7797 = vrot.lane.b32.xlu0 %v7782, 64
      %v7798 = vpop.permute.xlu0 %7797
      %7799 = vrot.lane.b32.xlu0 %v7784, 64
      %v7800 = vpop.permute.xlu0 %7799
      %7801 = vrot.lane.b32.xlu0 %v7786, 64
      %v7802 = vpop.permute.xlu0 %7801
      %7803 = vrot.lane.b32.xlu0 %v7788, 64
      %v7804 = vpop.permute.xlu0 %7803
      %7805 = vrot.lane.b32.xlu0 %v7787, 64
      %v7806 = vpop.permute.xlu0 %7805
      %v7817 = vrot.slane %v7708, 1
      %v7818 = vrot.slane %v7709, 1
      %v7819 = vsel %vm407, %v7817, %v7818
      %v7820 = vrot.slane %v7710, 1
      %v7821 = vsel %vm407, %v7818, %v7820
      %v7822 = vrot.slane %v7711, 1
      %v7823 = vsel %vm407, %v7820, %v7822
      %v7824 = vrot.slane %v7712, 1
      %v7825 = vsel %vm407, %v7822, %v7824
      %v7826 = vrot.slane %v7713, 1
      %v7827 = vsel %vm407, %v7824, %v7826
      %v7828 = vrot.slane %v7714, 1
      %v7829 = vsel %vm407, %v7826, %v7828
      %v7830 = vrot.slane %v7715, 1
      %v7831 = vsel %vm407, %v7828, %v7830
      %v7832 = vrot.slane %v7716, 1
      %v7833 = vsel %vm407, %v7830, %v7832
      %7834 = vrot.lane.b32.xlu0 %v7819, 96
      %v7835 = vpop.permute.xlu0 %7834
      %7836 = vrot.lane.b32.xlu0 %v7821, 96
      %v7837 = vpop.permute.xlu0 %7836
      %7838 = vrot.lane.b32.xlu0 %v7823, 96
      %v7839 = vpop.permute.xlu0 %7838
      %7840 = vrot.lane.b32.xlu0 %v7825, 96
      %v7841 = vpop.permute.xlu0 %7840
      %7842 = vrot.lane.b32.xlu0 %v7827, 96
      %v7843 = vpop.permute.xlu0 %7842
      %7844 = vrot.lane.b32.xlu0 %v7829, 96
      %v7845 = vpop.permute.xlu0 %7844
      %7846 = vrot.lane.b32.xlu0 %v7831, 96
      %v7847 = vpop.permute.xlu0 %7846
      %7848 = vrot.lane.b32.xlu0 %v7833, 96
      %v7849 = vpop.permute.xlu0 %7848
      %7850 = vrot.lane.b32.xlu0 %v7832, 96
      %v7851 = vpop.permute.xlu0 %7850
      %v7861 = vrot.slane %v7708, 4
      %v7862 = vrot.slane %v7709, 4
      %v7863 = vsel %vm2667, %v7861, %v7862
      %v7864 = vrot.slane %v7710, 4
      %v7865 = vsel %vm2667, %v7862, %v7864
      %v7866 = vrot.slane %v7711, 4
      %v7867 = vsel %vm2667, %v7864, %v7866
      %v7868 = vrot.slane %v7712, 4
      %v7869 = vsel %vm2667, %v7866, %v7868
      %v7870 = vrot.slane %v7713, 4
      %v7871 = vsel %vm2667, %v7868, %v7870
      %v7872 = vrot.slane %v7714, 4
      %v7873 = vsel %vm2667, %v7870, %v7872
      %v7874 = vrot.slane %v7715, 4
      %v7875 = vsel %vm2667, %v7872, %v7874
      %v7876 = vrot.slane %v7716, 4
      %v7877 = vsel %vm2667, %v7874, %v7876
      %v7887 = vrot.slane %v7709, 7
      %v7888 = vrot.slane %v7710, 7
      %v7889 = vsel %vm530, %v7887, %v7888
      %v7890 = vrot.slane %v7711, 7
      %v7891 = vsel %vm530, %v7888, %v7890
      %v7892 = vrot.slane %v7712, 7
      %v7893 = vsel %vm530, %v7890, %v7892
      %v7894 = vrot.slane %v7713, 7
      %v7895 = vsel %vm530, %v7892, %v7894
      %v7896 = vrot.slane %v7714, 7
      %v7897 = vsel %vm530, %v7894, %v7896
      %v7898 = vrot.slane %v7715, 7
      %v7899 = vsel %vm530, %v7896, %v7898
      %v7900 = vrot.slane %v7716, 7
      %v7901 = vsel %vm530, %v7898, %v7900
      %7902 = vrot.lane.b32.xlu0 %v7887, 32
      %v7903 = vpop.permute.xlu0 %7902
      %7904 = vrot.lane.b32.xlu0 %v7889, 32
      %v7905 = vpop.permute.xlu0 %7904
      %7906 = vrot.lane.b32.xlu0 %v7891, 32
      %v7907 = vpop.permute.xlu0 %7906
      %7908 = vrot.lane.b32.xlu0 %v7893, 32
      %v7909 = vpop.permute.xlu0 %7908
      %7910 = vrot.lane.b32.xlu0 %v7895, 32
      %v7911 = vpop.permute.xlu0 %7910
      %7912 = vrot.lane.b32.xlu0 %v7897, 32
      %v7913 = vpop.permute.xlu0 %7912
      %7914 = vrot.lane.b32.xlu0 %v7899, 32
      %v7915 = vpop.permute.xlu0 %7914
      %7916 = vrot.lane.b32.xlu0 %v7901, 32
      %v7917 = vpop.permute.xlu0 %7916
      %7918 = vrot.lane.b32.xlu0 %v7900, 32
      %v7919 = vpop.permute.xlu0 %7918
      %v7930 = vrot.slane %v7709, 2
      %v7931 = vrot.slane %v7710, 2
      %v7932 = vsel %vm451, %v7930, %v7931
      %v7933 = vrot.slane %v7711, 2
      %v7934 = vsel %vm451, %v7931, %v7933
      %v7935 = vrot.slane %v7712, 2
      %v7936 = vsel %vm451, %v7933, %v7935
      %v7937 = vrot.slane %v7713, 2
      %v7938 = vsel %vm451, %v7935, %v7937
      %v7939 = vrot.slane %v7714, 2
      %v7940 = vsel %vm451, %v7937, %v7939
      %v7941 = vrot.slane %v7715, 2
      %v7942 = vsel %vm451, %v7939, %v7941
      %v7943 = vrot.slane %v7716, 2
      %v7944 = vsel %vm451, %v7941, %v7943
      %v7945 = vrot.slane %v7717, 2
      %v7946 = vsel %vm451, %v7943, %v7945
      %7947 = vrot.lane.b32.xlu0 %v7932, 64
      %v7948 = vpop.permute.xlu0 %7947
      %7949 = vrot.lane.b32.xlu0 %v7934, 64
      %v7950 = vpop.permute.xlu0 %7949
      %7951 = vrot.lane.b32.xlu0 %v7936, 64
      %v7952 = vpop.permute.xlu0 %7951
      %7953 = vrot.lane.b32.xlu0 %v7938, 64
      %v7954 = vpop.permute.xlu0 %7953
      %7955 = vrot.lane.b32.xlu0 %v7940, 64
      %v7956 = vpop.permute.xlu0 %7955
      %7957 = vrot.lane.b32.xlu0 %v7942, 64
      %v7958 = vpop.permute.xlu0 %7957
      %7959 = vrot.lane.b32.xlu0 %v7944, 64
      %v7960 = vpop.permute.xlu0 %7959
      %7961 = vrot.lane.b32.xlu0 %v7946, 64
      %v7962 = vpop.permute.xlu0 %7961
      %7963 = vrot.lane.b32.xlu0 %v7945, 64
      %v7964 = vpop.permute.xlu0 %7963
      %v7974 = vrot.slane %v7709, 5
      %v7975 = vrot.slane %v7710, 5
      %v7976 = vsel %vm1252, %v7974, %v7975
      %v7977 = vrot.slane %v7711, 5
      %v7978 = vsel %vm1252, %v7975, %v7977
      %v7979 = vrot.slane %v7712, 5
      %v7980 = vsel %vm1252, %v7977, %v7979
      %v7981 = vrot.slane %v7713, 5
      %v7982 = vsel %vm1252, %v7979, %v7981
      %v7983 = vrot.slane %v7714, 5
      %v7984 = vsel %vm1252, %v7981, %v7983
      %v7985 = vrot.slane %v7715, 5
      %v7986 = vsel %vm1252, %v7983, %v7985
      %v7987 = vrot.slane %v7716, 5
      %v7988 = vsel %vm1252, %v7985, %v7987
      %v7989 = vrot.slane %v7717, 5
      %v7990 = vsel %vm1252, %v7987, %v7989
      %7991 = vrot.lane.b32.xlu0 %v7976, 96
      %v7992 = vpop.permute.xlu0 %7991
      %7993 = vrot.lane.b32.xlu0 %v7978, 96
      %v7994 = vpop.permute.xlu0 %7993
      %7995 = vrot.lane.b32.xlu0 %v7980, 96
      %v7996 = vpop.permute.xlu0 %7995
      %7997 = vrot.lane.b32.xlu0 %v7982, 96
      %v7998 = vpop.permute.xlu0 %7997
      %7999 = vrot.lane.b32.xlu0 %v7984, 96
      %v8000 = vpop.permute.xlu0 %7999
      %8001 = vrot.lane.b32.xlu0 %v7986, 96
      %v8002 = vpop.permute.xlu0 %8001
      %8003 = vrot.lane.b32.xlu0 %v7988, 96
      %v8004 = vpop.permute.xlu0 %8003
      %8005 = vrot.lane.b32.xlu0 %v7990, 96
      %v8006 = vpop.permute.xlu0 %8005
      %8007 = vrot.lane.b32.xlu0 %v7989, 96
      %v8008 = vpop.permute.xlu0 %8007
      %v8019 = vrot.slane %v7716, 3
      %v8020 = vsel %vm1130, %v7743, %v8019
      %v8021 = vrot.slane %v7717, 3
      %v8022 = vsel %vm1130, %v8019, %v8021
      %v8023 = vrot.slane %v7718, 3
      %v8024 = vsel %vm1130, %v8021, %v8023
      %8025 = vrot.lane.b32.xlu0 %v8020, 32
      %v8026 = vpop.permute.xlu0 %8025
      %8027 = vrot.lane.b32.xlu0 %v8022, 32
      %v8028 = vpop.permute.xlu0 %8027
      %8029 = vrot.lane.b32.xlu0 %v8024, 32
      %v8030 = vpop.permute.xlu0 %8029
      %8031 = vrot.lane.b32.xlu0 %v8023, 32
      %v8032 = vpop.permute.xlu0 %8031
      %v8037 = vrot.slane %v7716, 6
      %v8038 = vsel %vm1174, %v7787, %v8037
      %v8039 = vrot.slane %v7717, 6
      %v8040 = vsel %vm1174, %v8037, %v8039
      %v8041 = vrot.slane %v7718, 6
      %v8042 = vsel %vm1174, %v8039, %v8041
      %8043 = vrot.lane.b32.xlu0 %v8038, 64
      %v8044 = vpop.permute.xlu0 %8043
      %8045 = vrot.lane.b32.xlu0 %v8040, 64
      %v8046 = vpop.permute.xlu0 %8045
      %8047 = vrot.lane.b32.xlu0 %v8042, 64
      %v8048 = vpop.permute.xlu0 %8047
      %8049 = vrot.lane.b32.xlu0 %v8041, 64
      %v8050 = vpop.permute.xlu0 %8049
      %v8055 = vsel %vm279, %v7707, %v7746
      %v8056 = vsel %vm279, %v7708, %v7748
      %v8057 = vsel %vm279, %v7709, %v7750
      %v8058 = vsel %vm279, %v7710, %v7752
      %v8059 = vsel %vm279, %v7711, %v7754
      %v8060 = vsel %vm279, %v7712, %v7756
      %v8061 = vsel %vm279, %v7713, %v7758
      %v8062 = vsel %vm279, %v7714, %v7760
      %v8063 = vsel %vm279, %v7715, %v7762
      %v8064 = vsel %vm505, %v8055, %v7790
      %v8065 = vsel %vm505, %v8056, %v7792
      %v8066 = vsel %vm505, %v8057, %v7794
      %v8067 = vsel %vm505, %v8058, %v7796
      %v8068 = vsel %vm505, %v8059, %v7798
      %v8069 = vsel %vm505, %v8060, %v7800
      %v8070 = vsel %vm505, %v8061, %v7802
      %v8071 = vsel %vm505, %v8062, %v7804
      %v8072 = vsel %vm505, %v8063, %v7806
      %v8073 = vsel %vm548, %v8064, %v7835
      %v8074 = vsel %vm548, %v8065, %v7837
      %v8075 = vsel %vm548, %v8066, %v7839
      %v8076 = vsel %vm548, %v8067, %v7841
      %v8077 = vsel %vm548, %v8068, %v7843
      %v8078 = vsel %vm548, %v8069, %v7845
      %v8079 = vsel %vm548, %v8070, %v7847
      %v8080 = vsel %vm548, %v8071, %v7849
      %v8081 = vsel %vm548, %v8072, %v7851
      %v8082 = vsel %vm279, %v7863, %v7903
      %v8083 = vsel %vm279, %v7865, %v7905
      %v8084 = vsel %vm279, %v7867, %v7907
      %v8085 = vsel %vm279, %v7869, %v7909
      %v8086 = vsel %vm279, %v7871, %v7911
      %v8087 = vsel %vm279, %v7873, %v7913
      %v8088 = vsel %vm279, %v7875, %v7915
      %v8089 = vsel %vm279, %v7877, %v7917
      %v8090 = vsel %vm279, %v7876, %v7919
      %v8091 = vsel %vm505, %v8082, %v7948
      %v8092 = vsel %vm505, %v8083, %v7950
      %v8093 = vsel %vm505, %v8084, %v7952
      %v8094 = vsel %vm505, %v8085, %v7954
      %v8095 = vsel %vm505, %v8086, %v7956
      %v8096 = vsel %vm505, %v8087, %v7958
      %v8097 = vsel %vm505, %v8088, %v7960
      %v8098 = vsel %vm505, %v8089, %v7962
      %v8099 = vsel %vm505, %v8090, %v7964
      %v8100 = vsel %vm548, %v8091, %v7992
      %v8101 = vsel %vm548, %v8092, %v7994
      %v8102 = vsel %vm548, %v8093, %v7996
      %v8103 = vsel %vm548, %v8094, %v7998
      %v8104 = vsel %vm548, %v8095, %v8000
      %v8105 = vsel %vm548, %v8096, %v8002
      %v8106 = vsel %vm548, %v8097, %v8004
      %v8107 = vsel %vm548, %v8098, %v8006
      %v8108 = vsel %vm548, %v8099, %v8008
      %v8109 = vsel %vm279, %v7715, %v8026
      %v8110 = vsel %vm279, %v7716, %v8028
      %v8111 = vsel %vm279, %v7717, %v8030
      %v8112 = vsel %vm279, %v7718, %v8032
      %v8113 = vsel %vm505, %v8109, %v8044
      %v8114 = vsel %vm505, %v8110, %v8046
      %v8115 = vsel %vm505, %v8111, %v8048
      %v8116 = vsel %vm505, %v8112, %v8050
      %v8118 = vlaneseq
      %v8119 = vshrl.u32 %v8118, 7
      %v8120 = vsub.s32 0, %v8119
      %v8121 = vrot.slane %v7642, %v8120
      %v8150 = vrot.slane %v8073, 1
      %v8151 = vrot.slane %v8074, 1
      %v8152 = vsel %vm407, %v8150, %v8151
      %v8153 = vrot.slane %v8100, 1
      %v8154 = vrot.slane %v8101, 1
      %v8155 = vsel %vm407, %v8153, %v8154
      %v8156 = vrot.slane %v8067, 1
      %v8157 = vrot.slane %v8068, 1
      %v8158 = vsel %vm407, %v8156, %v8157
      %v8159 = vrot.slane %v8075, 1
      %v8160 = vsel %vm407, %v8151, %v8159
      %v8161 = vrot.slane %v8102, 1
      %v8162 = vsel %vm407, %v8154, %v8161
      %v8163 = vrot.slane %v8069, 1
      %v8164 = vsel %vm407, %v8157, %v8163
      %v8165 = vrot.slane %v8076, 1
      %v8166 = vsel %vm407, %v8159, %v8165
      %v8167 = vrot.slane %v8103, 1
      %v8168 = vsel %vm407, %v8161, %v8167
      %v8169 = vrot.slane %v8070, 1
      %v8170 = vsel %vm407, %v8163, %v8169
      %v8171 = vrot.slane %v8077, 1
      %v8172 = vsel %vm407, %v8165, %v8171
      %v8173 = vrot.slane %v8104, 1
      %v8174 = vsel %vm407, %v8167, %v8173
      %v8175 = vrot.slane %v8071, 1
      %v8176 = vsel %vm407, %v8169, %v8175
      %v8177 = vrot.slane %v8078, 1
      %v8178 = vsel %vm407, %v8171, %v8177
      %v8179 = vrot.slane %v8105, 1
      %v8180 = vsel %vm407, %v8173, %v8179
      %v8181 = vrot.slane %v8113, 1
      %v8182 = vsel %vm407, %v8175, %v8181
      %v8183 = vrot.slane %v8079, 1
      %v8184 = vsel %vm407, %v8177, %v8183
      %v8185 = vrot.slane %v8106, 1
      %v8186 = vsel %vm407, %v8179, %v8185
      %v8187 = vrot.slane %v8114, 1
      %v8188 = vsel %vm407, %v8181, %v8187
      %v8189 = vrot.slane %v8080, 1
      %v8190 = vsel %vm407, %v8183, %v8189
      %v8191 = vrot.slane %v8107, 1
      %v8192 = vsel %vm407, %v8185, %v8191
      %v8193 = vrot.slane %v8115, 1
      %v8194 = vsel %vm407, %v8187, %v8193
      %v8195 = vrot.slane %v8081, 1
      %v8196 = vsel %vm407, %v8189, %v8195
      %v8197 = vrot.slane %v8108, 1
      %v8198 = vsel %vm407, %v8191, %v8197
      %v8199 = vrot.slane %v8116, 1
      %v8200 = vsel %vm407, %v8193, %v8199
      %v8217 = vsel %vm548, %v8158, 0
      %v8219 = vsel %vm548, %v8164, 0
      %v8221 = vsel %vm548, %v8170, 0
      %v8223 = vsel %vm548, %v8176, 0
      %v8225 = vsel %vm548, %v8182, 0
      %v8227 = vsel %vm548, %v8188, 0
      %v8229 = vsel %vm548, %v8194, 0
      %v8231 = vsel %vm548, %v8200, 0
      %8233 = vmatprep.subr.mxu0 0.0
      %8234 = vmatpush1.msra.mxu0 %v7597
      %8235 = vmatprep.subr.mxu0 0.0
      %8236 = vmatpush1.msra.mxu0 %v7598
      %8237 = vmatprep.subr.mxu0 0.0
      %8238 = vmatpush1.msra.mxu0 %v7599
      %8239 = vmatprep.subr.mxu0 0.0
      %8240 = vmatpush1.msra.mxu0 %v7600
      %8241 = vmatprep.subr.mxu0 0.0
      %8242 = vmatpush1.msra.mxu0 %v7601
      %8243 = vmatprep.subr.mxu0 0.0
      %8244 = vmatpush1.msra.mxu0 %v7602
      %8245 = vmatprep.subr.mxu0 0.0
      %8246 = vmatpush1.msra.mxu0 %v7603
      %8247 = vmatprep.subr.mxu0 0.0
      %8248 = vmatpush1.msra.mxu0 %v7604
      %8249 = vmatprep.subr.mxu0 0.0
      %8250 = vmatpush1.msra.mxu0 %v7605
      %8251 = vmatprep.subr.mxu0 0.0
      %8252 = vmatpush1.msra.mxu0 %v7606
      %8253 = vmatprep.subr.mxu0 0.0
      %8254 = vmatpush1.msra.mxu0 %v7607
      %8255 = vmatprep.subr.mxu0 0.0
      %8256 = vmatpush1.msra.mxu0 %v7608
      %8257 = vmatprep.subr.mxu0 0.0
      %8258 = vmatpush1.msra.mxu0 %v7609
      %8259 = vmatprep.subr.mxu0 0.0
      %8260 = vmatpush1.msra.mxu0 %v7610
      %8261 = vmatprep.subr.mxu0 0.0
      %8262 = vmatpush1.msra.mxu0 %v7611
      %8263 = vmatprep.subr.mxu0 0.0
      %8264 = vmatpush1.msra.mxu0 %v7612
      %8265 = vmatprep.subr.mxu0 0.0
      %8266 = vmatpush1.msra.mxu0 %v7613
      %8267 = vmatprep.subr.mxu0 0.0
      %8268 = vmatpush1.msra.mxu0 %v7614
      %8269 = vmatprep.subr.mxu0 0.0
      %8270 = vmatpush1.msra.mxu0 %v7615
      %8271 = vmatprep.subr.mxu0 0.0
      %8272 = vmatpush1.msra.mxu0 %v7616
      %8273 = vmatprep.subr.mxu0 0.0
      %8274 = vmatpush1.msra.mxu0 %v7617
      %8275 = vmatprep.subr.mxu0 0.0
      %8276 = vmatpush1.msra.mxu0 %v7618
      %8277 = vmatprep.subr.mxu0 0.0
      %8278 = vmatpush1.msra.mxu0 %v7619
      %8279 = vmatprep.subr.mxu0 0.0
      %8280 = vmatpush1.msra.mxu0 %v7620
      %8281 = vmatprep.subr.mxu0 0.0
      %8282 = vmatpush1.msra.mxu0 %v7621
      %8283 = vmatprep.subr.mxu0 0.0
      %8284 = vmatpush1.msra.mxu0 %v7622
      %8285 = vmatprep.subr.mxu0 0.0
      %8286 = vmatpush1.msra.mxu0 %v7623
      %8287 = vmatprep.subr.mxu0 0.0
      %8288 = vmatpush1.msra.mxu0 %v7624
      %8289 = vmatprep.subr.mxu0 0.0
      %8290 = vmatpush1.msra.mxu0 %v7625
      %8291 = vmatprep.subr.mxu0 0.0
      %8292 = vmatpush1.msra.mxu0 %v7626
      %8293 = vmatprep.subr.mxu0 0.0
      %8294 = vmatpush1.msra.mxu0 %v7627
      %8295 = vmatprep.subr.mxu0 0.0
      %8296 = vmatpush1.msra.mxu0 %v7628
      %8297 = vmatprep.mubr.f32.mxu0 %v8155
      %8298 = vmatmul.mubr.f32.gmra.mrb[0].mxu0 %v8152
      %v8299 = vpop.f32.mrb[0].mxu0
      %v8300 = vadd.f32 %v8121, %v8299
      %v8301 = vpop.f32.mrb[0].mxu0
      %8302 = vmatprep.mubr.f32.mxu0 %v8162
      %8303 = vmatmul.mubr.f32.gmra.mrb[0].mxu0 %v8160
      %v8304 = vpop.f32.mrb[0].mxu0
      %v8305 = vadd.f32 %v8121, %v8304
      %v8306 = vpop.f32.mrb[0].mxu0
      %8307 = vmatprep.mubr.f32.mxu0 %v8168
      %8308 = vmatmul.mubr.f32.gmra.mrb[0].mxu0 %v8166
      %v8309 = vpop.f32.mrb[0].mxu0
      %v8310 = vadd.f32 %v8121, %v8309
      %v8311 = vpop.f32.mrb[0].mxu0
      %8312 = vmatprep.mubr.f32.mxu0 %v8174
      %8313 = vmatmul.mubr.f32.gmra.mrb[0].mxu0 %v8172
      %v8314 = vpop.f32.mrb[0].mxu0
      %v8315 = vadd.f32 %v8121, %v8314
      %v8316 = vpop.f32.mrb[0].mxu0
      %8317 = vmatprep.mubr.f32.mxu0 %v8180
      %8318 = vmatmul.mubr.f32.gmra.mrb[0].mxu0 %v8178
      %v8319 = vpop.f32.mrb[0].mxu0
      %v8320 = vadd.f32 %v8121, %v8319
      %v8321 = vpop.f32.mrb[0].mxu0
      %8322 = vmatprep.mubr.f32.mxu0 %v8186
      %8323 = vmatmul.mubr.f32.gmra.mrb[0].mxu0 %v8184
      %v8324 = vpop.f32.mrb[0].mxu0
      %v8325 = vadd.f32 %v8121, %v8324
      %v8326 = vpop.f32.mrb[0].mxu0
      %8327 = vmatprep.mubr.f32.mxu0 %v8192
      %8328 = vmatmul.mubr.f32.gmra.mrb[0].mxu0 %v8190
      %v8329 = vpop.f32.mrb[0].mxu0
      %v8330 = vadd.f32 %v8121, %v8329
      %v8331 = vpop.f32.mrb[0].mxu0
      %8332 = vmatprep.mubr.f32.mxu0 %v8198
      %8333 = vmatmul.mubr.f32.gmra.mrb[0].mxu0 %v8196
      %v8334 = vpop.f32.mrb[0].mxu0
      %v8335 = vadd.f32 %v8121, %v8334
      %v8336 = vpop.f32.mrb[0].mxu0
      %8337 = vdwg.mxu0
      %8338 = vmatprep.subr.mxu0 0.0
      %8339 = vmatpush1.msra.mxu0 %v7629
      %8340 = vmatprep.subr.mxu0 0.0
      %8341 = vmatpush1.msra.mxu0 %v7630
      %8342 = vmatprep.subr.mxu0 0.0
      %8343 = vmatpush1.msra.mxu0 %v7631
      %8344 = vmatprep.subr.mxu0 0.0
      %8345 = vmatpush1.msra.mxu0 %v7632
      %8346 = vmatprep.subr.mxu0 0.0
      %8347 = vmatpush1.msra.mxu0 %v7633
      %8348 = vmatprep.subr.mxu0 0.0
      %8349 = vmatpush1.msra.mxu0 %v7634
      %8350 = vmatprep.subr.mxu0 0.0
      %8351 = vmatpush1.msra.mxu0 %v7635
      %8352 = vmatprep.subr.mxu0 0.0
      %8353 = vmatpush1.msra.mxu0 %v7636
      %8354 = vmatprep.subr.mxu0 0.0
      %8355 = vmatpush1.msra.mxu0 %v7637
      %8356 = vmatprep.subr.mxu0 0.0
      %8357 = vmatpush1.msra.mxu0 %v7638
      %8358 = vmatprep.subr.mxu0 0.0
      %8359 = vmatpush1.msra.mxu0 %v7639
      %8360 = vmatprep.subr.mxu0 0.0
      %8361 = vmatpush1.msra.mxu0 %v7640
      %8362 = vmatprep.subr.mxu0 0.0
      %8363 = vmatpush1.msra.mxu0 0.0
      %8364 = vmatprep.subr.mxu0 0.0
      %8365 = vmatpush1.msra.mxu0 0.0
      %8366 = vmatprep.subr.mxu0 0.0
      %8367 = vmatpush1.msra.mxu0 0.0
      %8368 = vmatprep.subr.mxu0 0.0
      %8369 = vmatpush1.msra.mxu0 0.0
      %8370 = vmatprep.subr.mxu0 0.0
      %8371 = vmatpush1.msra.mxu0 0.0
      %8372 = vmatprep.subr.mxu0 0.0
      %8373 = vmatpush1.msra.mxu0 0.0
      %8374 = vmatprep.subr.mxu0 0.0
      %8375 = vmatpush1.msra.mxu0 0.0
      %8376 = vmatprep.subr.mxu0 0.0
      %8377 = vmatpush1.msra.mxu0 0.0
      %8378 = vmatprep.subr.mxu0 0.0
      %8379 = vmatpush1.msra.mxu0 0.0
      %8380 = vmatprep.subr.mxu0 0.0
      %8381 = vmatpush1.msra.mxu0 0.0
      %8382 = vmatprep.subr.mxu0 0.0
      %8383 = vmatpush1.msra.mxu0 0.0
      %8384 = vmatprep.subr.mxu0 0.0
      %8385 = vmatpush1.msra.mxu0 0.0
      %8386 = vmatprep.subr.mxu0 0.0
      %8387 = vmatpush1.msra.mxu0 0.0
      %8388 = vmatprep.subr.mxu0 0.0
      %8389 = vmatpush1.msra.mxu0 0.0
      %8390 = vmatprep.subr.mxu0 0.0
      %8391 = vmatpush1.msra.mxu0 0.0
      %8392 = vmatprep.subr.mxu0 0.0
      %8393 = vmatpush1.msra.mxu0 0.0
      %8394 = vmatprep.subr.mxu0 0.0
      %8395 = vmatpush1.msra.mxu0 0.0
      %8396 = vmatprep.subr.mxu0 0.0
      %8397 = vmatpush1.msra.mxu0 0.0
      %8398 = vmatprep.subr.mxu0 0.0
      %8399 = vmatpush1.msra.mxu0 0.0
      %8400 = vmatprep.subr.mxu0 0.0
      %8401 = vmatpush1.msra.mxu0 0.0
      %8402 = vmatprep.mubr.f32.mxu0 0.0
      %8403 = vmatmul.mubr.f32.gmra.mrb[0].mxu0 %v8217
      %v8404 = vpop.f32.mrb[0].mxu0
      %v8405 = vadd.f32 %v8300, %v8404
      %v8406 = vpop.f32.mrb[0].mxu0
      %8407 = vmatprep.mubr.f32.mxu0 0.0
      %8408 = vmatmul.mubr.f32.gmra.mrb[0].mxu0 %v8219
      %v8409 = vpop.f32.mrb[0].mxu0
      %v8410 = vadd.f32 %v8305, %v8409
      %v8411 = vpop.f32.mrb[0].mxu0
      %8412 = vmatprep.mubr.f32.mxu0 0.0
      %8413 = vmatmul.mubr.f32.gmra.mrb[0].mxu0 %v8221
      %v8414 = vpop.f32.mrb[0].mxu0
      %v8415 = vadd.f32 %v8310, %v8414
      %v8416 = vpop.f32.mrb[0].mxu0
      %8417 = vmatprep.mubr.f32.mxu0 0.0
      %8418 = vmatmul.mubr.f32.gmra.mrb[0].mxu0 %v8223
      %v8419 = vpop.f32.mrb[0].mxu0
      %v8420 = vadd.f32 %v8315, %v8419
      %v8421 = vpop.f32.mrb[0].mxu0
      %8422 = vmatprep.mubr.f32.mxu0 0.0
      %8423 = vmatmul.mubr.f32.gmra.mrb[0].mxu0 %v8225
      %v8424 = vpop.f32.mrb[0].mxu0
      %v8425 = vadd.f32 %v8320, %v8424
      %v8426 = vpop.f32.mrb[0].mxu0
      %8427 = vmatprep.mubr.f32.mxu0 0.0
      %8428 = vmatmul.mubr.f32.gmra.mrb[0].mxu0 %v8227
      %v8429 = vpop.f32.mrb[0].mxu0
      %v8430 = vadd.f32 %v8325, %v8429
      %v8431 = vpop.f32.mrb[0].mxu0
      %8432 = vmatprep.mubr.f32.mxu0 0.0
      %8433 = vmatmul.mubr.f32.gmra.mrb[0].mxu0 %v8229
      %v8434 = vpop.f32.mrb[0].mxu0
      %v8435 = vadd.f32 %v8330, %v8434
      %v8436 = vpop.f32.mrb[0].mxu0
      %8437 = vmatprep.mubr.f32.mxu0 0.0
      %8438 = vmatmul.mubr.f32.gmra.mrb[0].mxu0 %v8231
      %v8439 = vpop.f32.mrb[0].mxu0
      %v8440 = vadd.f32 %v8335, %v8439
      %v8441 = vpop.f32.mrb[0].mxu0
      %8442 = vdwg.mxu0
      %s8443 = scalar_lea.vmem %s5, 1056
      %v8444 = vld [vmem:[%s8443] sm:$0xff]
      %v8445 = vld [vmem:[%s8443 + $0x8] sm:$0xff]
      %v8446 = vld [vmem:[%s8443 + $0x10] sm:$0xff]
      %v8447 = vld [vmem:[%s8443 + $0x18] sm:$0xff]
      %v8448 = vld [vmem:[%s8443 + $0x20] sm:$0xff]
      %v8449 = vld [vmem:[%s8443 + $0x28] sm:$0xff]
      %v8450 = vld [vmem:[%s8443 + $0x30] sm:$0xff]
      %v8451 = vld [vmem:[%s8443 + $0x38] sm:$0xff]
      %v8452 = vld [vmem:[%s8443 + $0x40] sm:$0xff]
      %v8453 = vld [vmem:[%s8443 + $0x48] sm:$0xff]
      %v8454 = vld [vmem:[%s8443 + $0x50] sm:$0xff]
      %v8455 = vld [vmem:[%s8443 + $0x58] sm:$0xff]
      %v8456 = vld [vmem:[%s8443 + $0x60] sm:$0xff]
      %v8457 = vld [vmem:[%s8443 + $0x68] sm:$0xff]
      %v8458 = vld [vmem:[%s8443 + $0x70] sm:$0xff]
      %v8459 = vld [vmem:[%s8443 + $0x78] sm:$0xff]
      %v8460 = vld [vmem:[%s8443 + $0x80] sm:$0xff]
      %v8461 = vld [vmem:[%s8443 + $0x88] sm:$0xff]
      %v8462 = vld [vmem:[%s8443 + $0x90] sm:$0xff]
      %v8463 = vld [vmem:[%s8443 + $0x98] sm:$0xff]
      %v8464 = vld [vmem:[%s8443 + $0xa0] sm:$0xff]
      %v8465 = vld [vmem:[%s8443 + $0xa8] sm:$0xff]
      %v8466 = vld [vmem:[%s8443 + $0xb0] sm:$0xff]
      %v8467 = vld [vmem:[%s8443 + $0xb8] sm:$0xff]
      %v8468 = vld [vmem:[%s8443 + $0xc0] sm:$0xff]
      %v8469 = vld [vmem:[%s8443 + $0xc8] sm:$0xff]
      %v8470 = vld [vmem:[%s8443 + $0xd0] sm:$0xff]
      %v8471 = vld [vmem:[%s8443 + $0xd8] sm:$0xff]
      %v8472 = vld [vmem:[%s8443 + $0xe0] sm:$0xff]
      %v8473 = vld [vmem:[%s8443 + $0xe8] sm:$0xff]
      %v8474 = vld [vmem:[%s8443 + $0xf0] sm:$0xff]
      %v8475 = vld [vmem:[%s8443 + $0xf8] sm:$0xff]
      %v8476 = vld [vmem:[%s8443 + $0x100] sm:$0xff]
      %v8477 = vld [vmem:[%s8443 + $0x108] sm:$0xff]
      %v8478 = vld [vmem:[%s8443 + $0x110] sm:$0xff]
      %v8479 = vld [vmem:[%s8443 + $0x118] sm:$0xff]
      %v8480 = vld [vmem:[%s8443 + $0x120] sm:$0xff]
      %v8481 = vld [vmem:[%s8443 + $0x128] sm:$0xff]
      %v8482 = vld [vmem:[%s8443 + $0x130] sm:$0xff]
      %v8483 = vld [vmem:[%s8443 + $0x138] sm:$0xff]
      %v8484 = vld [vmem:[%s8443 + $0x140] sm:$0xff]
      %v8485 = vld [vmem:[%s8443 + $0x148] sm:$0xff]
      %v8486 = vld [vmem:[%s8443 + $0x150] sm:$0xff]
      %v8487 = vld [vmem:[%s8443 + $0x158] sm:$0xff]
      %s8488 = scalar_lea.vmem %s6, 3
      %v8489 = vld [vmem:[%s8488] sm:$0x1]
      %v8490 = vxor.u32 %v8405, 2147483648
      %v8491 = vxor.u32 %v8410, 2147483648
      %v8492 = vxor.u32 %v8415, 2147483648
      %v8493 = vxor.u32 %v8420, 2147483648
      %v8494 = vxor.u32 %v8425, 2147483648
      %v8495 = vxor.u32 %v8430, 2147483648
      %v8496 = vxor.u32 %v8435, 2147483648
      %v8497 = vxor.u32 %v8440, 2147483648
      %v8498 = vmul.f32 %v8490, 1.442695
      %v8499 = vpow.pop %v8498
      %v8500 = vmul.f32 %v8491, 1.442695
      %v8501 = vpow.pop %v8500
      %v8502 = vmul.f32 %v8492, 1.442695
      %v8503 = vpow.pop %v8502
      %v8504 = vmul.f32 %v8493, 1.442695
      %v8505 = vpow.pop %v8504
      %v8506 = vmul.f32 %v8494, 1.442695
      %v8507 = vpow.pop %v8506
      %v8508 = vmul.f32 %v8495, 1.442695
      %v8509 = vpow.pop %v8508
      %v8510 = vmul.f32 %v8496, 1.442695
      %v8511 = vpow.pop %v8510
      %v8512 = vmul.f32 %v8497, 1.442695
      %v8513 = vpow.pop %v8512
      %v8514 = vadd.f32 %v8499, 1.0
      %v8515 = vadd.f32 %v8501, 1.0
      %v8516 = vadd.f32 %v8503, 1.0
      %v8517 = vadd.f32 %v8505, 1.0
      %v8518 = vadd.f32 %v8507, 1.0
      %v8519 = vadd.f32 %v8509, 1.0
      %v8520 = vadd.f32 %v8511, 1.0
      %v8521 = vadd.f32 %v8513, 1.0
      %v8522 = vrcp.pop %v8514
      %v8523 = vmul.f32 1.0, %v8522
      %v8524 = vrcp.pop %v8515
      %v8525 = vmul.f32 1.0, %v8524
      %v8526 = vrcp.pop %v8516
      %v8527 = vmul.f32 1.0, %v8526
      %v8528 = vrcp.pop %v8517
      %v8529 = vmul.f32 1.0, %v8528
      %v8530 = vrcp.pop %v8518
      %v8531 = vmul.f32 1.0, %v8530
      %v8532 = vrcp.pop %v8519
      %v8533 = vmul.f32 1.0, %v8532
      %v8534 = vrcp.pop %v8520
      %v8535 = vmul.f32 1.0, %v8534
      %v8536 = vrcp.pop %v8521
      %v8537 = vmul.f32 1.0, %v8536
      %v8538 = vmul.f32 %v8405, %v8523
      %v8539 = vmul.f32 %v8410, %v8525
      %v8540 = vmul.f32 %v8415, %v8527
      %v8541 = vmul.f32 %v8420, %v8529
      %v8542 = vmul.f32 %v8425, %v8531
      %v8543 = vmul.f32 %v8430, %v8533
      %v8544 = vmul.f32 %v8435, %v8535
      %v8545 = vmul.f32 %v8440, %v8537
      %8546 = vst.msk [vmem:[#allocation4 + $0x20] sm:$0xff] %vm279, %v8538
      %8547 = vst.msk [vmem:[#allocation4 + $0x28] sm:$0xff] %vm279, %v8539
      %8548 = vst.msk [vmem:[#allocation4 + $0x30] sm:$0xff] %vm279, %v8540
      %8549 = vst.msk [vmem:[#allocation4 + $0x38] sm:$0xff] %vm279, %v8541
      %8550 = vst.msk [vmem:[#allocation4 + $0x40] sm:$0xff] %vm279, %v8542
      %8551 = vst.msk [vmem:[#allocation4 + $0x48] sm:$0xff] %vm279, %v8543
      %8552 = vst.msk [vmem:[#allocation4 + $0x50] sm:$0xff] %vm279, %v8544
      %8553 = vst.msk [vmem:[#allocation4 + $0x58] sm:$0xff] %vm279, %v8545
      %v8554 = vld [vmem:[#allocation4 + $0x18] sm:$0xff]
      %v8555 = vld [vmem:[#allocation4 + $0x20] sm:$0xff]
      %v8556 = vld [vmem:[#allocation4 + $0x28] sm:$0xff]
      %v8557 = vld [vmem:[#allocation4 + $0x30] sm:$0xff]
      %v8558 = vld [vmem:[#allocation4 + $0x38] sm:$0xff]
      %v8559 = vld [vmem:[#allocation4 + $0x40] sm:$0xff]
      %v8560 = vld [vmem:[#allocation4 + $0x48] sm:$0xff]
      %v8561 = vld [vmem:[#allocation4 + $0x50] sm:$0xff]
      %v8562 = vld [vmem:[#allocation4 + $0x58] sm:$0xff]
      %v8563 = vld [vmem:[#allocation4 + $0x60] sm:$0xff]
      %v8573 = vrot.slane %v8554, 1
      %v8574 = vrot.slane %v8555, 1
      %v8575 = vsel %vm407, %v8573, %v8574
      %v8576 = vrot.slane %v8556, 1
      %v8577 = vsel %vm407, %v8574, %v8576
      %v8578 = vrot.slane %v8557, 1
      %v8579 = vsel %vm407, %v8576, %v8578
      %v8580 = vrot.slane %v8558, 1
      %v8581 = vsel %vm407, %v8578, %v8580
      %v8582 = vrot.slane %v8559, 1
      %v8583 = vsel %vm407, %v8580, %v8582
      %v8584 = vrot.slane %v8560, 1
      %v8585 = vsel %vm407, %v8582, %v8584
      %v8586 = vrot.slane %v8561, 1
      %v8587 = vsel %vm407, %v8584, %v8586
      %v8588 = vrot.slane %v8562, 1
      %v8589 = vsel %vm407, %v8586, %v8588
      %8590 = vrot.lane.b32.xlu0 %v8575, 32
      %v8591 = vpop.permute.xlu0 %8590
      %8592 = vrot.lane.b32.xlu0 %v8577, 32
      %v8593 = vpop.permute.xlu0 %8592
      %8594 = vrot.lane.b32.xlu0 %v8579, 32
      %v8595 = vpop.permute.xlu0 %8594
      %8596 = vrot.lane.b32.xlu0 %v8581, 32
      %v8597 = vpop.permute.xlu0 %8596
      %8598 = vrot.lane.b32.xlu0 %v8583, 32
      %v8599 = vpop.permute.xlu0 %8598
      %8600 = vrot.lane.b32.xlu0 %v8585, 32
      %v8601 = vpop.permute.xlu0 %8600
      %8602 = vrot.lane.b32.xlu0 %v8587, 32
      %v8603 = vpop.permute.xlu0 %8602
      %8604 = vrot.lane.b32.xlu0 %v8589, 32
      %v8605 = vpop.permute.xlu0 %8604
      %8606 = vrot.lane.b32.xlu0 %v8588, 32
      %v8607 = vpop.permute.xlu0 %8606
      %v8617 = vrot.slane %v8554, 2
      %v8618 = vrot.slane %v8555, 2
      %v8619 = vsel %vm451, %v8617, %v8618
      %v8620 = vrot.slane %v8556, 2
      %v8621 = vsel %vm451, %v8618, %v8620
      %v8622 = vrot.slane %v8557, 2
      %v8623 = vsel %vm451, %v8620, %v8622
      %v8624 = vrot.slane %v8558, 2
      %v8625 = vsel %vm451, %v8622, %v8624
      %v8626 = vrot.slane %v8559, 2
      %v8627 = vsel %vm451, %v8624, %v8626
      %v8628 = vrot.slane %v8560, 2
      %v8629 = vsel %vm451, %v8626, %v8628
      %v8630 = vrot.slane %v8561, 2
      %v8631 = vsel %vm451, %v8628, %v8630
      %v8632 = vrot.slane %v8562, 2
      %v8633 = vsel %vm451, %v8630, %v8632
      %8634 = vrot.lane.b32.xlu0 %v8619, 64
      %v8635 = vpop.permute.xlu0 %8634
      %8636 = vrot.lane.b32.xlu0 %v8621, 64
      %v8637 = vpop.permute.xlu0 %8636
      %8638 = vrot.lane.b32.xlu0 %v8623, 64
      %v8639 = vpop.permute.xlu0 %8638
      %8640 = vrot.lane.b32.xlu0 %v8625, 64
      %v8641 = vpop.permute.xlu0 %8640
      %8642 = vrot.lane.b32.xlu0 %v8627, 64
      %v8643 = vpop.permute.xlu0 %8642
      %8644 = vrot.lane.b32.xlu0 %v8629, 64
      %v8645 = vpop.permute.xlu0 %8644
      %8646 = vrot.lane.b32.xlu0 %v8631, 64
      %v8647 = vpop.permute.xlu0 %8646
      %8648 = vrot.lane.b32.xlu0 %v8633, 64
      %v8649 = vpop.permute.xlu0 %8648
      %8650 = vrot.lane.b32.xlu0 %v8632, 64
      %v8651 = vpop.permute.xlu0 %8650
      %v8661 = vrot.slane %v8554, 3
      %v8662 = vrot.slane %v8555, 3
      %v8663 = vsel %vm1130, %v8661, %v8662
      %v8664 = vrot.slane %v8556, 3
      %v8665 = vsel %vm1130, %v8662, %v8664
      %v8666 = vrot.slane %v8557, 3
      %v8667 = vsel %vm1130, %v8664, %v8666
      %v8668 = vrot.slane %v8558, 3
      %v8669 = vsel %vm1130, %v8666, %v8668
      %v8670 = vrot.slane %v8559, 3
      %v8671 = vsel %vm1130, %v8668, %v8670
      %v8672 = vrot.slane %v8560, 3
      %v8673 = vsel %vm1130, %v8670, %v8672
      %v8674 = vrot.slane %v8561, 3
      %v8675 = vsel %vm1130, %v8672, %v8674
      %v8676 = vrot.slane %v8562, 3
      %v8677 = vsel %vm1130, %v8674, %v8676
      %8678 = vrot.lane.b32.xlu0 %v8663, 96
      %v8679 = vpop.permute.xlu0 %8678
      %8680 = vrot.lane.b32.xlu0 %v8665, 96
      %v8681 = vpop.permute.xlu0 %8680
      %8682 = vrot.lane.b32.xlu0 %v8667, 96
      %v8683 = vpop.permute.xlu0 %8682
      %8684 = vrot.lane.b32.xlu0 %v8669, 96
      %v8685 = vpop.permute.xlu0 %8684
      %8686 = vrot.lane.b32.xlu0 %v8671, 96
      %v8687 = vpop.permute.xlu0 %8686
      %8688 = vrot.lane.b32.xlu0 %v8673, 96
      %v8689 = vpop.permute.xlu0 %8688
      %8690 = vrot.lane.b32.xlu0 %v8675, 96
      %v8691 = vpop.permute.xlu0 %8690
      %8692 = vrot.lane.b32.xlu0 %v8677, 96
      %v8693 = vpop.permute.xlu0 %8692
      %8694 = vrot.lane.b32.xlu0 %v8676, 96
      %v8695 = vpop.permute.xlu0 %8694
      %v8705 = vrot.slane %v8554, 4
      %v8706 = vrot.slane %v8555, 4
      %v8707 = vsel %vm2667, %v8705, %v8706
      %v8708 = vrot.slane %v8556, 4
      %v8709 = vsel %vm2667, %v8706, %v8708
      %v8710 = vrot.slane %v8557, 4
      %v8711 = vsel %vm2667, %v8708, %v8710
      %v8712 = vrot.slane %v8558, 4
      %v8713 = vsel %vm2667, %v8710, %v8712
      %v8714 = vrot.slane %v8559, 4
      %v8715 = vsel %vm2667, %v8712, %v8714
      %v8716 = vrot.slane %v8560, 4
      %v8717 = vsel %vm2667, %v8714, %v8716
      %v8718 = vrot.slane %v8561, 4
      %v8719 = vsel %vm2667, %v8716, %v8718
      %v8720 = vrot.slane %v8562, 4
      %v8721 = vsel %vm2667, %v8718, %v8720
      %v8731 = vrot.slane %v8555, 5
      %v8732 = vrot.slane %v8556, 5
      %v8733 = vsel %vm1252, %v8731, %v8732
      %v8734 = vrot.slane %v8557, 5
      %v8735 = vsel %vm1252, %v8732, %v8734
      %v8736 = vrot.slane %v8558, 5
      %v8737 = vsel %vm1252, %v8734, %v8736
      %v8738 = vrot.slane %v8559, 5
      %v8739 = vsel %vm1252, %v8736, %v8738
      %v8740 = vrot.slane %v8560, 5
      %v8741 = vsel %vm1252, %v8738, %v8740
      %v8742 = vrot.slane %v8561, 5
      %v8743 = vsel %vm1252, %v8740, %v8742
      %v8744 = vrot.slane %v8562, 5
      %v8745 = vsel %vm1252, %v8742, %v8744
      %8746 = vrot.lane.b32.xlu0 %v8731, 32
      %v8747 = vpop.permute.xlu0 %8746
      %8748 = vrot.lane.b32.xlu0 %v8733, 32
      %v8749 = vpop.permute.xlu0 %8748
      %8750 = vrot.lane.b32.xlu0 %v8735, 32
      %v8751 = vpop.permute.xlu0 %8750
      %8752 = vrot.lane.b32.xlu0 %v8737, 32
      %v8753 = vpop.permute.xlu0 %8752
      %8754 = vrot.lane.b32.xlu0 %v8739, 32
      %v8755 = vpop.permute.xlu0 %8754
      %8756 = vrot.lane.b32.xlu0 %v8741, 32
      %v8757 = vpop.permute.xlu0 %8756
      %8758 = vrot.lane.b32.xlu0 %v8743, 32
      %v8759 = vpop.permute.xlu0 %8758
      %8760 = vrot.lane.b32.xlu0 %v8745, 32
      %v8761 = vpop.permute.xlu0 %8760
      %8762 = vrot.lane.b32.xlu0 %v8744, 32
      %v8763 = vpop.permute.xlu0 %8762
      %v8774 = vrot.slane %v8555, 6
      %v8775 = vrot.slane %v8556, 6
      %v8776 = vsel %vm1174, %v8774, %v8775
      %v8777 = vrot.slane %v8557, 6
      %v8778 = vsel %vm1174, %v8775, %v8777
      %v8779 = vrot.slane %v8558, 6
      %v8780 = vsel %vm1174, %v8777, %v8779
      %v8781 = vrot.slane %v8559, 6
      %v8782 = vsel %vm1174, %v8779, %v8781
      %v8783 = vrot.slane %v8560, 6
      %v8784 = vsel %vm1174, %v8781, %v8783
      %v8785 = vrot.slane %v8561, 6
      %v8786 = vsel %vm1174, %v8783, %v8785
      %v8787 = vrot.slane %v8562, 6
      %v8788 = vsel %vm1174, %v8785, %v8787
      %v8789 = vrot.slane %v8563, 6
      %v8790 = vsel %vm1174, %v8787, %v8789
      %8791 = vrot.lane.b32.xlu0 %v8774, 64
      %v8792 = vpop.permute.xlu0 %8791
      %8793 = vrot.lane.b32.xlu0 %v8776, 64
      %v8794 = vpop.permute.xlu0 %8793
      %8795 = vrot.lane.b32.xlu0 %v8778, 64
      %v8796 = vpop.permute.xlu0 %8795
      %8797 = vrot.lane.b32.xlu0 %v8780, 64
      %v8798 = vpop.permute.xlu0 %8797
      %8799 = vrot.lane.b32.xlu0 %v8782, 64
      %v8800 = vpop.permute.xlu0 %8799
      %8801 = vrot.lane.b32.xlu0 %v8784, 64
      %v8802 = vpop.permute.xlu0 %8801
      %8803 = vrot.lane.b32.xlu0 %v8786, 64
      %v8804 = vpop.permute.xlu0 %8803
      %8805 = vrot.lane.b32.xlu0 %v8788, 64
      %v8806 = vpop.permute.xlu0 %8805
      %8807 = vrot.lane.b32.xlu0 %v8790, 64
      %v8808 = vpop.permute.xlu0 %8807
      %v8818 = vrot.slane %v8555, 7
      %v8819 = vrot.slane %v8556, 7
      %v8820 = vsel %vm530, %v8818, %v8819
      %v8821 = vrot.slane %v8557, 7
      %v8822 = vsel %vm530, %v8819, %v8821
      %v8823 = vrot.slane %v8558, 7
      %v8824 = vsel %vm530, %v8821, %v8823
      %v8825 = vrot.slane %v8559, 7
      %v8826 = vsel %vm530, %v8823, %v8825
      %v8827 = vrot.slane %v8560, 7
      %v8828 = vsel %vm530, %v8825, %v8827
      %v8829 = vrot.slane %v8561, 7
      %v8830 = vsel %vm530, %v8827, %v8829
      %v8831 = vrot.slane %v8562, 7
      %v8832 = vsel %vm530, %v8829, %v8831
      %v8833 = vrot.slane %v8563, 7
      %v8834 = vsel %vm530, %v8831, %v8833
      %8835 = vrot.lane.b32.xlu0 %v8818, 96
      %v8836 = vpop.permute.xlu0 %8835
      %8837 = vrot.lane.b32.xlu0 %v8820, 96
      %v8838 = vpop.permute.xlu0 %8837
      %8839 = vrot.lane.b32.xlu0 %v8822, 96
      %v8840 = vpop.permute.xlu0 %8839
      %8841 = vrot.lane.b32.xlu0 %v8824, 96
      %v8842 = vpop.permute.xlu0 %8841
      %8843 = vrot.lane.b32.xlu0 %v8826, 96
      %v8844 = vpop.permute.xlu0 %8843
      %8845 = vrot.lane.b32.xlu0 %v8828, 96
      %v8846 = vpop.permute.xlu0 %8845
      %8847 = vrot.lane.b32.xlu0 %v8830, 96
      %v8848 = vpop.permute.xlu0 %8847
      %8849 = vrot.lane.b32.xlu0 %v8832, 96
      %v8850 = vpop.permute.xlu0 %8849
      %8851 = vrot.lane.b32.xlu0 %v8834, 96
      %v8852 = vpop.permute.xlu0 %8851
      %v8862 = vrot.slane %v8563, 1
      %v8863 = vsel %vm407, %v8588, %v8862
      %8864 = vrot.lane.b32.xlu0 %v8863, 32
      %v8865 = vpop.permute.xlu0 %8864
      %8866 = vrot.lane.b32.xlu0 %v8862, 32
      %v8867 = vpop.permute.xlu0 %8866
      %v8870 = vrot.slane %v8563, 2
      %v8871 = vsel %vm451, %v8632, %v8870
      %8872 = vrot.lane.b32.xlu0 %v8871, 64
      %v8873 = vpop.permute.xlu0 %8872
      %8874 = vrot.lane.b32.xlu0 %v8870, 64
      %v8875 = vpop.permute.xlu0 %8874
      %v8878 = vsel %vm279, %v8554, %v8591
      %v8879 = vsel %vm279, %v8555, %v8593
      %v8880 = vsel %vm279, %v8556, %v8595
      %v8881 = vsel %vm279, %v8557, %v8597
      %v8882 = vsel %vm279, %v8558, %v8599
      %v8883 = vsel %vm279, %v8559, %v8601
      %v8884 = vsel %vm279, %v8560, %v8603
      %v8885 = vsel %vm279, %v8561, %v8605
      %v8886 = vsel %vm279, %v8562, %v8607
      %v8887 = vsel %vm505, %v8878, %v8635
      %v8888 = vsel %vm505, %v8879, %v8637
      %v8889 = vsel %vm505, %v8880, %v8639
      %v8890 = vsel %vm505, %v8881, %v8641
      %v8891 = vsel %vm505, %v8882, %v8643
      %v8892 = vsel %vm505, %v8883, %v8645
      %v8893 = vsel %vm505, %v8884, %v8647
      %v8894 = vsel %vm505, %v8885, %v8649
      %v8895 = vsel %vm505, %v8886, %v8651
      %v8896 = vsel %vm548, %v8887, %v8679
      %v8897 = vsel %vm548, %v8888, %v8681
      %v8898 = vsel %vm548, %v8889, %v8683
      %v8899 = vsel %vm548, %v8890, %v8685
      %v8900 = vsel %vm548, %v8891, %v8687
      %v8901 = vsel %vm548, %v8892, %v8689
      %v8902 = vsel %vm548, %v8893, %v8691
      %v8903 = vsel %vm548, %v8894, %v8693
      %v8904 = vsel %vm548, %v8895, %v8695
      %v8905 = vsel %vm279, %v8707, %v8747
      %v8906 = vsel %vm279, %v8709, %v8749
      %v8907 = vsel %vm279, %v8711, %v8751
      %v8908 = vsel %vm279, %v8713, %v8753
      %v8909 = vsel %vm279, %v8715, %v8755
      %v8910 = vsel %vm279, %v8717, %v8757
      %v8911 = vsel %vm279, %v8719, %v8759
      %v8912 = vsel %vm279, %v8721, %v8761
      %v8913 = vsel %vm279, %v8720, %v8763
      %v8914 = vsel %vm505, %v8905, %v8792
      %v8915 = vsel %vm505, %v8906, %v8794
      %v8916 = vsel %vm505, %v8907, %v8796
      %v8917 = vsel %vm505, %v8908, %v8798
      %v8918 = vsel %vm505, %v8909, %v8800
      %v8919 = vsel %vm505, %v8910, %v8802
      %v8920 = vsel %vm505, %v8911, %v8804
      %v8921 = vsel %vm505, %v8912, %v8806
      %v8922 = vsel %vm505, %v8913, %v8808
      %v8923 = vsel %vm548, %v8914, %v8836
      %v8924 = vsel %vm548, %v8915, %v8838
      %v8925 = vsel %vm548, %v8916, %v8840
      %v8926 = vsel %vm548, %v8917, %v8842
      %v8927 = vsel %vm548, %v8918, %v8844
      %v8928 = vsel %vm548, %v8919, %v8846
      %v8929 = vsel %vm548, %v8920, %v8848
      %v8930 = vsel %vm548, %v8921, %v8850
      %v8931 = vsel %vm548, %v8922, %v8852
      %v8932 = vsel %vm279, %v8562, %v8865
      %v8933 = vsel %vm279, %v8563, %v8867
      %v8934 = vsel %vm505, %v8932, %v8873
      %v8935 = vsel %vm505, %v8933, %v8875
      %v8937 = vlaneseq
      %v8938 = vshrl.u32 %v8937, 7
      %v8939 = vsub.s32 0, %v8938
      %v8940 = vrot.slane %v8489, %v8939
      %v8969 = vrot.slane %v8896, 3
      %v8970 = vrot.slane %v8897, 3
      %v8971 = vsel %vm1130, %v8969, %v8970
      %v8972 = vrot.slane %v8923, 3
      %v8973 = vrot.slane %v8924, 3
      %v8974 = vsel %vm1130, %v8972, %v8973
      %v8975 = vrot.slane %v8888, 3
      %v8976 = vrot.slane %v8889, 3
      %v8977 = vsel %vm1130, %v8975, %v8976
      %v8978 = vrot.slane %v8898, 3
      %v8979 = vsel %vm1130, %v8970, %v8978
      %v8980 = vrot.slane %v8925, 3
      %v8981 = vsel %vm1130, %v8973, %v8980
      %v8982 = vrot.slane %v8890, 3
      %v8983 = vsel %vm1130, %v8976, %v8982
      %v8984 = vrot.slane %v8899, 3
      %v8985 = vsel %vm1130, %v8978, %v8984
      %v8986 = vrot.slane %v8926, 3
      %v8987 = vsel %vm1130, %v8980, %v8986
      %v8988 = vrot.slane %v8891, 3
      %v8989 = vsel %vm1130, %v8982, %v8988
      %v8990 = vrot.slane %v8900, 3
      %v8991 = vsel %vm1130, %v8984, %v8990
      %v8992 = vrot.slane %v8927, 3
      %v8993 = vsel %vm1130, %v8986, %v8992
      %v8994 = vrot.slane %v8892, 3
      %v8995 = vsel %vm1130, %v8988, %v8994
      %v8996 = vrot.slane %v8901, 3
      %v8997 = vsel %vm1130, %v8990, %v8996
      %v8998 = vrot.slane %v8928, 3
      %v8999 = vsel %vm1130, %v8992, %v8998
      %v9000 = vrot.slane %v8893, 3
      %v9001 = vsel %vm1130, %v8994, %v9000
      %v9002 = vrot.slane %v8902, 3
      %v9003 = vsel %vm1130, %v8996, %v9002
      %v9004 = vrot.slane %v8929, 3
      %v9005 = vsel %vm1130, %v8998, %v9004
      %v9006 = vrot.slane %v8894, 3
      %v9007 = vsel %vm1130, %v9000, %v9006
      %v9008 = vrot.slane %v8903, 3
      %v9009 = vsel %vm1130, %v9002, %v9008
      %v9010 = vrot.slane %v8930, 3
      %v9011 = vsel %vm1130, %v9004, %v9010
      %v9012 = vrot.slane %v8934, 3
      %v9013 = vsel %vm1130, %v9006, %v9012
      %v9014 = vrot.slane %v8904, 3
      %v9015 = vsel %vm1130, %v9008, %v9014
      %v9016 = vrot.slane %v8931, 3
      %v9017 = vsel %vm1130, %v9010, %v9016
      %v9018 = vrot.slane %v8935, 3
      %v9019 = vsel %vm1130, %v9012, %v9018
      %v9036 = vsel %vm548, %v8977, 0
      %v9038 = vsel %vm548, %v8983, 0
      %v9040 = vsel %vm548, %v8989, 0
      %v9042 = vsel %vm548, %v8995, 0
      %v9044 = vsel %vm548, %v9001, 0
      %v9046 = vsel %vm548, %v9007, 0
      %v9048 = vsel %vm548, %v9013, 0
      %v9050 = vsel %vm548, %v9019, 0
      %9052 = vmatprep.subr.mxu0 0.0
      %9053 = vmatpush1.msra.mxu0 %v8444
      %9054 = vmatprep.subr.mxu0 0.0
      %9055 = vmatpush1.msra.mxu0 %v8445
      %9056 = vmatprep.subr.mxu0 0.0
      %9057 = vmatpush1.msra.mxu0 %v8446
      %9058 = vmatprep.subr.mxu0 0.0
      %9059 = vmatpush1.msra.mxu0 %v8447
      %9060 = vmatprep.subr.mxu0 0.0
      %9061 = vmatpush1.msra.mxu0 %v8448
      %9062 = vmatprep.subr.mxu0 0.0
      %9063 = vmatpush1.msra.mxu0 %v8449
      %9064 = vmatprep.subr.mxu0 0.0
      %9065 = vmatpush1.msra.mxu0 %v8450
      %9066 = vmatprep.subr.mxu0 0.0
      %9067 = vmatpush1.msra.mxu0 %v8451
      %9068 = vmatprep.subr.mxu0 0.0
      %9069 = vmatpush1.msra.mxu0 %v8452
      %9070 = vmatprep.subr.mxu0 0.0
      %9071 = vmatpush1.msra.mxu0 %v8453
      %9072 = vmatprep.subr.mxu0 0.0
      %9073 = vmatpush1.msra.mxu0 %v8454
      %9074 = vmatprep.subr.mxu0 0.0
      %9075 = vmatpush1.msra.mxu0 %v8455
      %9076 = vmatprep.subr.mxu0 0.0
      %9077 = vmatpush1.msra.mxu0 %v8456
      %9078 = vmatprep.subr.mxu0 0.0
      %9079 = vmatpush1.msra.mxu0 %v8457
      %9080 = vmatprep.subr.mxu0 0.0
      %9081 = vmatpush1.msra.mxu0 %v8458
      %9082 = vmatprep.subr.mxu0 0.0
      %9083 = vmatpush1.msra.mxu0 %v8459
      %9084 = vmatprep.subr.mxu0 0.0
      %9085 = vmatpush1.msra.mxu0 %v8460
      %9086 = vmatprep.subr.mxu0 0.0
      %9087 = vmatpush1.msra.mxu0 %v8461
      %9088 = vmatprep.subr.mxu0 0.0
      %9089 = vmatpush1.msra.mxu0 %v8462
      %9090 = vmatprep.subr.mxu0 0.0
      %9091 = vmatpush1.msra.mxu0 %v8463
      %9092 = vmatprep.subr.mxu0 0.0
      %9093 = vmatpush1.msra.mxu0 %v8464
      %9094 = vmatprep.subr.mxu0 0.0
      %9095 = vmatpush1.msra.mxu0 %v8465
      %9096 = vmatprep.subr.mxu0 0.0
      %9097 = vmatpush1.msra.mxu0 %v8466
      %9098 = vmatprep.subr.mxu0 0.0
      %9099 = vmatpush1.msra.mxu0 %v8467
      %9100 = vmatprep.subr.mxu0 0.0
      %9101 = vmatpush1.msra.mxu0 %v8468
      %9102 = vmatprep.subr.mxu0 0.0
      %9103 = vmatpush1.msra.mxu0 %v8469
      %9104 = vmatprep.subr.mxu0 0.0
      %9105 = vmatpush1.msra.mxu0 %v8470
      %9106 = vmatprep.subr.mxu0 0.0
      %9107 = vmatpush1.msra.mxu0 %v8471
      %9108 = vmatprep.subr.mxu0 0.0
      %9109 = vmatpush1.msra.mxu0 %v8472
      %9110 = vmatprep.subr.mxu0 0.0
      %9111 = vmatpush1.msra.mxu0 %v8473
      %9112 = vmatprep.subr.mxu0 0.0
      %9113 = vmatpush1.msra.mxu0 %v8474
      %9114 = vmatprep.subr.mxu0 0.0
      %9115 = vmatpush1.msra.mxu0 %v8475
      %9116 = vmatprep.mubr.f32.mxu0 %v8974
      %9117 = vmatmul.mubr.f32.gmra.mrb[0].mxu0 %v8971
      %v9118 = vpop.f32.mrb[0].mxu0
      %v9119 = vadd.f32 %v8940, %v9118
      %v9120 = vpop.f32.mrb[0].mxu0
      %9121 = vmatprep.mubr.f32.mxu0 %v8981
      %9122 = vmatmul.mubr.f32.gmra.mrb[0].mxu0 %v8979
      %v9123 = vpop.f32.mrb[0].mxu0
      %v9124 = vadd.f32 %v8940, %v9123
      %v9125 = vpop.f32.mrb[0].mxu0
      %9126 = vmatprep.mubr.f32.mxu0 %v8987
      %9127 = vmatmul.mubr.f32.gmra.mrb[0].mxu0 %v8985
      %v9128 = vpop.f32.mrb[0].mxu0
      %v9129 = vadd.f32 %v8940, %v9128
      %v9130 = vpop.f32.mrb[0].mxu0
      %9131 = vmatprep.mubr.f32.mxu0 %v8993
      %9132 = vmatmul.mubr.f32.gmra.mrb[0].mxu0 %v8991
      %v9133 = vpop.f32.mrb[0].mxu0
      %v9134 = vadd.f32 %v8940, %v9133
      %v9135 = vpop.f32.mrb[0].mxu0
      %9136 = vmatprep.mubr.f32.mxu0 %v8999
      %9137 = vmatmul.mubr.f32.gmra.mrb[0].mxu0 %v8997
      %v9138 = vpop.f32.mrb[0].mxu0
      %v9139 = vadd.f32 %v8940, %v9138
      %v9140 = vpop.f32.mrb[0].mxu0
      %9141 = vmatprep.mubr.f32.mxu0 %v9005
      %9142 = vmatmul.mubr.f32.gmra.mrb[0].mxu0 %v9003
      %v9143 = vpop.f32.mrb[0].mxu0
      %v9144 = vadd.f32 %v8940, %v9143
      %v9145 = vpop.f32.mrb[0].mxu0
      %9146 = vmatprep.mubr.f32.mxu0 %v9011
      %9147 = vmatmul.mubr.f32.gmra.mrb[0].mxu0 %v9009
      %v9148 = vpop.f32.mrb[0].mxu0
      %v9149 = vadd.f32 %v8940, %v9148
      %v9150 = vpop.f32.mrb[0].mxu0
      %9151 = vmatprep.mubr.f32.mxu0 %v9017
      %9152 = vmatmul.mubr.f32.gmra.mrb[0].mxu0 %v9015
      %v9153 = vpop.f32.mrb[0].mxu0
      %v9154 = vadd.f32 %v8940, %v9153
      %v9155 = vpop.f32.mrb[0].mxu0
      %9156 = vdwg.mxu0
      %9157 = vmatprep.subr.mxu0 0.0
      %9158 = vmatpush1.msra.mxu0 %v8476
      %9159 = vmatprep.subr.mxu0 0.0
      %9160 = vmatpush1.msra.mxu0 %v8477
      %9161 = vmatprep.subr.mxu0 0.0
      %9162 = vmatpush1.msra.mxu0 %v8478
      %9163 = vmatprep.subr.mxu0 0.0
      %9164 = vmatpush1.msra.mxu0 %v8479
      %9165 = vmatprep.subr.mxu0 0.0
      %9166 = vmatpush1.msra.mxu0 %v8480
      %9167 = vmatprep.subr.mxu0 0.0
      %9168 = vmatpush1.msra.mxu0 %v8481
      %9169 = vmatprep.subr.mxu0 0.0
      %9170 = vmatpush1.msra.mxu0 %v8482
      %9171 = vmatprep.subr.mxu0 0.0
      %9172 = vmatpush1.msra.mxu0 %v8483
      %9173 = vmatprep.subr.mxu0 0.0
      %9174 = vmatpush1.msra.mxu0 %v8484
      %9175 = vmatprep.subr.mxu0 0.0
      %9176 = vmatpush1.msra.mxu0 %v8485
      %9177 = vmatprep.subr.mxu0 0.0
      %9178 = vmatpush1.msra.mxu0 %v8486
      %9179 = vmatprep.subr.mxu0 0.0
      %9180 = vmatpush1.msra.mxu0 %v8487
      %9181 = vmatprep.subr.mxu0 0.0
      %9182 = vmatpush1.msra.mxu0 0.0
      %9183 = vmatprep.subr.mxu0 0.0
      %9184 = vmatpush1.msra.mxu0 0.0
      %9185 = vmatprep.subr.mxu0 0.0
      %9186 = vmatpush1.msra.mxu0 0.0
      %9187 = vmatprep.subr.mxu0 0.0
      %9188 = vmatpush1.msra.mxu0 0.0
      %9189 = vmatprep.subr.mxu0 0.0
      %9190 = vmatpush1.msra.mxu0 0.0
      %9191 = vmatprep.subr.mxu0 0.0
      %9192 = vmatpush1.msra.mxu0 0.0
      %9193 = vmatprep.subr.mxu0 0.0
      %9194 = vmatpush1.msra.mxu0 0.0
      %9195 = vmatprep.subr.mxu0 0.0
      %9196 = vmatpush1.msra.mxu0 0.0
      %9197 = vmatprep.subr.mxu0 0.0
      %9198 = vmatpush1.msra.mxu0 0.0
      %9199 = vmatprep.subr.mxu0 0.0
      %9200 = vmatpush1.msra.mxu0 0.0
      %9201 = vmatprep.subr.mxu0 0.0
      %9202 = vmatpush1.msra.mxu0 0.0
      %9203 = vmatprep.subr.mxu0 0.0
      %9204 = vmatpush1.msra.mxu0 0.0
      %9205 = vmatprep.subr.mxu0 0.0
      %9206 = vmatpush1.msra.mxu0 0.0
      %9207 = vmatprep.subr.mxu0 0.0
      %9208 = vmatpush1.msra.mxu0 0.0
      %9209 = vmatprep.subr.mxu0 0.0
      %9210 = vmatpush1.msra.mxu0 0.0
      %9211 = vmatprep.subr.mxu0 0.0
      %9212 = vmatpush1.msra.mxu0 0.0
      %9213 = vmatprep.subr.mxu0 0.0
      %9214 = vmatpush1.msra.mxu0 0.0
      %9215 = vmatprep.subr.mxu0 0.0
      %9216 = vmatpush1.msra.mxu0 0.0
      %9217 = vmatprep.subr.mxu0 0.0
      %9218 = vmatpush1.msra.mxu0 0.0
      %9219 = vmatprep.subr.mxu0 0.0
      %9220 = vmatpush1.msra.mxu0 0.0
      %9221 = vmatprep.mubr.f32.mxu0 0.0
      %9222 = vmatmul.mubr.f32.gmra.mrb[0].mxu0 %v9036
      %v9223 = vpop.f32.mrb[0].mxu0
      %v9224 = vadd.f32 %v9119, %v9223
      %v9225 = vpop.f32.mrb[0].mxu0
      %9226 = vmatprep.mubr.f32.mxu0 0.0
      %9227 = vmatmul.mubr.f32.gmra.mrb[0].mxu0 %v9038
      %v9228 = vpop.f32.mrb[0].mxu0
      %v9229 = vadd.f32 %v9124, %v9228
      %v9230 = vpop.f32.mrb[0].mxu0
      %9231 = vmatprep.mubr.f32.mxu0 0.0
      %9232 = vmatmul.mubr.f32.gmra.mrb[0].mxu0 %v9040
      %v9233 = vpop.f32.mrb[0].mxu0
      %v9234 = vadd.f32 %v9129, %v9233
      %v9235 = vpop.f32.mrb[0].mxu0
      %9236 = vmatprep.mubr.f32.mxu0 0.0
      %9237 = vmatmul.mubr.f32.gmra.mrb[0].mxu0 %v9042
      %v9238 = vpop.f32.mrb[0].mxu0
      %v9239 = vadd.f32 %v9134, %v9238
      %v9240 = vpop.f32.mrb[0].mxu0
      %9241 = vmatprep.mubr.f32.mxu0 0.0
      %9242 = vmatmul.mubr.f32.gmra.mrb[0].mxu0 %v9044
      %v9243 = vpop.f32.mrb[0].mxu0
      %v9244 = vadd.f32 %v9139, %v9243
      %v9245 = vpop.f32.mrb[0].mxu0
      %9246 = vmatprep.mubr.f32.mxu0 0.0
      %9247 = vmatmul.mubr.f32.gmra.mrb[0].mxu0 %v9046
      %v9248 = vpop.f32.mrb[0].mxu0
      %v9249 = vadd.f32 %v9144, %v9248
      %v9250 = vpop.f32.mrb[0].mxu0
      %9251 = vmatprep.mubr.f32.mxu0 0.0
      %9252 = vmatmul.mubr.f32.gmra.mrb[0].mxu0 %v9048
      %v9253 = vpop.f32.mrb[0].mxu0
      %v9254 = vadd.f32 %v9149, %v9253
      %v9255 = vpop.f32.mrb[0].mxu0
      %9256 = vmatprep.mubr.f32.mxu0 0.0
      %9257 = vmatmul.mubr.f32.gmra.mrb[0].mxu0 %v9050
      %v9258 = vpop.f32.mrb[0].mxu0
      %v9259 = vadd.f32 %v9154, %v9258
      %v9260 = vpop.f32.mrb[0].mxu0
      %9261 = vdwg.mxu0
      %v9262 = vadd.f32 %v9224, %v7588
      %v9263 = vadd.f32 %v9229, %v7589
      %v9264 = vadd.f32 %v9234, %v7590
      %v9265 = vadd.f32 %v9239, %v7591
      %v9266 = vadd.f32 %v9244, %v7592
      %v9267 = vadd.f32 %v9249, %v7593
      %v9268 = vadd.f32 %v9254, %v7594
      %v9269 = vadd.f32 %v9259, %v7595
      %s9270 = scalar_lea.vmem %s5, 1408
      %v9271 = vld [vmem:[%s9270] sm:$0xff]
      %v9272 = vld [vmem:[%s9270 + $0x8] sm:$0xff]
      %v9273 = vld [vmem:[%s9270 + $0x10] sm:$0xff]
      %v9274 = vld [vmem:[%s9270 + $0x18] sm:$0xff]
      %v9275 = vld [vmem:[%s9270 + $0x20] sm:$0xff]
      %v9276 = vld [vmem:[%s9270 + $0x28] sm:$0xff]
      %v9277 = vld [vmem:[%s9270 + $0x30] sm:$0xff]
      %v9278 = vld [vmem:[%s9270 + $0x38] sm:$0xff]
      %v9279 = vld [vmem:[%s9270 + $0x40] sm:$0xff]
      %v9280 = vld [vmem:[%s9270 + $0x48] sm:$0xff]
      %v9281 = vld [vmem:[%s9270 + $0x50] sm:$0xff]
      %v9282 = vld [vmem:[%s9270 + $0x58] sm:$0xff]
      %v9283 = vld [vmem:[%s9270 + $0x60] sm:$0xff]
      %v9284 = vld [vmem:[%s9270 + $0x68] sm:$0xff]
      %v9285 = vld [vmem:[%s9270 + $0x70] sm:$0xff]
      %v9286 = vld [vmem:[%s9270 + $0x78] sm:$0xff]
      %v9287 = vld [vmem:[%s9270 + $0x80] sm:$0xff]
      %v9288 = vld [vmem:[%s9270 + $0x88] sm:$0xff]
      %v9289 = vld [vmem:[%s9270 + $0x90] sm:$0xff]
      %v9290 = vld [vmem:[%s9270 + $0x98] sm:$0xff]
      %v9291 = vld [vmem:[%s9270 + $0xa0] sm:$0xff]
      %v9292 = vld [vmem:[%s9270 + $0xa8] sm:$0xff]
      %v9293 = vld [vmem:[%s9270 + $0xb0] sm:$0xff]
      %v9294 = vld [vmem:[%s9270 + $0xb8] sm:$0xff]
      %v9295 = vld [vmem:[%s9270 + $0xc0] sm:$0xff]
      %v9296 = vld [vmem:[%s9270 + $0xc8] sm:$0xff]
      %v9297 = vld [vmem:[%s9270 + $0xd0] sm:$0xff]
      %v9298 = vld [vmem:[%s9270 + $0xd8] sm:$0xff]
      %v9299 = vld [vmem:[%s9270 + $0xe0] sm:$0xff]
      %v9300 = vld [vmem:[%s9270 + $0xe8] sm:$0xff]
      %v9301 = vld [vmem:[%s9270 + $0xf0] sm:$0xff]
      %v9302 = vld [vmem:[%s9270 + $0xf8] sm:$0xff]
      %v9303 = vld [vmem:[%s9270 + $0x100] sm:$0xff]
      %v9304 = vld [vmem:[%s9270 + $0x108] sm:$0xff]
      %v9305 = vld [vmem:[%s9270 + $0x110] sm:$0xff]
      %v9306 = vld [vmem:[%s9270 + $0x118] sm:$0xff]
      %v9307 = vld [vmem:[%s9270 + $0x120] sm:$0xff]
      %v9308 = vld [vmem:[%s9270 + $0x128] sm:$0xff]
      %v9309 = vld [vmem:[%s9270 + $0x130] sm:$0xff]
      %v9310 = vld [vmem:[%s9270 + $0x138] sm:$0xff]
      %v9311 = vld [vmem:[%s9270 + $0x140] sm:$0xff]
      %v9312 = vld [vmem:[%s9270 + $0x148] sm:$0xff]
      %v9313 = vld [vmem:[%s9270 + $0x150] sm:$0xff]
      %v9314 = vld [vmem:[%s9270 + $0x158] sm:$0xff]
      %s9315 = scalar_lea.vmem %s6, 4
      %v9316 = vld [vmem:[%s9315] sm:$0x1]
      %v9317 = vxor.u32 %v9262, 2147483648
      %v9318 = vxor.u32 %v9263, 2147483648
      %v9319 = vxor.u32 %v9264, 2147483648
      %v9320 = vxor.u32 %v9265, 2147483648
      %v9321 = vxor.u32 %v9266, 2147483648
      %v9322 = vxor.u32 %v9267, 2147483648
      %v9323 = vxor.u32 %v9268, 2147483648
      %v9324 = vxor.u32 %v9269, 2147483648
      %v9325 = vmul.f32 %v9317, 1.442695
      %v9326 = vpow.pop %v9325
      %v9327 = vmul.f32 %v9318, 1.442695
      %v9328 = vpow.pop %v9327
      %v9329 = vmul.f32 %v9319, 1.442695
      %v9330 = vpow.pop %v9329
      %v9331 = vmul.f32 %v9320, 1.442695
      %v9332 = vpow.pop %v9331
      %v9333 = vmul.f32 %v9321, 1.442695
      %v9334 = vpow.pop %v9333
      %v9335 = vmul.f32 %v9322, 1.442695
      %v9336 = vpow.pop %v9335
      %v9337 = vmul.f32 %v9323, 1.442695
      %v9338 = vpow.pop %v9337
      %v9339 = vmul.f32 %v9324, 1.442695
      %v9340 = vpow.pop %v9339
      %v9341 = vadd.f32 %v9326, 1.0
      %v9342 = vadd.f32 %v9328, 1.0
      %v9343 = vadd.f32 %v9330, 1.0
      %v9344 = vadd.f32 %v9332, 1.0
      %v9345 = vadd.f32 %v9334, 1.0
      %v9346 = vadd.f32 %v9336, 1.0
      %v9347 = vadd.f32 %v9338, 1.0
      %v9348 = vadd.f32 %v9340, 1.0
      %v9349 = vrcp.pop %v9341
      %v9350 = vmul.f32 1.0, %v9349
      %v9351 = vrcp.pop %v9342
      %v9352 = vmul.f32 1.0, %v9351
      %v9353 = vrcp.pop %v9343
      %v9354 = vmul.f32 1.0, %v9353
      %v9355 = vrcp.pop %v9344
      %v9356 = vmul.f32 1.0, %v9355
      %v9357 = vrcp.pop %v9345
      %v9358 = vmul.f32 1.0, %v9357
      %v9359 = vrcp.pop %v9346
      %v9360 = vmul.f32 1.0, %v9359
      %v9361 = vrcp.pop %v9347
      %v9362 = vmul.f32 1.0, %v9361
      %v9363 = vrcp.pop %v9348
      %v9364 = vmul.f32 1.0, %v9363
      %v9365 = vmul.f32 %v9262, %v9350
      %v9366 = vmul.f32 %v9263, %v9352
      %v9367 = vmul.f32 %v9264, %v9354
      %v9368 = vmul.f32 %v9265, %v9356
      %v9369 = vmul.f32 %v9266, %v9358
      %v9370 = vmul.f32 %v9267, %v9360
      %v9371 = vmul.f32 %v9268, %v9362
      %v9372 = vmul.f32 %v9269, %v9364
      %9373 = vst.msk [vmem:[#allocation4 + $0x20] sm:$0xff] %vm279, %v9365
      %9374 = vst.msk [vmem:[#allocation4 + $0x28] sm:$0xff] %vm279, %v9366
      %9375 = vst.msk [vmem:[#allocation4 + $0x30] sm:$0xff] %vm279, %v9367
      %9376 = vst.msk [vmem:[#allocation4 + $0x38] sm:$0xff] %vm279, %v9368
      %9377 = vst.msk [vmem:[#allocation4 + $0x40] sm:$0xff] %vm279, %v9369
      %9378 = vst.msk [vmem:[#allocation4 + $0x48] sm:$0xff] %vm279, %v9370
      %9379 = vst.msk [vmem:[#allocation4 + $0x50] sm:$0xff] %vm279, %v9371
      %9380 = vst.msk [vmem:[#allocation4 + $0x58] sm:$0xff] %vm279, %v9372
      %v9381 = vld [vmem:[#allocation4] sm:$0xff]
      %v9382 = vld [vmem:[#allocation4 + $0x8] sm:$0xff]
      %v9383 = vld [vmem:[#allocation4 + $0x10] sm:$0xff]
      %v9384 = vld [vmem:[#allocation4 + $0x18] sm:$0xff]
      %v9385 = vld [vmem:[#allocation4 + $0x20] sm:$0xff]
      %v9386 = vld [vmem:[#allocation4 + $0x28] sm:$0xff]
      %v9387 = vld [vmem:[#allocation4 + $0x30] sm:$0xff]
      %v9388 = vld [vmem:[#allocation4 + $0x38] sm:$0xff]
      %v9389 = vld [vmem:[#allocation4 + $0x40] sm:$0xff]
      %v9390 = vld [vmem:[#allocation4 + $0x48] sm:$0xff]
      %v9391 = vld [vmem:[#allocation4 + $0x50] sm:$0xff]
      %v9392 = vld [vmem:[#allocation4 + $0x58] sm:$0xff]
      %v9393 = vld [vmem:[#allocation4 + $0x60] sm:$0xff]
      %v9394 = vld [vmem:[#allocation4 + $0x68] sm:$0xff]
      %v9395 = vld [vmem:[#allocation4 + $0x70] sm:$0xff]
      %v9396 = vld [vmem:[#allocation4 + $0x78] sm:$0xff]
      %v9406 = vrot.slane %v9382, 5
      %v9407 = vrot.slane %v9383, 5
      %v9408 = vsel %vm1252, %v9406, %v9407
      %v9409 = vrot.slane %v9384, 5
      %v9410 = vsel %vm1252, %v9407, %v9409
      %v9411 = vrot.slane %v9385, 5
      %v9412 = vsel %vm1252, %v9409, %v9411
      %v9413 = vrot.slane %v9386, 5
      %v9414 = vsel %vm1252, %v9411, %v9413
      %v9415 = vrot.slane %v9387, 5
      %v9416 = vsel %vm1252, %v9413, %v9415
      %v9417 = vrot.slane %v9388, 5
      %v9418 = vsel %vm1252, %v9415, %v9417
      %v9419 = vrot.slane %v9389, 5
      %v9420 = vsel %vm1252, %v9417, %v9419
      %v9421 = vrot.slane %v9390, 5
      %v9422 = vsel %vm1252, %v9419, %v9421
      %9423 = vrot.lane.b32.xlu0 %v9406, 32
      %v9424 = vpop.permute.xlu0 %9423
      %9425 = vrot.lane.b32.xlu0 %v9408, 32
      %v9426 = vpop.permute.xlu0 %9425
      %9427 = vrot.lane.b32.xlu0 %v9410, 32
      %v9428 = vpop.permute.xlu0 %9427
      %9429 = vrot.lane.b32.xlu0 %v9412, 32
      %v9430 = vpop.permute.xlu0 %9429
      %9431 = vrot.lane.b32.xlu0 %v9414, 32
      %v9432 = vpop.permute.xlu0 %9431
      %9433 = vrot.lane.b32.xlu0 %v9416, 32
      %v9434 = vpop.permute.xlu0 %9433
      %9435 = vrot.lane.b32.xlu0 %v9418, 32
      %v9436 = vpop.permute.xlu0 %9435
      %9437 = vrot.lane.b32.xlu0 %v9420, 32
      %v9438 = vpop.permute.xlu0 %9437
      %9439 = vrot.lane.b32.xlu0 %v9422, 32
      %v9440 = vpop.permute.xlu0 %9439
      %v9451 = vrot.slane %v9383, 2
      %v9452 = vrot.slane %v9384, 2
      %v9453 = vsel %vm451, %v9451, %v9452
      %v9454 = vrot.slane %v9385, 2
      %v9455 = vsel %vm451, %v9452, %v9454
      %v9456 = vrot.slane %v9386, 2
      %v9457 = vsel %vm451, %v9454, %v9456
      %v9458 = vrot.slane %v9387, 2
      %v9459 = vsel %vm451, %v9456, %v9458
      %v9460 = vrot.slane %v9388, 2
      %v9461 = vsel %vm451, %v9458, %v9460
      %v9462 = vrot.slane %v9389, 2
      %v9463 = vsel %vm451, %v9460, %v9462
      %v9464 = vrot.slane %v9390, 2
      %v9465 = vsel %vm451, %v9462, %v9464
      %v9466 = vrot.slane %v9391, 2
      %v9467 = vsel %vm451, %v9464, %v9466
      %9468 = vrot.lane.b32.xlu0 %v9451, 64
      %v9469 = vpop.permute.xlu0 %9468
      %9470 = vrot.lane.b32.xlu0 %v9453, 64
      %v9471 = vpop.permute.xlu0 %9470
      %9472 = vrot.lane.b32.xlu0 %v9455, 64
      %v9473 = vpop.permute.xlu0 %9472
      %9474 = vrot.lane.b32.xlu0 %v9457, 64
      %v9475 = vpop.permute.xlu0 %9474
      %9476 = vrot.lane.b32.xlu0 %v9459, 64
      %v9477 = vpop.permute.xlu0 %9476
      %9478 = vrot.lane.b32.xlu0 %v9461, 64
      %v9479 = vpop.permute.xlu0 %9478
      %9480 = vrot.lane.b32.xlu0 %v9463, 64
      %v9481 = vpop.permute.xlu0 %9480
      %9482 = vrot.lane.b32.xlu0 %v9465, 64
      %v9483 = vpop.permute.xlu0 %9482
      %9484 = vrot.lane.b32.xlu0 %v9467, 64
      %v9485 = vpop.permute.xlu0 %9484
      %v9495 = vrot.slane %v9383, 7
      %v9496 = vrot.slane %v9384, 7
      %v9497 = vsel %vm530, %v9495, %v9496
      %v9498 = vrot.slane %v9385, 7
      %v9499 = vsel %vm530, %v9496, %v9498
      %v9500 = vrot.slane %v9386, 7
      %v9501 = vsel %vm530, %v9498, %v9500
      %v9502 = vrot.slane %v9387, 7
      %v9503 = vsel %vm530, %v9500, %v9502
      %v9504 = vrot.slane %v9388, 7
      %v9505 = vsel %vm530, %v9502, %v9504
      %v9506 = vrot.slane %v9389, 7
      %v9507 = vsel %vm530, %v9504, %v9506
      %v9508 = vrot.slane %v9390, 7
      %v9509 = vsel %vm530, %v9506, %v9508
      %v9510 = vrot.slane %v9391, 7
      %v9511 = vsel %vm530, %v9508, %v9510
      %9512 = vrot.lane.b32.xlu0 %v9495, 96
      %v9513 = vpop.permute.xlu0 %9512
      %9514 = vrot.lane.b32.xlu0 %v9497, 96
      %v9515 = vpop.permute.xlu0 %9514
      %9516 = vrot.lane.b32.xlu0 %v9499, 96
      %v9517 = vpop.permute.xlu0 %9516
      %9518 = vrot.lane.b32.xlu0 %v9501, 96
      %v9519 = vpop.permute.xlu0 %9518
      %9520 = vrot.lane.b32.xlu0 %v9503, 96
      %v9521 = vpop.permute.xlu0 %9520
      %9522 = vrot.lane.b32.xlu0 %v9505, 96
      %v9523 = vpop.permute.xlu0 %9522
      %9524 = vrot.lane.b32.xlu0 %v9507, 96
      %v9525 = vpop.permute.xlu0 %9524
      %9526 = vrot.lane.b32.xlu0 %v9509, 96
      %v9527 = vpop.permute.xlu0 %9526
      %9528 = vrot.lane.b32.xlu0 %v9511, 96
      %v9529 = vpop.permute.xlu0 %9528
      %v9540 = vrot.slane %v9384, 4
      %v9541 = vrot.slane %v9385, 4
      %v9542 = vsel %vm2667, %v9540, %v9541
      %v9543 = vrot.slane %v9386, 4
      %v9544 = vsel %vm2667, %v9541, %v9543
      %v9545 = vrot.slane %v9387, 4
      %v9546 = vsel %vm2667, %v9543, %v9545
      %v9547 = vrot.slane %v9388, 4
      %v9548 = vsel %vm2667, %v9545, %v9547
      %v9549 = vrot.slane %v9389, 4
      %v9550 = vsel %vm2667, %v9547, %v9549
      %v9551 = vrot.slane %v9390, 4
      %v9552 = vsel %vm2667, %v9549, %v9551
      %v9553 = vrot.slane %v9391, 4
      %v9554 = vsel %vm2667, %v9551, %v9553
      %v9555 = vrot.slane %v9392, 4
      %v9556 = vsel %vm2667, %v9553, %v9555
      %v9566 = vrot.slane %v9385, 1
      %v9567 = vrot.slane %v9386, 1
      %v9568 = vsel %vm407, %v9566, %v9567
      %v9569 = vrot.slane %v9387, 1
      %v9570 = vsel %vm407, %v9567, %v9569
      %v9571 = vrot.slane %v9388, 1
      %v9572 = vsel %vm407, %v9569, %v9571
      %v9573 = vrot.slane %v9389, 1
      %v9574 = vsel %vm407, %v9571, %v9573
      %v9575 = vrot.slane %v9390, 1
      %v9576 = vsel %vm407, %v9573, %v9575
      %v9577 = vrot.slane %v9391, 1
      %v9578 = vsel %vm407, %v9575, %v9577
      %v9579 = vrot.slane %v9392, 1
      %v9580 = vsel %vm407, %v9577, %v9579
      %9581 = vrot.lane.b32.xlu0 %v9566, 32
      %v9582 = vpop.permute.xlu0 %9581
      %9583 = vrot.lane.b32.xlu0 %v9568, 32
      %v9584 = vpop.permute.xlu0 %9583
      %9585 = vrot.lane.b32.xlu0 %v9570, 32
      %v9586 = vpop.permute.xlu0 %9585
      %9587 = vrot.lane.b32.xlu0 %v9572, 32
      %v9588 = vpop.permute.xlu0 %9587
      %9589 = vrot.lane.b32.xlu0 %v9574, 32
      %v9590 = vpop.permute.xlu0 %9589
      %9591 = vrot.lane.b32.xlu0 %v9576, 32
      %v9592 = vpop.permute.xlu0 %9591
      %9593 = vrot.lane.b32.xlu0 %v9578, 32
      %v9594 = vpop.permute.xlu0 %9593
      %9595 = vrot.lane.b32.xlu0 %v9580, 32
      %v9596 = vpop.permute.xlu0 %9595
      %9597 = vrot.lane.b32.xlu0 %v9579, 32
      %v9598 = vpop.permute.xlu0 %9597
      %v9609 = vrot.slane %v9385, 6
      %v9610 = vrot.slane %v9386, 6
      %v9611 = vsel %vm1174, %v9609, %v9610
      %v9612 = vrot.slane %v9387, 6
      %v9613 = vsel %vm1174, %v9610, %v9612
      %v9614 = vrot.slane %v9388, 6
      %v9615 = vsel %vm1174, %v9612, %v9614
      %v9616 = vrot.slane %v9389, 6
      %v9617 = vsel %vm1174, %v9614, %v9616
      %v9618 = vrot.slane %v9390, 6
      %v9619 = vsel %vm1174, %v9616, %v9618
      %v9620 = vrot.slane %v9391, 6
      %v9621 = vsel %vm1174, %v9618, %v9620
      %v9622 = vrot.slane %v9392, 6
      %v9623 = vsel %vm1174, %v9620, %v9622
      %v9624 = vrot.slane %v9393, 6
      %v9625 = vsel %vm1174, %v9622, %v9624
      %9626 = vrot.lane.b32.xlu0 %v9609, 64
      %v9627 = vpop.permute.xlu0 %9626
      %9628 = vrot.lane.b32.xlu0 %v9611, 64
      %v9629 = vpop.permute.xlu0 %9628
      %9630 = vrot.lane.b32.xlu0 %v9613, 64
      %v9631 = vpop.permute.xlu0 %9630
      %9632 = vrot.lane.b32.xlu0 %v9615, 64
      %v9633 = vpop.permute.xlu0 %9632
      %9634 = vrot.lane.b32.xlu0 %v9617, 64
      %v9635 = vpop.permute.xlu0 %9634
      %9636 = vrot.lane.b32.xlu0 %v9619, 64
      %v9637 = vpop.permute.xlu0 %9636
      %9638 = vrot.lane.b32.xlu0 %v9621, 64
      %v9639 = vpop.permute.xlu0 %9638
      %9640 = vrot.lane.b32.xlu0 %v9623, 64
      %v9641 = vpop.permute.xlu0 %9640
      %9642 = vrot.lane.b32.xlu0 %v9625, 64
      %v9643 = vpop.permute.xlu0 %9642
      %v9654 = vrot.slane %v9386, 3
      %v9655 = vrot.slane %v9387, 3
      %v9656 = vsel %vm1130, %v9654, %v9655
      %v9657 = vrot.slane %v9388, 3
      %v9658 = vsel %vm1130, %v9655, %v9657
      %v9659 = vrot.slane %v9389, 3
      %v9660 = vsel %vm1130, %v9657, %v9659
      %v9661 = vrot.slane %v9390, 3
      %v9662 = vsel %vm1130, %v9659, %v9661
      %v9663 = vrot.slane %v9391, 3
      %v9664 = vsel %vm1130, %v9661, %v9663
      %v9665 = vrot.slane %v9392, 3
      %v9666 = vsel %vm1130, %v9663, %v9665
      %v9667 = vrot.slane %v9393, 3
      %v9668 = vsel %vm1130, %v9665, %v9667
      %v9669 = vrot.slane %v9394, 3
      %v9670 = vsel %vm1130, %v9667, %v9669
      %9671 = vrot.lane.b32.xlu0 %v9654, 96
      %v9672 = vpop.permute.xlu0 %9671
      %9673 = vrot.lane.b32.xlu0 %v9656, 96
      %v9674 = vpop.permute.xlu0 %9673
      %9675 = vrot.lane.b32.xlu0 %v9658, 96
      %v9676 = vpop.permute.xlu0 %9675
      %9677 = vrot.lane.b32.xlu0 %v9660, 96
      %v9678 = vpop.permute.xlu0 %9677
      %9679 = vrot.lane.b32.xlu0 %v9662, 96
      %v9680 = vpop.permute.xlu0 %9679
      %9681 = vrot.lane.b32.xlu0 %v9664, 96
      %v9682 = vpop.permute.xlu0 %9681
      %9683 = vrot.lane.b32.xlu0 %v9666, 96
      %v9684 = vpop.permute.xlu0 %9683
      %9685 = vrot.lane.b32.xlu0 %v9668, 96
      %v9686 = vpop.permute.xlu0 %9685
      %9687 = vrot.lane.b32.xlu0 %v9670, 96
      %v9688 = vpop.permute.xlu0 %9687
      %v9699 = vrot.slane %v9391, 5
      %v9700 = vsel %vm1252, %v9421, %v9699
      %v9701 = vrot.slane %v9392, 5
      %v9702 = vsel %vm1252, %v9699, %v9701
      %v9703 = vrot.slane %v9393, 5
      %v9704 = vsel %vm1252, %v9701, %v9703
      %v9705 = vrot.slane %v9394, 5
      %v9706 = vsel %vm1252, %v9703, %v9705
      %v9707 = vrot.slane %v9395, 5
      %v9708 = vsel %vm1252, %v9705, %v9707
      %9709 = vrot.lane.b32.xlu0 %v9415, 32
      %v9710 = vpop.permute.xlu0 %9709
      %9711 = vrot.lane.b32.xlu0 %v9700, 32
      %v9712 = vpop.permute.xlu0 %9711
      %9713 = vrot.lane.b32.xlu0 %v9702, 32
      %v9714 = vpop.permute.xlu0 %9713
      %9715 = vrot.lane.b32.xlu0 %v9704, 32
      %v9716 = vpop.permute.xlu0 %9715
      %9717 = vrot.lane.b32.xlu0 %v9706, 32
      %v9718 = vpop.permute.xlu0 %9717
      %9719 = vrot.lane.b32.xlu0 %v9708, 32
      %v9720 = vpop.permute.xlu0 %9719
      %v9728 = vrot.slane %v9392, 2
      %v9729 = vsel %vm451, %v9466, %v9728
      %v9730 = vrot.slane %v9393, 2
      %v9731 = vsel %vm451, %v9728, %v9730
      %v9732 = vrot.slane %v9394, 2
      %v9733 = vsel %vm451, %v9730, %v9732
      %v9734 = vrot.slane %v9395, 2
      %v9735 = vsel %vm451, %v9732, %v9734
      %v9736 = vrot.slane %v9396, 2
      %v9737 = vsel %vm451, %v9734, %v9736
      %9738 = vrot.lane.b32.xlu0 %v9460, 64
      %v9739 = vpop.permute.xlu0 %9738
      %9740 = vrot.lane.b32.xlu0 %v9729, 64
      %v9741 = vpop.permute.xlu0 %9740
      %9742 = vrot.lane.b32.xlu0 %v9731, 64
      %v9743 = vpop.permute.xlu0 %9742
      %9744 = vrot.lane.b32.xlu0 %v9733, 64
      %v9745 = vpop.permute.xlu0 %9744
      %9746 = vrot.lane.b32.xlu0 %v9735, 64
      %v9747 = vpop.permute.xlu0 %9746
      %9748 = vrot.lane.b32.xlu0 %v9737, 64
      %v9749 = vpop.permute.xlu0 %9748
      %v9756 = vsel %vm279, %v9381, %v9424
      %v9757 = vsel %vm279, %v9382, %v9426
      %v9758 = vsel %vm279, %v9383, %v9428
      %v9759 = vsel %vm279, %v9384, %v9430
      %v9760 = vsel %vm279, %v9385, %v9432
      %v9761 = vsel %vm279, %v9386, %v9434
      %v9762 = vsel %vm279, %v9387, %v9436
      %v9763 = vsel %vm279, %v9388, %v9438
      %v9764 = vsel %vm279, %v9389, %v9440
      %v9765 = vsel %vm505, %v9756, %v9469
      %v9766 = vsel %vm505, %v9757, %v9471
      %v9767 = vsel %vm505, %v9758, %v9473
      %v9768 = vsel %vm505, %v9759, %v9475
      %v9769 = vsel %vm505, %v9760, %v9477
      %v9770 = vsel %vm505, %v9761, %v9479
      %v9771 = vsel %vm505, %v9762, %v9481
      %v9772 = vsel %vm505, %v9763, %v9483
      %v9773 = vsel %vm505, %v9764, %v9485
      %v9774 = vsel %vm548, %v9765, %v9513
      %v9775 = vsel %vm548, %v9766, %v9515
      %v9776 = vsel %vm548, %v9767, %v9517
      %v9777 = vsel %vm548, %v9768, %v9519
      %v9778 = vsel %vm548, %v9769, %v9521
      %v9779 = vsel %vm548, %v9770, %v9523
      %v9780 = vsel %vm548, %v9771, %v9525
      %v9781 = vsel %vm548, %v9772, %v9527
      %v9782 = vsel %vm548, %v9773, %v9529
      %v9783 = vsel %vm279, %v9540, %v9582
      %v9784 = vsel %vm279, %v9542, %v9584
      %v9785 = vsel %vm279, %v9544, %v9586
      %v9786 = vsel %vm279, %v9546, %v9588
      %v9787 = vsel %vm279, %v9548, %v9590
      %v9788 = vsel %vm279, %v9550, %v9592
      %v9789 = vsel %vm279, %v9552, %v9594
      %v9790 = vsel %vm279, %v9554, %v9596
      %v9791 = vsel %vm279, %v9556, %v9598
      %v9792 = vsel %vm505, %v9783, %v9627
      %v9793 = vsel %vm505, %v9784, %v9629
      %v9794 = vsel %vm505, %v9785, %v9631
      %v9795 = vsel %vm505, %v9786, %v9633
      %v9796 = vsel %vm505, %v9787, %v9635
      %v9797 = vsel %vm505, %v9788, %v9637
      %v9798 = vsel %vm505, %v9789, %v9639
      %v9799 = vsel %vm505, %v9790, %v9641
      %v9800 = vsel %vm505, %v9791, %v9643
      %v9801 = vsel %vm548, %v9792, %v9672
      %v9802 = vsel %vm548, %v9793, %v9674
      %v9803 = vsel %vm548, %v9794, %v9676
      %v9804 = vsel %vm548, %v9795, %v9678
      %v9805 = vsel %vm548, %v9796, %v9680
      %v9806 = vsel %vm548, %v9797, %v9682
      %v9807 = vsel %vm548, %v9798, %v9684
      %v9808 = vsel %vm548, %v9799, %v9686
      %v9809 = vsel %vm548, %v9800, %v9688
      %v9810 = vsel %vm279, %v9386, %v9710
      %v9811 = vsel %vm279, %v9390, %v9712
      %v9812 = vsel %vm279, %v9391, %v9714
      %v9813 = vsel %vm279, %v9392, %v9716
      %v9814 = vsel %vm279, %v9393, %v9718
      %v9815 = vsel %vm279, %v9394, %v9720
      %v9816 = vsel %vm505, %v9810, %v9739
      %v9817 = vsel %vm505, %v9811, %v9741
      %v9818 = vsel %vm505, %v9812, %v9743
      %v9819 = vsel %vm505, %v9813, %v9745
      %v9820 = vsel %vm505, %v9814, %v9747
      %v9821 = vsel %vm505, %v9815, %v9749
      %v9823 = vlaneseq
      %v9824 = vshrl.u32 %v9823, 7
      %v9825 = vsub.s32 0, %v9824
      %v9826 = vrot.slane %v9316, %v9825
      %v9855 = vrot.slane %v9774, 7
      %v9856 = vrot.slane %v9775, 7
      %v9857 = vsel %vm530, %v9855, %v9856
      %v9858 = vrot.slane %v9801, 7
      %v9859 = vrot.slane %v9802, 7
      %v9860 = vsel %vm530, %v9858, %v9859
      %v9861 = vrot.slane %v9816, 7
      %v9862 = vrot.slane %v9771, 7
      %v9863 = vsel %vm530, %v9861, %v9862
      %v9864 = vrot.slane %v9776, 7
      %v9865 = vsel %vm530, %v9856, %v9864
      %v9866 = vrot.slane %v9803, 7
      %v9867 = vsel %vm530, %v9859, %v9866
      %v9868 = vrot.slane %v9772, 7
      %v9869 = vsel %vm530, %v9862, %v9868
      %v9870 = vrot.slane %v9777, 7
      %v9871 = vsel %vm530, %v9864, %v9870
      %v9872 = vrot.slane %v9804, 7
      %v9873 = vsel %vm530, %v9866, %v9872
      %v9874 = vrot.slane %v9773, 7
      %v9875 = vsel %vm530, %v9868, %v9874
      %v9876 = vrot.slane %v9778, 7
      %v9877 = vsel %vm530, %v9870, %v9876
      %v9878 = vrot.slane %v9805, 7
      %v9879 = vsel %vm530, %v9872, %v9878
      %v9880 = vrot.slane %v9817, 7
      %v9881 = vsel %vm530, %v9874, %v9880
      %v9882 = vrot.slane %v9779, 7
      %v9883 = vsel %vm530, %v9876, %v9882
      %v9884 = vrot.slane %v9806, 7
      %v9885 = vsel %vm530, %v9878, %v9884
      %v9886 = vrot.slane %v9818, 7
      %v9887 = vsel %vm530, %v9880, %v9886
      %v9888 = vrot.slane %v9780, 7
      %v9889 = vsel %vm530, %v9882, %v9888
      %v9890 = vrot.slane %v9807, 7
      %v9891 = vsel %vm530, %v9884, %v9890
      %v9892 = vrot.slane %v9819, 7
      %v9893 = vsel %vm530, %v9886, %v9892
      %v9894 = vrot.slane %v9781, 7
      %v9895 = vsel %vm530, %v9888, %v9894
      %v9896 = vrot.slane %v9808, 7
      %v9897 = vsel %vm530, %v9890, %v9896
      %v9898 = vrot.slane %v9820, 7
      %v9899 = vsel %vm530, %v9892, %v9898
      %v9900 = vrot.slane %v9782, 7
      %v9901 = vsel %vm530, %v9894, %v9900
      %v9902 = vrot.slane %v9809, 7
      %v9903 = vsel %vm530, %v9896, %v9902
      %v9904 = vrot.slane %v9821, 7
      %v9905 = vsel %vm530, %v9898, %v9904
      %v9922 = vsel %vm548, %v9863, 0
      %v9924 = vsel %vm548, %v9869, 0
      %v9926 = vsel %vm548, %v9875, 0
      %v9928 = vsel %vm548, %v9881, 0
      %v9930 = vsel %vm548, %v9887, 0
      %v9932 = vsel %vm548, %v9893, 0
      %v9934 = vsel %vm548, %v9899, 0
      %v9936 = vsel %vm548, %v9905, 0
      %9938 = vmatprep.subr.mxu0 0.0
      %9939 = vmatpush1.msra.mxu0 %v9271
      %9940 = vmatprep.subr.mxu0 0.0
      %9941 = vmatpush1.msra.mxu0 %v9272
      %9942 = vmatprep.subr.mxu0 0.0
      %9943 = vmatpush1.msra.mxu0 %v9273
      %9944 = vmatprep.subr.mxu0 0.0
      %9945 = vmatpush1.msra.mxu0 %v9274
      %9946 = vmatprep.subr.mxu0 0.0
      %9947 = vmatpush1.msra.mxu0 %v9275
      %9948 = vmatprep.subr.mxu0 0.0
      %9949 = vmatpush1.msra.mxu0 %v9276
      %9950 = vmatprep.subr.mxu0 0.0
      %9951 = vmatpush1.msra.mxu0 %v9277
      %9952 = vmatprep.subr.mxu0 0.0
      %9953 = vmatpush1.msra.mxu0 %v9278
      %9954 = vmatprep.subr.mxu0 0.0
      %9955 = vmatpush1.msra.mxu0 %v9279
      %9956 = vmatprep.subr.mxu0 0.0
      %9957 = vmatpush1.msra.mxu0 %v9280
      %9958 = vmatprep.subr.mxu0 0.0
      %9959 = vmatpush1.msra.mxu0 %v9281
      %9960 = vmatprep.subr.mxu0 0.0
      %9961 = vmatpush1.msra.mxu0 %v9282
      %9962 = vmatprep.subr.mxu0 0.0
      %9963 = vmatpush1.msra.mxu0 %v9283
      %9964 = vmatprep.subr.mxu0 0.0
      %9965 = vmatpush1.msra.mxu0 %v9284
      %9966 = vmatprep.subr.mxu0 0.0
      %9967 = vmatpush1.msra.mxu0 %v9285
      %9968 = vmatprep.subr.mxu0 0.0
      %9969 = vmatpush1.msra.mxu0 %v9286
      %9970 = vmatprep.subr.mxu0 0.0
      %9971 = vmatpush1.msra.mxu0 %v9287
      %9972 = vmatprep.subr.mxu0 0.0
      %9973 = vmatpush1.msra.mxu0 %v9288
      %9974 = vmatprep.subr.mxu0 0.0
      %9975 = vmatpush1.msra.mxu0 %v9289
      %9976 = vmatprep.subr.mxu0 0.0
      %9977 = vmatpush1.msra.mxu0 %v9290
      %9978 = vmatprep.subr.mxu0 0.0
      %9979 = vmatpush1.msra.mxu0 %v9291
      %9980 = vmatprep.subr.mxu0 0.0
      %9981 = vmatpush1.msra.mxu0 %v9292
      %9982 = vmatprep.subr.mxu0 0.0
      %9983 = vmatpush1.msra.mxu0 %v9293
      %9984 = vmatprep.subr.mxu0 0.0
      %9985 = vmatpush1.msra.mxu0 %v9294
      %9986 = vmatprep.subr.mxu0 0.0
      %9987 = vmatpush1.msra.mxu0 %v9295
      %9988 = vmatprep.subr.mxu0 0.0
      %9989 = vmatpush1.msra.mxu0 %v9296
      %9990 = vmatprep.subr.mxu0 0.0
      %9991 = vmatpush1.msra.mxu0 %v9297
      %9992 = vmatprep.subr.mxu0 0.0
      %9993 = vmatpush1.msra.mxu0 %v9298
      %9994 = vmatprep.subr.mxu0 0.0
      %9995 = vmatpush1.msra.mxu0 %v9299
      %9996 = vmatprep.subr.mxu0 0.0
      %9997 = vmatpush1.msra.mxu0 %v9300
      %9998 = vmatprep.subr.mxu0 0.0
      %9999 = vmatpush1.msra.mxu0 %v9301
      %10000 = vmatprep.subr.mxu0 0.0
      %10001 = vmatpush1.msra.mxu0 %v9302
      %10002 = vmatprep.mubr.f32.mxu0 %v9860
      %10003 = vmatmul.mubr.f32.gmra.mrb[0].mxu0 %v9857
      %v10004 = vpop.f32.mrb[0].mxu0
      %v10005 = vadd.f32 %v9826, %v10004
      %v10006 = vpop.f32.mrb[0].mxu0
      %10007 = vmatprep.mubr.f32.mxu0 %v9867
      %10008 = vmatmul.mubr.f32.gmra.mrb[0].mxu0 %v9865
      %v10009 = vpop.f32.mrb[0].mxu0
      %v10010 = vadd.f32 %v9826, %v10009
      %v10011 = vpop.f32.mrb[0].mxu0
      %10012 = vmatprep.mubr.f32.mxu0 %v9873
      %10013 = vmatmul.mubr.f32.gmra.mrb[0].mxu0 %v9871
      %v10014 = vpop.f32.mrb[0].mxu0
      %v10015 = vadd.f32 %v9826, %v10014
      %v10016 = vpop.f32.mrb[0].mxu0
      %10017 = vmatprep.mubr.f32.mxu0 %v9879
      %10018 = vmatmul.mubr.f32.gmra.mrb[0].mxu0 %v9877
      %v10019 = vpop.f32.mrb[0].mxu0
      %v10020 = vadd.f32 %v9826, %v10019
      %v10021 = vpop.f32.mrb[0].mxu0
      %10022 = vmatprep.mubr.f32.mxu0 %v9885
      %10023 = vmatmul.mubr.f32.gmra.mrb[0].mxu0 %v9883
      %v10024 = vpop.f32.mrb[0].mxu0
      %v10025 = vadd.f32 %v9826, %v10024
      %v10026 = vpop.f32.mrb[0].mxu0
      %10027 = vmatprep.mubr.f32.mxu0 %v9891
      %10028 = vmatmul.mubr.f32.gmra.mrb[0].mxu0 %v9889
      %v10029 = vpop.f32.mrb[0].mxu0
      %v10030 = vadd.f32 %v9826, %v10029
      %v10031 = vpop.f32.mrb[0].mxu0
      %10032 = vmatprep.mubr.f32.mxu0 %v9897
      %10033 = vmatmul.mubr.f32.gmra.mrb[0].mxu0 %v9895
      %v10034 = vpop.f32.mrb[0].mxu0
      %v10035 = vadd.f32 %v9826, %v10034
      %v10036 = vpop.f32.mrb[0].mxu0
      %10037 = vmatprep.mubr.f32.mxu0 %v9903
      %10038 = vmatmul.mubr.f32.gmra.mrb[0].mxu0 %v9901
      %v10039 = vpop.f32.mrb[0].mxu0
      %v10040 = vadd.f32 %v9826, %v10039
      %v10041 = vpop.f32.mrb[0].mxu0
      %10042 = vdwg.mxu0
      %10043 = vmatprep.subr.mxu0 0.0
      %10044 = vmatpush1.msra.mxu0 %v9303
      %10045 = vmatprep.subr.mxu0 0.0
      %10046 = vmatpush1.msra.mxu0 %v9304
      %10047 = vmatprep.subr.mxu0 0.0
      %10048 = vmatpush1.msra.mxu0 %v9305
      %10049 = vmatprep.subr.mxu0 0.0
      %10050 = vmatpush1.msra.mxu0 %v9306
      %10051 = vmatprep.subr.mxu0 0.0
      %10052 = vmatpush1.msra.mxu0 %v9307
      %10053 = vmatprep.subr.mxu0 0.0
      %10054 = vmatpush1.msra.mxu0 %v9308
      %10055 = vmatprep.subr.mxu0 0.0
      %10056 = vmatpush1.msra.mxu0 %v9309
      %10057 = vmatprep.subr.mxu0 0.0
      %10058 = vmatpush1.msra.mxu0 %v9310
      %10059 = vmatprep.subr.mxu0 0.0
      %10060 = vmatpush1.msra.mxu0 %v9311
      %10061 = vmatprep.subr.mxu0 0.0
      %10062 = vmatpush1.msra.mxu0 %v9312
      %10063 = vmatprep.subr.mxu0 0.0
      %10064 = vmatpush1.msra.mxu0 %v9313
      %10065 = vmatprep.subr.mxu0 0.0
      %10066 = vmatpush1.msra.mxu0 %v9314
      %10067 = vmatprep.subr.mxu0 0.0
      %10068 = vmatpush1.msra.mxu0 0.0
      %10069 = vmatprep.subr.mxu0 0.0
      %10070 = vmatpush1.msra.mxu0 0.0
      %10071 = vmatprep.subr.mxu0 0.0
      %10072 = vmatpush1.msra.mxu0 0.0
      %10073 = vmatprep.subr.mxu0 0.0
      %10074 = vmatpush1.msra.mxu0 0.0
      %10075 = vmatprep.subr.mxu0 0.0
      %10076 = vmatpush1.msra.mxu0 0.0
      %10077 = vmatprep.subr.mxu0 0.0
      %10078 = vmatpush1.msra.mxu0 0.0
      %10079 = vmatprep.subr.mxu0 0.0
      %10080 = vmatpush1.msra.mxu0 0.0
      %10081 = vmatprep.subr.mxu0 0.0
      %10082 = vmatpush1.msra.mxu0 0.0
      %10083 = vmatprep.subr.mxu0 0.0
      %10084 = vmatpush1.msra.mxu0 0.0
      %10085 = vmatprep.subr.mxu0 0.0
      %10086 = vmatpush1.msra.mxu0 0.0
      %10087 = vmatprep.subr.mxu0 0.0
      %10088 = vmatpush1.msra.mxu0 0.0
      %10089 = vmatprep.subr.mxu0 0.0
      %10090 = vmatpush1.msra.mxu0 0.0
      %10091 = vmatprep.subr.mxu0 0.0
      %10092 = vmatpush1.msra.mxu0 0.0
      %10093 = vmatprep.subr.mxu0 0.0
      %10094 = vmatpush1.msra.mxu0 0.0
      %10095 = vmatprep.subr.mxu0 0.0
      %10096 = vmatpush1.msra.mxu0 0.0
      %10097 = vmatprep.subr.mxu0 0.0
      %10098 = vmatpush1.msra.mxu0 0.0
      %10099 = vmatprep.subr.mxu0 0.0
      %10100 = vmatpush1.msra.mxu0 0.0
      %10101 = vmatprep.subr.mxu0 0.0
      %10102 = vmatpush1.msra.mxu0 0.0
      %10103 = vmatprep.subr.mxu0 0.0
      %10104 = vmatpush1.msra.mxu0 0.0
      %10105 = vmatprep.subr.mxu0 0.0
      %10106 = vmatpush1.msra.mxu0 0.0
      %10107 = vmatprep.mubr.f32.mxu0 0.0
      %10108 = vmatmul.mubr.f32.gmra.mrb[0].mxu0 %v9922
      %v10109 = vpop.f32.mrb[0].mxu0
      %v10110 = vadd.f32 %v10005, %v10109
      %v10111 = vpop.f32.mrb[0].mxu0
      %10112 = vmatprep.mubr.f32.mxu0 0.0
      %10113 = vmatmul.mubr.f32.gmra.mrb[0].mxu0 %v9924
      %v10114 = vpop.f32.mrb[0].mxu0
      %v10115 = vadd.f32 %v10010, %v10114
      %v10116 = vpop.f32.mrb[0].mxu0
      %10117 = vmatprep.mubr.f32.mxu0 0.0
      %10118 = vmatmul.mubr.f32.gmra.mrb[0].mxu0 %v9926
      %v10119 = vpop.f32.mrb[0].mxu0
      %v10120 = vadd.f32 %v10015, %v10119
      %v10121 = vpop.f32.mrb[0].mxu0
      %10122 = vmatprep.mubr.f32.mxu0 0.0
      %10123 = vmatmul.mubr.f32.gmra.mrb[0].mxu0 %v9928
      %v10124 = vpop.f32.mrb[0].mxu0
      %v10125 = vadd.f32 %v10020, %v10124
      %v10126 = vpop.f32.mrb[0].mxu0
      %10127 = vmatprep.mubr.f32.mxu0 0.0
      %10128 = vmatmul.mubr.f32.gmra.mrb[0].mxu0 %v9930
      %v10129 = vpop.f32.mrb[0].mxu0
      %v10130 = vadd.f32 %v10025, %v10129
      %v10131 = vpop.f32.mrb[0].mxu0
      %10132 = vmatprep.mubr.f32.mxu0 0.0
      %10133 = vmatmul.mubr.f32.gmra.mrb[0].mxu0 %v9932
      %v10134 = vpop.f32.mrb[0].mxu0
      %v10135 = vadd.f32 %v10030, %v10134
      %v10136 = vpop.f32.mrb[0].mxu0
      %10137 = vmatprep.mubr.f32.mxu0 0.0
      %10138 = vmatmul.mubr.f32.gmra.mrb[0].mxu0 %v9934
      %v10139 = vpop.f32.mrb[0].mxu0
      %v10140 = vadd.f32 %v10035, %v10139
      %v10141 = vpop.f32.mrb[0].mxu0
      %10142 = vmatprep.mubr.f32.mxu0 0.0
      %10143 = vmatmul.mubr.f32.gmra.mrb[0].mxu0 %v9936
      %v10144 = vpop.f32.mrb[0].mxu0
      %v10145 = vadd.f32 %v10040, %v10144
      %v10146 = vpop.f32.mrb[0].mxu0
      %10147 = vdwg.mxu0
      %s10148 = scalar_lea.vmem %s5, 1760
      %v10149 = vld [vmem:[%s10148] sm:$0xff]
      %v10150 = vld [vmem:[%s10148 + $0x8] sm:$0xff]
      %v10151 = vld [vmem:[%s10148 + $0x10] sm:$0xff]
      %v10152 = vld [vmem:[%s10148 + $0x18] sm:$0xff]
      %v10153 = vld [vmem:[%s10148 + $0x20] sm:$0xff]
      %v10154 = vld [vmem:[%s10148 + $0x28] sm:$0xff]
      %v10155 = vld [vmem:[%s10148 + $0x30] sm:$0xff]
      %v10156 = vld [vmem:[%s10148 + $0x38] sm:$0xff]
      %v10157 = vld [vmem:[%s10148 + $0x40] sm:$0xff]
      %v10158 = vld [vmem:[%s10148 + $0x48] sm:$0xff]
      %v10159 = vld [vmem:[%s10148 + $0x50] sm:$0xff]
      %v10160 = vld [vmem:[%s10148 + $0x58] sm:$0xff]
      %v10161 = vld [vmem:[%s10148 + $0x60] sm:$0xff]
      %v10162 = vld [vmem:[%s10148 + $0x68] sm:$0xff]
      %v10163 = vld [vmem:[%s10148 + $0x70] sm:$0xff]
      %v10164 = vld [vmem:[%s10148 + $0x78] sm:$0xff]
      %v10165 = vld [vmem:[%s10148 + $0x80] sm:$0xff]
      %v10166 = vld [vmem:[%s10148 + $0x88] sm:$0xff]
      %v10167 = vld [vmem:[%s10148 + $0x90] sm:$0xff]
      %v10168 = vld [vmem:[%s10148 + $0x98] sm:$0xff]
      %v10169 = vld [vmem:[%s10148 + $0xa0] sm:$0xff]
      %v10170 = vld [vmem:[%s10148 + $0xa8] sm:$0xff]
      %v10171 = vld [vmem:[%s10148 + $0xb0] sm:$0xff]
      %v10172 = vld [vmem:[%s10148 + $0xb8] sm:$0xff]
      %v10173 = vld [vmem:[%s10148 + $0xc0] sm:$0xff]
      %v10174 = vld [vmem:[%s10148 + $0xc8] sm:$0xff]
      %v10175 = vld [vmem:[%s10148 + $0xd0] sm:$0xff]
      %v10176 = vld [vmem:[%s10148 + $0xd8] sm:$0xff]
      %v10177 = vld [vmem:[%s10148 + $0xe0] sm:$0xff]
      %v10178 = vld [vmem:[%s10148 + $0xe8] sm:$0xff]
      %v10179 = vld [vmem:[%s10148 + $0xf0] sm:$0xff]
      %v10180 = vld [vmem:[%s10148 + $0xf8] sm:$0xff]
      %v10181 = vld [vmem:[%s10148 + $0x100] sm:$0xff]
      %v10182 = vld [vmem:[%s10148 + $0x108] sm:$0xff]
      %v10183 = vld [vmem:[%s10148 + $0x110] sm:$0xff]
      %v10184 = vld [vmem:[%s10148 + $0x118] sm:$0xff]
      %v10185 = vld [vmem:[%s10148 + $0x120] sm:$0xff]
      %v10186 = vld [vmem:[%s10148 + $0x128] sm:$0xff]
      %v10187 = vld [vmem:[%s10148 + $0x130] sm:$0xff]
      %v10188 = vld [vmem:[%s10148 + $0x138] sm:$0xff]
      %v10189 = vld [vmem:[%s10148 + $0x140] sm:$0xff]
      %v10190 = vld [vmem:[%s10148 + $0x148] sm:$0xff]
      %v10191 = vld [vmem:[%s10148 + $0x150] sm:$0xff]
      %v10192 = vld [vmem:[%s10148 + $0x158] sm:$0xff]
      %s10193 = scalar_lea.vmem %s6, 5
      %v10194 = vld [vmem:[%s10193] sm:$0x1]
      %v10195 = vxor.u32 %v10110, 2147483648
      %v10196 = vxor.u32 %v10115, 2147483648
      %v10197 = vxor.u32 %v10120, 2147483648
      %v10198 = vxor.u32 %v10125, 2147483648
      %v10199 = vxor.u32 %v10130, 2147483648
      %v10200 = vxor.u32 %v10135, 2147483648
      %v10201 = vxor.u32 %v10140, 2147483648
      %v10202 = vxor.u32 %v10145, 2147483648
      %v10203 = vmul.f32 %v10195, 1.442695
      %v10204 = vpow.pop %v10203
      %v10205 = vmul.f32 %v10196, 1.442695
      %v10206 = vpow.pop %v10205
      %v10207 = vmul.f32 %v10197, 1.442695
      %v10208 = vpow.pop %v10207
      %v10209 = vmul.f32 %v10198, 1.442695
      %v10210 = vpow.pop %v10209
      %v10211 = vmul.f32 %v10199, 1.442695
      %v10212 = vpow.pop %v10211
      %v10213 = vmul.f32 %v10200, 1.442695
      %v10214 = vpow.pop %v10213
      %v10215 = vmul.f32 %v10201, 1.442695
      %v10216 = vpow.pop %v10215
      %v10217 = vmul.f32 %v10202, 1.442695
      %v10218 = vpow.pop %v10217
      %v10219 = vadd.f32 %v10204, 1.0
      %v10220 = vadd.f32 %v10206, 1.0
      %v10221 = vadd.f32 %v10208, 1.0
      %v10222 = vadd.f32 %v10210, 1.0
      %v10223 = vadd.f32 %v10212, 1.0
      %v10224 = vadd.f32 %v10214, 1.0
      %v10225 = vadd.f32 %v10216, 1.0
      %v10226 = vadd.f32 %v10218, 1.0
      %v10227 = vrcp.pop %v10219
      %v10228 = vmul.f32 1.0, %v10227
      %v10229 = vrcp.pop %v10220
      %v10230 = vmul.f32 1.0, %v10229
      %v10231 = vrcp.pop %v10221
      %v10232 = vmul.f32 1.0, %v10231
      %v10233 = vrcp.pop %v10222
      %v10234 = vmul.f32 1.0, %v10233
      %v10235 = vrcp.pop %v10223
      %v10236 = vmul.f32 1.0, %v10235
      %v10237 = vrcp.pop %v10224
      %v10238 = vmul.f32 1.0, %v10237
      %v10239 = vrcp.pop %v10225
      %v10240 = vmul.f32 1.0, %v10239
      %v10241 = vrcp.pop %v10226
      %v10242 = vmul.f32 1.0, %v10241
      %v10243 = vmul.f32 %v10110, %v10228
      %v10244 = vmul.f32 %v10115, %v10230
      %v10245 = vmul.f32 %v10120, %v10232
      %v10246 = vmul.f32 %v10125, %v10234
      %v10247 = vmul.f32 %v10130, %v10236
      %v10248 = vmul.f32 %v10135, %v10238
      %v10249 = vmul.f32 %v10140, %v10240
      %v10250 = vmul.f32 %v10145, %v10242
      %10251 = vst.msk [vmem:[#allocation4 + $0x20] sm:$0xff] %vm279, %v10243
      %10252 = vst.msk [vmem:[#allocation4 + $0x28] sm:$0xff] %vm279, %v10244
      %10253 = vst.msk [vmem:[#allocation4 + $0x30] sm:$0xff] %vm279, %v10245
      %10254 = vst.msk [vmem:[#allocation4 + $0x38] sm:$0xff] %vm279, %v10246
      %10255 = vst.msk [vmem:[#allocation4 + $0x40] sm:$0xff] %vm279, %v10247
      %10256 = vst.msk [vmem:[#allocation4 + $0x48] sm:$0xff] %vm279, %v10248
      %10257 = vst.msk [vmem:[#allocation4 + $0x50] sm:$0xff] %vm279, %v10249
      %10258 = vst.msk [vmem:[#allocation4 + $0x58] sm:$0xff] %vm279, %v10250
      %v10259 = vld [vmem:[#allocation4 + $0x18] sm:$0xff]
      %v10260 = vld [vmem:[#allocation4 + $0x20] sm:$0xff]
      %v10261 = vld [vmem:[#allocation4 + $0x28] sm:$0xff]
      %v10262 = vld [vmem:[#allocation4 + $0x30] sm:$0xff]
      %v10263 = vld [vmem:[#allocation4 + $0x38] sm:$0xff]
      %v10264 = vld [vmem:[#allocation4 + $0x40] sm:$0xff]
      %v10265 = vld [vmem:[#allocation4 + $0x48] sm:$0xff]
      %v10266 = vld [vmem:[#allocation4 + $0x50] sm:$0xff]
      %v10267 = vld [vmem:[#allocation4 + $0x58] sm:$0xff]
      %v10268 = vld [vmem:[#allocation4 + $0x60] sm:$0xff]
      %v10278 = vrot.slane %v10259, 1
      %v10279 = vrot.slane %v10260, 1
      %v10280 = vsel %vm407, %v10278, %v10279
      %v10281 = vrot.slane %v10261, 1
      %v10282 = vsel %vm407, %v10279, %v10281
      %v10283 = vrot.slane %v10262, 1
      %v10284 = vsel %vm407, %v10281, %v10283
      %v10285 = vrot.slane %v10263, 1
      %v10286 = vsel %vm407, %v10283, %v10285
      %v10287 = vrot.slane %v10264, 1
      %v10288 = vsel %vm407, %v10285, %v10287
      %v10289 = vrot.slane %v10265, 1
      %v10290 = vsel %vm407, %v10287, %v10289
      %v10291 = vrot.slane %v10266, 1
      %v10292 = vsel %vm407, %v10289, %v10291
      %v10293 = vrot.slane %v10267, 1
      %v10294 = vsel %vm407, %v10291, %v10293
      %10295 = vrot.lane.b32.xlu0 %v10280, 32
      %v10296 = vpop.permute.xlu0 %10295
      %10297 = vrot.lane.b32.xlu0 %v10282, 32
      %v10298 = vpop.permute.xlu0 %10297
      %10299 = vrot.lane.b32.xlu0 %v10284, 32
      %v10300 = vpop.permute.xlu0 %10299
      %10301 = vrot.lane.b32.xlu0 %v10286, 32
      %v10302 = vpop.permute.xlu0 %10301
      %10303 = vrot.lane.b32.xlu0 %v10288, 32
      %v10304 = vpop.permute.xlu0 %10303
      %10305 = vrot.lane.b32.xlu0 %v10290, 32
      %v10306 = vpop.permute.xlu0 %10305
      %10307 = vrot.lane.b32.xlu0 %v10292, 32
      %v10308 = vpop.permute.xlu0 %10307
      %10309 = vrot.lane.b32.xlu0 %v10294, 32
      %v10310 = vpop.permute.xlu0 %10309
      %10311 = vrot.lane.b32.xlu0 %v10293, 32
      %v10312 = vpop.permute.xlu0 %10311
      %v10322 = vrot.slane %v10259, 2
      %v10323 = vrot.slane %v10260, 2
      %v10324 = vsel %vm451, %v10322, %v10323
      %v10325 = vrot.slane %v10261, 2
      %v10326 = vsel %vm451, %v10323, %v10325
      %v10327 = vrot.slane %v10262, 2
      %v10328 = vsel %vm451, %v10325, %v10327
      %v10329 = vrot.slane %v10263, 2
      %v10330 = vsel %vm451, %v10327, %v10329
      %v10331 = vrot.slane %v10264, 2
      %v10332 = vsel %vm451, %v10329, %v10331
      %v10333 = vrot.slane %v10265, 2
      %v10334 = vsel %vm451, %v10331, %v10333
      %v10335 = vrot.slane %v10266, 2
      %v10336 = vsel %vm451, %v10333, %v10335
      %v10337 = vrot.slane %v10267, 2
      %v10338 = vsel %vm451, %v10335, %v10337
      %10339 = vrot.lane.b32.xlu0 %v10324, 64
      %v10340 = vpop.permute.xlu0 %10339
      %10341 = vrot.lane.b32.xlu0 %v10326, 64
      %v10342 = vpop.permute.xlu0 %10341
      %10343 = vrot.lane.b32.xlu0 %v10328, 64
      %v10344 = vpop.permute.xlu0 %10343
      %10345 = vrot.lane.b32.xlu0 %v10330, 64
      %v10346 = vpop.permute.xlu0 %10345
      %10347 = vrot.lane.b32.xlu0 %v10332, 64
      %v10348 = vpop.permute.xlu0 %10347
      %10349 = vrot.lane.b32.xlu0 %v10334, 64
      %v10350 = vpop.permute.xlu0 %10349
      %10351 = vrot.lane.b32.xlu0 %v10336, 64
      %v10352 = vpop.permute.xlu0 %10351
      %10353 = vrot.lane.b32.xlu0 %v10338, 64
      %v10354 = vpop.permute.xlu0 %10353
      %10355 = vrot.lane.b32.xlu0 %v10337, 64
      %v10356 = vpop.permute.xlu0 %10355
      %v10366 = vrot.slane %v10259, 3
      %v10367 = vrot.slane %v10260, 3
      %v10368 = vsel %vm1130, %v10366, %v10367
      %v10369 = vrot.slane %v10261, 3
      %v10370 = vsel %vm1130, %v10367, %v10369
      %v10371 = vrot.slane %v10262, 3
      %v10372 = vsel %vm1130, %v10369, %v10371
      %v10373 = vrot.slane %v10263, 3
      %v10374 = vsel %vm1130, %v10371, %v10373
      %v10375 = vrot.slane %v10264, 3
      %v10376 = vsel %vm1130, %v10373, %v10375
      %v10377 = vrot.slane %v10265, 3
      %v10378 = vsel %vm1130, %v10375, %v10377
      %v10379 = vrot.slane %v10266, 3
      %v10380 = vsel %vm1130, %v10377, %v10379
      %v10381 = vrot.slane %v10267, 3
      %v10382 = vsel %vm1130, %v10379, %v10381
      %10383 = vrot.lane.b32.xlu0 %v10368, 96
      %v10384 = vpop.permute.xlu0 %10383
      %10385 = vrot.lane.b32.xlu0 %v10370, 96
      %v10386 = vpop.permute.xlu0 %10385
      %10387 = vrot.lane.b32.xlu0 %v10372, 96
      %v10388 = vpop.permute.xlu0 %10387
      %10389 = vrot.lane.b32.xlu0 %v10374, 96
      %v10390 = vpop.permute.xlu0 %10389
      %10391 = vrot.lane.b32.xlu0 %v10376, 96
      %v10392 = vpop.permute.xlu0 %10391
      %10393 = vrot.lane.b32.xlu0 %v10378, 96
      %v10394 = vpop.permute.xlu0 %10393
      %10395 = vrot.lane.b32.xlu0 %v10380, 96
      %v10396 = vpop.permute.xlu0 %10395
      %10397 = vrot.lane.b32.xlu0 %v10382, 96
      %v10398 = vpop.permute.xlu0 %10397
      %10399 = vrot.lane.b32.xlu0 %v10381, 96
      %v10400 = vpop.permute.xlu0 %10399
      %v10410 = vrot.slane %v10259, 4
      %v10411 = vrot.slane %v10260, 4
      %v10412 = vsel %vm2667, %v10410, %v10411
      %v10413 = vrot.slane %v10261, 4
      %v10414 = vsel %vm2667, %v10411, %v10413
      %v10415 = vrot.slane %v10262, 4
      %v10416 = vsel %vm2667, %v10413, %v10415
      %v10417 = vrot.slane %v10263, 4
      %v10418 = vsel %vm2667, %v10415, %v10417
      %v10419 = vrot.slane %v10264, 4
      %v10420 = vsel %vm2667, %v10417, %v10419
      %v10421 = vrot.slane %v10265, 4
      %v10422 = vsel %vm2667, %v10419, %v10421
      %v10423 = vrot.slane %v10266, 4
      %v10424 = vsel %vm2667, %v10421, %v10423
      %v10425 = vrot.slane %v10267, 4
      %v10426 = vsel %vm2667, %v10423, %v10425
      %v10436 = vrot.slane %v10260, 5
      %v10437 = vrot.slane %v10261, 5
      %v10438 = vsel %vm1252, %v10436, %v10437
      %v10439 = vrot.slane %v10262, 5
      %v10440 = vsel %vm1252, %v10437, %v10439
      %v10441 = vrot.slane %v10263, 5
      %v10442 = vsel %vm1252, %v10439, %v10441
      %v10443 = vrot.slane %v10264, 5
      %v10444 = vsel %vm1252, %v10441, %v10443
      %v10445 = vrot.slane %v10265, 5
      %v10446 = vsel %vm1252, %v10443, %v10445
      %v10447 = vrot.slane %v10266, 5
      %v10448 = vsel %vm1252, %v10445, %v10447
      %v10449 = vrot.slane %v10267, 5
      %v10450 = vsel %vm1252, %v10447, %v10449
      %10451 = vrot.lane.b32.xlu0 %v10436, 32
      %v10452 = vpop.permute.xlu0 %10451
      %10453 = vrot.lane.b32.xlu0 %v10438, 32
      %v10454 = vpop.permute.xlu0 %10453
      %10455 = vrot.lane.b32.xlu0 %v10440, 32
      %v10456 = vpop.permute.xlu0 %10455
      %10457 = vrot.lane.b32.xlu0 %v10442, 32
      %v10458 = vpop.permute.xlu0 %10457
      %10459 = vrot.lane.b32.xlu0 %v10444, 32
      %v10460 = vpop.permute.xlu0 %10459
      %10461 = vrot.lane.b32.xlu0 %v10446, 32
      %v10462 = vpop.permute.xlu0 %10461
      %10463 = vrot.lane.b32.xlu0 %v10448, 32
      %v10464 = vpop.permute.xlu0 %10463
      %10465 = vrot.lane.b32.xlu0 %v10450, 32
      %v10466 = vpop.permute.xlu0 %10465
      %10467 = vrot.lane.b32.xlu0 %v10449, 32
      %v10468 = vpop.permute.xlu0 %10467
      %v10479 = vrot.slane %v10260, 6
      %v10480 = vrot.slane %v10261, 6
      %v10481 = vsel %vm1174, %v10479, %v10480
      %v10482 = vrot.slane %v10262, 6
      %v10483 = vsel %vm1174, %v10480, %v10482
      %v10484 = vrot.slane %v10263, 6
      %v10485 = vsel %vm1174, %v10482, %v10484
      %v10486 = vrot.slane %v10264, 6
      %v10487 = vsel %vm1174, %v10484, %v10486
      %v10488 = vrot.slane %v10265, 6
      %v10489 = vsel %vm1174, %v10486, %v10488
      %v10490 = vrot.slane %v10266, 6
      %v10491 = vsel %vm1174, %v10488, %v10490
      %v10492 = vrot.slane %v10267, 6
      %v10493 = vsel %vm1174, %v10490, %v10492
      %v10494 = vrot.slane %v10268, 6
      %v10495 = vsel %vm1174, %v10492, %v10494
      %10496 = vrot.lane.b32.xlu0 %v10479, 64
      %v10497 = vpop.permute.xlu0 %10496
      %10498 = vrot.lane.b32.xlu0 %v10481, 64
      %v10499 = vpop.permute.xlu0 %10498
      %10500 = vrot.lane.b32.xlu0 %v10483, 64
      %v10501 = vpop.permute.xlu0 %10500
      %10502 = vrot.lane.b32.xlu0 %v10485, 64
      %v10503 = vpop.permute.xlu0 %10502
      %10504 = vrot.lane.b32.xlu0 %v10487, 64
      %v10505 = vpop.permute.xlu0 %10504
      %10506 = vrot.lane.b32.xlu0 %v10489, 64
      %v10507 = vpop.permute.xlu0 %10506
      %10508 = vrot.lane.b32.xlu0 %v10491, 64
      %v10509 = vpop.permute.xlu0 %10508
      %10510 = vrot.lane.b32.xlu0 %v10493, 64
      %v10511 = vpop.permute.xlu0 %10510
      %10512 = vrot.lane.b32.xlu0 %v10495, 64
      %v10513 = vpop.permute.xlu0 %10512
      %v10523 = vrot.slane %v10260, 7
      %v10524 = vrot.slane %v10261, 7
      %v10525 = vsel %vm530, %v10523, %v10524
      %v10526 = vrot.slane %v10262, 7
      %v10527 = vsel %vm530, %v10524, %v10526
      %v10528 = vrot.slane %v10263, 7
      %v10529 = vsel %vm530, %v10526, %v10528
      %v10530 = vrot.slane %v10264, 7
      %v10531 = vsel %vm530, %v10528, %v10530
      %v10532 = vrot.slane %v10265, 7
      %v10533 = vsel %vm530, %v10530, %v10532
      %v10534 = vrot.slane %v10266, 7
      %v10535 = vsel %vm530, %v10532, %v10534
      %v10536 = vrot.slane %v10267, 7
      %v10537 = vsel %vm530, %v10534, %v10536
      %v10538 = vrot.slane %v10268, 7
      %v10539 = vsel %vm530, %v10536, %v10538
      %10540 = vrot.lane.b32.xlu0 %v10523, 96
      %v10541 = vpop.permute.xlu0 %10540
      %10542 = vrot.lane.b32.xlu0 %v10525, 96
      %v10543 = vpop.permute.xlu0 %10542
      %10544 = vrot.lane.b32.xlu0 %v10527, 96
      %v10545 = vpop.permute.xlu0 %10544
      %10546 = vrot.lane.b32.xlu0 %v10529, 96
      %v10547 = vpop.permute.xlu0 %10546
      %10548 = vrot.lane.b32.xlu0 %v10531, 96
      %v10549 = vpop.permute.xlu0 %10548
      %10550 = vrot.lane.b32.xlu0 %v10533, 96
      %v10551 = vpop.permute.xlu0 %10550
      %10552 = vrot.lane.b32.xlu0 %v10535, 96
      %v10553 = vpop.permute.xlu0 %10552
      %10554 = vrot.lane.b32.xlu0 %v10537, 96
      %v10555 = vpop.permute.xlu0 %10554
      %10556 = vrot.lane.b32.xlu0 %v10539, 96
      %v10557 = vpop.permute.xlu0 %10556
      %v10567 = vrot.slane %v10268, 1
      %v10568 = vsel %vm407, %v10293, %v10567
      %10569 = vrot.lane.b32.xlu0 %v10568, 32
      %v10570 = vpop.permute.xlu0 %10569
      %10571 = vrot.lane.b32.xlu0 %v10567, 32
      %v10572 = vpop.permute.xlu0 %10571
      %v10575 = vrot.slane %v10268, 2
      %v10576 = vsel %vm451, %v10337, %v10575
      %10577 = vrot.lane.b32.xlu0 %v10576, 64
      %v10578 = vpop.permute.xlu0 %10577
      %10579 = vrot.lane.b32.xlu0 %v10575, 64
      %v10580 = vpop.permute.xlu0 %10579
      %v10583 = vsel %vm279, %v10259, %v10296
      %v10584 = vsel %vm279, %v10260, %v10298
      %v10585 = vsel %vm279, %v10261, %v10300
      %v10586 = vsel %vm279, %v10262, %v10302
      %v10587 = vsel %vm279, %v10263, %v10304
      %v10588 = vsel %vm279, %v10264, %v10306
      %v10589 = vsel %vm279, %v10265, %v10308
      %v10590 = vsel %vm279, %v10266, %v10310
      %v10591 = vsel %vm279, %v10267, %v10312
      %v10592 = vsel %vm505, %v10583, %v10340
      %v10593 = vsel %vm505, %v10584, %v10342
      %v10594 = vsel %vm505, %v10585, %v10344
      %v10595 = vsel %vm505, %v10586, %v10346
      %v10596 = vsel %vm505, %v10587, %v10348
      %v10597 = vsel %vm505, %v10588, %v10350
      %v10598 = vsel %vm505, %v10589, %v10352
      %v10599 = vsel %vm505, %v10590, %v10354
      %v10600 = vsel %vm505, %v10591, %v10356
      %v10601 = vsel %vm548, %v10592, %v10384
      %v10602 = vsel %vm548, %v10593, %v10386
      %v10603 = vsel %vm548, %v10594, %v10388
      %v10604 = vsel %vm548, %v10595, %v10390
      %v10605 = vsel %vm548, %v10596, %v10392
      %v10606 = vsel %vm548, %v10597, %v10394
      %v10607 = vsel %vm548, %v10598, %v10396
      %v10608 = vsel %vm548, %v10599, %v10398
      %v10609 = vsel %vm548, %v10600, %v10400
      %v10610 = vsel %vm279, %v10412, %v10452
      %v10611 = vsel %vm279, %v10414, %v10454
      %v10612 = vsel %vm279, %v10416, %v10456
      %v10613 = vsel %vm279, %v10418, %v10458
      %v10614 = vsel %vm279, %v10420, %v10460
      %v10615 = vsel %vm279, %v10422, %v10462
      %v10616 = vsel %vm279, %v10424, %v10464
      %v10617 = vsel %vm279, %v10426, %v10466
      %v10618 = vsel %vm279, %v10425, %v10468
      %v10619 = vsel %vm505, %v10610, %v10497
      %v10620 = vsel %vm505, %v10611, %v10499
      %v10621 = vsel %vm505, %v10612, %v10501
      %v10622 = vsel %vm505, %v10613, %v10503
      %v10623 = vsel %vm505, %v10614, %v10505
      %v10624 = vsel %vm505, %v10615, %v10507
      %v10625 = vsel %vm505, %v10616, %v10509
      %v10626 = vsel %vm505, %v10617, %v10511
      %v10627 = vsel %vm505, %v10618, %v10513
      %v10628 = vsel %vm548, %v10619, %v10541
      %v10629 = vsel %vm548, %v10620, %v10543
      %v10630 = vsel %vm548, %v10621, %v10545
      %v10631 = vsel %vm548, %v10622, %v10547
      %v10632 = vsel %vm548, %v10623, %v10549
      %v10633 = vsel %vm548, %v10624, %v10551
      %v10634 = vsel %vm548, %v10625, %v10553
      %v10635 = vsel %vm548, %v10626, %v10555
      %v10636 = vsel %vm548, %v10627, %v10557
      %v10637 = vsel %vm279, %v10267, %v10570
      %v10638 = vsel %vm279, %v10268, %v10572
      %v10639 = vsel %vm505, %v10637, %v10578
      %v10640 = vsel %vm505, %v10638, %v10580
      %v10642 = vlaneseq
      %v10643 = vshrl.u32 %v10642, 7
      %v10644 = vsub.s32 0, %v10643
      %v10645 = vrot.slane %v10194, %v10644
      %v10674 = vrot.slane %v10601, 3
      %v10675 = vrot.slane %v10602, 3
      %v10676 = vsel %vm1130, %v10674, %v10675
      %v10677 = vrot.slane %v10628, 3
      %v10678 = vrot.slane %v10629, 3
      %v10679 = vsel %vm1130, %v10677, %v10678
      %v10680 = vrot.slane %v10593, 3
      %v10681 = vrot.slane %v10594, 3
      %v10682 = vsel %vm1130, %v10680, %v10681
      %v10683 = vrot.slane %v10603, 3
      %v10684 = vsel %vm1130, %v10675, %v10683
      %v10685 = vrot.slane %v10630, 3
      %v10686 = vsel %vm1130, %v10678, %v10685
      %v10687 = vrot.slane %v10595, 3
      %v10688 = vsel %vm1130, %v10681, %v10687
      %v10689 = vrot.slane %v10604, 3
      %v10690 = vsel %vm1130, %v10683, %v10689
      %v10691 = vrot.slane %v10631, 3
      %v10692 = vsel %vm1130, %v10685, %v10691
      %v10693 = vrot.slane %v10596, 3
      %v10694 = vsel %vm1130, %v10687, %v10693
      %v10695 = vrot.slane %v10605, 3
      %v10696 = vsel %vm1130, %v10689, %v10695
      %v10697 = vrot.slane %v10632, 3
      %v10698 = vsel %vm1130, %v10691, %v10697
      %v10699 = vrot.slane %v10597, 3
      %v10700 = vsel %vm1130, %v10693, %v10699
      %v10701 = vrot.slane %v10606, 3
      %v10702 = vsel %vm1130, %v10695, %v10701
      %v10703 = vrot.slane %v10633, 3
      %v10704 = vsel %vm1130, %v10697, %v10703
      %v10705 = vrot.slane %v10598, 3
      %v10706 = vsel %vm1130, %v10699, %v10705
      %v10707 = vrot.slane %v10607, 3
      %v10708 = vsel %vm1130, %v10701, %v10707
      %v10709 = vrot.slane %v10634, 3
      %v10710 = vsel %vm1130, %v10703, %v10709
      %v10711 = vrot.slane %v10599, 3
      %v10712 = vsel %vm1130, %v10705, %v10711
      %v10713 = vrot.slane %v10608, 3
      %v10714 = vsel %vm1130, %v10707, %v10713
      %v10715 = vrot.slane %v10635, 3
      %v10716 = vsel %vm1130, %v10709, %v10715
      %v10717 = vrot.slane %v10639, 3
      %v10718 = vsel %vm1130, %v10711, %v10717
      %v10719 = vrot.slane %v10609, 3
      %v10720 = vsel %vm1130, %v10713, %v10719
      %v10721 = vrot.slane %v10636, 3
      %v10722 = vsel %vm1130, %v10715, %v10721
      %v10723 = vrot.slane %v10640, 3
      %v10724 = vsel %vm1130, %v10717, %v10723
      %v10741 = vsel %vm548, %v10682, 0
      %v10743 = vsel %vm548, %v10688, 0
      %v10745 = vsel %vm548, %v10694, 0
      %v10747 = vsel %vm548, %v10700, 0
      %v10749 = vsel %vm548, %v10706, 0
      %v10751 = vsel %vm548, %v10712, 0
      %v10753 = vsel %vm548, %v10718, 0
      %v10755 = vsel %vm548, %v10724, 0
      %10757 = vmatprep.subr.mxu0 0.0
      %10758 = vmatpush1.msra.mxu0 %v10149
      %10759 = vmatprep.subr.mxu0 0.0
      %10760 = vmatpush1.msra.mxu0 %v10150
      %10761 = vmatprep.subr.mxu0 0.0
      %10762 = vmatpush1.msra.mxu0 %v10151
      %10763 = vmatprep.subr.mxu0 0.0
      %10764 = vmatpush1.msra.mxu0 %v10152
      %10765 = vmatprep.subr.mxu0 0.0
      %10766 = vmatpush1.msra.mxu0 %v10153
      %10767 = vmatprep.subr.mxu0 0.0
      %10768 = vmatpush1.msra.mxu0 %v10154
      %10769 = vmatprep.subr.mxu0 0.0
      %10770 = vmatpush1.msra.mxu0 %v10155
      %10771 = vmatprep.subr.mxu0 0.0
      %10772 = vmatpush1.msra.mxu0 %v10156
      %10773 = vmatprep.subr.mxu0 0.0
      %10774 = vmatpush1.msra.mxu0 %v10157
      %10775 = vmatprep.subr.mxu0 0.0
      %10776 = vmatpush1.msra.mxu0 %v10158
      %10777 = vmatprep.subr.mxu0 0.0
      %10778 = vmatpush1.msra.mxu0 %v10159
      %10779 = vmatprep.subr.mxu0 0.0
      %10780 = vmatpush1.msra.mxu0 %v10160
      %10781 = vmatprep.subr.mxu0 0.0
      %10782 = vmatpush1.msra.mxu0 %v10161
      %10783 = vmatprep.subr.mxu0 0.0
      %10784 = vmatpush1.msra.mxu0 %v10162
      %10785 = vmatprep.subr.mxu0 0.0
      %10786 = vmatpush1.msra.mxu0 %v10163
      %10787 = vmatprep.subr.mxu0 0.0
      %10788 = vmatpush1.msra.mxu0 %v10164
      %10789 = vmatprep.subr.mxu0 0.0
      %10790 = vmatpush1.msra.mxu0 %v10165
      %10791 = vmatprep.subr.mxu0 0.0
      %10792 = vmatpush1.msra.mxu0 %v10166
      %10793 = vmatprep.subr.mxu0 0.0
      %10794 = vmatpush1.msra.mxu0 %v10167
      %10795 = vmatprep.subr.mxu0 0.0
      %10796 = vmatpush1.msra.mxu0 %v10168
      %10797 = vmatprep.subr.mxu0 0.0
      %10798 = vmatpush1.msra.mxu0 %v10169
      %10799 = vmatprep.subr.mxu0 0.0
      %10800 = vmatpush1.msra.mxu0 %v10170
      %10801 = vmatprep.subr.mxu0 0.0
      %10802 = vmatpush1.msra.mxu0 %v10171
      %10803 = vmatprep.subr.mxu0 0.0
      %10804 = vmatpush1.msra.mxu0 %v10172
      %10805 = vmatprep.subr.mxu0 0.0
      %10806 = vmatpush1.msra.mxu0 %v10173
      %10807 = vmatprep.subr.mxu0 0.0
      %10808 = vmatpush1.msra.mxu0 %v10174
      %10809 = vmatprep.subr.mxu0 0.0
      %10810 = vmatpush1.msra.mxu0 %v10175
      %10811 = vmatprep.subr.mxu0 0.0
      %10812 = vmatpush1.msra.mxu0 %v10176
      %10813 = vmatprep.subr.mxu0 0.0
      %10814 = vmatpush1.msra.mxu0 %v10177
      %10815 = vmatprep.subr.mxu0 0.0
      %10816 = vmatpush1.msra.mxu0 %v10178
      %10817 = vmatprep.subr.mxu0 0.0
      %10818 = vmatpush1.msra.mxu0 %v10179
      %10819 = vmatprep.subr.mxu0 0.0
      %10820 = vmatpush1.msra.mxu0 %v10180
      %10821 = vmatprep.mubr.f32.mxu0 %v10679
      %10822 = vmatmul.mubr.f32.gmra.mrb[0].mxu0 %v10676
      %v10823 = vpop.f32.mrb[0].mxu0
      %v10824 = vadd.f32 %v10645, %v10823
      %v10825 = vpop.f32.mrb[0].mxu0
      %10826 = vmatprep.mubr.f32.mxu0 %v10686
      %10827 = vmatmul.mubr.f32.gmra.mrb[0].mxu0 %v10684
      %v10828 = vpop.f32.mrb[0].mxu0
      %v10829 = vadd.f32 %v10645, %v10828
      %v10830 = vpop.f32.mrb[0].mxu0
      %10831 = vmatprep.mubr.f32.mxu0 %v10692
      %10832 = vmatmul.mubr.f32.gmra.mrb[0].mxu0 %v10690
      %v10833 = vpop.f32.mrb[0].mxu0
      %v10834 = vadd.f32 %v10645, %v10833
      %v10835 = vpop.f32.mrb[0].mxu0
      %10836 = vmatprep.mubr.f32.mxu0 %v10698
      %10837 = vmatmul.mubr.f32.gmra.mrb[0].mxu0 %v10696
      %v10838 = vpop.f32.mrb[0].mxu0
      %v10839 = vadd.f32 %v10645, %v10838
      %v10840 = vpop.f32.mrb[0].mxu0
      %10841 = vmatprep.mubr.f32.mxu0 %v10704
      %10842 = vmatmul.mubr.f32.gmra.mrb[0].mxu0 %v10702
      %v10843 = vpop.f32.mrb[0].mxu0
      %v10844 = vadd.f32 %v10645, %v10843
      %v10845 = vpop.f32.mrb[0].mxu0
      %10846 = vmatprep.mubr.f32.mxu0 %v10710
      %10847 = vmatmul.mubr.f32.gmra.mrb[0].mxu0 %v10708
      %v10848 = vpop.f32.mrb[0].mxu0
      %v10849 = vadd.f32 %v10645, %v10848
      %v10850 = vpop.f32.mrb[0].mxu0
      %10851 = vmatprep.mubr.f32.mxu0 %v10716
      %10852 = vmatmul.mubr.f32.gmra.mrb[0].mxu0 %v10714
      %v10853 = vpop.f32.mrb[0].mxu0
      %v10854 = vadd.f32 %v10645, %v10853
      %v10855 = vpop.f32.mrb[0].mxu0
      %10856 = vmatprep.mubr.f32.mxu0 %v10722
      %10857 = vmatmul.mubr.f32.gmra.mrb[0].mxu0 %v10720
      %v10858 = vpop.f32.mrb[0].mxu0
      %v10859 = vadd.f32 %v10645, %v10858
      %v10860 = vpop.f32.mrb[0].mxu0
      %10861 = vdwg.mxu0
      %10862 = vmatprep.subr.mxu0 0.0
      %10863 = vmatpush1.msra.mxu0 %v10181
      %10864 = vmatprep.subr.mxu0 0.0
      %10865 = vmatpush1.msra.mxu0 %v10182
      %10866 = vmatprep.subr.mxu0 0.0
      %10867 = vmatpush1.msra.mxu0 %v10183
      %10868 = vmatprep.subr.mxu0 0.0
      %10869 = vmatpush1.msra.mxu0 %v10184
      %10870 = vmatprep.subr.mxu0 0.0
      %10871 = vmatpush1.msra.mxu0 %v10185
      %10872 = vmatprep.subr.mxu0 0.0
      %10873 = vmatpush1.msra.mxu0 %v10186
      %10874 = vmatprep.subr.mxu0 0.0
      %10875 = vmatpush1.msra.mxu0 %v10187
      %10876 = vmatprep.subr.mxu0 0.0
      %10877 = vmatpush1.msra.mxu0 %v10188
      %10878 = vmatprep.subr.mxu0 0.0
      %10879 = vmatpush1.msra.mxu0 %v10189
      %10880 = vmatprep.subr.mxu0 0.0
      %10881 = vmatpush1.msra.mxu0 %v10190
      %10882 = vmatprep.subr.mxu0 0.0
      %10883 = vmatpush1.msra.mxu0 %v10191
      %10884 = vmatprep.subr.mxu0 0.0
      %10885 = vmatpush1.msra.mxu0 %v10192
      %10886 = vmatprep.subr.mxu0 0.0
      %10887 = vmatpush1.msra.mxu0 0.0
      %10888 = vmatprep.subr.mxu0 0.0
      %10889 = vmatpush1.msra.mxu0 0.0
      %10890 = vmatprep.subr.mxu0 0.0
      %10891 = vmatpush1.msra.mxu0 0.0
      %10892 = vmatprep.subr.mxu0 0.0
      %10893 = vmatpush1.msra.mxu0 0.0
      %10894 = vmatprep.subr.mxu0 0.0
      %10895 = vmatpush1.msra.mxu0 0.0
      %10896 = vmatprep.subr.mxu0 0.0
      %10897 = vmatpush1.msra.mxu0 0.0
      %10898 = vmatprep.subr.mxu0 0.0
      %10899 = vmatpush1.msra.mxu0 0.0
      %10900 = vmatprep.subr.mxu0 0.0
      %10901 = vmatpush1.msra.mxu0 0.0
      %10902 = vmatprep.subr.mxu0 0.0
      %10903 = vmatpush1.msra.mxu0 0.0
      %10904 = vmatprep.subr.mxu0 0.0
      %10905 = vmatpush1.msra.mxu0 0.0
      %10906 = vmatprep.subr.mxu0 0.0
      %10907 = vmatpush1.msra.mxu0 0.0
      %10908 = vmatprep.subr.mxu0 0.0
      %10909 = vmatpush1.msra.mxu0 0.0
      %10910 = vmatprep.subr.mxu0 0.0
      %10911 = vmatpush1.msra.mxu0 0.0
      %10912 = vmatprep.subr.mxu0 0.0
      %10913 = vmatpush1.msra.mxu0 0.0
      %10914 = vmatprep.subr.mxu0 0.0
      %10915 = vmatpush1.msra.mxu0 0.0
      %10916 = vmatprep.subr.mxu0 0.0
      %10917 = vmatpush1.msra.mxu0 0.0
      %10918 = vmatprep.subr.mxu0 0.0
      %10919 = vmatpush1.msra.mxu0 0.0
      %10920 = vmatprep.subr.mxu0 0.0
      %10921 = vmatpush1.msra.mxu0 0.0
      %10922 = vmatprep.subr.mxu0 0.0
      %10923 = vmatpush1.msra.mxu0 0.0
      %10924 = vmatprep.subr.mxu0 0.0
      %10925 = vmatpush1.msra.mxu0 0.0
      %10926 = vmatprep.mubr.f32.mxu0 0.0
      %10927 = vmatmul.mubr.f32.gmra.mrb[0].mxu0 %v10741
      %v10928 = vpop.f32.mrb[0].mxu0
      %v10929 = vadd.f32 %v10824, %v10928
      %v10930 = vpop.f32.mrb[0].mxu0
      %10931 = vmatprep.mubr.f32.mxu0 0.0
      %10932 = vmatmul.mubr.f32.gmra.mrb[0].mxu0 %v10743
      %v10933 = vpop.f32.mrb[0].mxu0
      %v10934 = vadd.f32 %v10829, %v10933
      %v10935 = vpop.f32.mrb[0].mxu0
      %10936 = vmatprep.mubr.f32.mxu0 0.0
      %10937 = vmatmul.mubr.f32.gmra.mrb[0].mxu0 %v10745
      %v10938 = vpop.f32.mrb[0].mxu0
      %v10939 = vadd.f32 %v10834, %v10938
      %v10940 = vpop.f32.mrb[0].mxu0
      %10941 = vmatprep.mubr.f32.mxu0 0.0
      %10942 = vmatmul.mubr.f32.gmra.mrb[0].mxu0 %v10747
      %v10943 = vpop.f32.mrb[0].mxu0
      %v10944 = vadd.f32 %v10839, %v10943
      %v10945 = vpop.f32.mrb[0].mxu0
      %10946 = vmatprep.mubr.f32.mxu0 0.0
      %10947 = vmatmul.mubr.f32.gmra.mrb[0].mxu0 %v10749
      %v10948 = vpop.f32.mrb[0].mxu0
      %v10949 = vadd.f32 %v10844, %v10948
      %v10950 = vpop.f32.mrb[0].mxu0
      %10951 = vmatprep.mubr.f32.mxu0 0.0
      %10952 = vmatmul.mubr.f32.gmra.mrb[0].mxu0 %v10751
      %v10953 = vpop.f32.mrb[0].mxu0
      %v10954 = vadd.f32 %v10849, %v10953
      %v10955 = vpop.f32.mrb[0].mxu0
      %10956 = vmatprep.mubr.f32.mxu0 0.0
      %10957 = vmatmul.mubr.f32.gmra.mrb[0].mxu0 %v10753
      %v10958 = vpop.f32.mrb[0].mxu0
      %v10959 = vadd.f32 %v10854, %v10958
      %v10960 = vpop.f32.mrb[0].mxu0
      %10961 = vmatprep.mubr.f32.mxu0 0.0
      %10962 = vmatmul.mubr.f32.gmra.mrb[0].mxu0 %v10755
      %v10963 = vpop.f32.mrb[0].mxu0
      %v10964 = vadd.f32 %v10859, %v10963
      %v10965 = vpop.f32.mrb[0].mxu0
      %10966 = vdwg.mxu0
      %v10967 = vadd.f32 %v10929, %v9262
      %v10968 = vadd.f32 %v10934, %v9263
      %v10969 = vadd.f32 %v10939, %v9264
      %v10970 = vadd.f32 %v10944, %v9265
      %v10971 = vadd.f32 %v10949, %v9266
      %v10972 = vadd.f32 %v10954, %v9267
      %v10973 = vadd.f32 %v10959, %v9268
      %v10974 = vadd.f32 %v10964, %v9269
      %v10975 = vadd.f32 %v6000, %v10967
      %v10976 = vadd.f32 %v6001, %v10968
      %v10977 = vadd.f32 %v6002, %v10969
      %v10978 = vadd.f32 %v6003, %v10970
      %v10979 = vadd.f32 %v6004, %v10971
      %v10980 = vadd.f32 %v6005, %v10972
      %v10981 = vadd.f32 %v6006, %v10973
      %v10982 = vadd.f32 %v6007, %v10974
      %v10983 = vmul.f32 %v10975, 0.33333334
      %v10984 = vmul.f32 %v10976, 0.33333334
      %v10985 = vmul.f32 %v10977, 0.33333334
      %v10986 = vmul.f32 %v10978, 0.33333334
      %v10987 = vmul.f32 %v10979, 0.33333334
      %v10988 = vmul.f32 %v10980, 0.33333334
      %v10989 = vmul.f32 %v10981, 0.33333334
      %v10990 = vmul.f32 %v10982, 0.33333334
      %10991 = vst.msk [vmem:[%s278] sm:$0xff] %vm279, %v10983
      %10992 = vst.msk [vmem:[%s278 + $0x8] sm:$0xff] %vm279, %v10984
      %10993 = vst.msk [vmem:[%s278 + $0x10] sm:$0xff] %vm279, %v10985
      %10994 = vst.msk [vmem:[%s278 + $0x18] sm:$0xff] %vm279, %v10986
      %10995 = vst.msk [vmem:[%s278 + $0x20] sm:$0xff] %vm279, %v10987
      %10996 = vst.msk [vmem:[%s278 + $0x28] sm:$0xff] %vm279, %v10988
      %10997 = vst.msk [vmem:[%s278 + $0x30] sm:$0xff] %vm279, %v10989
      %10998 = vst.msk [vmem:[%s278 + $0x38] sm:$0xff] %vm279, %v10990
      %p10999 = scmp.lt.s32.totalorder %s18, 1
      %s11000 = scalar_select %p10999, %s18, 1
      %s11001 = smul.addr %s11000, 8
      %s11002 = smul.addr %s11001, 8
      %s11003 = scalar_lea.vmem %s7, %s11002
      // Predicated region
      $region49: #{parallel_block_forward.1} parent=47 // pred_check
        %p11004 = pneg %p188
      $region50: #{parallel_block_forward.1} parent=47 // pred_check_branch
        %11006 = sbr.rel (%p11004) target = $region52
      $region51: #{parallel_block_forward.1} parent=47 // pred_region
        _
      $region52: #{parallel_block_forward.1} parent=47 // pred_fallthru
        _
    $region48: #{parallel_block_forward.1} parent=5 // pred_fallthru
      _
    %p11007 = scmp.le.s32.totalorder 2, %s13
    // Predicated region
    $region53: #{parallel_block_forward.1} parent=5 // pred_check
      %p11008 = pneg %p11007
    $region54: #{parallel_block_forward.1} parent=5 // pred_check_branch
      %11010 = sbr.rel (%p11008) target = $region56
    $region55: #{parallel_block_forward.1} parent=5 // pred_region
      %s11011 = ssub.s32 %s13, 2
      // Predicated region
      $region57: #{parallel_block_forward.1} parent=55 // pred_check
        %p11012 = pneg %p194
      $region58: #{parallel_block_forward.1} parent=55 // pred_check_branch
        %11014 = sbr.rel (%p11012) target = $region60
      $region59: #{parallel_block_forward.1} parent=55 // pred_region
        %p11015 = scmp.lt.s32.totalorder %s19, 1
        %s11016 = scalar_select %p11015, %s19, 1
        %s11017 = smul.addr %s11016, 8
        %s11018 = smul.addr %s11017, 8
        %s11019 = scalar_lea.vmem %s7, %s11018
      $region60: #{parallel_block_forward.1} parent=55 // pred_fallthru
        _
    $region56: #{parallel_block_forward.1} parent=5 // pred_fallthru
      _
  $region6: #{parallel_block_forward.1} parent=0 // loop_footer
    %s17 = sadd.s32 1, %s13
  $region7: #{parallel_block_forward.1} parent=0 // loop_footer_branch
    %12 = sbr.rel target = $region3
  $region8: #{parallel_block_forward.1} parent=0 // loop_exit
    _

</llo_original>
